<compile_context>
chip_gen: v7x
topology: tpu7x:2x2x1
jax: 0.10.0
libtpu: 0.0.40
codegen_flags: <defaults>
</compile_context>

<pallas_src>
import math

import jax
import jax.numpy as jnp
from jax import lax
from jax.experimental import pallas as pl
from jax.experimental.pallas import tpu as pltpu

INPUT_DIM = 14
HIDDEN_DIM = 64
MLP_DIM = 32
OUTPUT_DIM = 1
NUM_LAYERS = 2
SEQ_LEN = 24
BN_EPS = 1e-5


def _lstm_mlp_kernel(x_ref,
                     wih0_ref, whh0_ref, b0_ref,
                     wih1_ref, whh1_ref, b1_ref,
                     w1_ref, bfc1_ref, bn1s_ref, bn1t_ref,
                     w2_ref, bfc2_ref, bn2s_ref, bn2t_ref,
                     w3_ref, bfc3_ref,
                     out_ref,
                     proj_scr, h0_scr):
    T, B, D = x_ref.shape
    H = whh0_ref.shape[0]
    G = 4 * H
    f32 = jnp.float32

    # Hoisted activation constants. The wrapper pre-scales the gate columns by
    # [0.5, 0.5, 1, 0.5] (i, f, g, o), so:
    #   act = tanh(gates) * post_mul + post_add
    #       = [sigmoid(z_i) | sigmoid(z_f) | tanh(z_g) | sigmoid(z_o)]
    half = jnp.full((1, H), 0.5, f32)
    one = jnp.ones((1, H), f32)
    zero = jnp.zeros((1, H), f32)
    post_mul = jnp.broadcast_to(jnp.concatenate([half, half, one, half], axis=1), (B, G))
    post_add = jnp.broadcast_to(jnp.concatenate([half, half, zero, half], axis=1), (B, G))

    # Recurrent weights, hoisted out of the loops.
    whh0 = whh0_ref[...]
    whh1 = whh1_ref[...]

    def cell(proj_t, h, c, whh):
        # Single MXU op per step; input projection + bias already folded into proj_t.
        gates = proj_t + jnp.dot(h, whh, preferred_element_type=f32)
        act = jnp.tanh(gates) * post_mul + post_add       # one EUP pass over 4H lanes
        i = act[:, 0:H]
        f = act[:, H:2 * H]
        g = act[:, 2 * H:3 * H]
        o = act[:, 3 * H:4 * H]
        c_new = f * c + i * g
        h_new = o * jnp.tanh(c_new)
        return h_new, c_new

    z = jnp.zeros((B, H), f32)

    # ---------------- layer 0: hoisted input projection + recurrence -----------
    x2d = x_ref[...].reshape(T * B, D)
    proj_scr[...] = (jnp.dot(x2d, wih0_ref[...], preferred_element_type=f32)
                     + b0_ref[...]).reshape(T, B, G)

    def step0(t, carry):
        h, c = carry
        h, c = cell(proj_scr[t], h, c, whh0)
        h0_scr[t] = h
        return (h, c)

    _ = lax.fori_loop(0, T, step0, (z, z), unroll=True)

    # ---------------- layer 1: hoisted input projection + recurrence -----------
    h0_all = h0_scr[...].reshape(T * B, H)
    proj_scr[...] = (jnp.dot(h0_all, wih1_ref[...], preferred_element_type=f32)
                     + b1_ref[...]).reshape(T, B, G)

    def step1(t, carry):
        h, c = carry
        return cell(proj_scr[t], h, c, whh1)

    h1, _ = lax.fori_loop(0, T, step1, (z, z), unroll=True)

    # ---------------- MLP head (eval BatchNorm folded; Dropout = identity) -----
    # TODO(synk): training-mode (stochastic) Dropout not implemented.
    y = jnp.dot(h1, w1_ref[...], preferred_element_type=f32) + bfc1_ref[...]
    y = jnp.maximum(y, 0.0) * bn1s_ref[...] + bn1t_ref[...]
    y = jnp.dot(y, w2_ref[...], preferred_element_type=f32) + bfc2_ref[...]
    y = jnp.maximum(y, 0.0) * bn2s_ref[...] + bn2t_ref[...]
    out_ref[...] = jnp.dot(y, w3_ref[...], preferred_element_type=f32) + bfc3_ref[...]


def _batch_blocks(B):
    # Shard the batch across TensorCores (v7x megacore) when it splits into >=8-row
    # blocks; otherwise a single program (v5e/v6e and small demo batches).
    if B % 2 == 0 and (B // 2) % 8 == 0:
        return 2
    return 1


def lstm_model_forward(x, p):
    """x: (B, T, D) float32, matching the PyTorch batch_first input."""
    B, T, D = x.shape
    f32 = jnp.float32
    H = HIDDEN_DIM
    G = 4 * H

    x_tbd = jnp.transpose(x, (1, 0, 2)).astype(f32)          # (T, B, D), time-major

    def row(v):
        return v.reshape(1, -1).astype(f32)

    # Gate pre-scale [0.5, 0.5, 1, 0.5] folded into the LSTM weights so the kernel
    # evaluates all gates with a single tanh (sigmoid(z) = 0.5*tanh(0.5*z)+0.5).
    gscale = jnp.concatenate([jnp.full((H,), 0.5, f32),
                              jnp.full((H,), 0.5, f32),
                              jnp.ones((H,), f32),
                              jnp.full((H,), 0.5, f32)])

    wih0 = p["w_ih_l0"].astype(f32).T * gscale
    whh0 = p["w_hh_l0"].astype(f32).T * gscale
    b0 = row((p["b_ih_l0"] + p["b_hh_l0"]).astype(f32) * gscale)
    wih1 = p["w_ih_l1"].astype(f32).T * gscale
    whh1 = p["w_hh_l1"].astype(f32).T * gscale
    b1 = row((p["b_ih_l1"] + p["b_hh_l1"]).astype(f32) * gscale)

    # Fold BatchNorm (eval) into affine scale/shift.
    bn1_scale = p["bn1_gamma"] / jnp.sqrt(p["bn1_var"] + BN_EPS)
    bn1_shift = p["bn1_beta"] - p["bn1_mean"] * bn1_scale
    bn2_scale = p["bn2_gamma"] / jnp.sqrt(p["bn2_var"] + BN_EPS)
    bn2_shift = p["bn2_beta"] - p["bn2_mean"] * bn2_scale

    args = [
        x_tbd,
        wih0, whh0, b0,
        wih1, whh1, b1,
        p["fc1_w"].astype(f32).T, row(p["fc1_b"]), row(bn1_scale), row(bn1_shift),
        p["fc2_w"].astype(f32).T, row(p["fc2_b"]), row(bn2_scale), row(bn2_shift),
        p["fc3_w"].astype(f32).T, row(p["fc3_b"]),
    ]

    nb = _batch_blocks(B)
    b_blk = B // nb

    x_spec = pl.BlockSpec((T, b_blk, D), lambda i: (0, i, 0))

    def full_spec(a):
        return pl.BlockSpec(a.shape, lambda i, nd=a.ndim: (0,) * nd)

    in_specs = [x_spec] + [full_spec(a) for a in args[1:]]
    out_spec = pl.BlockSpec((b_blk, OUTPUT_DIM), lambda i: (i, 0))

    return pl.pallas_call(
        _lstm_mlp_kernel,
        out_shape=jax.ShapeDtypeStruct((B, OUTPUT_DIM), f32),
        grid=(nb,),
        in_specs=in_specs,
        out_specs=out_spec,
        scratch_shapes=[
            pltpu.VMEM((T, b_blk, G), f32),   # shared scratch for layer-0/1 projections
            pltpu.VMEM((T, b_blk, H), f32),   # all layer-0 hidden states
        ],
        compiler_params=pltpu.CompilerParams(dimension_semantics=("parallel",)),
    )(*args)


def init_params(key):
    ks = jax.random.split(key, 14)
    sH = 1.0 / math.sqrt(HIDDEN_DIM)
    sM = 1.0 / math.sqrt(MLP_DIM)

    def u(k, shape, scale):
        return jax.random.uniform(k, shape, jnp.float32, -scale, scale)

    H4 = 4 * HIDDEN_DIM
    p = {
        # LSTM layer 0
        "w_ih_l0": u(ks[0], (H4, INPUT_DIM), sH),
        "w_hh_l0": u(ks[1], (H4, HIDDEN_DIM), sH),
        "b_ih_l0": u(ks[2], (H4,), sH),
        "b_hh_l0": u(ks[3], (H4,), sH),
        # LSTM layer 1
        "w_ih_l1": u(ks[4], (H4, HIDDEN_DIM), sH),
        "w_hh_l1": u(ks[5], (H4, HIDDEN_DIM), sH),
        "b_ih_l1": u(ks[6], (H4,), sH),
        "b_hh_l1": u(ks[7], (H4,), sH),
        # MLP
        "fc1_w": u(ks[8], (MLP_DIM, HIDDEN_DIM), sH),
        "fc1_b": u(ks[9], (MLP_DIM,), sH),
        "fc2_w": u(ks[10], (MLP_DIM, MLP_DIM), sM),
        "fc2_b": u(ks[11], (MLP_DIM,), sM),
        "fc3_w": u(ks[12], (OUTPUT_DIM, MLP_DIM), sM),
        "fc3_b": u(ks[13], (OUTPUT_DIM,), sM),
        # BatchNorm1d params / running stats (PyTorch defaults)
        "bn1_gamma": jnp.ones((MLP_DIM,), jnp.float32),
        "bn1_beta": jnp.zeros((MLP_DIM,), jnp.float32),
        "bn1_mean": jnp.zeros((MLP_DIM,), jnp.float32),
        "bn1_var": jnp.ones((MLP_DIM,), jnp.float32),
        "bn2_gamma": jnp.ones((MLP_DIM,), jnp.float32),
        "bn2_beta": jnp.zeros((MLP_DIM,), jnp.float32),
        "bn2_mean": jnp.zeros((MLP_DIM,), jnp.float32),
        "bn2_var": jnp.ones((MLP_DIM,), jnp.float32),
    }
    return p


def reference_forward(x, p):
    """Pure-JAX reference replicating PyTorch eval-mode forward."""
    B, T, _ = x.shape
    H = HIDDEN_DIM

    def cell(x_t, h, c, wih, whh, bih, bhh):
        gates = x_t @ wih.T + bih + h @ whh.T + bhh
        i, f, g, o = jnp.split(gates, 4, axis=-1)
        i, f, o = jax.nn.sigmoid(i), jax.nn.sigmoid(f), jax.nn.sigmoid(o)
        g = jnp.tanh(g)
        c = f * c + i * g
        h = o * jnp.tanh(c)
        return h, c

    h0 = c0 = h1 = c1 = jnp.zeros((B, H), jnp.float32)
    for t in range(T):
        h0, c0 = cell(x[:, t], h0, c0, p["w_ih_l0"], p["w_hh_l0"], p["b_ih_l0"], p["b_hh_l0"])
        h1, c1 = cell(h0, h1, c1, p["w_ih_l1"], p["w_hh_l1"], p["b_ih_l1"], p["b_hh_l1"])

    def bn(y, g, b, m, v):
        return (y - m) / jnp.sqrt(v + BN_EPS) * g + b

    y = jnp.maximum(h1 @ p["fc1_w"].T + p["fc1_b"], 0.0)
    y = bn(y, p["bn1_gamma"], p["bn1_beta"], p["bn1_mean"], p["bn1_var"])
    y = jnp.maximum(y @ p["fc2_w"].T + p["fc2_b"], 0.0)
    y = bn(y, p["bn2_gamma"], p["bn2_beta"], p["bn2_mean"], p["bn2_var"])
    return y @ p["fc3_w"].T + p["fc3_b"]


if __name__ == "__main__":
    key = jax.random.PRNGKey(0)
    k_param, k_x = jax.random.split(key)
    params = init_params(k_param)

    B = 8  # small batch for the demo (PyTorch script used 256)
    x = jax.random.normal(k_x, (B, SEQ_LEN, INPUT_DIM), jnp.float32)

    out = lstm_model_forward(x, params)
    out = jax.block_until_ready(out)

    ref = reference_forward(x, params)
    assert out.shape == (B, OUTPUT_DIM)
    assert jnp.allclose(out, ref, atol=1e-4, rtol=1e-4), (out, ref)
    print("KERNEL_OK")
</pallas_src>

<mosaic_0001>
module attributes {stable_mosaic.version = 11 : i64} {
  func.func @_lstm_mlp_kernel(%arg0: i32, %arg1: memref<24x8x14xf32, #tpu.memory_space<vmem>>, %arg2: memref<14x256xf32, #tpu.memory_space<vmem>>, %arg3: memref<64x256xf32, #tpu.memory_space<vmem>>, %arg4: memref<1x256xf32, #tpu.memory_space<vmem>>, %arg5: memref<64x256xf32, #tpu.memory_space<vmem>>, %arg6: memref<64x256xf32, #tpu.memory_space<vmem>>, %arg7: memref<1x256xf32, #tpu.memory_space<vmem>>, %arg8: memref<64x32xf32, #tpu.memory_space<vmem>>, %arg9: memref<1x32xf32, #tpu.memory_space<vmem>>, %arg10: memref<1x32xf32, #tpu.memory_space<vmem>>, %arg11: memref<1x32xf32, #tpu.memory_space<vmem>>, %arg12: memref<32x32xf32, #tpu.memory_space<vmem>>, %arg13: memref<1x32xf32, #tpu.memory_space<vmem>>, %arg14: memref<1x32xf32, #tpu.memory_space<vmem>>, %arg15: memref<1x32xf32, #tpu.memory_space<vmem>>, %arg16: memref<32x1xf32, #tpu.memory_space<vmem>>, %arg17: memref<1x1xf32, #tpu.memory_space<vmem>>, %arg18: memref<8x1xf32, #tpu.memory_space<vmem>>, %arg19: memref<24x8x256xf32, #tpu.memory_space<vmem>>, %arg20: memref<24x8x64xf32, #tpu.memory_space<vmem>>) attributes {dimension_semantics = [#tpu.dimension_semantics<parallel>], iteration_bounds = array<i64: 1>, scalar_prefetch = 0 : i64, scratch_operands = 2 : i64, tpu.core_type = #tpu.core_type<tc>, window_params = [{transform_indices = @transform_0, window_bounds = array<i64: 24, 8, 14>}, {pipeline_mode = #tpu.pipeline_mode<synchronous>, transform_indices = @transform_1, window_bounds = array<i64: 14, 256>}, {pipeline_mode = #tpu.pipeline_mode<synchronous>, transform_indices = @transform_2, window_bounds = array<i64: 64, 256>}, {pipeline_mode = #tpu.pipeline_mode<synchronous>, transform_indices = @transform_3, window_bounds = array<i64: 1, 256>}, {pipeline_mode = #tpu.pipeline_mode<synchronous>, transform_indices = @transform_4, window_bounds = array<i64: 64, 256>}, {pipeline_mode = #tpu.pipeline_mode<synchronous>, transform_indices = @transform_5, window_bounds = array<i64: 64, 256>}, {pipeline_mode = #tpu.pipeline_mode<synchronous>, transform_indices = @transform_6, window_bounds = array<i64: 1, 256>}, {pipeline_mode = #tpu.pipeline_mode<synchronous>, transform_indices = @transform_7, window_bounds = array<i64: 64, 32>}, {pipeline_mode = #tpu.pipeline_mode<synchronous>, transform_indices = @transform_8, window_bounds = array<i64: 1, 32>}, {pipeline_mode = #tpu.pipeline_mode<synchronous>, transform_indices = @transform_9, window_bounds = array<i64: 1, 32>}, {pipeline_mode = #tpu.pipeline_mode<synchronous>, transform_indices = @transform_10, window_bounds = array<i64: 1, 32>}, {pipeline_mode = #tpu.pipeline_mode<synchronous>, transform_indices = @transform_11, window_bounds = array<i64: 32, 32>}, {pipeline_mode = #tpu.pipeline_mode<synchronous>, transform_indices = @transform_12, window_bounds = array<i64: 1, 32>}, {pipeline_mode = #tpu.pipeline_mode<synchronous>, transform_indices = @transform_13, window_bounds = array<i64: 1, 32>}, {pipeline_mode = #tpu.pipeline_mode<synchronous>, transform_indices = @transform_14, window_bounds = array<i64: 1, 32>}, {pipeline_mode = #tpu.pipeline_mode<synchronous>, transform_indices = @transform_15, window_bounds = array<i64: 32, 1>}, {pipeline_mode = #tpu.pipeline_mode<synchronous>, transform_indices = @transform_16, window_bounds = array<i64: 1, 1>}, {transform_indices = @transform_17, window_bounds = array<i64: 8, 1>}]} {
    %cst = arith.constant 5.000000e-01 : f32
    %0 = vector.broadcast %cst : f32 to vector<1x64xf32>
    %cst_0 = arith.constant 1.000000e+00 : f32
    %1 = vector.broadcast %cst_0 : f32 to vector<1x64xf32>
    %cst_1 = arith.constant 0.000000e+00 : f32
    %2 = vector.broadcast %cst_1 : f32 to vector<1x64xf32>
    %3 = tpu.concatenate %0, %0, %1, %0 in 1 : vector<1x64xf32>, vector<1x64xf32>, vector<1x64xf32>, vector<1x64xf32> -> vector<1x256xf32>
    %4 = vector.shape_cast %3 : vector<1x256xf32> to vector<1x256xf32>
    %5 = vector.broadcast %4 : vector<1x256xf32> to vector<8x256xf32>
    %6 = tpu.concatenate %0, %0, %2, %0 in 1 : vector<1x64xf32>, vector<1x64xf32>, vector<1x64xf32>, vector<1x64xf32> -> vector<1x256xf32>
    %7 = vector.shape_cast %6 : vector<1x256xf32> to vector<1x256xf32>
    %8 = vector.broadcast %7 : vector<1x256xf32> to vector<8x256xf32>
    %c0 = arith.constant 0 : index
    %c0_2 = arith.constant 0 : index
    %9 = vector.load %arg3[%c0, %c0_2] : memref<64x256xf32, #tpu.memory_space<vmem>>, vector<64x256xf32>
    %c0_3 = arith.constant 0 : index
    %c0_4 = arith.constant 0 : index
    %10 = vector.load %arg6[%c0_3, %c0_4] : memref<64x256xf32, #tpu.memory_space<vmem>>, vector<64x256xf32>
    %cst_5 = arith.constant 0.000000e+00 : f32
    %11 = vector.broadcast %cst_5 : f32 to vector<8x64xf32>
    %c0_6 = arith.constant 0 : index
    %c0_7 = arith.constant 0 : index
    %c0_8 = arith.constant 0 : index
    %12 = vector.load %arg1[%c0_6, %c0_7, %c0_8] : memref<24x8x14xf32, #tpu.memory_space<vmem>>, vector<24x8x14xf32>
    %13 = vector.shape_cast %12 : vector<24x8x14xf32> to vector<192x14xf32>
    %c0_9 = arith.constant 0 : index
    %c0_10 = arith.constant 0 : index
    %14 = vector.load %arg2[%c0_9, %c0_10] : memref<14x256xf32, #tpu.memory_space<vmem>>, vector<14x256xf32>
    %cst_11 = arith.constant dense<0.000000e+00> : vector<192x256xf32>
    %15 = tpu.matmul %13, %14, %cst_11 {dimension_numbers = #tpu.dot_dimension_numbers<[1], [0], [0], [1], [0, 0, 1, 1], [], []>} : vector<192x14xf32>, vector<14x256xf32>, vector<192x256xf32> -> vector<192x256xf32>
    %c0_12 = arith.constant 0 : index
    %c0_13 = arith.constant 0 : index
    %16 = vector.load %arg4[%c0_12, %c0_13] : memref<1x256xf32, #tpu.memory_space<vmem>>, vector<1x256xf32>
    %17 = vector.broadcast %16 : vector<1x256xf32> to vector<192x256xf32>
    %18 = arith.addf %15, %17 : vector<192x256xf32>
    %19 = vector.shape_cast %18 : vector<192x256xf32> to vector<24x8x256xf32>
    %c0_14 = arith.constant 0 : index
    %c0_15 = arith.constant 0 : index
    %c0_16 = arith.constant 0 : index
    %20 = vector.load %arg19[%c0_14, %c0_15, %c0_16] : memref<24x8x256xf32, #tpu.memory_space<vmem>>, vector<24x8x256xf32>
    tpu.vector_store %arg19[%c0_14, %c0_15, %c0_16], %19 {strides = array<i32>} : memref<24x8x256xf32, #tpu.memory_space<vmem>>, vector<24x8x256xf32>,
    %c0_i32 = arith.constant 0 : i32
    %21 = arith.index_cast %c0_i32 : i32 to index
    %c0_17 = arith.constant 0 : index
    %c0_18 = arith.constant 0 : index
    %22 = vector.load %arg19[%21, %c0_17, %c0_18] : memref<24x8x256xf32, #tpu.memory_space<vmem>>, vector<1x8x256xf32>
    %23 = vector.shape_cast %22 : vector<1x8x256xf32> to vector<8x256xf32>
    %cst_19 = arith.constant dense<0.000000e+00> : vector<8x256xf32>
    %24 = tpu.matmul %11, %9, %cst_19 {dimension_numbers = #tpu.dot_dimension_numbers<[1], [0], [0], [1], [0, 0, 1, 1], [], []>} : vector<8x64xf32>, vector<64x256xf32>, vector<8x256xf32> -> vector<8x256xf32>
    %25 = arith.addf %23, %24 : vector<8x256xf32>
    %26 = math.tanh %25 : vector<8x256xf32>
    %27 = arith.mulf %26, %5 : vector<8x256xf32>
    %28 = arith.addf %27, %8 : vector<8x256xf32>
    %29 = vector.extract_strided_slice %28 {offsets = [0, 0], sizes = [8, 64], strides = [1, 1]} : vector<8x256xf32> to vector<8x64xf32>
    %30 = vector.extract_strided_slice %28 {offsets = [0, 64], sizes = [8, 64], strides = [1, 1]} : vector<8x256xf32> to vector<8x64xf32>
    %31 = vector.extract_strided_slice %28 {offsets = [0, 128], sizes = [8, 64], strides = [1, 1]} : vector<8x256xf32> to vector<8x64xf32>
    %32 = vector.extract_strided_slice %28 {offsets = [0, 192], sizes = [8, 64], strides = [1, 1]} : vector<8x256xf32> to vector<8x64xf32>
    %33 = arith.mulf %30, %11 : vector<8x64xf32>
    %34 = arith.mulf %29, %31 : vector<8x64xf32>
    %35 = arith.addf %33, %34 : vector<8x64xf32>
    %36 = math.tanh %35 : vector<8x64xf32>
    %37 = arith.mulf %32, %36 : vector<8x64xf32>
    %38 = arith.index_cast %c0_i32 : i32 to index
    %c0_20 = arith.constant 0 : index
    %c0_21 = arith.constant 0 : index
    %39 = vector.load %arg20[%38, %c0_20, %c0_21] : memref<24x8x64xf32, #tpu.memory_space<vmem>>, vector<1x8x64xf32>
    %40 = vector.shape_cast %39 : vector<1x8x64xf32> to vector<8x64xf32>
    %41 = vector.shape_cast %37 : vector<8x64xf32> to vector<1x8x64xf32>
    tpu.vector_store %arg20[%38, %c0_20, %c0_21], %41 {strides = array<i32>} : memref<24x8x64xf32, #tpu.memory_space<vmem>>, vector<1x8x64xf32>,
    %c1_i32 = arith.constant 1 : i32
    %42 = arith.index_cast %c1_i32 : i32 to index
    %c0_22 = arith.constant 0 : index
    %c0_23 = arith.constant 0 : index
    %43 = vector.load %arg19[%42, %c0_22, %c0_23] : memref<24x8x256xf32, #tpu.memory_space<vmem>>, vector<1x8x256xf32>
    %44 = vector.shape_cast %43 : vector<1x8x256xf32> to vector<8x256xf32>
    %cst_24 = arith.constant dense<0.000000e+00> : vector<8x256xf32>
    %45 = tpu.matmul %37, %9, %cst_24 {dimension_numbers = #tpu.dot_dimension_numbers<[1], [0], [0], [1], [0, 0, 1, 1], [], []>} : vector<8x64xf32>, vector<64x256xf32>, vector<8x256xf32> -> vector<8x256xf32>
    %46 = arith.addf %44, %45 : vector<8x256xf32>
    %47 = math.tanh %46 : vector<8x256xf32>
    %48 = arith.mulf %47, %5 : vector<8x256xf32>
    %49 = arith.addf %48, %8 : vector<8x256xf32>
    %50 = vector.extract_strided_slice %49 {offsets = [0, 0], sizes = [8, 64], strides = [1, 1]} : vector<8x256xf32> to vector<8x64xf32>
    %51 = vector.extract_strided_slice %49 {offsets = [0, 64], sizes = [8, 64], strides = [1, 1]} : vector<8x256xf32> to vector<8x64xf32>
    %52 = vector.extract_strided_slice %49 {offsets = [0, 128], sizes = [8, 64], strides = [1, 1]} : vector<8x256xf32> to vector<8x64xf32>
    %53 = vector.extract_strided_slice %49 {offsets = [0, 192], sizes = [8, 64], strides = [1, 1]} : vector<8x256xf32> to vector<8x64xf32>
    %54 = arith.mulf %51, %35 : vector<8x64xf32>
    %55 = arith.mulf %50, %52 : vector<8x64xf32>
    %56 = arith.addf %54, %55 : vector<8x64xf32>
    %57 = math.tanh %56 : vector<8x64xf32>
    %58 = arith.mulf %53, %57 : vector<8x64xf32>
    %59 = arith.index_cast %c1_i32 : i32 to index
    %c0_25 = arith.constant 0 : index
    %c0_26 = arith.constant 0 : index
    %60 = vector.load %arg20[%59, %c0_25, %c0_26] : memref<24x8x64xf32, #tpu.memory_space<vmem>>, vector<1x8x64xf32>
    %61 = vector.shape_cast %60 : vector<1x8x64xf32> to vector<8x64xf32>
    %62 = vector.shape_cast %58 : vector<8x64xf32> to vector<1x8x64xf32>
    tpu.vector_store %arg20[%59, %c0_25, %c0_26], %62 {strides = array<i32>} : memref<24x8x64xf32, #tpu.memory_space<vmem>>, vector<1x8x64xf32>,
    %c2_i32 = arith.constant 2 : i32
    %63 = arith.index_cast %c2_i32 : i32 to index
    %c0_27 = arith.constant 0 : index
    %c0_28 = arith.constant 0 : index
    %64 = vector.load %arg19[%63, %c0_27, %c0_28] : memref<24x8x256xf32, #tpu.memory_space<vmem>>, vector<1x8x256xf32>
    %65 = vector.shape_cast %64 : vector<1x8x256xf32> to vector<8x256xf32>
    %cst_29 = arith.constant dense<0.000000e+00> : vector<8x256xf32>
    %66 = tpu.matmul %58, %9, %cst_29 {dimension_numbers = #tpu.dot_dimension_numbers<[1], [0], [0], [1], [0, 0, 1, 1], [], []>} : vector<8x64xf32>, vector<64x256xf32>, vector<8x256xf32> -> vector<8x256xf32>
    %67 = arith.addf %65, %66 : vector<8x256xf32>
    %68 = math.tanh %67 : vector<8x256xf32>
    %69 = arith.mulf %68, %5 : vector<8x256xf32>
    %70 = arith.addf %69, %8 : vector<8x256xf32>
    %71 = vector.extract_strided_slice %70 {offsets = [0, 0], sizes = [8, 64], strides = [1, 1]} : vector<8x256xf32> to vector<8x64xf32>
    %72 = vector.extract_strided_slice %70 {offsets = [0, 64], sizes = [8, 64], strides = [1, 1]} : vector<8x256xf32> to vector<8x64xf32>
    %73 = vector.extract_strided_slice %70 {offsets = [0, 128], sizes = [8, 64], strides = [1, 1]} : vector<8x256xf32> to vector<8x64xf32>
    %74 = vector.extract_strided_slice %70 {offsets = [0, 192], sizes = [8, 64], strides = [1, 1]} : vector<8x256xf32> to vector<8x64xf32>
    %75 = arith.mulf %72, %56 : vector<8x64xf32>
    %76 = arith.mulf %71, %73 : vector<8x64xf32>
    %77 = arith.addf %75, %76 : vector<8x64xf32>
    %78 = math.tanh %77 : vector<8x64xf32>
    %79 = arith.mulf %74, %78 : vector<8x64xf32>
    %80 = arith.index_cast %c2_i32 : i32 to index
    %c0_30 = arith.constant 0 : index
    %c0_31 = arith.constant 0 : index
    %81 = vector.load %arg20[%80, %c0_30, %c0_31] : memref<24x8x64xf32, #tpu.memory_space<vmem>>, vector<1x8x64xf32>
    %82 = vector.shape_cast %81 : vector<1x8x64xf32> to vector<8x64xf32>
    %83 = vector.shape_cast %79 : vector<8x64xf32> to vector<1x8x64xf32>
    tpu.vector_store %arg20[%80, %c0_30, %c0_31], %83 {strides = array<i32>} : memref<24x8x64xf32, #tpu.memory_space<vmem>>, vector<1x8x64xf32>,
    %c3_i32 = arith.constant 3 : i32
    %84 = arith.index_cast %c3_i32 : i32 to index
    %c0_32 = arith.constant 0 : index
    %c0_33 = arith.constant 0 : index
    %85 = vector.load %arg19[%84, %c0_32, %c0_33] : memref<24x8x256xf32, #tpu.memory_space<vmem>>, vector<1x8x256xf32>
    %86 = vector.shape_cast %85 : vector<1x8x256xf32> to vector<8x256xf32>
    %cst_34 = arith.constant dense<0.000000e+00> : vector<8x256xf32>
    %87 = tpu.matmul %79, %9, %cst_34 {dimension_numbers = #tpu.dot_dimension_numbers<[1], [0], [0], [1], [0, 0, 1, 1], [], []>} : vector<8x64xf32>, vector<64x256xf32>, vector<8x256xf32> -> vector<8x256xf32>
    %88 = arith.addf %86, %87 : vector<8x256xf32>
    %89 = math.tanh %88 : vector<8x256xf32>
    %90 = arith.mulf %89, %5 : vector<8x256xf32>
    %91 = arith.addf %90, %8 : vector<8x256xf32>
    %92 = vector.extract_strided_slice %91 {offsets = [0, 0], sizes = [8, 64], strides = [1, 1]} : vector<8x256xf32> to vector<8x64xf32>
    %93 = vector.extract_strided_slice %91 {offsets = [0, 64], sizes = [8, 64], strides = [1, 1]} : vector<8x256xf32> to vector<8x64xf32>
    %94 = vector.extract_strided_slice %91 {offsets = [0, 128], sizes = [8, 64], strides = [1, 1]} : vector<8x256xf32> to vector<8x64xf32>
    %95 = vector.extract_strided_slice %91 {offsets = [0, 192], sizes = [8, 64], strides = [1, 1]} : vector<8x256xf32> to vector<8x64xf32>
    %96 = arith.mulf %93, %77 : vector<8x64xf32>
    %97 = arith.mulf %92, %94 : vector<8x64xf32>
    %98 = arith.addf %96, %97 : vector<8x64xf32>
    %99 = math.tanh %98 : vector<8x64xf32>
    %100 = arith.mulf %95, %99 : vector<8x64xf32>
    %101 = arith.index_cast %c3_i32 : i32 to index
    %c0_35 = arith.constant 0 : index
    %c0_36 = arith.constant 0 : index
    %102 = vector.load %arg20[%101, %c0_35, %c0_36] : memref<24x8x64xf32, #tpu.memory_space<vmem>>, vector<1x8x64xf32>
    %103 = vector.shape_cast %102 : vector<1x8x64xf32> to vector<8x64xf32>
    %104 = vector.shape_cast %100 : vector<8x64xf32> to vector<1x8x64xf32>
    tpu.vector_store %arg20[%101, %c0_35, %c0_36], %104 {strides = array<i32>} : memref<24x8x64xf32, #tpu.memory_space<vmem>>, vector<1x8x64xf32>,
    %c4_i32 = arith.constant 4 : i32
    %105 = arith.index_cast %c4_i32 : i32 to index
    %c0_37 = arith.constant 0 : index
    %c0_38 = arith.constant 0 : index
    %106 = vector.load %arg19[%105, %c0_37, %c0_38] : memref<24x8x256xf32, #tpu.memory_space<vmem>>, vector<1x8x256xf32>
    %107 = vector.shape_cast %106 : vector<1x8x256xf32> to vector<8x256xf32>
    %cst_39 = arith.constant dense<0.000000e+00> : vector<8x256xf32>
    %108 = tpu.matmul %100, %9, %cst_39 {dimension_numbers = #tpu.dot_dimension_numbers<[1], [0], [0], [1], [0, 0, 1, 1], [], []>} : vector<8x64xf32>, vector<64x256xf32>, vector<8x256xf32> -> vector<8x256xf32>
    %109 = arith.addf %107, %108 : vector<8x256xf32>
    %110 = math.tanh %109 : vector<8x256xf32>
    %111 = arith.mulf %110, %5 : vector<8x256xf32>
    %112 = arith.addf %111, %8 : vector<8x256xf32>
    %113 = vector.extract_strided_slice %112 {offsets = [0, 0], sizes = [8, 64], strides = [1, 1]} : vector<8x256xf32> to vector<8x64xf32>
    %114 = vector.extract_strided_slice %112 {offsets = [0, 64], sizes = [8, 64], strides = [1, 1]} : vector<8x256xf32> to vector<8x64xf32>
    %115 = vector.extract_strided_slice %112 {offsets = [0, 128], sizes = [8, 64], strides = [1, 1]} : vector<8x256xf32> to vector<8x64xf32>
    %116 = vector.extract_strided_slice %112 {offsets = [0, 192], sizes = [8, 64], strides = [1, 1]} : vector<8x256xf32> to vector<8x64xf32>
    %117 = arith.mulf %114, %98 : vector<8x64xf32>
    %118 = arith.mulf %113, %115 : vector<8x64xf32>
    %119 = arith.addf %117, %118 : vector<8x64xf32>
    %120 = math.tanh %119 : vector<8x64xf32>
    %121 = arith.mulf %116, %120 : vector<8x64xf32>
    %122 = arith.index_cast %c4_i32 : i32 to index
    %c0_40 = arith.constant 0 : index
    %c0_41 = arith.constant 0 : index
    %123 = vector.load %arg20[%122, %c0_40, %c0_41] : memref<24x8x64xf32, #tpu.memory_space<vmem>>, vector<1x8x64xf32>
    %124 = vector.shape_cast %123 : vector<1x8x64xf32> to vector<8x64xf32>
    %125 = vector.shape_cast %121 : vector<8x64xf32> to vector<1x8x64xf32>
    tpu.vector_store %arg20[%122, %c0_40, %c0_41], %125 {strides = array<i32>} : memref<24x8x64xf32, #tpu.memory_space<vmem>>, vector<1x8x64xf32>,
    %c5_i32 = arith.constant 5 : i32
    %126 = arith.index_cast %c5_i32 : i32 to index
    %c0_42 = arith.constant 0 : index
    %c0_43 = arith.constant 0 : index
    %127 = vector.load %arg19[%126, %c0_42, %c0_43] : memref<24x8x256xf32, #tpu.memory_space<vmem>>, vector<1x8x256xf32>
    %128 = vector.shape_cast %127 : vector<1x8x256xf32> to vector<8x256xf32>
    %cst_44 = arith.constant dense<0.000000e+00> : vector<8x256xf32>
    %129 = tpu.matmul %121, %9, %cst_44 {dimension_numbers = #tpu.dot_dimension_numbers<[1], [0], [0], [1], [0, 0, 1, 1], [], []>} : vector<8x64xf32>, vector<64x256xf32>, vector<8x256xf32> -> vector<8x256xf32>
    %130 = arith.addf %128, %129 : vector<8x256xf32>
    %131 = math.tanh %130 : vector<8x256xf32>
    %132 = arith.mulf %131, %5 : vector<8x256xf32>
    %133 = arith.addf %132, %8 : vector<8x256xf32>
    %134 = vector.extract_strided_slice %133 {offsets = [0, 0], sizes = [8, 64], strides = [1, 1]} : vector<8x256xf32> to vector<8x64xf32>
    %135 = vector.extract_strided_slice %133 {offsets = [0, 64], sizes = [8, 64], strides = [1, 1]} : vector<8x256xf32> to vector<8x64xf32>
    %136 = vector.extract_strided_slice %133 {offsets = [0, 128], sizes = [8, 64], strides = [1, 1]} : vector<8x256xf32> to vector<8x64xf32>
    %137 = vector.extract_strided_slice %133 {offsets = [0, 192], sizes = [8, 64], strides = [1, 1]} : vector<8x256xf32> to vector<8x64xf32>
    %138 = arith.mulf %135, %119 : vector<8x64xf32>
    %139 = arith.mulf %134, %136 : vector<8x64xf32>
    %140 = arith.addf %138, %139 : vector<8x64xf32>
    %141 = math.tanh %140 : vector<8x64xf32>
    %142 = arith.mulf %137, %141 : vector<8x64xf32>
    %143 = arith.index_cast %c5_i32 : i32 to index
    %c0_45 = arith.constant 0 : index
    %c0_46 = arith.constant 0 : index
    %144 = vector.load %arg20[%143, %c0_45, %c0_46] : memref<24x8x64xf32, #tpu.memory_space<vmem>>, vector<1x8x64xf32>
    %145 = vector.shape_cast %144 : vector<1x8x64xf32> to vector<8x64xf32>
    %146 = vector.shape_cast %142 : vector<8x64xf32> to vector<1x8x64xf32>
    tpu.vector_store %arg20[%143, %c0_45, %c0_46], %146 {strides = array<i32>} : memref<24x8x64xf32, #tpu.memory_space<vmem>>, vector<1x8x64xf32>,
    %c6_i32 = arith.constant 6 : i32
    %147 = arith.index_cast %c6_i32 : i32 to index
    %c0_47 = arith.constant 0 : index
    %c0_48 = arith.constant 0 : index
    %148 = vector.load %arg19[%147, %c0_47, %c0_48] : memref<24x8x256xf32, #tpu.memory_space<vmem>>, vector<1x8x256xf32>
    %149 = vector.shape_cast %148 : vector<1x8x256xf32> to vector<8x256xf32>
    %cst_49 = arith.constant dense<0.000000e+00> : vector<8x256xf32>
    %150 = tpu.matmul %142, %9, %cst_49 {dimension_numbers = #tpu.dot_dimension_numbers<[1], [0], [0], [1], [0, 0, 1, 1], [], []>} : vector<8x64xf32>, vector<64x256xf32>, vector<8x256xf32> -> vector<8x256xf32>
    %151 = arith.addf %149, %150 : vector<8x256xf32>
    %152 = math.tanh %151 : vector<8x256xf32>
    %153 = arith.mulf %152, %5 : vector<8x256xf32>
    %154 = arith.addf %153, %8 : vector<8x256xf32>
    %155 = vector.extract_strided_slice %154 {offsets = [0, 0], sizes = [8, 64], strides = [1, 1]} : vector<8x256xf32> to vector<8x64xf32>
    %156 = vector.extract_strided_slice %154 {offsets = [0, 64], sizes = [8, 64], strides = [1, 1]} : vector<8x256xf32> to vector<8x64xf32>
    %157 = vector.extract_strided_slice %154 {offsets = [0, 128], sizes = [8, 64], strides = [1, 1]} : vector<8x256xf32> to vector<8x64xf32>
    %158 = vector.extract_strided_slice %154 {offsets = [0, 192], sizes = [8, 64], strides = [1, 1]} : vector<8x256xf32> to vector<8x64xf32>
    %159 = arith.mulf %156, %140 : vector<8x64xf32>
    %160 = arith.mulf %155, %157 : vector<8x64xf32>
    %161 = arith.addf %159, %160 : vector<8x64xf32>
    %162 = math.tanh %161 : vector<8x64xf32>
    %163 = arith.mulf %158, %162 : vector<8x64xf32>
    %164 = arith.index_cast %c6_i32 : i32 to index
    %c0_50 = arith.constant 0 : index
    %c0_51 = arith.constant 0 : index
    %165 = vector.load %arg20[%164, %c0_50, %c0_51] : memref<24x8x64xf32, #tpu.memory_space<vmem>>, vector<1x8x64xf32>
    %166 = vector.shape_cast %165 : vector<1x8x64xf32> to vector<8x64xf32>
    %167 = vector.shape_cast %163 : vector<8x64xf32> to vector<1x8x64xf32>
    tpu.vector_store %arg20[%164, %c0_50, %c0_51], %167 {strides = array<i32>} : memref<24x8x64xf32, #tpu.memory_space<vmem>>, vector<1x8x64xf32>,
    %c7_i32 = arith.constant 7 : i32
    %168 = arith.index_cast %c7_i32 : i32 to index
    %c0_52 = arith.constant 0 : index
    %c0_53 = arith.constant 0 : index
    %169 = vector.load %arg19[%168, %c0_52, %c0_53] : memref<24x8x256xf32, #tpu.memory_space<vmem>>, vector<1x8x256xf32>
    %170 = vector.shape_cast %169 : vector<1x8x256xf32> to vector<8x256xf32>
    %cst_54 = arith.constant dense<0.000000e+00> : vector<8x256xf32>
    %171 = tpu.matmul %163, %9, %cst_54 {dimension_numbers = #tpu.dot_dimension_numbers<[1], [0], [0], [1], [0, 0, 1, 1], [], []>} : vector<8x64xf32>, vector<64x256xf32>, vector<8x256xf32> -> vector<8x256xf32>
    %172 = arith.addf %170, %171 : vector<8x256xf32>
    %173 = math.tanh %172 : vector<8x256xf32>
    %174 = arith.mulf %173, %5 : vector<8x256xf32>
    %175 = arith.addf %174, %8 : vector<8x256xf32>
    %176 = vector.extract_strided_slice %175 {offsets = [0, 0], sizes = [8, 64], strides = [1, 1]} : vector<8x256xf32> to vector<8x64xf32>
    %177 = vector.extract_strided_slice %175 {offsets = [0, 64], sizes = [8, 64], strides = [1, 1]} : vector<8x256xf32> to vector<8x64xf32>
    %178 = vector.extract_strided_slice %175 {offsets = [0, 128], sizes = [8, 64], strides = [1, 1]} : vector<8x256xf32> to vector<8x64xf32>
    %179 = vector.extract_strided_slice %175 {offsets = [0, 192], sizes = [8, 64], strides = [1, 1]} : vector<8x256xf32> to vector<8x64xf32>
    %180 = arith.mulf %177, %161 : vector<8x64xf32>
    %181 = arith.mulf %176, %178 : vector<8x64xf32>
    %182 = arith.addf %180, %181 : vector<8x64xf32>
    %183 = math.tanh %182 : vector<8x64xf32>
    %184 = arith.mulf %179, %183 : vector<8x64xf32>
    %185 = arith.index_cast %c7_i32 : i32 to index
    %c0_55 = arith.constant 0 : index
    %c0_56 = arith.constant 0 : index
    %186 = vector.load %arg20[%185, %c0_55, %c0_56] : memref<24x8x64xf32, #tpu.memory_space<vmem>>, vector<1x8x64xf32>
    %187 = vector.shape_cast %186 : vector<1x8x64xf32> to vector<8x64xf32>
    %188 = vector.shape_cast %184 : vector<8x64xf32> to vector<1x8x64xf32>
    tpu.vector_store %arg20[%185, %c0_55, %c0_56], %188 {strides = array<i32>} : memref<24x8x64xf32, #tpu.memory_space<vmem>>, vector<1x8x64xf32>,
    %c8_i32 = arith.constant 8 : i32
    %189 = arith.index_cast %c8_i32 : i32 to index
    %c0_57 = arith.constant 0 : index
    %c0_58 = arith.constant 0 : index
    %190 = vector.load %arg19[%189, %c0_57, %c0_58] : memref<24x8x256xf32, #tpu.memory_space<vmem>>, vector<1x8x256xf32>
    %191 = vector.shape_cast %190 : vector<1x8x256xf32> to vector<8x256xf32>
    %cst_59 = arith.constant dense<0.000000e+00> : vector<8x256xf32>
    %192 = tpu.matmul %184, %9, %cst_59 {dimension_numbers = #tpu.dot_dimension_numbers<[1], [0], [0], [1], [0, 0, 1, 1], [], []>} : vector<8x64xf32>, vector<64x256xf32>, vector<8x256xf32> -> vector<8x256xf32>
    %193 = arith.addf %191, %192 : vector<8x256xf32>
    %194 = math.tanh %193 : vector<8x256xf32>
    %195 = arith.mulf %194, %5 : vector<8x256xf32>
    %196 = arith.addf %195, %8 : vector<8x256xf32>
    %197 = vector.extract_strided_slice %196 {offsets = [0, 0], sizes = [8, 64], strides = [1, 1]} : vector<8x256xf32> to vector<8x64xf32>
    %198 = vector.extract_strided_slice %196 {offsets = [0, 64], sizes = [8, 64], strides = [1, 1]} : vector<8x256xf32> to vector<8x64xf32>
    %199 = vector.extract_strided_slice %196 {offsets = [0, 128], sizes = [8, 64], strides = [1, 1]} : vector<8x256xf32> to vector<8x64xf32>
    %200 = vector.extract_strided_slice %196 {offsets = [0, 192], sizes = [8, 64], strides = [1, 1]} : vector<8x256xf32> to vector<8x64xf32>
    %201 = arith.mulf %198, %182 : vector<8x64xf32>
    %202 = arith.mulf %197, %199 : vector<8x64xf32>
    %203 = arith.addf %201, %202 : vector<8x64xf32>
    %204 = math.tanh %203 : vector<8x64xf32>
    %205 = arith.mulf %200, %204 : vector<8x64xf32>
    %206 = arith.index_cast %c8_i32 : i32 to index
    %c0_60 = arith.constant 0 : index
    %c0_61 = arith.constant 0 : index
    %207 = vector.load %arg20[%206, %c0_60, %c0_61] : memref<24x8x64xf32, #tpu.memory_space<vmem>>, vector<1x8x64xf32>
    %208 = vector.shape_cast %207 : vector<1x8x64xf32> to vector<8x64xf32>
    %209 = vector.shape_cast %205 : vector<8x64xf32> to vector<1x8x64xf32>
    tpu.vector_store %arg20[%206, %c0_60, %c0_61], %209 {strides = array<i32>} : memref<24x8x64xf32, #tpu.memory_space<vmem>>, vector<1x8x64xf32>,
    %c9_i32 = arith.constant 9 : i32
    %210 = arith.index_cast %c9_i32 : i32 to index
    %c0_62 = arith.constant 0 : index
    %c0_63 = arith.constant 0 : index
    %211 = vector.load %arg19[%210, %c0_62, %c0_63] : memref<24x8x256xf32, #tpu.memory_space<vmem>>, vector<1x8x256xf32>
    %212 = vector.shape_cast %211 : vector<1x8x256xf32> to vector<8x256xf32>
    %cst_64 = arith.constant dense<0.000000e+00> : vector<8x256xf32>
    %213 = tpu.matmul %205, %9, %cst_64 {dimension_numbers = #tpu.dot_dimension_numbers<[1], [0], [0], [1], [0, 0, 1, 1], [], []>} : vector<8x64xf32>, vector<64x256xf32>, vector<8x256xf32> -> vector<8x256xf32>
    %214 = arith.addf %212, %213 : vector<8x256xf32>
    %215 = math.tanh %214 : vector<8x256xf32>
    %216 = arith.mulf %215, %5 : vector<8x256xf32>
    %217 = arith.addf %216, %8 : vector<8x256xf32>
    %218 = vector.extract_strided_slice %217 {offsets = [0, 0], sizes = [8, 64], strides = [1, 1]} : vector<8x256xf32> to vector<8x64xf32>
    %219 = vector.extract_strided_slice %217 {offsets = [0, 64], sizes = [8, 64], strides = [1, 1]} : vector<8x256xf32> to vector<8x64xf32>
    %220 = vector.extract_strided_slice %217 {offsets = [0, 128], sizes = [8, 64], strides = [1, 1]} : vector<8x256xf32> to vector<8x64xf32>
    %221 = vector.extract_strided_slice %217 {offsets = [0, 192], sizes = [8, 64], strides = [1, 1]} : vector<8x256xf32> to vector<8x64xf32>
    %222 = arith.mulf %219, %203 : vector<8x64xf32>
    %223 = arith.mulf %218, %220 : vector<8x64xf32>
    %224 = arith.addf %222, %223 : vector<8x64xf32>
    %225 = math.tanh %224 : vector<8x64xf32>
    %226 = arith.mulf %221, %225 : vector<8x64xf32>
    %227 = arith.index_cast %c9_i32 : i32 to index
    %c0_65 = arith.constant 0 : index
    %c0_66 = arith.constant 0 : index
    %228 = vector.load %arg20[%227, %c0_65, %c0_66] : memref<24x8x64xf32, #tpu.memory_space<vmem>>, vector<1x8x64xf32>
    %229 = vector.shape_cast %228 : vector<1x8x64xf32> to vector<8x64xf32>
    %230 = vector.shape_cast %226 : vector<8x64xf32> to vector<1x8x64xf32>
    tpu.vector_store %arg20[%227, %c0_65, %c0_66], %230 {strides = array<i32>} : memref<24x8x64xf32, #tpu.memory_space<vmem>>, vector<1x8x64xf32>,
    %c10_i32 = arith.constant 10 : i32
    %231 = arith.index_cast %c10_i32 : i32 to index
    %c0_67 = arith.constant 0 : index
    %c0_68 = arith.constant 0 : index
    %232 = vector.load %arg19[%231, %c0_67, %c0_68] : memref<24x8x256xf32, #tpu.memory_space<vmem>>, vector<1x8x256xf32>
    %233 = vector.shape_cast %232 : vector<1x8x256xf32> to vector<8x256xf32>
    %cst_69 = arith.constant dense<0.000000e+00> : vector<8x256xf32>
    %234 = tpu.matmul %226, %9, %cst_69 {dimension_numbers = #tpu.dot_dimension_numbers<[1], [0], [0], [1], [0, 0, 1, 1], [], []>} : vector<8x64xf32>, vector<64x256xf32>, vector<8x256xf32> -> vector<8x256xf32>
    %235 = arith.addf %233, %234 : vector<8x256xf32>
    %236 = math.tanh %235 : vector<8x256xf32>
    %237 = arith.mulf %236, %5 : vector<8x256xf32>
    %238 = arith.addf %237, %8 : vector<8x256xf32>
    %239 = vector.extract_strided_slice %238 {offsets = [0, 0], sizes = [8, 64], strides = [1, 1]} : vector<8x256xf32> to vector<8x64xf32>
    %240 = vector.extract_strided_slice %238 {offsets = [0, 64], sizes = [8, 64], strides = [1, 1]} : vector<8x256xf32> to vector<8x64xf32>
    %241 = vector.extract_strided_slice %238 {offsets = [0, 128], sizes = [8, 64], strides = [1, 1]} : vector<8x256xf32> to vector<8x64xf32>
    %242 = vector.extract_strided_slice %238 {offsets = [0, 192], sizes = [8, 64], strides = [1, 1]} : vector<8x256xf32> to vector<8x64xf32>
    %243 = arith.mulf %240, %224 : vector<8x64xf32>
    %244 = arith.mulf %239, %241 : vector<8x64xf32>
    %245 = arith.addf %243, %244 : vector<8x64xf32>
    %246 = math.tanh %245 : vector<8x64xf32>
    %247 = arith.mulf %242, %246 : vector<8x64xf32>
    %248 = arith.index_cast %c10_i32 : i32 to index
    %c0_70 = arith.constant 0 : index
    %c0_71 = arith.constant 0 : index
    %249 = vector.load %arg20[%248, %c0_70, %c0_71] : memref<24x8x64xf32, #tpu.memory_space<vmem>>, vector<1x8x64xf32>
    %250 = vector.shape_cast %249 : vector<1x8x64xf32> to vector<8x64xf32>
    %251 = vector.shape_cast %247 : vector<8x64xf32> to vector<1x8x64xf32>
    tpu.vector_store %arg20[%248, %c0_70, %c0_71], %251 {strides = array<i32>} : memref<24x8x64xf32, #tpu.memory_space<vmem>>, vector<1x8x64xf32>,
    %c11_i32 = arith.constant 11 : i32
    %252 = arith.index_cast %c11_i32 : i32 to index
    %c0_72 = arith.constant 0 : index
    %c0_73 = arith.constant 0 : index
    %253 = vector.load %arg19[%252, %c0_72, %c0_73] : memref<24x8x256xf32, #tpu.memory_space<vmem>>, vector<1x8x256xf32>
    %254 = vector.shape_cast %253 : vector<1x8x256xf32> to vector<8x256xf32>
    %cst_74 = arith.constant dense<0.000000e+00> : vector<8x256xf32>
    %255 = tpu.matmul %247, %9, %cst_74 {dimension_numbers = #tpu.dot_dimension_numbers<[1], [0], [0], [1], [0, 0, 1, 1], [], []>} : vector<8x64xf32>, vector<64x256xf32>, vector<8x256xf32> -> vector<8x256xf32>
    %256 = arith.addf %254, %255 : vector<8x256xf32>
    %257 = math.tanh %256 : vector<8x256xf32>
    %258 = arith.mulf %257, %5 : vector<8x256xf32>
    %259 = arith.addf %258, %8 : vector<8x256xf32>
    %260 = vector.extract_strided_slice %259 {offsets = [0, 0], sizes = [8, 64], strides = [1, 1]} : vector<8x256xf32> to vector<8x64xf32>
    %261 = vector.extract_strided_slice %259 {offsets = [0, 64], sizes = [8, 64], strides = [1, 1]} : vector<8x256xf32> to vector<8x64xf32>
    %262 = vector.extract_strided_slice %259 {offsets = [0, 128], sizes = [8, 64], strides = [1, 1]} : vector<8x256xf32> to vector<8x64xf32>
    %263 = vector.extract_strided_slice %259 {offsets = [0, 192], sizes = [8, 64], strides = [1, 1]} : vector<8x256xf32> to vector<8x64xf32>
    %264 = arith.mulf %261, %245 : vector<8x64xf32>
    %265 = arith.mulf %260, %262 : vector<8x64xf32>
    %266 = arith.addf %264, %265 : vector<8x64xf32>
    %267 = math.tanh %266 : vector<8x64xf32>
    %268 = arith.mulf %263, %267 : vector<8x64xf32>
    %269 = arith.index_cast %c11_i32 : i32 to index
    %c0_75 = arith.constant 0 : index
    %c0_76 = arith.constant 0 : index
    %270 = vector.load %arg20[%269, %c0_75, %c0_76] : memref<24x8x64xf32, #tpu.memory_space<vmem>>, vector<1x8x64xf32>
    %271 = vector.shape_cast %270 : vector<1x8x64xf32> to vector<8x64xf32>
    %272 = vector.shape_cast %268 : vector<8x64xf32> to vector<1x8x64xf32>
    tpu.vector_store %arg20[%269, %c0_75, %c0_76], %272 {strides = array<i32>} : memref<24x8x64xf32, #tpu.memory_space<vmem>>, vector<1x8x64xf32>,
    %c12_i32 = arith.constant 12 : i32
    %273 = arith.index_cast %c12_i32 : i32 to index
    %c0_77 = arith.constant 0 : index
    %c0_78 = arith.constant 0 : index
    %274 = vector.load %arg19[%273, %c0_77, %c0_78] : memref<24x8x256xf32, #tpu.memory_space<vmem>>, vector<1x8x256xf32>
    %275 = vector.shape_cast %274 : vector<1x8x256xf32> to vector<8x256xf32>
    %cst_79 = arith.constant dense<0.000000e+00> : vector<8x256xf32>
    %276 = tpu.matmul %268, %9, %cst_79 {dimension_numbers = #tpu.dot_dimension_numbers<[1], [0], [0], [1], [0, 0, 1, 1], [], []>} : vector<8x64xf32>, vector<64x256xf32>, vector<8x256xf32> -> vector<8x256xf32>
    %277 = arith.addf %275, %276 : vector<8x256xf32>
    %278 = math.tanh %277 : vector<8x256xf32>
    %279 = arith.mulf %278, %5 : vector<8x256xf32>
    %280 = arith.addf %279, %8 : vector<8x256xf32>
    %281 = vector.extract_strided_slice %280 {offsets = [0, 0], sizes = [8, 64], strides = [1, 1]} : vector<8x256xf32> to vector<8x64xf32>
    %282 = vector.extract_strided_slice %280 {offsets = [0, 64], sizes = [8, 64], strides = [1, 1]} : vector<8x256xf32> to vector<8x64xf32>
    %283 = vector.extract_strided_slice %280 {offsets = [0, 128], sizes = [8, 64], strides = [1, 1]} : vector<8x256xf32> to vector<8x64xf32>
    %284 = vector.extract_strided_slice %280 {offsets = [0, 192], sizes = [8, 64], strides = [1, 1]} : vector<8x256xf32> to vector<8x64xf32>
    %285 = arith.mulf %282, %266 : vector<8x64xf32>
    %286 = arith.mulf %281, %283 : vector<8x64xf32>
    %287 = arith.addf %285, %286 : vector<8x64xf32>
    %288 = math.tanh %287 : vector<8x64xf32>
    %289 = arith.mulf %284, %288 : vector<8x64xf32>
    %290 = arith.index_cast %c12_i32 : i32 to index
    %c0_80 = arith.constant 0 : index
    %c0_81 = arith.constant 0 : index
    %291 = vector.load %arg20[%290, %c0_80, %c0_81] : memref<24x8x64xf32, #tpu.memory_space<vmem>>, vector<1x8x64xf32>
    %292 = vector.shape_cast %291 : vector<1x8x64xf32> to vector<8x64xf32>
    %293 = vector.shape_cast %289 : vector<8x64xf32> to vector<1x8x64xf32>
    tpu.vector_store %arg20[%290, %c0_80, %c0_81], %293 {strides = array<i32>} : memref<24x8x64xf32, #tpu.memory_space<vmem>>, vector<1x8x64xf32>,
    %c13_i32 = arith.constant 13 : i32
    %294 = arith.index_cast %c13_i32 : i32 to index
    %c0_82 = arith.constant 0 : index
    %c0_83 = arith.constant 0 : index
    %295 = vector.load %arg19[%294, %c0_82, %c0_83] : memref<24x8x256xf32, #tpu.memory_space<vmem>>, vector<1x8x256xf32>
    %296 = vector.shape_cast %295 : vector<1x8x256xf32> to vector<8x256xf32>
    %cst_84 = arith.constant dense<0.000000e+00> : vector<8x256xf32>
    %297 = tpu.matmul %289, %9, %cst_84 {dimension_numbers = #tpu.dot_dimension_numbers<[1], [0], [0], [1], [0, 0, 1, 1], [], []>} : vector<8x64xf32>, vector<64x256xf32>, vector<8x256xf32> -> vector<8x256xf32>
    %298 = arith.addf %296, %297 : vector<8x256xf32>
    %299 = math.tanh %298 : vector<8x256xf32>
    %300 = arith.mulf %299, %5 : vector<8x256xf32>
    %301 = arith.addf %300, %8 : vector<8x256xf32>
    %302 = vector.extract_strided_slice %301 {offsets = [0, 0], sizes = [8, 64], strides = [1, 1]} : vector<8x256xf32> to vector<8x64xf32>
    %303 = vector.extract_strided_slice %301 {offsets = [0, 64], sizes = [8, 64], strides = [1, 1]} : vector<8x256xf32> to vector<8x64xf32>
    %304 = vector.extract_strided_slice %301 {offsets = [0, 128], sizes = [8, 64], strides = [1, 1]} : vector<8x256xf32> to vector<8x64xf32>
    %305 = vector.extract_strided_slice %301 {offsets = [0, 192], sizes = [8, 64], strides = [1, 1]} : vector<8x256xf32> to vector<8x64xf32>
    %306 = arith.mulf %303, %287 : vector<8x64xf32>
    %307 = arith.mulf %302, %304 : vector<8x64xf32>
    %308 = arith.addf %306, %307 : vector<8x64xf32>
    %309 = math.tanh %308 : vector<8x64xf32>
    %310 = arith.mulf %305, %309 : vector<8x64xf32>
    %311 = arith.index_cast %c13_i32 : i32 to index
    %c0_85 = arith.constant 0 : index
    %c0_86 = arith.constant 0 : index
    %312 = vector.load %arg20[%311, %c0_85, %c0_86] : memref<24x8x64xf32, #tpu.memory_space<vmem>>, vector<1x8x64xf32>
    %313 = vector.shape_cast %312 : vector<1x8x64xf32> to vector<8x64xf32>
    %314 = vector.shape_cast %310 : vector<8x64xf32> to vector<1x8x64xf32>
    tpu.vector_store %arg20[%311, %c0_85, %c0_86], %314 {strides = array<i32>} : memref<24x8x64xf32, #tpu.memory_space<vmem>>, vector<1x8x64xf32>,
    %c14_i32 = arith.constant 14 : i32
    %315 = arith.index_cast %c14_i32 : i32 to index
    %c0_87 = arith.constant 0 : index
    %c0_88 = arith.constant 0 : index
    %316 = vector.load %arg19[%315, %c0_87, %c0_88] : memref<24x8x256xf32, #tpu.memory_space<vmem>>, vector<1x8x256xf32>
    %317 = vector.shape_cast %316 : vector<1x8x256xf32> to vector<8x256xf32>
    %cst_89 = arith.constant dense<0.000000e+00> : vector<8x256xf32>
    %318 = tpu.matmul %310, %9, %cst_89 {dimension_numbers = #tpu.dot_dimension_numbers<[1], [0], [0], [1], [0, 0, 1, 1], [], []>} : vector<8x64xf32>, vector<64x256xf32>, vector<8x256xf32> -> vector<8x256xf32>
    %319 = arith.addf %317, %318 : vector<8x256xf32>
    %320 = math.tanh %319 : vector<8x256xf32>
    %321 = arith.mulf %320, %5 : vector<8x256xf32>
    %322 = arith.addf %321, %8 : vector<8x256xf32>
    %323 = vector.extract_strided_slice %322 {offsets = [0, 0], sizes = [8, 64], strides = [1, 1]} : vector<8x256xf32> to vector<8x64xf32>
    %324 = vector.extract_strided_slice %322 {offsets = [0, 64], sizes = [8, 64], strides = [1, 1]} : vector<8x256xf32> to vector<8x64xf32>
    %325 = vector.extract_strided_slice %322 {offsets = [0, 128], sizes = [8, 64], strides = [1, 1]} : vector<8x256xf32> to vector<8x64xf32>
    %326 = vector.extract_strided_slice %322 {offsets = [0, 192], sizes = [8, 64], strides = [1, 1]} : vector<8x256xf32> to vector<8x64xf32>
    %327 = arith.mulf %324, %308 : vector<8x64xf32>
    %328 = arith.mulf %323, %325 : vector<8x64xf32>
    %329 = arith.addf %327, %328 : vector<8x64xf32>
    %330 = math.tanh %329 : vector<8x64xf32>
    %331 = arith.mulf %326, %330 : vector<8x64xf32>
    %332 = arith.index_cast %c14_i32 : i32 to index
    %c0_90 = arith.constant 0 : index
    %c0_91 = arith.constant 0 : index
    %333 = vector.load %arg20[%332, %c0_90, %c0_91] : memref<24x8x64xf32, #tpu.memory_space<vmem>>, vector<1x8x64xf32>
    %334 = vector.shape_cast %333 : vector<1x8x64xf32> to vector<8x64xf32>
    %335 = vector.shape_cast %331 : vector<8x64xf32> to vector<1x8x64xf32>
    tpu.vector_store %arg20[%332, %c0_90, %c0_91], %335 {strides = array<i32>} : memref<24x8x64xf32, #tpu.memory_space<vmem>>, vector<1x8x64xf32>,
    %c15_i32 = arith.constant 15 : i32
    %336 = arith.index_cast %c15_i32 : i32 to index
    %c0_92 = arith.constant 0 : index
    %c0_93 = arith.constant 0 : index
    %337 = vector.load %arg19[%336, %c0_92, %c0_93] : memref<24x8x256xf32, #tpu.memory_space<vmem>>, vector<1x8x256xf32>
    %338 = vector.shape_cast %337 : vector<1x8x256xf32> to vector<8x256xf32>
    %cst_94 = arith.constant dense<0.000000e+00> : vector<8x256xf32>
    %339 = tpu.matmul %331, %9, %cst_94 {dimension_numbers = #tpu.dot_dimension_numbers<[1], [0], [0], [1], [0, 0, 1, 1], [], []>} : vector<8x64xf32>, vector<64x256xf32>, vector<8x256xf32> -> vector<8x256xf32>
    %340 = arith.addf %338, %339 : vector<8x256xf32>
    %341 = math.tanh %340 : vector<8x256xf32>
    %342 = arith.mulf %341, %5 : vector<8x256xf32>
    %343 = arith.addf %342, %8 : vector<8x256xf32>
    %344 = vector.extract_strided_slice %343 {offsets = [0, 0], sizes = [8, 64], strides = [1, 1]} : vector<8x256xf32> to vector<8x64xf32>
    %345 = vector.extract_strided_slice %343 {offsets = [0, 64], sizes = [8, 64], strides = [1, 1]} : vector<8x256xf32> to vector<8x64xf32>
    %346 = vector.extract_strided_slice %343 {offsets = [0, 128], sizes = [8, 64], strides = [1, 1]} : vector<8x256xf32> to vector<8x64xf32>
    %347 = vector.extract_strided_slice %343 {offsets = [0, 192], sizes = [8, 64], strides = [1, 1]} : vector<8x256xf32> to vector<8x64xf32>
    %348 = arith.mulf %345, %329 : vector<8x64xf32>
    %349 = arith.mulf %344, %346 : vector<8x64xf32>
    %350 = arith.addf %348, %349 : vector<8x64xf32>
    %351 = math.tanh %350 : vector<8x64xf32>
    %352 = arith.mulf %347, %351 : vector<8x64xf32>
    %353 = arith.index_cast %c15_i32 : i32 to index
    %c0_95 = arith.constant 0 : index
    %c0_96 = arith.constant 0 : index
    %354 = vector.load %arg20[%353, %c0_95, %c0_96] : memref<24x8x64xf32, #tpu.memory_space<vmem>>, vector<1x8x64xf32>
    %355 = vector.shape_cast %354 : vector<1x8x64xf32> to vector<8x64xf32>
    %356 = vector.shape_cast %352 : vector<8x64xf32> to vector<1x8x64xf32>
    tpu.vector_store %arg20[%353, %c0_95, %c0_96], %356 {strides = array<i32>} : memref<24x8x64xf32, #tpu.memory_space<vmem>>, vector<1x8x64xf32>,
    %c16_i32 = arith.constant 16 : i32
    %357 = arith.index_cast %c16_i32 : i32 to index
    %c0_97 = arith.constant 0 : index
    %c0_98 = arith.constant 0 : index
    %358 = vector.load %arg19[%357, %c0_97, %c0_98] : memref<24x8x256xf32, #tpu.memory_space<vmem>>, vector<1x8x256xf32>
    %359 = vector.shape_cast %358 : vector<1x8x256xf32> to vector<8x256xf32>
    %cst_99 = arith.constant dense<0.000000e+00> : vector<8x256xf32>
    %360 = tpu.matmul %352, %9, %cst_99 {dimension_numbers = #tpu.dot_dimension_numbers<[1], [0], [0], [1], [0, 0, 1, 1], [], []>} : vector<8x64xf32>, vector<64x256xf32>, vector<8x256xf32> -> vector<8x256xf32>
    %361 = arith.addf %359, %360 : vector<8x256xf32>
    %362 = math.tanh %361 : vector<8x256xf32>
    %363 = arith.mulf %362, %5 : vector<8x256xf32>
    %364 = arith.addf %363, %8 : vector<8x256xf32>
    %365 = vector.extract_strided_slice %364 {offsets = [0, 0], sizes = [8, 64], strides = [1, 1]} : vector<8x256xf32> to vector<8x64xf32>
    %366 = vector.extract_strided_slice %364 {offsets = [0, 64], sizes = [8, 64], strides = [1, 1]} : vector<8x256xf32> to vector<8x64xf32>
    %367 = vector.extract_strided_slice %364 {offsets = [0, 128], sizes = [8, 64], strides = [1, 1]} : vector<8x256xf32> to vector<8x64xf32>
    %368 = vector.extract_strided_slice %364 {offsets = [0, 192], sizes = [8, 64], strides = [1, 1]} : vector<8x256xf32> to vector<8x64xf32>
    %369 = arith.mulf %366, %350 : vector<8x64xf32>
    %370 = arith.mulf %365, %367 : vector<8x64xf32>
    %371 = arith.addf %369, %370 : vector<8x64xf32>
    %372 = math.tanh %371 : vector<8x64xf32>
    %373 = arith.mulf %368, %372 : vector<8x64xf32>
    %374 = arith.index_cast %c16_i32 : i32 to index
    %c0_100 = arith.constant 0 : index
    %c0_101 = arith.constant 0 : index
    %375 = vector.load %arg20[%374, %c0_100, %c0_101] : memref<24x8x64xf32, #tpu.memory_space<vmem>>, vector<1x8x64xf32>
    %376 = vector.shape_cast %375 : vector<1x8x64xf32> to vector<8x64xf32>
    %377 = vector.shape_cast %373 : vector<8x64xf32> to vector<1x8x64xf32>
    tpu.vector_store %arg20[%374, %c0_100, %c0_101], %377 {strides = array<i32>} : memref<24x8x64xf32, #tpu.memory_space<vmem>>, vector<1x8x64xf32>,
    %c17_i32 = arith.constant 17 : i32
    %378 = arith.index_cast %c17_i32 : i32 to index
    %c0_102 = arith.constant 0 : index
    %c0_103 = arith.constant 0 : index
    %379 = vector.load %arg19[%378, %c0_102, %c0_103] : memref<24x8x256xf32, #tpu.memory_space<vmem>>, vector<1x8x256xf32>
    %380 = vector.shape_cast %379 : vector<1x8x256xf32> to vector<8x256xf32>
    %cst_104 = arith.constant dense<0.000000e+00> : vector<8x256xf32>
    %381 = tpu.matmul %373, %9, %cst_104 {dimension_numbers = #tpu.dot_dimension_numbers<[1], [0], [0], [1], [0, 0, 1, 1], [], []>} : vector<8x64xf32>, vector<64x256xf32>, vector<8x256xf32> -> vector<8x256xf32>
    %382 = arith.addf %380, %381 : vector<8x256xf32>
    %383 = math.tanh %382 : vector<8x256xf32>
    %384 = arith.mulf %383, %5 : vector<8x256xf32>
    %385 = arith.addf %384, %8 : vector<8x256xf32>
    %386 = vector.extract_strided_slice %385 {offsets = [0, 0], sizes = [8, 64], strides = [1, 1]} : vector<8x256xf32> to vector<8x64xf32>
    %387 = vector.extract_strided_slice %385 {offsets = [0, 64], sizes = [8, 64], strides = [1, 1]} : vector<8x256xf32> to vector<8x64xf32>
    %388 = vector.extract_strided_slice %385 {offsets = [0, 128], sizes = [8, 64], strides = [1, 1]} : vector<8x256xf32> to vector<8x64xf32>
    %389 = vector.extract_strided_slice %385 {offsets = [0, 192], sizes = [8, 64], strides = [1, 1]} : vector<8x256xf32> to vector<8x64xf32>
    %390 = arith.mulf %387, %371 : vector<8x64xf32>
    %391 = arith.mulf %386, %388 : vector<8x64xf32>
    %392 = arith.addf %390, %391 : vector<8x64xf32>
    %393 = math.tanh %392 : vector<8x64xf32>
    %394 = arith.mulf %389, %393 : vector<8x64xf32>
    %395 = arith.index_cast %c17_i32 : i32 to index
    %c0_105 = arith.constant 0 : index
    %c0_106 = arith.constant 0 : index
    %396 = vector.load %arg20[%395, %c0_105, %c0_106] : memref<24x8x64xf32, #tpu.memory_space<vmem>>, vector<1x8x64xf32>
    %397 = vector.shape_cast %396 : vector<1x8x64xf32> to vector<8x64xf32>
    %398 = vector.shape_cast %394 : vector<8x64xf32> to vector<1x8x64xf32>
    tpu.vector_store %arg20[%395, %c0_105, %c0_106], %398 {strides = array<i32>} : memref<24x8x64xf32, #tpu.memory_space<vmem>>, vector<1x8x64xf32>,
    %c18_i32 = arith.constant 18 : i32
    %399 = arith.index_cast %c18_i32 : i32 to index
    %c0_107 = arith.constant 0 : index
    %c0_108 = arith.constant 0 : index
    %400 = vector.load %arg19[%399, %c0_107, %c0_108] : memref<24x8x256xf32, #tpu.memory_space<vmem>>, vector<1x8x256xf32>
    %401 = vector.shape_cast %400 : vector<1x8x256xf32> to vector<8x256xf32>
    %cst_109 = arith.constant dense<0.000000e+00> : vector<8x256xf32>
    %402 = tpu.matmul %394, %9, %cst_109 {dimension_numbers = #tpu.dot_dimension_numbers<[1], [0], [0], [1], [0, 0, 1, 1], [], []>} : vector<8x64xf32>, vector<64x256xf32>, vector<8x256xf32> -> vector<8x256xf32>
    %403 = arith.addf %401, %402 : vector<8x256xf32>
    %404 = math.tanh %403 : vector<8x256xf32>
    %405 = arith.mulf %404, %5 : vector<8x256xf32>
    %406 = arith.addf %405, %8 : vector<8x256xf32>
    %407 = vector.extract_strided_slice %406 {offsets = [0, 0], sizes = [8, 64], strides = [1, 1]} : vector<8x256xf32> to vector<8x64xf32>
    %408 = vector.extract_strided_slice %406 {offsets = [0, 64], sizes = [8, 64], strides = [1, 1]} : vector<8x256xf32> to vector<8x64xf32>
    %409 = vector.extract_strided_slice %406 {offsets = [0, 128], sizes = [8, 64], strides = [1, 1]} : vector<8x256xf32> to vector<8x64xf32>
    %410 = vector.extract_strided_slice %406 {offsets = [0, 192], sizes = [8, 64], strides = [1, 1]} : vector<8x256xf32> to vector<8x64xf32>
    %411 = arith.mulf %408, %392 : vector<8x64xf32>
    %412 = arith.mulf %407, %409 : vector<8x64xf32>
    %413 = arith.addf %411, %412 : vector<8x64xf32>
    %414 = math.tanh %413 : vector<8x64xf32>
    %415 = arith.mulf %410, %414 : vector<8x64xf32>
    %416 = arith.index_cast %c18_i32 : i32 to index
    %c0_110 = arith.constant 0 : index
    %c0_111 = arith.constant 0 : index
    %417 = vector.load %arg20[%416, %c0_110, %c0_111] : memref<24x8x64xf32, #tpu.memory_space<vmem>>, vector<1x8x64xf32>
    %418 = vector.shape_cast %417 : vector<1x8x64xf32> to vector<8x64xf32>
    %419 = vector.shape_cast %415 : vector<8x64xf32> to vector<1x8x64xf32>
    tpu.vector_store %arg20[%416, %c0_110, %c0_111], %419 {strides = array<i32>} : memref<24x8x64xf32, #tpu.memory_space<vmem>>, vector<1x8x64xf32>,
    %c19_i32 = arith.constant 19 : i32
    %420 = arith.index_cast %c19_i32 : i32 to index
    %c0_112 = arith.constant 0 : index
    %c0_113 = arith.constant 0 : index
    %421 = vector.load %arg19[%420, %c0_112, %c0_113] : memref<24x8x256xf32, #tpu.memory_space<vmem>>, vector<1x8x256xf32>
    %422 = vector.shape_cast %421 : vector<1x8x256xf32> to vector<8x256xf32>
    %cst_114 = arith.constant dense<0.000000e+00> : vector<8x256xf32>
    %423 = tpu.matmul %415, %9, %cst_114 {dimension_numbers = #tpu.dot_dimension_numbers<[1], [0], [0], [1], [0, 0, 1, 1], [], []>} : vector<8x64xf32>, vector<64x256xf32>, vector<8x256xf32> -> vector<8x256xf32>
    %424 = arith.addf %422, %423 : vector<8x256xf32>
    %425 = math.tanh %424 : vector<8x256xf32>
    %426 = arith.mulf %425, %5 : vector<8x256xf32>
    %427 = arith.addf %426, %8 : vector<8x256xf32>
    %428 = vector.extract_strided_slice %427 {offsets = [0, 0], sizes = [8, 64], strides = [1, 1]} : vector<8x256xf32> to vector<8x64xf32>
    %429 = vector.extract_strided_slice %427 {offsets = [0, 64], sizes = [8, 64], strides = [1, 1]} : vector<8x256xf32> to vector<8x64xf32>
    %430 = vector.extract_strided_slice %427 {offsets = [0, 128], sizes = [8, 64], strides = [1, 1]} : vector<8x256xf32> to vector<8x64xf32>
    %431 = vector.extract_strided_slice %427 {offsets = [0, 192], sizes = [8, 64], strides = [1, 1]} : vector<8x256xf32> to vector<8x64xf32>
    %432 = arith.mulf %429, %413 : vector<8x64xf32>
    %433 = arith.mulf %428, %430 : vector<8x64xf32>
    %434 = arith.addf %432, %433 : vector<8x64xf32>
    %435 = math.tanh %434 : vector<8x64xf32>
    %436 = arith.mulf %431, %435 : vector<8x64xf32>
    %437 = arith.index_cast %c19_i32 : i32 to index
    %c0_115 = arith.constant 0 : index
    %c0_116 = arith.constant 0 : index
    %438 = vector.load %arg20[%437, %c0_115, %c0_116] : memref<24x8x64xf32, #tpu.memory_space<vmem>>, vector<1x8x64xf32>
    %439 = vector.shape_cast %438 : vector<1x8x64xf32> to vector<8x64xf32>
    %440 = vector.shape_cast %436 : vector<8x64xf32> to vector<1x8x64xf32>
    tpu.vector_store %arg20[%437, %c0_115, %c0_116], %440 {strides = array<i32>} : memref<24x8x64xf32, #tpu.memory_space<vmem>>, vector<1x8x64xf32>,
    %c20_i32 = arith.constant 20 : i32
    %441 = arith.index_cast %c20_i32 : i32 to index
    %c0_117 = arith.constant 0 : index
    %c0_118 = arith.constant 0 : index
    %442 = vector.load %arg19[%441, %c0_117, %c0_118] : memref<24x8x256xf32, #tpu.memory_space<vmem>>, vector<1x8x256xf32>
    %443 = vector.shape_cast %442 : vector<1x8x256xf32> to vector<8x256xf32>
    %cst_119 = arith.constant dense<0.000000e+00> : vector<8x256xf32>
    %444 = tpu.matmul %436, %9, %cst_119 {dimension_numbers = #tpu.dot_dimension_numbers<[1], [0], [0], [1], [0, 0, 1, 1], [], []>} : vector<8x64xf32>, vector<64x256xf32>, vector<8x256xf32> -> vector<8x256xf32>
    %445 = arith.addf %443, %444 : vector<8x256xf32>
    %446 = math.tanh %445 : vector<8x256xf32>
    %447 = arith.mulf %446, %5 : vector<8x256xf32>
    %448 = arith.addf %447, %8 : vector<8x256xf32>
    %449 = vector.extract_strided_slice %448 {offsets = [0, 0], sizes = [8, 64], strides = [1, 1]} : vector<8x256xf32> to vector<8x64xf32>
    %450 = vector.extract_strided_slice %448 {offsets = [0, 64], sizes = [8, 64], strides = [1, 1]} : vector<8x256xf32> to vector<8x64xf32>
    %451 = vector.extract_strided_slice %448 {offsets = [0, 128], sizes = [8, 64], strides = [1, 1]} : vector<8x256xf32> to vector<8x64xf32>
    %452 = vector.extract_strided_slice %448 {offsets = [0, 192], sizes = [8, 64], strides = [1, 1]} : vector<8x256xf32> to vector<8x64xf32>
    %453 = arith.mulf %450, %434 : vector<8x64xf32>
    %454 = arith.mulf %449, %451 : vector<8x64xf32>
    %455 = arith.addf %453, %454 : vector<8x64xf32>
    %456 = math.tanh %455 : vector<8x64xf32>
    %457 = arith.mulf %452, %456 : vector<8x64xf32>
    %458 = arith.index_cast %c20_i32 : i32 to index
    %c0_120 = arith.constant 0 : index
    %c0_121 = arith.constant 0 : index
    %459 = vector.load %arg20[%458, %c0_120, %c0_121] : memref<24x8x64xf32, #tpu.memory_space<vmem>>, vector<1x8x64xf32>
    %460 = vector.shape_cast %459 : vector<1x8x64xf32> to vector<8x64xf32>
    %461 = vector.shape_cast %457 : vector<8x64xf32> to vector<1x8x64xf32>
    tpu.vector_store %arg20[%458, %c0_120, %c0_121], %461 {strides = array<i32>} : memref<24x8x64xf32, #tpu.memory_space<vmem>>, vector<1x8x64xf32>,
    %c21_i32 = arith.constant 21 : i32
    %462 = arith.index_cast %c21_i32 : i32 to index
    %c0_122 = arith.constant 0 : index
    %c0_123 = arith.constant 0 : index
    %463 = vector.load %arg19[%462, %c0_122, %c0_123] : memref<24x8x256xf32, #tpu.memory_space<vmem>>, vector<1x8x256xf32>
    %464 = vector.shape_cast %463 : vector<1x8x256xf32> to vector<8x256xf32>
    %cst_124 = arith.constant dense<0.000000e+00> : vector<8x256xf32>
    %465 = tpu.matmul %457, %9, %cst_124 {dimension_numbers = #tpu.dot_dimension_numbers<[1], [0], [0], [1], [0, 0, 1, 1], [], []>} : vector<8x64xf32>, vector<64x256xf32>, vector<8x256xf32> -> vector<8x256xf32>
    %466 = arith.addf %464, %465 : vector<8x256xf32>
    %467 = math.tanh %466 : vector<8x256xf32>
    %468 = arith.mulf %467, %5 : vector<8x256xf32>
    %469 = arith.addf %468, %8 : vector<8x256xf32>
    %470 = vector.extract_strided_slice %469 {offsets = [0, 0], sizes = [8, 64], strides = [1, 1]} : vector<8x256xf32> to vector<8x64xf32>
    %471 = vector.extract_strided_slice %469 {offsets = [0, 64], sizes = [8, 64], strides = [1, 1]} : vector<8x256xf32> to vector<8x64xf32>
    %472 = vector.extract_strided_slice %469 {offsets = [0, 128], sizes = [8, 64], strides = [1, 1]} : vector<8x256xf32> to vector<8x64xf32>
    %473 = vector.extract_strided_slice %469 {offsets = [0, 192], sizes = [8, 64], strides = [1, 1]} : vector<8x256xf32> to vector<8x64xf32>
    %474 = arith.mulf %471, %455 : vector<8x64xf32>
    %475 = arith.mulf %470, %472 : vector<8x64xf32>
    %476 = arith.addf %474, %475 : vector<8x64xf32>
    %477 = math.tanh %476 : vector<8x64xf32>
    %478 = arith.mulf %473, %477 : vector<8x64xf32>
    %479 = arith.index_cast %c21_i32 : i32 to index
    %c0_125 = arith.constant 0 : index
    %c0_126 = arith.constant 0 : index
    %480 = vector.load %arg20[%479, %c0_125, %c0_126] : memref<24x8x64xf32, #tpu.memory_space<vmem>>, vector<1x8x64xf32>
    %481 = vector.shape_cast %480 : vector<1x8x64xf32> to vector<8x64xf32>
    %482 = vector.shape_cast %478 : vector<8x64xf32> to vector<1x8x64xf32>
    tpu.vector_store %arg20[%479, %c0_125, %c0_126], %482 {strides = array<i32>} : memref<24x8x64xf32, #tpu.memory_space<vmem>>, vector<1x8x64xf32>,
    %c22_i32 = arith.constant 22 : i32
    %483 = arith.index_cast %c22_i32 : i32 to index
    %c0_127 = arith.constant 0 : index
    %c0_128 = arith.constant 0 : index
    %484 = vector.load %arg19[%483, %c0_127, %c0_128] : memref<24x8x256xf32, #tpu.memory_space<vmem>>, vector<1x8x256xf32>
    %485 = vector.shape_cast %484 : vector<1x8x256xf32> to vector<8x256xf32>
    %cst_129 = arith.constant dense<0.000000e+00> : vector<8x256xf32>
    %486 = tpu.matmul %478, %9, %cst_129 {dimension_numbers = #tpu.dot_dimension_numbers<[1], [0], [0], [1], [0, 0, 1, 1], [], []>} : vector<8x64xf32>, vector<64x256xf32>, vector<8x256xf32> -> vector<8x256xf32>
    %487 = arith.addf %485, %486 : vector<8x256xf32>
    %488 = math.tanh %487 : vector<8x256xf32>
    %489 = arith.mulf %488, %5 : vector<8x256xf32>
    %490 = arith.addf %489, %8 : vector<8x256xf32>
    %491 = vector.extract_strided_slice %490 {offsets = [0, 0], sizes = [8, 64], strides = [1, 1]} : vector<8x256xf32> to vector<8x64xf32>
    %492 = vector.extract_strided_slice %490 {offsets = [0, 64], sizes = [8, 64], strides = [1, 1]} : vector<8x256xf32> to vector<8x64xf32>
    %493 = vector.extract_strided_slice %490 {offsets = [0, 128], sizes = [8, 64], strides = [1, 1]} : vector<8x256xf32> to vector<8x64xf32>
    %494 = vector.extract_strided_slice %490 {offsets = [0, 192], sizes = [8, 64], strides = [1, 1]} : vector<8x256xf32> to vector<8x64xf32>
    %495 = arith.mulf %492, %476 : vector<8x64xf32>
    %496 = arith.mulf %491, %493 : vector<8x64xf32>
    %497 = arith.addf %495, %496 : vector<8x64xf32>
    %498 = math.tanh %497 : vector<8x64xf32>
    %499 = arith.mulf %494, %498 : vector<8x64xf32>
    %500 = arith.index_cast %c22_i32 : i32 to index
    %c0_130 = arith.constant 0 : index
    %c0_131 = arith.constant 0 : index
    %501 = vector.load %arg20[%500, %c0_130, %c0_131] : memref<24x8x64xf32, #tpu.memory_space<vmem>>, vector<1x8x64xf32>
    %502 = vector.shape_cast %501 : vector<1x8x64xf32> to vector<8x64xf32>
    %503 = vector.shape_cast %499 : vector<8x64xf32> to vector<1x8x64xf32>
    tpu.vector_store %arg20[%500, %c0_130, %c0_131], %503 {strides = array<i32>} : memref<24x8x64xf32, #tpu.memory_space<vmem>>, vector<1x8x64xf32>,
    %c23_i32 = arith.constant 23 : i32
    %504 = arith.index_cast %c23_i32 : i32 to index
    %c0_132 = arith.constant 0 : index
    %c0_133 = arith.constant 0 : index
    %505 = vector.load %arg19[%504, %c0_132, %c0_133] : memref<24x8x256xf32, #tpu.memory_space<vmem>>, vector<1x8x256xf32>
    %506 = vector.shape_cast %505 : vector<1x8x256xf32> to vector<8x256xf32>
    %cst_134 = arith.constant dense<0.000000e+00> : vector<8x256xf32>
    %507 = tpu.matmul %499, %9, %cst_134 {dimension_numbers = #tpu.dot_dimension_numbers<[1], [0], [0], [1], [0, 0, 1, 1], [], []>} : vector<8x64xf32>, vector<64x256xf32>, vector<8x256xf32> -> vector<8x256xf32>
    %508 = arith.addf %506, %507 : vector<8x256xf32>
    %509 = math.tanh %508 : vector<8x256xf32>
    %510 = arith.mulf %509, %5 : vector<8x256xf32>
    %511 = arith.addf %510, %8 : vector<8x256xf32>
    %512 = vector.extract_strided_slice %511 {offsets = [0, 0], sizes = [8, 64], strides = [1, 1]} : vector<8x256xf32> to vector<8x64xf32>
    %513 = vector.extract_strided_slice %511 {offsets = [0, 64], sizes = [8, 64], strides = [1, 1]} : vector<8x256xf32> to vector<8x64xf32>
    %514 = vector.extract_strided_slice %511 {offsets = [0, 128], sizes = [8, 64], strides = [1, 1]} : vector<8x256xf32> to vector<8x64xf32>
    %515 = vector.extract_strided_slice %511 {offsets = [0, 192], sizes = [8, 64], strides = [1, 1]} : vector<8x256xf32> to vector<8x64xf32>
    %516 = arith.mulf %513, %497 : vector<8x64xf32>
    %517 = arith.mulf %512, %514 : vector<8x64xf32>
    %518 = arith.addf %516, %517 : vector<8x64xf32>
    %519 = math.tanh %518 : vector<8x64xf32>
    %520 = arith.mulf %515, %519 : vector<8x64xf32>
    %521 = arith.index_cast %c23_i32 : i32 to index
    %c0_135 = arith.constant 0 : index
    %c0_136 = arith.constant 0 : index
    %522 = vector.load %arg20[%521, %c0_135, %c0_136] : memref<24x8x64xf32, #tpu.memory_space<vmem>>, vector<1x8x64xf32>
    %523 = vector.shape_cast %522 : vector<1x8x64xf32> to vector<8x64xf32>
    %524 = vector.shape_cast %520 : vector<8x64xf32> to vector<1x8x64xf32>
    tpu.vector_store %arg20[%521, %c0_135, %c0_136], %524 {strides = array<i32>} : memref<24x8x64xf32, #tpu.memory_space<vmem>>, vector<1x8x64xf32>,
    %c24_i32 = arith.constant 24 : i32
    %c0_137 = arith.constant 0 : index
    %c0_138 = arith.constant 0 : index
    %c0_139 = arith.constant 0 : index
    %525 = vector.load %arg20[%c0_137, %c0_138, %c0_139] : memref<24x8x64xf32, #tpu.memory_space<vmem>>, vector<24x8x64xf32>
    %526 = vector.shape_cast %525 : vector<24x8x64xf32> to vector<192x64xf32>
    %c0_140 = arith.constant 0 : index
    %c0_141 = arith.constant 0 : index
    %527 = vector.load %arg5[%c0_140, %c0_141] : memref<64x256xf32, #tpu.memory_space<vmem>>, vector<64x256xf32>
    %cst_142 = arith.constant dense<0.000000e+00> : vector<192x256xf32>
    %528 = tpu.matmul %526, %527, %cst_142 {dimension_numbers = #tpu.dot_dimension_numbers<[1], [0], [0], [1], [0, 0, 1, 1], [], []>} : vector<192x64xf32>, vector<64x256xf32>, vector<192x256xf32> -> vector<192x256xf32>
    %c0_143 = arith.constant 0 : index
    %c0_144 = arith.constant 0 : index
    %529 = vector.load %arg7[%c0_143, %c0_144] : memref<1x256xf32, #tpu.memory_space<vmem>>, vector<1x256xf32>
    %530 = vector.broadcast %529 : vector<1x256xf32> to vector<192x256xf32>
    %531 = arith.addf %528, %530 : vector<192x256xf32>
    %532 = vector.shape_cast %531 : vector<192x256xf32> to vector<24x8x256xf32>
    %c0_145 = arith.constant 0 : index
    %c0_146 = arith.constant 0 : index
    %c0_147 = arith.constant 0 : index
    %533 = vector.load %arg19[%c0_145, %c0_146, %c0_147] : memref<24x8x256xf32, #tpu.memory_space<vmem>>, vector<24x8x256xf32>
    tpu.vector_store %arg19[%c0_145, %c0_146, %c0_147], %532 {strides = array<i32>} : memref<24x8x256xf32, #tpu.memory_space<vmem>>, vector<24x8x256xf32>,
    %c0_i32_148 = arith.constant 0 : i32
    %534 = arith.index_cast %c0_i32_148 : i32 to index
    %c0_149 = arith.constant 0 : index
    %c0_150 = arith.constant 0 : index
    %535 = vector.load %arg19[%534, %c0_149, %c0_150] : memref<24x8x256xf32, #tpu.memory_space<vmem>>, vector<1x8x256xf32>
    %536 = vector.shape_cast %535 : vector<1x8x256xf32> to vector<8x256xf32>
    %cst_151 = arith.constant dense<0.000000e+00> : vector<8x256xf32>
    %537 = tpu.matmul %11, %10, %cst_151 {dimension_numbers = #tpu.dot_dimension_numbers<[1], [0], [0], [1], [0, 0, 1, 1], [], []>} : vector<8x64xf32>, vector<64x256xf32>, vector<8x256xf32> -> vector<8x256xf32>
    %538 = arith.addf %536, %537 : vector<8x256xf32>
    %539 = math.tanh %538 : vector<8x256xf32>
    %540 = arith.mulf %539, %5 : vector<8x256xf32>
    %541 = arith.addf %540, %8 : vector<8x256xf32>
    %542 = vector.extract_strided_slice %541 {offsets = [0, 0], sizes = [8, 64], strides = [1, 1]} : vector<8x256xf32> to vector<8x64xf32>
    %543 = vector.extract_strided_slice %541 {offsets = [0, 64], sizes = [8, 64], strides = [1, 1]} : vector<8x256xf32> to vector<8x64xf32>
    %544 = vector.extract_strided_slice %541 {offsets = [0, 128], sizes = [8, 64], strides = [1, 1]} : vector<8x256xf32> to vector<8x64xf32>
    %545 = vector.extract_strided_slice %541 {offsets = [0, 192], sizes = [8, 64], strides = [1, 1]} : vector<8x256xf32> to vector<8x64xf32>
    %546 = arith.mulf %543, %11 : vector<8x64xf32>
    %547 = arith.mulf %542, %544 : vector<8x64xf32>
    %548 = arith.addf %546, %547 : vector<8x64xf32>
    %549 = math.tanh %548 : vector<8x64xf32>
    %550 = arith.mulf %545, %549 : vector<8x64xf32>
    %c1_i32_152 = arith.constant 1 : i32
    %551 = arith.index_cast %c1_i32_152 : i32 to index
    %c0_153 = arith.constant 0 : index
    %c0_154 = arith.constant 0 : index
    %552 = vector.load %arg19[%551, %c0_153, %c0_154] : memref<24x8x256xf32, #tpu.memory_space<vmem>>, vector<1x8x256xf32>
    %553 = vector.shape_cast %552 : vector<1x8x256xf32> to vector<8x256xf32>
    %cst_155 = arith.constant dense<0.000000e+00> : vector<8x256xf32>
    %554 = tpu.matmul %550, %10, %cst_155 {dimension_numbers = #tpu.dot_dimension_numbers<[1], [0], [0], [1], [0, 0, 1, 1], [], []>} : vector<8x64xf32>, vector<64x256xf32>, vector<8x256xf32> -> vector<8x256xf32>
    %555 = arith.addf %553, %554 : vector<8x256xf32>
    %556 = math.tanh %555 : vector<8x256xf32>
    %557 = arith.mulf %556, %5 : vector<8x256xf32>
    %558 = arith.addf %557, %8 : vector<8x256xf32>
    %559 = vector.extract_strided_slice %558 {offsets = [0, 0], sizes = [8, 64], strides = [1, 1]} : vector<8x256xf32> to vector<8x64xf32>
    %560 = vector.extract_strided_slice %558 {offsets = [0, 64], sizes = [8, 64], strides = [1, 1]} : vector<8x256xf32> to vector<8x64xf32>
    %561 = vector.extract_strided_slice %558 {offsets = [0, 128], sizes = [8, 64], strides = [1, 1]} : vector<8x256xf32> to vector<8x64xf32>
    %562 = vector.extract_strided_slice %558 {offsets = [0, 192], sizes = [8, 64], strides = [1, 1]} : vector<8x256xf32> to vector<8x64xf32>
    %563 = arith.mulf %560, %548 : vector<8x64xf32>
    %564 = arith.mulf %559, %561 : vector<8x64xf32>
    %565 = arith.addf %563, %564 : vector<8x64xf32>
    %566 = math.tanh %565 : vector<8x64xf32>
    %567 = arith.mulf %562, %566 : vector<8x64xf32>
    %c2_i32_156 = arith.constant 2 : i32
    %568 = arith.index_cast %c2_i32_156 : i32 to index
    %c0_157 = arith.constant 0 : index
    %c0_158 = arith.constant 0 : index
    %569 = vector.load %arg19[%568, %c0_157, %c0_158] : memref<24x8x256xf32, #tpu.memory_space<vmem>>, vector<1x8x256xf32>
    %570 = vector.shape_cast %569 : vector<1x8x256xf32> to vector<8x256xf32>
    %cst_159 = arith.constant dense<0.000000e+00> : vector<8x256xf32>
    %571 = tpu.matmul %567, %10, %cst_159 {dimension_numbers = #tpu.dot_dimension_numbers<[1], [0], [0], [1], [0, 0, 1, 1], [], []>} : vector<8x64xf32>, vector<64x256xf32>, vector<8x256xf32> -> vector<8x256xf32>
    %572 = arith.addf %570, %571 : vector<8x256xf32>
    %573 = math.tanh %572 : vector<8x256xf32>
    %574 = arith.mulf %573, %5 : vector<8x256xf32>
    %575 = arith.addf %574, %8 : vector<8x256xf32>
    %576 = vector.extract_strided_slice %575 {offsets = [0, 0], sizes = [8, 64], strides = [1, 1]} : vector<8x256xf32> to vector<8x64xf32>
    %577 = vector.extract_strided_slice %575 {offsets = [0, 64], sizes = [8, 64], strides = [1, 1]} : vector<8x256xf32> to vector<8x64xf32>
    %578 = vector.extract_strided_slice %575 {offsets = [0, 128], sizes = [8, 64], strides = [1, 1]} : vector<8x256xf32> to vector<8x64xf32>
    %579 = vector.extract_strided_slice %575 {offsets = [0, 192], sizes = [8, 64], strides = [1, 1]} : vector<8x256xf32> to vector<8x64xf32>
    %580 = arith.mulf %577, %565 : vector<8x64xf32>
    %581 = arith.mulf %576, %578 : vector<8x64xf32>
    %582 = arith.addf %580, %581 : vector<8x64xf32>
    %583 = math.tanh %582 : vector<8x64xf32>
    %584 = arith.mulf %579, %583 : vector<8x64xf32>
    %c3_i32_160 = arith.constant 3 : i32
    %585 = arith.index_cast %c3_i32_160 : i32 to index
    %c0_161 = arith.constant 0 : index
    %c0_162 = arith.constant 0 : index
    %586 = vector.load %arg19[%585, %c0_161, %c0_162] : memref<24x8x256xf32, #tpu.memory_space<vmem>>, vector<1x8x256xf32>
    %587 = vector.shape_cast %586 : vector<1x8x256xf32> to vector<8x256xf32>
    %cst_163 = arith.constant dense<0.000000e+00> : vector<8x256xf32>
    %588 = tpu.matmul %584, %10, %cst_163 {dimension_numbers = #tpu.dot_dimension_numbers<[1], [0], [0], [1], [0, 0, 1, 1], [], []>} : vector<8x64xf32>, vector<64x256xf32>, vector<8x256xf32> -> vector<8x256xf32>
    %589 = arith.addf %587, %588 : vector<8x256xf32>
    %590 = math.tanh %589 : vector<8x256xf32>
    %591 = arith.mulf %590, %5 : vector<8x256xf32>
    %592 = arith.addf %591, %8 : vector<8x256xf32>
    %593 = vector.extract_strided_slice %592 {offsets = [0, 0], sizes = [8, 64], strides = [1, 1]} : vector<8x256xf32> to vector<8x64xf32>
    %594 = vector.extract_strided_slice %592 {offsets = [0, 64], sizes = [8, 64], strides = [1, 1]} : vector<8x256xf32> to vector<8x64xf32>
    %595 = vector.extract_strided_slice %592 {offsets = [0, 128], sizes = [8, 64], strides = [1, 1]} : vector<8x256xf32> to vector<8x64xf32>
    %596 = vector.extract_strided_slice %592 {offsets = [0, 192], sizes = [8, 64], strides = [1, 1]} : vector<8x256xf32> to vector<8x64xf32>
    %597 = arith.mulf %594, %582 : vector<8x64xf32>
    %598 = arith.mulf %593, %595 : vector<8x64xf32>
    %599 = arith.addf %597, %598 : vector<8x64xf32>
    %600 = math.tanh %599 : vector<8x64xf32>
    %601 = arith.mulf %596, %600 : vector<8x64xf32>
    %c4_i32_164 = arith.constant 4 : i32
    %602 = arith.index_cast %c4_i32_164 : i32 to index
    %c0_165 = arith.constant 0 : index
    %c0_166 = arith.constant 0 : index
    %603 = vector.load %arg19[%602, %c0_165, %c0_166] : memref<24x8x256xf32, #tpu.memory_space<vmem>>, vector<1x8x256xf32>
    %604 = vector.shape_cast %603 : vector<1x8x256xf32> to vector<8x256xf32>
    %cst_167 = arith.constant dense<0.000000e+00> : vector<8x256xf32>
    %605 = tpu.matmul %601, %10, %cst_167 {dimension_numbers = #tpu.dot_dimension_numbers<[1], [0], [0], [1], [0, 0, 1, 1], [], []>} : vector<8x64xf32>, vector<64x256xf32>, vector<8x256xf32> -> vector<8x256xf32>
    %606 = arith.addf %604, %605 : vector<8x256xf32>
    %607 = math.tanh %606 : vector<8x256xf32>
    %608 = arith.mulf %607, %5 : vector<8x256xf32>
    %609 = arith.addf %608, %8 : vector<8x256xf32>
    %610 = vector.extract_strided_slice %609 {offsets = [0, 0], sizes = [8, 64], strides = [1, 1]} : vector<8x256xf32> to vector<8x64xf32>
    %611 = vector.extract_strided_slice %609 {offsets = [0, 64], sizes = [8, 64], strides = [1, 1]} : vector<8x256xf32> to vector<8x64xf32>
    %612 = vector.extract_strided_slice %609 {offsets = [0, 128], sizes = [8, 64], strides = [1, 1]} : vector<8x256xf32> to vector<8x64xf32>
    %613 = vector.extract_strided_slice %609 {offsets = [0, 192], sizes = [8, 64], strides = [1, 1]} : vector<8x256xf32> to vector<8x64xf32>
    %614 = arith.mulf %611, %599 : vector<8x64xf32>
    %615 = arith.mulf %610, %612 : vector<8x64xf32>
    %616 = arith.addf %614, %615 : vector<8x64xf32>
    %617 = math.tanh %616 : vector<8x64xf32>
    %618 = arith.mulf %613, %617 : vector<8x64xf32>
    %c5_i32_168 = arith.constant 5 : i32
    %619 = arith.index_cast %c5_i32_168 : i32 to index
    %c0_169 = arith.constant 0 : index
    %c0_170 = arith.constant 0 : index
    %620 = vector.load %arg19[%619, %c0_169, %c0_170] : memref<24x8x256xf32, #tpu.memory_space<vmem>>, vector<1x8x256xf32>
    %621 = vector.shape_cast %620 : vector<1x8x256xf32> to vector<8x256xf32>
    %cst_171 = arith.constant dense<0.000000e+00> : vector<8x256xf32>
    %622 = tpu.matmul %618, %10, %cst_171 {dimension_numbers = #tpu.dot_dimension_numbers<[1], [0], [0], [1], [0, 0, 1, 1], [], []>} : vector<8x64xf32>, vector<64x256xf32>, vector<8x256xf32> -> vector<8x256xf32>
    %623 = arith.addf %621, %622 : vector<8x256xf32>
    %624 = math.tanh %623 : vector<8x256xf32>
    %625 = arith.mulf %624, %5 : vector<8x256xf32>
    %626 = arith.addf %625, %8 : vector<8x256xf32>
    %627 = vector.extract_strided_slice %626 {offsets = [0, 0], sizes = [8, 64], strides = [1, 1]} : vector<8x256xf32> to vector<8x64xf32>
    %628 = vector.extract_strided_slice %626 {offsets = [0, 64], sizes = [8, 64], strides = [1, 1]} : vector<8x256xf32> to vector<8x64xf32>
    %629 = vector.extract_strided_slice %626 {offsets = [0, 128], sizes = [8, 64], strides = [1, 1]} : vector<8x256xf32> to vector<8x64xf32>
    %630 = vector.extract_strided_slice %626 {offsets = [0, 192], sizes = [8, 64], strides = [1, 1]} : vector<8x256xf32> to vector<8x64xf32>
    %631 = arith.mulf %628, %616 : vector<8x64xf32>
    %632 = arith.mulf %627, %629 : vector<8x64xf32>
    %633 = arith.addf %631, %632 : vector<8x64xf32>
    %634 = math.tanh %633 : vector<8x64xf32>
    %635 = arith.mulf %630, %634 : vector<8x64xf32>
    %c6_i32_172 = arith.constant 6 : i32
    %636 = arith.index_cast %c6_i32_172 : i32 to index
    %c0_173 = arith.constant 0 : index
    %c0_174 = arith.constant 0 : index
    %637 = vector.load %arg19[%636, %c0_173, %c0_174] : memref<24x8x256xf32, #tpu.memory_space<vmem>>, vector<1x8x256xf32>
    %638 = vector.shape_cast %637 : vector<1x8x256xf32> to vector<8x256xf32>
    %cst_175 = arith.constant dense<0.000000e+00> : vector<8x256xf32>
    %639 = tpu.matmul %635, %10, %cst_175 {dimension_numbers = #tpu.dot_dimension_numbers<[1], [0], [0], [1], [0, 0, 1, 1], [], []>} : vector<8x64xf32>, vector<64x256xf32>, vector<8x256xf32> -> vector<8x256xf32>
    %640 = arith.addf %638, %639 : vector<8x256xf32>
    %641 = math.tanh %640 : vector<8x256xf32>
    %642 = arith.mulf %641, %5 : vector<8x256xf32>
    %643 = arith.addf %642, %8 : vector<8x256xf32>
    %644 = vector.extract_strided_slice %643 {offsets = [0, 0], sizes = [8, 64], strides = [1, 1]} : vector<8x256xf32> to vector<8x64xf32>
    %645 = vector.extract_strided_slice %643 {offsets = [0, 64], sizes = [8, 64], strides = [1, 1]} : vector<8x256xf32> to vector<8x64xf32>
    %646 = vector.extract_strided_slice %643 {offsets = [0, 128], sizes = [8, 64], strides = [1, 1]} : vector<8x256xf32> to vector<8x64xf32>
    %647 = vector.extract_strided_slice %643 {offsets = [0, 192], sizes = [8, 64], strides = [1, 1]} : vector<8x256xf32> to vector<8x64xf32>
    %648 = arith.mulf %645, %633 : vector<8x64xf32>
    %649 = arith.mulf %644, %646 : vector<8x64xf32>
    %650 = arith.addf %648, %649 : vector<8x64xf32>
    %651 = math.tanh %650 : vector<8x64xf32>
    %652 = arith.mulf %647, %651 : vector<8x64xf32>
    %c7_i32_176 = arith.constant 7 : i32
    %653 = arith.index_cast %c7_i32_176 : i32 to index
    %c0_177 = arith.constant 0 : index
    %c0_178 = arith.constant 0 : index
    %654 = vector.load %arg19[%653, %c0_177, %c0_178] : memref<24x8x256xf32, #tpu.memory_space<vmem>>, vector<1x8x256xf32>
    %655 = vector.shape_cast %654 : vector<1x8x256xf32> to vector<8x256xf32>
    %cst_179 = arith.constant dense<0.000000e+00> : vector<8x256xf32>
    %656 = tpu.matmul %652, %10, %cst_179 {dimension_numbers = #tpu.dot_dimension_numbers<[1], [0], [0], [1], [0, 0, 1, 1], [], []>} : vector<8x64xf32>, vector<64x256xf32>, vector<8x256xf32> -> vector<8x256xf32>
    %657 = arith.addf %655, %656 : vector<8x256xf32>
    %658 = math.tanh %657 : vector<8x256xf32>
    %659 = arith.mulf %658, %5 : vector<8x256xf32>
    %660 = arith.addf %659, %8 : vector<8x256xf32>
    %661 = vector.extract_strided_slice %660 {offsets = [0, 0], sizes = [8, 64], strides = [1, 1]} : vector<8x256xf32> to vector<8x64xf32>
    %662 = vector.extract_strided_slice %660 {offsets = [0, 64], sizes = [8, 64], strides = [1, 1]} : vector<8x256xf32> to vector<8x64xf32>
    %663 = vector.extract_strided_slice %660 {offsets = [0, 128], sizes = [8, 64], strides = [1, 1]} : vector<8x256xf32> to vector<8x64xf32>
    %664 = vector.extract_strided_slice %660 {offsets = [0, 192], sizes = [8, 64], strides = [1, 1]} : vector<8x256xf32> to vector<8x64xf32>
    %665 = arith.mulf %662, %650 : vector<8x64xf32>
    %666 = arith.mulf %661, %663 : vector<8x64xf32>
    %667 = arith.addf %665, %666 : vector<8x64xf32>
    %668 = math.tanh %667 : vector<8x64xf32>
    %669 = arith.mulf %664, %668 : vector<8x64xf32>
    %c8_i32_180 = arith.constant 8 : i32
    %670 = arith.index_cast %c8_i32_180 : i32 to index
    %c0_181 = arith.constant 0 : index
    %c0_182 = arith.constant 0 : index
    %671 = vector.load %arg19[%670, %c0_181, %c0_182] : memref<24x8x256xf32, #tpu.memory_space<vmem>>, vector<1x8x256xf32>
    %672 = vector.shape_cast %671 : vector<1x8x256xf32> to vector<8x256xf32>
    %cst_183 = arith.constant dense<0.000000e+00> : vector<8x256xf32>
    %673 = tpu.matmul %669, %10, %cst_183 {dimension_numbers = #tpu.dot_dimension_numbers<[1], [0], [0], [1], [0, 0, 1, 1], [], []>} : vector<8x64xf32>, vector<64x256xf32>, vector<8x256xf32> -> vector<8x256xf32>
    %674 = arith.addf %672, %673 : vector<8x256xf32>
    %675 = math.tanh %674 : vector<8x256xf32>
    %676 = arith.mulf %675, %5 : vector<8x256xf32>
    %677 = arith.addf %676, %8 : vector<8x256xf32>
    %678 = vector.extract_strided_slice %677 {offsets = [0, 0], sizes = [8, 64], strides = [1, 1]} : vector<8x256xf32> to vector<8x64xf32>
    %679 = vector.extract_strided_slice %677 {offsets = [0, 64], sizes = [8, 64], strides = [1, 1]} : vector<8x256xf32> to vector<8x64xf32>
    %680 = vector.extract_strided_slice %677 {offsets = [0, 128], sizes = [8, 64], strides = [1, 1]} : vector<8x256xf32> to vector<8x64xf32>
    %681 = vector.extract_strided_slice %677 {offsets = [0, 192], sizes = [8, 64], strides = [1, 1]} : vector<8x256xf32> to vector<8x64xf32>
    %682 = arith.mulf %679, %667 : vector<8x64xf32>
    %683 = arith.mulf %678, %680 : vector<8x64xf32>
    %684 = arith.addf %682, %683 : vector<8x64xf32>
    %685 = math.tanh %684 : vector<8x64xf32>
    %686 = arith.mulf %681, %685 : vector<8x64xf32>
    %c9_i32_184 = arith.constant 9 : i32
    %687 = arith.index_cast %c9_i32_184 : i32 to index
    %c0_185 = arith.constant 0 : index
    %c0_186 = arith.constant 0 : index
    %688 = vector.load %arg19[%687, %c0_185, %c0_186] : memref<24x8x256xf32, #tpu.memory_space<vmem>>, vector<1x8x256xf32>
    %689 = vector.shape_cast %688 : vector<1x8x256xf32> to vector<8x256xf32>
    %cst_187 = arith.constant dense<0.000000e+00> : vector<8x256xf32>
    %690 = tpu.matmul %686, %10, %cst_187 {dimension_numbers = #tpu.dot_dimension_numbers<[1], [0], [0], [1], [0, 0, 1, 1], [], []>} : vector<8x64xf32>, vector<64x256xf32>, vector<8x256xf32> -> vector<8x256xf32>
    %691 = arith.addf %689, %690 : vector<8x256xf32>
    %692 = math.tanh %691 : vector<8x256xf32>
    %693 = arith.mulf %692, %5 : vector<8x256xf32>
    %694 = arith.addf %693, %8 : vector<8x256xf32>
    %695 = vector.extract_strided_slice %694 {offsets = [0, 0], sizes = [8, 64], strides = [1, 1]} : vector<8x256xf32> to vector<8x64xf32>
    %696 = vector.extract_strided_slice %694 {offsets = [0, 64], sizes = [8, 64], strides = [1, 1]} : vector<8x256xf32> to vector<8x64xf32>
    %697 = vector.extract_strided_slice %694 {offsets = [0, 128], sizes = [8, 64], strides = [1, 1]} : vector<8x256xf32> to vector<8x64xf32>
    %698 = vector.extract_strided_slice %694 {offsets = [0, 192], sizes = [8, 64], strides = [1, 1]} : vector<8x256xf32> to vector<8x64xf32>
    %699 = arith.mulf %696, %684 : vector<8x64xf32>
    %700 = arith.mulf %695, %697 : vector<8x64xf32>
    %701 = arith.addf %699, %700 : vector<8x64xf32>
    %702 = math.tanh %701 : vector<8x64xf32>
    %703 = arith.mulf %698, %702 : vector<8x64xf32>
    %c10_i32_188 = arith.constant 10 : i32
    %704 = arith.index_cast %c10_i32_188 : i32 to index
    %c0_189 = arith.constant 0 : index
    %c0_190 = arith.constant 0 : index
    %705 = vector.load %arg19[%704, %c0_189, %c0_190] : memref<24x8x256xf32, #tpu.memory_space<vmem>>, vector<1x8x256xf32>
    %706 = vector.shape_cast %705 : vector<1x8x256xf32> to vector<8x256xf32>
    %cst_191 = arith.constant dense<0.000000e+00> : vector<8x256xf32>
    %707 = tpu.matmul %703, %10, %cst_191 {dimension_numbers = #tpu.dot_dimension_numbers<[1], [0], [0], [1], [0, 0, 1, 1], [], []>} : vector<8x64xf32>, vector<64x256xf32>, vector<8x256xf32> -> vector<8x256xf32>
    %708 = arith.addf %706, %707 : vector<8x256xf32>
    %709 = math.tanh %708 : vector<8x256xf32>
    %710 = arith.mulf %709, %5 : vector<8x256xf32>
    %711 = arith.addf %710, %8 : vector<8x256xf32>
    %712 = vector.extract_strided_slice %711 {offsets = [0, 0], sizes = [8, 64], strides = [1, 1]} : vector<8x256xf32> to vector<8x64xf32>
    %713 = vector.extract_strided_slice %711 {offsets = [0, 64], sizes = [8, 64], strides = [1, 1]} : vector<8x256xf32> to vector<8x64xf32>
    %714 = vector.extract_strided_slice %711 {offsets = [0, 128], sizes = [8, 64], strides = [1, 1]} : vector<8x256xf32> to vector<8x64xf32>
    %715 = vector.extract_strided_slice %711 {offsets = [0, 192], sizes = [8, 64], strides = [1, 1]} : vector<8x256xf32> to vector<8x64xf32>
    %716 = arith.mulf %713, %701 : vector<8x64xf32>
    %717 = arith.mulf %712, %714 : vector<8x64xf32>
    %718 = arith.addf %716, %717 : vector<8x64xf32>
    %719 = math.tanh %718 : vector<8x64xf32>
    %720 = arith.mulf %715, %719 : vector<8x64xf32>
    %c11_i32_192 = arith.constant 11 : i32
    %721 = arith.index_cast %c11_i32_192 : i32 to index
    %c0_193 = arith.constant 0 : index
    %c0_194 = arith.constant 0 : index
    %722 = vector.load %arg19[%721, %c0_193, %c0_194] : memref<24x8x256xf32, #tpu.memory_space<vmem>>, vector<1x8x256xf32>
    %723 = vector.shape_cast %722 : vector<1x8x256xf32> to vector<8x256xf32>
    %cst_195 = arith.constant dense<0.000000e+00> : vector<8x256xf32>
    %724 = tpu.matmul %720, %10, %cst_195 {dimension_numbers = #tpu.dot_dimension_numbers<[1], [0], [0], [1], [0, 0, 1, 1], [], []>} : vector<8x64xf32>, vector<64x256xf32>, vector<8x256xf32> -> vector<8x256xf32>
    %725 = arith.addf %723, %724 : vector<8x256xf32>
    %726 = math.tanh %725 : vector<8x256xf32>
    %727 = arith.mulf %726, %5 : vector<8x256xf32>
    %728 = arith.addf %727, %8 : vector<8x256xf32>
    %729 = vector.extract_strided_slice %728 {offsets = [0, 0], sizes = [8, 64], strides = [1, 1]} : vector<8x256xf32> to vector<8x64xf32>
    %730 = vector.extract_strided_slice %728 {offsets = [0, 64], sizes = [8, 64], strides = [1, 1]} : vector<8x256xf32> to vector<8x64xf32>
    %731 = vector.extract_strided_slice %728 {offsets = [0, 128], sizes = [8, 64], strides = [1, 1]} : vector<8x256xf32> to vector<8x64xf32>
    %732 = vector.extract_strided_slice %728 {offsets = [0, 192], sizes = [8, 64], strides = [1, 1]} : vector<8x256xf32> to vector<8x64xf32>
    %733 = arith.mulf %730, %718 : vector<8x64xf32>
    %734 = arith.mulf %729, %731 : vector<8x64xf32>
    %735 = arith.addf %733, %734 : vector<8x64xf32>
    %736 = math.tanh %735 : vector<8x64xf32>
    %737 = arith.mulf %732, %736 : vector<8x64xf32>
    %c12_i32_196 = arith.constant 12 : i32
    %738 = arith.index_cast %c12_i32_196 : i32 to index
    %c0_197 = arith.constant 0 : index
    %c0_198 = arith.constant 0 : index
    %739 = vector.load %arg19[%738, %c0_197, %c0_198] : memref<24x8x256xf32, #tpu.memory_space<vmem>>, vector<1x8x256xf32>
    %740 = vector.shape_cast %739 : vector<1x8x256xf32> to vector<8x256xf32>
    %cst_199 = arith.constant dense<0.000000e+00> : vector<8x256xf32>
    %741 = tpu.matmul %737, %10, %cst_199 {dimension_numbers = #tpu.dot_dimension_numbers<[1], [0], [0], [1], [0, 0, 1, 1], [], []>} : vector<8x64xf32>, vector<64x256xf32>, vector<8x256xf32> -> vector<8x256xf32>
    %742 = arith.addf %740, %741 : vector<8x256xf32>
    %743 = math.tanh %742 : vector<8x256xf32>
    %744 = arith.mulf %743, %5 : vector<8x256xf32>
    %745 = arith.addf %744, %8 : vector<8x256xf32>
    %746 = vector.extract_strided_slice %745 {offsets = [0, 0], sizes = [8, 64], strides = [1, 1]} : vector<8x256xf32> to vector<8x64xf32>
    %747 = vector.extract_strided_slice %745 {offsets = [0, 64], sizes = [8, 64], strides = [1, 1]} : vector<8x256xf32> to vector<8x64xf32>
    %748 = vector.extract_strided_slice %745 {offsets = [0, 128], sizes = [8, 64], strides = [1, 1]} : vector<8x256xf32> to vector<8x64xf32>
    %749 = vector.extract_strided_slice %745 {offsets = [0, 192], sizes = [8, 64], strides = [1, 1]} : vector<8x256xf32> to vector<8x64xf32>
    %750 = arith.mulf %747, %735 : vector<8x64xf32>
    %751 = arith.mulf %746, %748 : vector<8x64xf32>
    %752 = arith.addf %750, %751 : vector<8x64xf32>
    %753 = math.tanh %752 : vector<8x64xf32>
    %754 = arith.mulf %749, %753 : vector<8x64xf32>
    %c13_i32_200 = arith.constant 13 : i32
    %755 = arith.index_cast %c13_i32_200 : i32 to index
    %c0_201 = arith.constant 0 : index
    %c0_202 = arith.constant 0 : index
    %756 = vector.load %arg19[%755, %c0_201, %c0_202] : memref<24x8x256xf32, #tpu.memory_space<vmem>>, vector<1x8x256xf32>
    %757 = vector.shape_cast %756 : vector<1x8x256xf32> to vector<8x256xf32>
    %cst_203 = arith.constant dense<0.000000e+00> : vector<8x256xf32>
    %758 = tpu.matmul %754, %10, %cst_203 {dimension_numbers = #tpu.dot_dimension_numbers<[1], [0], [0], [1], [0, 0, 1, 1], [], []>} : vector<8x64xf32>, vector<64x256xf32>, vector<8x256xf32> -> vector<8x256xf32>
    %759 = arith.addf %757, %758 : vector<8x256xf32>
    %760 = math.tanh %759 : vector<8x256xf32>
    %761 = arith.mulf %760, %5 : vector<8x256xf32>
    %762 = arith.addf %761, %8 : vector<8x256xf32>
    %763 = vector.extract_strided_slice %762 {offsets = [0, 0], sizes = [8, 64], strides = [1, 1]} : vector<8x256xf32> to vector<8x64xf32>
    %764 = vector.extract_strided_slice %762 {offsets = [0, 64], sizes = [8, 64], strides = [1, 1]} : vector<8x256xf32> to vector<8x64xf32>
    %765 = vector.extract_strided_slice %762 {offsets = [0, 128], sizes = [8, 64], strides = [1, 1]} : vector<8x256xf32> to vector<8x64xf32>
    %766 = vector.extract_strided_slice %762 {offsets = [0, 192], sizes = [8, 64], strides = [1, 1]} : vector<8x256xf32> to vector<8x64xf32>
    %767 = arith.mulf %764, %752 : vector<8x64xf32>
    %768 = arith.mulf %763, %765 : vector<8x64xf32>
    %769 = arith.addf %767, %768 : vector<8x64xf32>
    %770 = math.tanh %769 : vector<8x64xf32>
    %771 = arith.mulf %766, %770 : vector<8x64xf32>
    %c14_i32_204 = arith.constant 14 : i32
    %772 = arith.index_cast %c14_i32_204 : i32 to index
    %c0_205 = arith.constant 0 : index
    %c0_206 = arith.constant 0 : index
    %773 = vector.load %arg19[%772, %c0_205, %c0_206] : memref<24x8x256xf32, #tpu.memory_space<vmem>>, vector<1x8x256xf32>
    %774 = vector.shape_cast %773 : vector<1x8x256xf32> to vector<8x256xf32>
    %cst_207 = arith.constant dense<0.000000e+00> : vector<8x256xf32>
    %775 = tpu.matmul %771, %10, %cst_207 {dimension_numbers = #tpu.dot_dimension_numbers<[1], [0], [0], [1], [0, 0, 1, 1], [], []>} : vector<8x64xf32>, vector<64x256xf32>, vector<8x256xf32> -> vector<8x256xf32>
    %776 = arith.addf %774, %775 : vector<8x256xf32>
    %777 = math.tanh %776 : vector<8x256xf32>
    %778 = arith.mulf %777, %5 : vector<8x256xf32>
    %779 = arith.addf %778, %8 : vector<8x256xf32>
    %780 = vector.extract_strided_slice %779 {offsets = [0, 0], sizes = [8, 64], strides = [1, 1]} : vector<8x256xf32> to vector<8x64xf32>
    %781 = vector.extract_strided_slice %779 {offsets = [0, 64], sizes = [8, 64], strides = [1, 1]} : vector<8x256xf32> to vector<8x64xf32>
    %782 = vector.extract_strided_slice %779 {offsets = [0, 128], sizes = [8, 64], strides = [1, 1]} : vector<8x256xf32> to vector<8x64xf32>
    %783 = vector.extract_strided_slice %779 {offsets = [0, 192], sizes = [8, 64], strides = [1, 1]} : vector<8x256xf32> to vector<8x64xf32>
    %784 = arith.mulf %781, %769 : vector<8x64xf32>
    %785 = arith.mulf %780, %782 : vector<8x64xf32>
    %786 = arith.addf %784, %785 : vector<8x64xf32>
    %787 = math.tanh %786 : vector<8x64xf32>
    %788 = arith.mulf %783, %787 : vector<8x64xf32>
    %c15_i32_208 = arith.constant 15 : i32
    %789 = arith.index_cast %c15_i32_208 : i32 to index
    %c0_209 = arith.constant 0 : index
    %c0_210 = arith.constant 0 : index
    %790 = vector.load %arg19[%789, %c0_209, %c0_210] : memref<24x8x256xf32, #tpu.memory_space<vmem>>, vector<1x8x256xf32>
    %791 = vector.shape_cast %790 : vector<1x8x256xf32> to vector<8x256xf32>
    %cst_211 = arith.constant dense<0.000000e+00> : vector<8x256xf32>
    %792 = tpu.matmul %788, %10, %cst_211 {dimension_numbers = #tpu.dot_dimension_numbers<[1], [0], [0], [1], [0, 0, 1, 1], [], []>} : vector<8x64xf32>, vector<64x256xf32>, vector<8x256xf32> -> vector<8x256xf32>
    %793 = arith.addf %791, %792 : vector<8x256xf32>
    %794 = math.tanh %793 : vector<8x256xf32>
    %795 = arith.mulf %794, %5 : vector<8x256xf32>
    %796 = arith.addf %795, %8 : vector<8x256xf32>
    %797 = vector.extract_strided_slice %796 {offsets = [0, 0], sizes = [8, 64], strides = [1, 1]} : vector<8x256xf32> to vector<8x64xf32>
    %798 = vector.extract_strided_slice %796 {offsets = [0, 64], sizes = [8, 64], strides = [1, 1]} : vector<8x256xf32> to vector<8x64xf32>
    %799 = vector.extract_strided_slice %796 {offsets = [0, 128], sizes = [8, 64], strides = [1, 1]} : vector<8x256xf32> to vector<8x64xf32>
    %800 = vector.extract_strided_slice %796 {offsets = [0, 192], sizes = [8, 64], strides = [1, 1]} : vector<8x256xf32> to vector<8x64xf32>
    %801 = arith.mulf %798, %786 : vector<8x64xf32>
    %802 = arith.mulf %797, %799 : vector<8x64xf32>
    %803 = arith.addf %801, %802 : vector<8x64xf32>
    %804 = math.tanh %803 : vector<8x64xf32>
    %805 = arith.mulf %800, %804 : vector<8x64xf32>
    %c16_i32_212 = arith.constant 16 : i32
    %806 = arith.index_cast %c16_i32_212 : i32 to index
    %c0_213 = arith.constant 0 : index
    %c0_214 = arith.constant 0 : index
    %807 = vector.load %arg19[%806, %c0_213, %c0_214] : memref<24x8x256xf32, #tpu.memory_space<vmem>>, vector<1x8x256xf32>
    %808 = vector.shape_cast %807 : vector<1x8x256xf32> to vector<8x256xf32>
    %cst_215 = arith.constant dense<0.000000e+00> : vector<8x256xf32>
    %809 = tpu.matmul %805, %10, %cst_215 {dimension_numbers = #tpu.dot_dimension_numbers<[1], [0], [0], [1], [0, 0, 1, 1], [], []>} : vector<8x64xf32>, vector<64x256xf32>, vector<8x256xf32> -> vector<8x256xf32>
    %810 = arith.addf %808, %809 : vector<8x256xf32>
    %811 = math.tanh %810 : vector<8x256xf32>
    %812 = arith.mulf %811, %5 : vector<8x256xf32>
    %813 = arith.addf %812, %8 : vector<8x256xf32>
    %814 = vector.extract_strided_slice %813 {offsets = [0, 0], sizes = [8, 64], strides = [1, 1]} : vector<8x256xf32> to vector<8x64xf32>
    %815 = vector.extract_strided_slice %813 {offsets = [0, 64], sizes = [8, 64], strides = [1, 1]} : vector<8x256xf32> to vector<8x64xf32>
    %816 = vector.extract_strided_slice %813 {offsets = [0, 128], sizes = [8, 64], strides = [1, 1]} : vector<8x256xf32> to vector<8x64xf32>
    %817 = vector.extract_strided_slice %813 {offsets = [0, 192], sizes = [8, 64], strides = [1, 1]} : vector<8x256xf32> to vector<8x64xf32>
    %818 = arith.mulf %815, %803 : vector<8x64xf32>
    %819 = arith.mulf %814, %816 : vector<8x64xf32>
    %820 = arith.addf %818, %819 : vector<8x64xf32>
    %821 = math.tanh %820 : vector<8x64xf32>
    %822 = arith.mulf %817, %821 : vector<8x64xf32>
    %c17_i32_216 = arith.constant 17 : i32
    %823 = arith.index_cast %c17_i32_216 : i32 to index
    %c0_217 = arith.constant 0 : index
    %c0_218 = arith.constant 0 : index
    %824 = vector.load %arg19[%823, %c0_217, %c0_218] : memref<24x8x256xf32, #tpu.memory_space<vmem>>, vector<1x8x256xf32>
    %825 = vector.shape_cast %824 : vector<1x8x256xf32> to vector<8x256xf32>
    %cst_219 = arith.constant dense<0.000000e+00> : vector<8x256xf32>
    %826 = tpu.matmul %822, %10, %cst_219 {dimension_numbers = #tpu.dot_dimension_numbers<[1], [0], [0], [1], [0, 0, 1, 1], [], []>} : vector<8x64xf32>, vector<64x256xf32>, vector<8x256xf32> -> vector<8x256xf32>
    %827 = arith.addf %825, %826 : vector<8x256xf32>
    %828 = math.tanh %827 : vector<8x256xf32>
    %829 = arith.mulf %828, %5 : vector<8x256xf32>
    %830 = arith.addf %829, %8 : vector<8x256xf32>
    %831 = vector.extract_strided_slice %830 {offsets = [0, 0], sizes = [8, 64], strides = [1, 1]} : vector<8x256xf32> to vector<8x64xf32>
    %832 = vector.extract_strided_slice %830 {offsets = [0, 64], sizes = [8, 64], strides = [1, 1]} : vector<8x256xf32> to vector<8x64xf32>
    %833 = vector.extract_strided_slice %830 {offsets = [0, 128], sizes = [8, 64], strides = [1, 1]} : vector<8x256xf32> to vector<8x64xf32>
    %834 = vector.extract_strided_slice %830 {offsets = [0, 192], sizes = [8, 64], strides = [1, 1]} : vector<8x256xf32> to vector<8x64xf32>
    %835 = arith.mulf %832, %820 : vector<8x64xf32>
    %836 = arith.mulf %831, %833 : vector<8x64xf32>
    %837 = arith.addf %835, %836 : vector<8x64xf32>
    %838 = math.tanh %837 : vector<8x64xf32>
    %839 = arith.mulf %834, %838 : vector<8x64xf32>
    %c18_i32_220 = arith.constant 18 : i32
    %840 = arith.index_cast %c18_i32_220 : i32 to index
    %c0_221 = arith.constant 0 : index
    %c0_222 = arith.constant 0 : index
    %841 = vector.load %arg19[%840, %c0_221, %c0_222] : memref<24x8x256xf32, #tpu.memory_space<vmem>>, vector<1x8x256xf32>
    %842 = vector.shape_cast %841 : vector<1x8x256xf32> to vector<8x256xf32>
    %cst_223 = arith.constant dense<0.000000e+00> : vector<8x256xf32>
    %843 = tpu.matmul %839, %10, %cst_223 {dimension_numbers = #tpu.dot_dimension_numbers<[1], [0], [0], [1], [0, 0, 1, 1], [], []>} : vector<8x64xf32>, vector<64x256xf32>, vector<8x256xf32> -> vector<8x256xf32>
    %844 = arith.addf %842, %843 : vector<8x256xf32>
    %845 = math.tanh %844 : vector<8x256xf32>
    %846 = arith.mulf %845, %5 : vector<8x256xf32>
    %847 = arith.addf %846, %8 : vector<8x256xf32>
    %848 = vector.extract_strided_slice %847 {offsets = [0, 0], sizes = [8, 64], strides = [1, 1]} : vector<8x256xf32> to vector<8x64xf32>
    %849 = vector.extract_strided_slice %847 {offsets = [0, 64], sizes = [8, 64], strides = [1, 1]} : vector<8x256xf32> to vector<8x64xf32>
    %850 = vector.extract_strided_slice %847 {offsets = [0, 128], sizes = [8, 64], strides = [1, 1]} : vector<8x256xf32> to vector<8x64xf32>
    %851 = vector.extract_strided_slice %847 {offsets = [0, 192], sizes = [8, 64], strides = [1, 1]} : vector<8x256xf32> to vector<8x64xf32>
    %852 = arith.mulf %849, %837 : vector<8x64xf32>
    %853 = arith.mulf %848, %850 : vector<8x64xf32>
    %854 = arith.addf %852, %853 : vector<8x64xf32>
    %855 = math.tanh %854 : vector<8x64xf32>
    %856 = arith.mulf %851, %855 : vector<8x64xf32>
    %c19_i32_224 = arith.constant 19 : i32
    %857 = arith.index_cast %c19_i32_224 : i32 to index
    %c0_225 = arith.constant 0 : index
    %c0_226 = arith.constant 0 : index
    %858 = vector.load %arg19[%857, %c0_225, %c0_226] : memref<24x8x256xf32, #tpu.memory_space<vmem>>, vector<1x8x256xf32>
    %859 = vector.shape_cast %858 : vector<1x8x256xf32> to vector<8x256xf32>
    %cst_227 = arith.constant dense<0.000000e+00> : vector<8x256xf32>
    %860 = tpu.matmul %856, %10, %cst_227 {dimension_numbers = #tpu.dot_dimension_numbers<[1], [0], [0], [1], [0, 0, 1, 1], [], []>} : vector<8x64xf32>, vector<64x256xf32>, vector<8x256xf32> -> vector<8x256xf32>
    %861 = arith.addf %859, %860 : vector<8x256xf32>
    %862 = math.tanh %861 : vector<8x256xf32>
    %863 = arith.mulf %862, %5 : vector<8x256xf32>
    %864 = arith.addf %863, %8 : vector<8x256xf32>
    %865 = vector.extract_strided_slice %864 {offsets = [0, 0], sizes = [8, 64], strides = [1, 1]} : vector<8x256xf32> to vector<8x64xf32>
    %866 = vector.extract_strided_slice %864 {offsets = [0, 64], sizes = [8, 64], strides = [1, 1]} : vector<8x256xf32> to vector<8x64xf32>
    %867 = vector.extract_strided_slice %864 {offsets = [0, 128], sizes = [8, 64], strides = [1, 1]} : vector<8x256xf32> to vector<8x64xf32>
    %868 = vector.extract_strided_slice %864 {offsets = [0, 192], sizes = [8, 64], strides = [1, 1]} : vector<8x256xf32> to vector<8x64xf32>
    %869 = arith.mulf %866, %854 : vector<8x64xf32>
    %870 = arith.mulf %865, %867 : vector<8x64xf32>
    %871 = arith.addf %869, %870 : vector<8x64xf32>
    %872 = math.tanh %871 : vector<8x64xf32>
    %873 = arith.mulf %868, %872 : vector<8x64xf32>
    %c20_i32_228 = arith.constant 20 : i32
    %874 = arith.index_cast %c20_i32_228 : i32 to index
    %c0_229 = arith.constant 0 : index
    %c0_230 = arith.constant 0 : index
    %875 = vector.load %arg19[%874, %c0_229, %c0_230] : memref<24x8x256xf32, #tpu.memory_space<vmem>>, vector<1x8x256xf32>
    %876 = vector.shape_cast %875 : vector<1x8x256xf32> to vector<8x256xf32>
    %cst_231 = arith.constant dense<0.000000e+00> : vector<8x256xf32>
    %877 = tpu.matmul %873, %10, %cst_231 {dimension_numbers = #tpu.dot_dimension_numbers<[1], [0], [0], [1], [0, 0, 1, 1], [], []>} : vector<8x64xf32>, vector<64x256xf32>, vector<8x256xf32> -> vector<8x256xf32>
    %878 = arith.addf %876, %877 : vector<8x256xf32>
    %879 = math.tanh %878 : vector<8x256xf32>
    %880 = arith.mulf %879, %5 : vector<8x256xf32>
    %881 = arith.addf %880, %8 : vector<8x256xf32>
    %882 = vector.extract_strided_slice %881 {offsets = [0, 0], sizes = [8, 64], strides = [1, 1]} : vector<8x256xf32> to vector<8x64xf32>
    %883 = vector.extract_strided_slice %881 {offsets = [0, 64], sizes = [8, 64], strides = [1, 1]} : vector<8x256xf32> to vector<8x64xf32>
    %884 = vector.extract_strided_slice %881 {offsets = [0, 128], sizes = [8, 64], strides = [1, 1]} : vector<8x256xf32> to vector<8x64xf32>
    %885 = vector.extract_strided_slice %881 {offsets = [0, 192], sizes = [8, 64], strides = [1, 1]} : vector<8x256xf32> to vector<8x64xf32>
    %886 = arith.mulf %883, %871 : vector<8x64xf32>
    %887 = arith.mulf %882, %884 : vector<8x64xf32>
    %888 = arith.addf %886, %887 : vector<8x64xf32>
    %889 = math.tanh %888 : vector<8x64xf32>
    %890 = arith.mulf %885, %889 : vector<8x64xf32>
    %c21_i32_232 = arith.constant 21 : i32
    %891 = arith.index_cast %c21_i32_232 : i32 to index
    %c0_233 = arith.constant 0 : index
    %c0_234 = arith.constant 0 : index
    %892 = vector.load %arg19[%891, %c0_233, %c0_234] : memref<24x8x256xf32, #tpu.memory_space<vmem>>, vector<1x8x256xf32>
    %893 = vector.shape_cast %892 : vector<1x8x256xf32> to vector<8x256xf32>
    %cst_235 = arith.constant dense<0.000000e+00> : vector<8x256xf32>
    %894 = tpu.matmul %890, %10, %cst_235 {dimension_numbers = #tpu.dot_dimension_numbers<[1], [0], [0], [1], [0, 0, 1, 1], [], []>} : vector<8x64xf32>, vector<64x256xf32>, vector<8x256xf32> -> vector<8x256xf32>
    %895 = arith.addf %893, %894 : vector<8x256xf32>
    %896 = math.tanh %895 : vector<8x256xf32>
    %897 = arith.mulf %896, %5 : vector<8x256xf32>
    %898 = arith.addf %897, %8 : vector<8x256xf32>
    %899 = vector.extract_strided_slice %898 {offsets = [0, 0], sizes = [8, 64], strides = [1, 1]} : vector<8x256xf32> to vector<8x64xf32>
    %900 = vector.extract_strided_slice %898 {offsets = [0, 64], sizes = [8, 64], strides = [1, 1]} : vector<8x256xf32> to vector<8x64xf32>
    %901 = vector.extract_strided_slice %898 {offsets = [0, 128], sizes = [8, 64], strides = [1, 1]} : vector<8x256xf32> to vector<8x64xf32>
    %902 = vector.extract_strided_slice %898 {offsets = [0, 192], sizes = [8, 64], strides = [1, 1]} : vector<8x256xf32> to vector<8x64xf32>
    %903 = arith.mulf %900, %888 : vector<8x64xf32>
    %904 = arith.mulf %899, %901 : vector<8x64xf32>
    %905 = arith.addf %903, %904 : vector<8x64xf32>
    %906 = math.tanh %905 : vector<8x64xf32>
    %907 = arith.mulf %902, %906 : vector<8x64xf32>
    %c22_i32_236 = arith.constant 22 : i32
    %908 = arith.index_cast %c22_i32_236 : i32 to index
    %c0_237 = arith.constant 0 : index
    %c0_238 = arith.constant 0 : index
    %909 = vector.load %arg19[%908, %c0_237, %c0_238] : memref<24x8x256xf32, #tpu.memory_space<vmem>>, vector<1x8x256xf32>
    %910 = vector.shape_cast %909 : vector<1x8x256xf32> to vector<8x256xf32>
    %cst_239 = arith.constant dense<0.000000e+00> : vector<8x256xf32>
    %911 = tpu.matmul %907, %10, %cst_239 {dimension_numbers = #tpu.dot_dimension_numbers<[1], [0], [0], [1], [0, 0, 1, 1], [], []>} : vector<8x64xf32>, vector<64x256xf32>, vector<8x256xf32> -> vector<8x256xf32>
    %912 = arith.addf %910, %911 : vector<8x256xf32>
    %913 = math.tanh %912 : vector<8x256xf32>
    %914 = arith.mulf %913, %5 : vector<8x256xf32>
    %915 = arith.addf %914, %8 : vector<8x256xf32>
    %916 = vector.extract_strided_slice %915 {offsets = [0, 0], sizes = [8, 64], strides = [1, 1]} : vector<8x256xf32> to vector<8x64xf32>
    %917 = vector.extract_strided_slice %915 {offsets = [0, 64], sizes = [8, 64], strides = [1, 1]} : vector<8x256xf32> to vector<8x64xf32>
    %918 = vector.extract_strided_slice %915 {offsets = [0, 128], sizes = [8, 64], strides = [1, 1]} : vector<8x256xf32> to vector<8x64xf32>
    %919 = vector.extract_strided_slice %915 {offsets = [0, 192], sizes = [8, 64], strides = [1, 1]} : vector<8x256xf32> to vector<8x64xf32>
    %920 = arith.mulf %917, %905 : vector<8x64xf32>
    %921 = arith.mulf %916, %918 : vector<8x64xf32>
    %922 = arith.addf %920, %921 : vector<8x64xf32>
    %923 = math.tanh %922 : vector<8x64xf32>
    %924 = arith.mulf %919, %923 : vector<8x64xf32>
    %c23_i32_240 = arith.constant 23 : i32
    %925 = arith.index_cast %c23_i32_240 : i32 to index
    %c0_241 = arith.constant 0 : index
    %c0_242 = arith.constant 0 : index
    %926 = vector.load %arg19[%925, %c0_241, %c0_242] : memref<24x8x256xf32, #tpu.memory_space<vmem>>, vector<1x8x256xf32>
    %927 = vector.shape_cast %926 : vector<1x8x256xf32> to vector<8x256xf32>
    %cst_243 = arith.constant dense<0.000000e+00> : vector<8x256xf32>
    %928 = tpu.matmul %924, %10, %cst_243 {dimension_numbers = #tpu.dot_dimension_numbers<[1], [0], [0], [1], [0, 0, 1, 1], [], []>} : vector<8x64xf32>, vector<64x256xf32>, vector<8x256xf32> -> vector<8x256xf32>
    %929 = arith.addf %927, %928 : vector<8x256xf32>
    %930 = math.tanh %929 : vector<8x256xf32>
    %931 = arith.mulf %930, %5 : vector<8x256xf32>
    %932 = arith.addf %931, %8 : vector<8x256xf32>
    %933 = vector.extract_strided_slice %932 {offsets = [0, 0], sizes = [8, 64], strides = [1, 1]} : vector<8x256xf32> to vector<8x64xf32>
    %934 = vector.extract_strided_slice %932 {offsets = [0, 64], sizes = [8, 64], strides = [1, 1]} : vector<8x256xf32> to vector<8x64xf32>
    %935 = vector.extract_strided_slice %932 {offsets = [0, 128], sizes = [8, 64], strides = [1, 1]} : vector<8x256xf32> to vector<8x64xf32>
    %936 = vector.extract_strided_slice %932 {offsets = [0, 192], sizes = [8, 64], strides = [1, 1]} : vector<8x256xf32> to vector<8x64xf32>
    %937 = arith.mulf %934, %922 : vector<8x64xf32>
    %938 = arith.mulf %933, %935 : vector<8x64xf32>
    %939 = arith.addf %937, %938 : vector<8x64xf32>
    %940 = math.tanh %939 : vector<8x64xf32>
    %941 = arith.mulf %936, %940 : vector<8x64xf32>
    %c24_i32_244 = arith.constant 24 : i32
    %c0_245 = arith.constant 0 : index
    %c0_246 = arith.constant 0 : index
    %942 = vector.load %arg8[%c0_245, %c0_246] : memref<64x32xf32, #tpu.memory_space<vmem>>, vector<64x32xf32>
    %cst_247 = arith.constant dense<0.000000e+00> : vector<8x32xf32>
    %943 = tpu.matmul %941, %942, %cst_247 {dimension_numbers = #tpu.dot_dimension_numbers<[1], [0], [0], [1], [0, 0, 1, 1], [], []>} : vector<8x64xf32>, vector<64x32xf32>, vector<8x32xf32> -> vector<8x32xf32>
    %c0_248 = arith.constant 0 : index
    %c0_249 = arith.constant 0 : index
    %944 = vector.load %arg9[%c0_248, %c0_249] : memref<1x32xf32, #tpu.memory_space<vmem>>, vector<1x32xf32>
    %945 = vector.broadcast %944 : vector<1x32xf32> to vector<8x32xf32>
    %946 = arith.addf %943, %945 : vector<8x32xf32>
    %cst_250 = arith.constant 0.000000e+00 : f32
    %947 = vector.broadcast %cst_250 : f32 to vector<8x32xf32>
    %948 = arith.maximumf %946, %947 : vector<8x32xf32>
    %c0_251 = arith.constant 0 : index
    %c0_252 = arith.constant 0 : index
    %949 = vector.load %arg10[%c0_251, %c0_252] : memref<1x32xf32, #tpu.memory_space<vmem>>, vector<1x32xf32>
    %950 = vector.broadcast %949 : vector<1x32xf32> to vector<8x32xf32>
    %951 = arith.mulf %948, %950 : vector<8x32xf32>
    %c0_253 = arith.constant 0 : index
    %c0_254 = arith.constant 0 : index
    %952 = vector.load %arg11[%c0_253, %c0_254] : memref<1x32xf32, #tpu.memory_space<vmem>>, vector<1x32xf32>
    %953 = vector.broadcast %952 : vector<1x32xf32> to vector<8x32xf32>
    %954 = arith.addf %951, %953 : vector<8x32xf32>
    %c0_255 = arith.constant 0 : index
    %c0_256 = arith.constant 0 : index
    %955 = vector.load %arg12[%c0_255, %c0_256] : memref<32x32xf32, #tpu.memory_space<vmem>>, vector<32x32xf32>
    %cst_257 = arith.constant dense<0.000000e+00> : vector<8x32xf32>
    %956 = tpu.matmul %954, %955, %cst_257 {dimension_numbers = #tpu.dot_dimension_numbers<[1], [0], [0], [1], [0, 0, 1, 1], [], []>} : vector<8x32xf32>, vector<32x32xf32>, vector<8x32xf32> -> vector<8x32xf32>
    %c0_258 = arith.constant 0 : index
    %c0_259 = arith.constant 0 : index
    %957 = vector.load %arg13[%c0_258, %c0_259] : memref<1x32xf32, #tpu.memory_space<vmem>>, vector<1x32xf32>
    %958 = vector.broadcast %957 : vector<1x32xf32> to vector<8x32xf32>
    %959 = arith.addf %956, %958 : vector<8x32xf32>
    %cst_260 = arith.constant 0.000000e+00 : f32
    %960 = vector.broadcast %cst_260 : f32 to vector<8x32xf32>
    %961 = arith.maximumf %959, %960 : vector<8x32xf32>
    %c0_261 = arith.constant 0 : index
    %c0_262 = arith.constant 0 : index
    %962 = vector.load %arg14[%c0_261, %c0_262] : memref<1x32xf32, #tpu.memory_space<vmem>>, vector<1x32xf32>
    %963 = vector.broadcast %962 : vector<1x32xf32> to vector<8x32xf32>
    %964 = arith.mulf %961, %963 : vector<8x32xf32>
    %c0_263 = arith.constant 0 : index
    %c0_264 = arith.constant 0 : index
    %965 = vector.load %arg15[%c0_263, %c0_264] : memref<1x32xf32, #tpu.memory_space<vmem>>, vector<1x32xf32>
    %966 = vector.broadcast %965 : vector<1x32xf32> to vector<8x32xf32>
    %967 = arith.addf %964, %966 : vector<8x32xf32>
    %c0_265 = arith.constant 0 : index
    %c0_266 = arith.constant 0 : index
    %968 = vector.load %arg16[%c0_265, %c0_266] : memref<32x1xf32, #tpu.memory_space<vmem>>, vector<32x1xf32>
    %cst_267 = arith.constant dense<0.000000e+00> : vector<8x1xf32>
    %969 = tpu.matmul %967, %968, %cst_267 {dimension_numbers = #tpu.dot_dimension_numbers<[1], [0], [0], [1], [0, 0, 1, 1], [], []>} : vector<8x32xf32>, vector<32x1xf32>, vector<8x1xf32> -> vector<8x1xf32>
    %c0_268 = arith.constant 0 : index
    %c0_269 = arith.constant 0 : index
    %970 = vector.load %arg17[%c0_268, %c0_269] : memref<1x1xf32, #tpu.memory_space<vmem>>, vector<1x1xf32>
    %971 = vector.broadcast %970 : vector<1x1xf32> to vector<8x1xf32>
    %972 = arith.addf %969, %971 : vector<8x1xf32>
    %c0_270 = arith.constant 0 : index
    %c0_271 = arith.constant 0 : index
    %973 = vector.load %arg18[%c0_270, %c0_271] : memref<8x1xf32, #tpu.memory_space<vmem>>, vector<8x1xf32>
    tpu.vector_store %arg18[%c0_270, %c0_271], %972 {strides = array<i32>} : memref<8x1xf32, #tpu.memory_space<vmem>>, vector<8x1xf32>,
    return
  }
  func.func @transform_0(%arg0: i32) -> (i32, i32, i32) {
    %c0_i32 = arith.constant 0 : i32
    %c0_i32_0 = arith.constant 0 : i32
    %c0_i32_1 = arith.constant 0 : i32
    return %c0_i32, %arg0, %c0_i32_0 : i32, i32, i32
  }
  func.func @transform_1(%arg0: i32) -> (i32, i32) {
    %c0_i32 = arith.constant 0 : i32
    %c0_i32_0 = arith.constant 0 : i32
    %c0_i32_1 = arith.constant 0 : i32
    return %c0_i32, %c0_i32_0 : i32, i32
  }
  func.func @transform_2(%arg0: i32) -> (i32, i32) {
    %c0_i32 = arith.constant 0 : i32
    %c0_i32_0 = arith.constant 0 : i32
    %c0_i32_1 = arith.constant 0 : i32
    return %c0_i32, %c0_i32_0 : i32, i32
  }
  func.func @transform_3(%arg0: i32) -> (i32, i32) {
    %c0_i32 = arith.constant 0 : i32
    %c0_i32_0 = arith.constant 0 : i32
    %c0_i32_1 = arith.constant 0 : i32
    return %c0_i32, %c0_i32_0 : i32, i32
  }
  func.func @transform_4(%arg0: i32) -> (i32, i32) {
    %c0_i32 = arith.constant 0 : i32
    %c0_i32_0 = arith.constant 0 : i32
    %c0_i32_1 = arith.constant 0 : i32
    return %c0_i32, %c0_i32_0 : i32, i32
  }
  func.func @transform_5(%arg0: i32) -> (i32, i32) {
    %c0_i32 = arith.constant 0 : i32
    %c0_i32_0 = arith.constant 0 : i32
    %c0_i32_1 = arith.constant 0 : i32
    return %c0_i32, %c0_i32_0 : i32, i32
  }
  func.func @transform_6(%arg0: i32) -> (i32, i32) {
    %c0_i32 = arith.constant 0 : i32
    %c0_i32_0 = arith.constant 0 : i32
    %c0_i32_1 = arith.constant 0 : i32
    return %c0_i32, %c0_i32_0 : i32, i32
  }
  func.func @transform_7(%arg0: i32) -> (i32, i32) {
    %c0_i32 = arith.constant 0 : i32
    %c0_i32_0 = arith.constant 0 : i32
    %c0_i32_1 = arith.constant 0 : i32
    return %c0_i32, %c0_i32_0 : i32, i32
  }
  func.func @transform_8(%arg0: i32) -> (i32, i32) {
    %c0_i32 = arith.constant 0 : i32
    %c0_i32_0 = arith.constant 0 : i32
    %c0_i32_1 = arith.constant 0 : i32
    return %c0_i32, %c0_i32_0 : i32, i32
  }
  func.func @transform_9(%arg0: i32) -> (i32, i32) {
    %c0_i32 = arith.constant 0 : i32
    %c0_i32_0 = arith.constant 0 : i32
    %c0_i32_1 = arith.constant 0 : i32
    return %c0_i32, %c0_i32_0 : i32, i32
  }
  func.func @transform_10(%arg0: i32) -> (i32, i32) {
    %c0_i32 = arith.constant 0 : i32
    %c0_i32_0 = arith.constant 0 : i32
    %c0_i32_1 = arith.constant 0 : i32
    return %c0_i32, %c0_i32_0 : i32, i32
  }
  func.func @transform_11(%arg0: i32) -> (i32, i32) {
    %c0_i32 = arith.constant 0 : i32
    %c0_i32_0 = arith.constant 0 : i32
    %c0_i32_1 = arith.constant 0 : i32
    return %c0_i32, %c0_i32_0 : i32, i32
  }
  func.func @transform_12(%arg0: i32) -> (i32, i32) {
    %c0_i32 = arith.constant 0 : i32
    %c0_i32_0 = arith.constant 0 : i32
    %c0_i32_1 = arith.constant 0 : i32
    return %c0_i32, %c0_i32_0 : i32, i32
  }
  func.func @transform_13(%arg0: i32) -> (i32, i32) {
    %c0_i32 = arith.constant 0 : i32
    %c0_i32_0 = arith.constant 0 : i32
    %c0_i32_1 = arith.constant 0 : i32
    return %c0_i32, %c0_i32_0 : i32, i32
  }
  func.func @transform_14(%arg0: i32) -> (i32, i32) {
    %c0_i32 = arith.constant 0 : i32
    %c0_i32_0 = arith.constant 0 : i32
    %c0_i32_1 = arith.constant 0 : i32
    return %c0_i32, %c0_i32_0 : i32, i32
  }
  func.func @transform_15(%arg0: i32) -> (i32, i32) {
    %c0_i32 = arith.constant 0 : i32
    %c0_i32_0 = arith.constant 0 : i32
    %c0_i32_1 = arith.constant 0 : i32
    return %c0_i32, %c0_i32_0 : i32, i32
  }
  func.func @transform_16(%arg0: i32) -> (i32, i32) {
    %c0_i32 = arith.constant 0 : i32
    %c0_i32_0 = arith.constant 0 : i32
    %c0_i32_1 = arith.constant 0 : i32
    return %c0_i32, %c0_i32_0 : i32, i32
  }
  func.func @transform_17(%arg0: i32) -> (i32, i32) {
    %c0_i32 = arith.constant 0 : i32
    %c0_i32_0 = arith.constant 0 : i32
    return %arg0, %c0_i32 : i32, i32
  }
}

</mosaic_0001>

<llo_original>
// kernel: tpu_custom_call.1
$region0: #{tpu_custom_call.1}
  #allocation0 [shape = 'u32[]', space=smem, size = 0x4, offset = 0x4, fixed_abs, tag = 'smem constant byte address 0x4 - core index']
  #allocation1 [shape = 'u32[144,128]{1,0:T(1,128)}', space=vmem, size = 0x12000, scoped, tag = 'internal scratch']
  #allocation2 [shape = 'f32[24,8,256]{2,1,0:T(8,128)}', space=vmem, size = 0x30000, scoped, tag = 'scratch operand']
  #allocation3 [shape = 'f32[24,8,64]{2,1,0:T(8,128)}', space=vmem, size = 0x18000, scoped, tag = 'scratch operand']
  #allocation4 [shape = 'f32[1,1]{1,0:T(1,128)S(1)}', space=vmem, size = 0x200, scoped, tag = 'scoped memory for tpu_custom_call.1']
  %s0 = inlined_call_operand.vmem [shape: f32[24,8,14], index: 0, kind: input, shape index: {}]
  %s1 = inlined_call_operand.vmem [shape: f32[14,256], index: 1, kind: input, shape index: {}]
  %s2 = inlined_call_operand.vmem [shape: f32[64,256], index: 2, kind: input, shape index: {}]
  %s3 = inlined_call_operand.vmem [shape: f32[1,256], index: 3, kind: input, shape index: {}]
  %s4 = inlined_call_operand.vmem [shape: f32[64,256], index: 4, kind: input, shape index: {}]
  %s5 = inlined_call_operand.vmem [shape: f32[64,256], index: 5, kind: input, shape index: {}]
  %s6 = inlined_call_operand.vmem [shape: f32[1,256], index: 6, kind: input, shape index: {}]
  %s7 = inlined_call_operand.vmem [shape: f32[64,32], index: 7, kind: input, shape index: {}]
  %s8 = inlined_call_operand.vmem [shape: f32[1,32], index: 8, kind: input, shape index: {}]
  %s9 = inlined_call_operand.vmem [shape: f32[1,32], index: 9, kind: input, shape index: {}]
  %s10 = inlined_call_operand.vmem [shape: f32[1,32], index: 10, kind: input, shape index: {}]
  %s11 = inlined_call_operand.hbm [shape: f32[32,32], index: 11, kind: input, shape index: {}]
  %s12 = inlined_call_operand.vmem [shape: f32[1,32], index: 12, kind: input, shape index: {}]
  %s13 = inlined_call_operand.vmem [shape: f32[1,32], index: 13, kind: input, shape index: {}]
  %s14 = inlined_call_operand.vmem [shape: f32[1,32], index: 14, kind: input, shape index: {}]
  %s15 = inlined_call_operand.vmem [shape: f32[32,1], index: 15, kind: input, shape index: {}]
  %s16 = inlined_call_operand.<no memory space> [shape: f32[1,1], index: 16, kind: input, shape index: {}]
  %s17 = inlined_call_operand.vmem [shape: f32[8,1], index: 17, kind: output, shape index: {}]
  %s18 = sld [smem:[#allocation0]]
  $region82: #{tpu_custom_call.1} parent=0
    _
  %s20 = ssub.s32 1, %s18
  %s21 = scalar_select 0, %s20, %s18
  %v22 = vstv %s16
  %23 = vst [vmem:[#allocation4] sm:$0x1] %v22
  $region1: #{tpu_custom_call.1} parent=0
    #allocation5 [shape = 'u8[16384]{0}', space=vmem, size = 0x4000, scoped, tag = 'input window, operand 11, single buffered']
    #allocation6 [shape = 's32[1]{0}', space=sflag, size = 0x4, scoped, tag = 'scoped memory for tpu_custom_call.1']
    %24 = vsyncpa [#allocation6], 0
    // Predicated region
    $region2: #{tpu_custom_call.1} parent=1 // pred_check
      _
    $region3: #{tpu_custom_call.1} parent=1 // pred_check_branch
      %26 = sbr.rel (0) target = $region5
    $region4: #{tpu_custom_call.1} parent=1 // pred_region
      _
    $region5: #{tpu_custom_call.1} parent=1 // pred_fallthru
      _
    // Predicated region
    $region6: #{tpu_custom_call.1} parent=1 // pred_check
      _
    $region7: #{tpu_custom_call.1} parent=1 // pred_check_branch
      %28 = sbr.rel (0) target = $region9
    $region8: #{tpu_custom_call.1} parent=1 // pred_region
      _
    $region9: #{tpu_custom_call.1} parent=1 // pred_fallthru
      _
    // Predicated region
    $region10: #{tpu_custom_call.1} parent=1 // pred_check
      _
    $region11: #{tpu_custom_call.1} parent=1 // pred_check_branch
      %30 = sbr.rel (0) target = $region13
    $region12: #{tpu_custom_call.1} parent=1 // pred_region
      _
    $region13: #{tpu_custom_call.1} parent=1 // pred_fallthru
      _
    // Predicated region
    $region14: #{tpu_custom_call.1} parent=1 // pred_check
      _
    $region15: #{tpu_custom_call.1} parent=1 // pred_check_branch
      %32 = sbr.rel (0) target = $region17
    $region16: #{tpu_custom_call.1} parent=1 // pred_region
      _
    $region17: #{tpu_custom_call.1} parent=1 // pred_fallthru
      _
    // Predicated region
    $region18: #{tpu_custom_call.1} parent=1 // pred_check
      _
    $region19: #{tpu_custom_call.1} parent=1 // pred_check_branch
      %34 = sbr.rel (0) target = $region21
    $region20: #{tpu_custom_call.1} parent=1 // pred_region
      _
    $region21: #{tpu_custom_call.1} parent=1 // pred_fallthru
      _
    // Predicated region
    $region22: #{tpu_custom_call.1} parent=1 // pred_check
      _
    $region23: #{tpu_custom_call.1} parent=1 // pred_check_branch
      %36 = sbr.rel (0) target = $region25
    $region24: #{tpu_custom_call.1} parent=1 // pred_region
      _
    $region25: #{tpu_custom_call.1} parent=1 // pred_fallthru
      _
    // Predicated region
    $region26: #{tpu_custom_call.1} parent=1 // pred_check
      _
    $region27: #{tpu_custom_call.1} parent=1 // pred_check_branch
      %38 = sbr.rel (0) target = $region29
    $region28: #{tpu_custom_call.1} parent=1 // pred_region
      _
    $region29: #{tpu_custom_call.1} parent=1 // pred_fallthru
      _
    // Predicated region
    $region30: #{tpu_custom_call.1} parent=1 // pred_check
      _
    $region31: #{tpu_custom_call.1} parent=1 // pred_check_branch
      %40 = sbr.rel (0) target = $region33
    $region32: #{tpu_custom_call.1} parent=1 // pred_region
      _
    $region33: #{tpu_custom_call.1} parent=1 // pred_fallthru
      _
    // Predicated region
    $region34: #{tpu_custom_call.1} parent=1 // pred_check
      _
    $region35: #{tpu_custom_call.1} parent=1 // pred_check_branch
      %42 = sbr.rel (0) target = $region37
    $region36: #{tpu_custom_call.1} parent=1 // pred_region
      _
    $region37: #{tpu_custom_call.1} parent=1 // pred_fallthru
      _
    // Predicated region
    $region38: #{tpu_custom_call.1} parent=1 // pred_check
      _
    $region39: #{tpu_custom_call.1} parent=1 // pred_check_branch
      %44 = sbr.rel (0) target = $region41
    $region40: #{tpu_custom_call.1} parent=1 // pred_region
      _
    $region41: #{tpu_custom_call.1} parent=1 // pred_fallthru
      _
    // Predicated region
    $region42: #{tpu_custom_call.1} parent=1 // pred_check
      _
    $region43: #{tpu_custom_call.1} parent=1 // pred_check_branch
      %46 = sbr.rel (0) target = $region45
    $region44: #{tpu_custom_call.1} parent=1 // pred_region
      _
    $region45: #{tpu_custom_call.1} parent=1 // pred_fallthru
      _
    // Predicated region
    $region46: #{tpu_custom_call.1} parent=1 // pred_check
      _
    $region47: #{tpu_custom_call.1} parent=1 // pred_check_branch
      %48 = sbr.rel (0) target = $region49
    $region48: #{tpu_custom_call.1} parent=1 // pred_region
      %s50 = ssub.s32 512, 512
      %51 = vsyncadd [#allocation6], %s50
      %s52 = sshll.u32 [#allocation5], 4
      %s53 = int_to_ptr.vmem [resolvable:$true] %s52
      %58 = dma.hbm_to_vmem [thread:$0]  %s11, 512, %s53, [#allocation6], 128, 128, 8
    $region49: #{tpu_custom_call.1} parent=1 // pred_fallthru
      _
    // Predicated region
    $region50: #{tpu_custom_call.1} parent=1 // pred_check
      _
    $region51: #{tpu_custom_call.1} parent=1 // pred_check_branch
      %60 = sbr.rel (0) target = $region53
    $region52: #{tpu_custom_call.1} parent=1 // pred_region
      _
    $region53: #{tpu_custom_call.1} parent=1 // pred_fallthru
      _
    // Predicated region
    $region54: #{tpu_custom_call.1} parent=1 // pred_check
      _
    $region55: #{tpu_custom_call.1} parent=1 // pred_check_branch
      %62 = sbr.rel (0) target = $region57
    $region56: #{tpu_custom_call.1} parent=1 // pred_region
      _
    $region57: #{tpu_custom_call.1} parent=1 // pred_fallthru
      _
    // Predicated region
    $region58: #{tpu_custom_call.1} parent=1 // pred_check
      _
    $region59: #{tpu_custom_call.1} parent=1 // pred_check_branch
      %64 = sbr.rel (0) target = $region61
    $region60: #{tpu_custom_call.1} parent=1 // pred_region
      _
    $region61: #{tpu_custom_call.1} parent=1 // pred_fallthru
      _
    // Predicated region
    $region62: #{tpu_custom_call.1} parent=1 // pred_check
      _
    $region63: #{tpu_custom_call.1} parent=1 // pred_check_branch
      %66 = sbr.rel (0) target = $region65
    $region64: #{tpu_custom_call.1} parent=1 // pred_region
      _
    $region65: #{tpu_custom_call.1} parent=1 // pred_fallthru
      _
    // Predicated region
    $region66: #{tpu_custom_call.1} parent=1 // pred_check
      _
    $region67: #{tpu_custom_call.1} parent=1 // pred_check_branch
      %68 = sbr.rel (0) target = $region69
    $region68: #{tpu_custom_call.1} parent=1 // pred_region
      _
    $region69: #{tpu_custom_call.1} parent=1 // pred_fallthru
      _
    // Predicated region
    $region70: #{tpu_custom_call.1} parent=1 // pred_check
      _
    $region71: #{tpu_custom_call.1} parent=1 // pred_check_branch
      %70 = sbr.rel (0) target = $region73
    $region72: #{tpu_custom_call.1} parent=1 // pred_region
      %71 = dma.done [#allocation6], 512
    $region73: #{tpu_custom_call.1} parent=1 // pred_fallthru
      _
    %vm72 = vcmask 523264
    %v73 = vsel %vm72, 1.0, 0.5
    %v74 = vlaneseq
    %v75 = vshrl.u32 %v74, 7
    %v76 = vsub.s32 0, %v75
    %v77 = vlaneseq
    %v78 = vshrl.u32 %v77, 7
    %v79 = vsub.s32 0, %v78
    %v80 = vrot.slane %v73, %v79
    %v81 = vsel %vm72, 0.0, 0.5
    %v82 = vlaneseq
    %v83 = vshrl.u32 %v82, 7
    %v84 = vsub.s32 0, %v83
    %v85 = vrot.slane %v81, %v84
    %v86 = vld [vmem:[%s2] sm:$0xff]
    %v87 = vld [vmem:[%s2 + $0x8] sm:$0xff]
    %v88 = vld [vmem:[%s2 + $0x10] sm:$0xff]
    %v89 = vld [vmem:[%s2 + $0x18] sm:$0xff]
    %v90 = vld [vmem:[%s2 + $0x20] sm:$0xff]
    %v91 = vld [vmem:[%s2 + $0x28] sm:$0xff]
    %v92 = vld [vmem:[%s2 + $0x30] sm:$0xff]
    %v93 = vld [vmem:[%s2 + $0x38] sm:$0xff]
    %v94 = vld [vmem:[%s2 + $0x40] sm:$0xff]
    %v95 = vld [vmem:[%s2 + $0x48] sm:$0xff]
    %v96 = vld [vmem:[%s2 + $0x50] sm:$0xff]
    %v97 = vld [vmem:[%s2 + $0x58] sm:$0xff]
    %v98 = vld [vmem:[%s2 + $0x60] sm:$0xff]
    %v99 = vld [vmem:[%s2 + $0x68] sm:$0xff]
    %v100 = vld [vmem:[%s2 + $0x70] sm:$0xff]
    %v101 = vld [vmem:[%s2 + $0x78] sm:$0xff]
    %v102 = vld [vmem:[%s5] sm:$0xff]
    %v103 = vld [vmem:[%s5 + $0x8] sm:$0xff]
    %v104 = vld [vmem:[%s5 + $0x10] sm:$0xff]
    %v105 = vld [vmem:[%s5 + $0x18] sm:$0xff]
    %v106 = vld [vmem:[%s5 + $0x20] sm:$0xff]
    %v107 = vld [vmem:[%s5 + $0x28] sm:$0xff]
    %v108 = vld [vmem:[%s5 + $0x30] sm:$0xff]
    %v109 = vld [vmem:[%s5 + $0x38] sm:$0xff]
    %v110 = vld [vmem:[%s5 + $0x40] sm:$0xff]
    %v111 = vld [vmem:[%s5 + $0x48] sm:$0xff]
    %v112 = vld [vmem:[%s5 + $0x50] sm:$0xff]
    %v113 = vld [vmem:[%s5 + $0x58] sm:$0xff]
    %v114 = vld [vmem:[%s5 + $0x60] sm:$0xff]
    %v115 = vld [vmem:[%s5 + $0x68] sm:$0xff]
    %v116 = vld [vmem:[%s5 + $0x70] sm:$0xff]
    %v117 = vld [vmem:[%s5 + $0x78] sm:$0xff]
    %v118 = vld [vmem:[%s0] sm:$0xff]
    %v119 = vld [vmem:[%s0 + $0x8] sm:$0xff]
    %v120 = vld [vmem:[%s0 + $0x10] sm:$0xff]
    %v121 = vld [vmem:[%s0 + $0x18] sm:$0xff]
    %v122 = vld [vmem:[%s0 + $0x20] sm:$0xff]
    %v123 = vld [vmem:[%s0 + $0x28] sm:$0xff]
    %v124 = vld [vmem:[%s0 + $0x30] sm:$0xff]
    %v125 = vld [vmem:[%s0 + $0x38] sm:$0xff]
    %v126 = vld [vmem:[%s0 + $0x40] sm:$0xff]
    %v127 = vld [vmem:[%s0 + $0x48] sm:$0xff]
    %v128 = vld [vmem:[%s0 + $0x50] sm:$0xff]
    %v129 = vld [vmem:[%s0 + $0x58] sm:$0xff]
    %v130 = vld [vmem:[%s0 + $0x60] sm:$0xff]
    %v131 = vld [vmem:[%s0 + $0x68] sm:$0xff]
    %v132 = vld [vmem:[%s0 + $0x70] sm:$0xff]
    %v133 = vld [vmem:[%s0 + $0x78] sm:$0xff]
    %v134 = vld [vmem:[%s0 + $0x80] sm:$0xff]
    %v135 = vld [vmem:[%s0 + $0x88] sm:$0xff]
    %v136 = vld [vmem:[%s0 + $0x90] sm:$0xff]
    %v137 = vld [vmem:[%s0 + $0x98] sm:$0xff]
    %v138 = vld [vmem:[%s0 + $0xa0] sm:$0xff]
    %v139 = vld [vmem:[%s0 + $0xa8] sm:$0xff]
    %v140 = vld [vmem:[%s0 + $0xb0] sm:$0xff]
    %v141 = vld [vmem:[%s0 + $0xb8] sm:$0xff]
    %v142 = vld [vmem:[%s1] sm:$0xff]
    %v143 = vld [vmem:[%s1 + $0x8] sm:$0xff]
    %v144 = vld [vmem:[%s1 + $0x10] sm:$0x3f]
    %v145 = vld [vmem:[%s1 + $0x18] sm:$0x3f]
    %v146 = vld [vmem:[%s3] sm:$0x3]
    %v148 = vlaneseq
    %v149 = vshrl.u32 %v148, 7
    %v150 = vsub.s32 0, %v149
    %v151 = vrot.slane %v146, %v150
    %v152 = vlaneseq
    %v153 = vshrl.u32 %v152, 7
    %v154 = vsub.s32 1, %v153
    %v155 = vrot.slane %v146, %v154
    %vm158 = vcmask 113664
    %v160 = vsel %vm158, %v118, 0
    %v163 = vsel %vm158, %v119, 0
    %v166 = vsel %vm158, %v120, 0
    %v169 = vsel %vm158, %v121, 0
    %v172 = vsel %vm158, %v122, 0
    %v175 = vsel %vm158, %v123, 0
    %v178 = vsel %vm158, %v124, 0
    %v181 = vsel %vm158, %v125, 0
    %v184 = vsel %vm158, %v126, 0
    %v187 = vsel %vm158, %v127, 0
    %v190 = vsel %vm158, %v128, 0
    %v193 = vsel %vm158, %v129, 0
    %v196 = vsel %vm158, %v130, 0
    %v199 = vsel %vm158, %v131, 0
    %v202 = vsel %vm158, %v132, 0
    %v205 = vsel %vm158, %v133, 0
    %v208 = vsel %vm158, %v134, 0
    %v211 = vsel %vm158, %v135, 0
    %v214 = vsel %vm158, %v136, 0
    %v217 = vsel %vm158, %v137, 0
    %v220 = vsel %vm158, %v138, 0
    %v223 = vsel %vm158, %v139, 0
    %v226 = vsel %vm158, %v140, 0
    %v229 = vsel %vm158, %v141, 0
    %vm231 = vcmask 1045504
    %v233 = vsel %vm231, %v144, 0
    %v236 = vsel %vm231, %v145, 0
    %238 = vmatprep.subr.mxu0 %v143
    %239 = vmatpush1.msra.mxu0 %v142
    %240 = vmatprep.subr.mxu0 %v236
    %241 = vmatpush1.msra.mxu0 %v233
    %242 = vmatprep.subr.mxu0 0.0
    %243 = vmatpush1.msra.mxu0 0.0
    %244 = vmatprep.subr.mxu0 0.0
    %245 = vmatpush1.msra.mxu0 0.0
    %246 = vmatprep.subr.mxu0 0.0
    %247 = vmatpush1.msra.mxu0 0.0
    %248 = vmatprep.subr.mxu0 0.0
    %249 = vmatpush1.msra.mxu0 0.0
    %250 = vmatprep.subr.mxu0 0.0
    %251 = vmatpush1.msra.mxu0 0.0
    %252 = vmatprep.subr.mxu0 0.0
    %253 = vmatpush1.msra.mxu0 0.0
    %254 = vmatprep.subr.mxu0 0.0
    %255 = vmatpush1.msra.mxu0 0.0
    %256 = vmatprep.subr.mxu0 0.0
    %257 = vmatpush1.msra.mxu0 0.0
    %258 = vmatprep.subr.mxu0 0.0
    %259 = vmatpush1.msra.mxu0 0.0
    %260 = vmatprep.subr.mxu0 0.0
    %261 = vmatpush1.msra.mxu0 0.0
    %262 = vmatprep.subr.mxu0 0.0
    %263 = vmatpush1.msra.mxu0 0.0
    %264 = vmatprep.subr.mxu0 0.0
    %265 = vmatpush1.msra.mxu0 0.0
    %266 = vmatprep.subr.mxu0 0.0
    %267 = vmatpush1.msra.mxu0 0.0
    %268 = vmatprep.subr.mxu0 0.0
    %269 = vmatpush1.msra.mxu0 0.0
    %270 = vmatprep.subr.mxu0 0.0
    %271 = vmatpush1.msra.mxu0 0.0
    %272 = vmatprep.subr.mxu0 0.0
    %273 = vmatpush1.msra.mxu0 0.0
    %274 = vmatprep.subr.mxu0 0.0
    %275 = vmatpush1.msra.mxu0 0.0
    %276 = vmatprep.subr.mxu0 0.0
    %277 = vmatpush1.msra.mxu0 0.0
    %278 = vmatprep.subr.mxu0 0.0
    %279 = vmatpush1.msra.mxu0 0.0
    %280 = vmatprep.subr.mxu0 0.0
    %281 = vmatpush1.msra.mxu0 0.0
    %282 = vmatprep.subr.mxu0 0.0
    %283 = vmatpush1.msra.mxu0 0.0
    %284 = vmatprep.subr.mxu0 0.0
    %285 = vmatpush1.msra.mxu0 0.0
    %286 = vmatprep.subr.mxu0 0.0
    %287 = vmatpush1.msra.mxu0 0.0
    %288 = vmatprep.subr.mxu0 0.0
    %289 = vmatpush1.msra.mxu0 0.0
    %290 = vmatprep.subr.mxu0 0.0
    %291 = vmatpush1.msra.mxu0 0.0
    %292 = vmatprep.subr.mxu0 0.0
    %293 = vmatpush1.msra.mxu0 0.0
    %294 = vmatprep.subr.mxu0 0.0
    %295 = vmatpush1.msra.mxu0 0.0
    %296 = vmatprep.subr.mxu0 0.0
    %297 = vmatpush1.msra.mxu0 0.0
    %298 = vmatprep.subr.mxu0 0.0
    %299 = vmatpush1.msra.mxu0 0.0
    %300 = vmatprep.subr.mxu0 0.0
    %301 = vmatpush1.msra.mxu0 0.0
    %302 = vmatprep.mubr.f32.mxu0 0.0
    %303 = vmatmul.mubr.f32.gmra.mrb[0].mxu0 %v160
    %v304 = vpop.f32.mrb[0].mxu0
    %v305 = vadd.f32 %v151, %v304
    %v306 = vpop.f32.mrb[0].mxu0
    %v307 = vadd.f32 %v155, %v306
    %308 = vmatprep.mubr.f32.mxu0 0.0
    %309 = vmatmul.mubr.f32.gmra.mrb[0].mxu0 %v163
    %v310 = vpop.f32.mrb[0].mxu0
    %v311 = vadd.f32 %v151, %v310
    %v312 = vpop.f32.mrb[0].mxu0
    %v313 = vadd.f32 %v155, %v312
    %314 = vmatprep.mubr.f32.mxu0 0.0
    %315 = vmatmul.mubr.f32.gmra.mrb[0].mxu0 %v166
    %v316 = vpop.f32.mrb[0].mxu0
    %v317 = vadd.f32 %v151, %v316
    %v318 = vpop.f32.mrb[0].mxu0
    %v319 = vadd.f32 %v155, %v318
    %320 = vmatprep.mubr.f32.mxu0 0.0
    %321 = vmatmul.mubr.f32.gmra.mrb[0].mxu0 %v169
    %v322 = vpop.f32.mrb[0].mxu0
    %v323 = vadd.f32 %v151, %v322
    %v324 = vpop.f32.mrb[0].mxu0
    %v325 = vadd.f32 %v155, %v324
    %326 = vmatprep.mubr.f32.mxu0 0.0
    %327 = vmatmul.mubr.f32.gmra.mrb[0].mxu0 %v172
    %v328 = vpop.f32.mrb[0].mxu0
    %v329 = vadd.f32 %v151, %v328
    %v330 = vpop.f32.mrb[0].mxu0
    %v331 = vadd.f32 %v155, %v330
    %332 = vmatprep.mubr.f32.mxu0 0.0
    %333 = vmatmul.mubr.f32.gmra.mrb[0].mxu0 %v175
    %v334 = vpop.f32.mrb[0].mxu0
    %v335 = vadd.f32 %v151, %v334
    %v336 = vpop.f32.mrb[0].mxu0
    %v337 = vadd.f32 %v155, %v336
    %338 = vmatprep.mubr.f32.mxu0 0.0
    %339 = vmatmul.mubr.f32.gmra.mrb[0].mxu0 %v178
    %v340 = vpop.f32.mrb[0].mxu0
    %v341 = vadd.f32 %v151, %v340
    %v342 = vpop.f32.mrb[0].mxu0
    %v343 = vadd.f32 %v155, %v342
    %344 = vmatprep.mubr.f32.mxu0 0.0
    %345 = vmatmul.mubr.f32.gmra.mrb[0].mxu0 %v181
    %v346 = vpop.f32.mrb[0].mxu0
    %v347 = vadd.f32 %v151, %v346
    %v348 = vpop.f32.mrb[0].mxu0
    %v349 = vadd.f32 %v155, %v348
    %350 = vmatprep.mubr.f32.mxu0 0.0
    %351 = vmatmul.mubr.f32.gmra.mrb[0].mxu0 %v184
    %v352 = vpop.f32.mrb[0].mxu0
    %v353 = vadd.f32 %v151, %v352
    %v354 = vpop.f32.mrb[0].mxu0
    %v355 = vadd.f32 %v155, %v354
    %356 = vmatprep.mubr.f32.mxu0 0.0
    %357 = vmatmul.mubr.f32.gmra.mrb[0].mxu0 %v187
    %v358 = vpop.f32.mrb[0].mxu0
    %v359 = vadd.f32 %v151, %v358
    %v360 = vpop.f32.mrb[0].mxu0
    %v361 = vadd.f32 %v155, %v360
    %362 = vmatprep.mubr.f32.mxu0 0.0
    %363 = vmatmul.mubr.f32.gmra.mrb[0].mxu0 %v190
    %v364 = vpop.f32.mrb[0].mxu0
    %v365 = vadd.f32 %v151, %v364
    %v366 = vpop.f32.mrb[0].mxu0
    %v367 = vadd.f32 %v155, %v366
    %368 = vmatprep.mubr.f32.mxu0 0.0
    %369 = vmatmul.mubr.f32.gmra.mrb[0].mxu0 %v193
    %v370 = vpop.f32.mrb[0].mxu0
    %v371 = vadd.f32 %v151, %v370
    %v372 = vpop.f32.mrb[0].mxu0
    %v373 = vadd.f32 %v155, %v372
    %374 = vmatprep.mubr.f32.mxu0 0.0
    %375 = vmatmul.mubr.f32.gmra.mrb[0].mxu0 %v196
    %v376 = vpop.f32.mrb[0].mxu0
    %v377 = vadd.f32 %v151, %v376
    %v378 = vpop.f32.mrb[0].mxu0
    %v379 = vadd.f32 %v155, %v378
    %380 = vmatprep.mubr.f32.mxu0 0.0
    %381 = vmatmul.mubr.f32.gmra.mrb[0].mxu0 %v199
    %v382 = vpop.f32.mrb[0].mxu0
    %v383 = vadd.f32 %v151, %v382
    %v384 = vpop.f32.mrb[0].mxu0
    %v385 = vadd.f32 %v155, %v384
    %386 = vmatprep.mubr.f32.mxu0 0.0
    %387 = vmatmul.mubr.f32.gmra.mrb[0].mxu0 %v202
    %v388 = vpop.f32.mrb[0].mxu0
    %v389 = vadd.f32 %v151, %v388
    %v390 = vpop.f32.mrb[0].mxu0
    %v391 = vadd.f32 %v155, %v390
    %392 = vmatprep.mubr.f32.mxu0 0.0
    %393 = vmatmul.mubr.f32.gmra.mrb[0].mxu0 %v205
    %v394 = vpop.f32.mrb[0].mxu0
    %v395 = vadd.f32 %v151, %v394
    %v396 = vpop.f32.mrb[0].mxu0
    %v397 = vadd.f32 %v155, %v396
    %398 = vmatprep.mubr.f32.mxu0 0.0
    %399 = vmatmul.mubr.f32.gmra.mrb[0].mxu0 %v208
    %v400 = vpop.f32.mrb[0].mxu0
    %v401 = vadd.f32 %v151, %v400
    %v402 = vpop.f32.mrb[0].mxu0
    %v403 = vadd.f32 %v155, %v402
    %404 = vmatprep.mubr.f32.mxu0 0.0
    %405 = vmatmul.mubr.f32.gmra.mrb[0].mxu0 %v211
    %v406 = vpop.f32.mrb[0].mxu0
    %v407 = vadd.f32 %v151, %v406
    %v408 = vpop.f32.mrb[0].mxu0
    %v409 = vadd.f32 %v155, %v408
    %410 = vmatprep.mubr.f32.mxu0 0.0
    %411 = vmatmul.mubr.f32.gmra.mrb[0].mxu0 %v214
    %v412 = vpop.f32.mrb[0].mxu0
    %v413 = vadd.f32 %v151, %v412
    %v414 = vpop.f32.mrb[0].mxu0
    %v415 = vadd.f32 %v155, %v414
    %416 = vmatprep.mubr.f32.mxu0 0.0
    %417 = vmatmul.mubr.f32.gmra.mrb[0].mxu0 %v217
    %v418 = vpop.f32.mrb[0].mxu0
    %v419 = vadd.f32 %v151, %v418
    %v420 = vpop.f32.mrb[0].mxu0
    %v421 = vadd.f32 %v155, %v420
    %422 = vmatprep.mubr.f32.mxu0 0.0
    %423 = vmatmul.mubr.f32.gmra.mrb[0].mxu0 %v220
    %v424 = vpop.f32.mrb[0].mxu0
    %v425 = vadd.f32 %v151, %v424
    %v426 = vpop.f32.mrb[0].mxu0
    %v427 = vadd.f32 %v155, %v426
    %428 = vmatprep.mubr.f32.mxu0 0.0
    %429 = vmatmul.mubr.f32.gmra.mrb[0].mxu0 %v223
    %v430 = vpop.f32.mrb[0].mxu0
    %v431 = vadd.f32 %v151, %v430
    %v432 = vpop.f32.mrb[0].mxu0
    %v433 = vadd.f32 %v155, %v432
    %434 = vmatprep.mubr.f32.mxu0 0.0
    %435 = vmatmul.mubr.f32.gmra.mrb[0].mxu0 %v226
    %v436 = vpop.f32.mrb[0].mxu0
    %v437 = vadd.f32 %v151, %v436
    %v438 = vpop.f32.mrb[0].mxu0
    %v439 = vadd.f32 %v155, %v438
    %440 = vmatprep.mubr.f32.mxu0 0.0
    %441 = vmatmul.mubr.f32.gmra.mrb[0].mxu0 %v229
    %v442 = vpop.f32.mrb[0].mxu0
    %v443 = vadd.f32 %v151, %v442
    %v444 = vpop.f32.mrb[0].mxu0
    %v445 = vadd.f32 %v155, %v444
    %446 = vdwg.mxu0
    %447 = vst [vmem:[#allocation2] sm:$0xff] %v305
    %448 = vst [vmem:[#allocation2 + $0x8] sm:$0xff] %v307
    %449 = vst [vmem:[#allocation2 + $0x10] sm:$0xff] %v311
    %450 = vst [vmem:[#allocation2 + $0x18] sm:$0xff] %v313
    %451 = vst [vmem:[#allocation2 + $0x20] sm:$0xff] %v317
    %452 = vst [vmem:[#allocation2 + $0x28] sm:$0xff] %v319
    %453 = vst [vmem:[#allocation2 + $0x30] sm:$0xff] %v323
    %454 = vst [vmem:[#allocation2 + $0x38] sm:$0xff] %v325
    %455 = vst [vmem:[#allocation2 + $0x40] sm:$0xff] %v329
    %456 = vst [vmem:[#allocation2 + $0x48] sm:$0xff] %v331
    %457 = vst [vmem:[#allocation2 + $0x50] sm:$0xff] %v335
    %458 = vst [vmem:[#allocation2 + $0x58] sm:$0xff] %v337
    %459 = vst [vmem:[#allocation2 + $0x60] sm:$0xff] %v341
    %460 = vst [vmem:[#allocation2 + $0x68] sm:$0xff] %v343
    %461 = vst [vmem:[#allocation2 + $0x70] sm:$0xff] %v347
    %462 = vst [vmem:[#allocation2 + $0x78] sm:$0xff] %v349
    %463 = vst [vmem:[#allocation2 + $0x80] sm:$0xff] %v353
    %464 = vst [vmem:[#allocation2 + $0x88] sm:$0xff] %v355
    %465 = vst [vmem:[#allocation2 + $0x90] sm:$0xff] %v359
    %466 = vst [vmem:[#allocation2 + $0x98] sm:$0xff] %v361
    %467 = vst [vmem:[#allocation2 + $0xa0] sm:$0xff] %v365
    %468 = vst [vmem:[#allocation2 + $0xa8] sm:$0xff] %v367
    %469 = vst [vmem:[#allocation2 + $0xb0] sm:$0xff] %v371
    %470 = vst [vmem:[#allocation2 + $0xb8] sm:$0xff] %v373
    %471 = vst [vmem:[#allocation2 + $0xc0] sm:$0xff] %v377
    %472 = vst [vmem:[#allocation2 + $0xc8] sm:$0xff] %v379
    %473 = vst [vmem:[#allocation2 + $0xd0] sm:$0xff] %v383
    %474 = vst [vmem:[#allocation2 + $0xd8] sm:$0xff] %v385
    %475 = vst [vmem:[#allocation2 + $0xe0] sm:$0xff] %v389
    %476 = vst [vmem:[#allocation2 + $0xe8] sm:$0xff] %v391
    %477 = vst [vmem:[#allocation2 + $0xf0] sm:$0xff] %v395
    %478 = vst [vmem:[#allocation2 + $0xf8] sm:$0xff] %v397
    %479 = vst [vmem:[#allocation2 + $0x100] sm:$0xff] %v401
    %480 = vst [vmem:[#allocation2 + $0x108] sm:$0xff] %v403
    %481 = vst [vmem:[#allocation2 + $0x110] sm:$0xff] %v407
    %482 = vst [vmem:[#allocation2 + $0x118] sm:$0xff] %v409
    %483 = vst [vmem:[#allocation2 + $0x120] sm:$0xff] %v413
    %484 = vst [vmem:[#allocation2 + $0x128] sm:$0xff] %v415
    %485 = vst [vmem:[#allocation2 + $0x130] sm:$0xff] %v419
    %486 = vst [vmem:[#allocation2 + $0x138] sm:$0xff] %v421
    %487 = vst [vmem:[#allocation2 + $0x140] sm:$0xff] %v425
    %488 = vst [vmem:[#allocation2 + $0x148] sm:$0xff] %v427
    %489 = vst [vmem:[#allocation2 + $0x150] sm:$0xff] %v431
    %490 = vst [vmem:[#allocation2 + $0x158] sm:$0xff] %v433
    %491 = vst [vmem:[#allocation2 + $0x160] sm:$0xff] %v437
    %492 = vst [vmem:[#allocation2 + $0x168] sm:$0xff] %v439
    %493 = vst [vmem:[#allocation2 + $0x170] sm:$0xff] %v443
    %494 = vst [vmem:[#allocation2 + $0x178] sm:$0xff] %v445
    %v495 = vld [vmem:[#allocation2] sm:$0xff]
    %v496 = vld [vmem:[#allocation2 + $0x8] sm:$0xff]
    %v498 = vsel %vm72, 0.0, 0
    %500 = vmatprep.subr.mxu0 %v87
    %501 = vmatpush1.msra.mxu0 %v86
    %502 = vmatprep.subr.mxu0 %v89
    %503 = vmatpush1.msra.mxu0 %v88
    %504 = vmatprep.subr.mxu0 %v91
    %505 = vmatpush1.msra.mxu0 %v90
    %506 = vmatprep.subr.mxu0 %v93
    %507 = vmatpush1.msra.mxu0 %v92
    %508 = vmatprep.subr.mxu0 %v95
    %509 = vmatpush1.msra.mxu0 %v94
    %510 = vmatprep.subr.mxu0 %v97
    %511 = vmatpush1.msra.mxu0 %v96
    %512 = vmatprep.subr.mxu0 %v99
    %513 = vmatpush1.msra.mxu0 %v98
    %514 = vmatprep.subr.mxu0 %v101
    %515 = vmatpush1.msra.mxu0 %v100
    %516 = vmatprep.subr.mxu0 0.0
    %517 = vmatpush1.msra.mxu0 0.0
    %518 = vmatprep.subr.mxu0 0.0
    %519 = vmatpush1.msra.mxu0 0.0
    %520 = vmatprep.subr.mxu0 0.0
    %521 = vmatpush1.msra.mxu0 0.0
    %522 = vmatprep.subr.mxu0 0.0
    %523 = vmatpush1.msra.mxu0 0.0
    %524 = vmatprep.subr.mxu0 0.0
    %525 = vmatpush1.msra.mxu0 0.0
    %526 = vmatprep.subr.mxu0 0.0
    %527 = vmatpush1.msra.mxu0 0.0
    %528 = vmatprep.subr.mxu0 0.0
    %529 = vmatpush1.msra.mxu0 0.0
    %530 = vmatprep.subr.mxu0 0.0
    %531 = vmatpush1.msra.mxu0 0.0
    %532 = vmatprep.subr.mxu0 0.0
    %533 = vmatpush1.msra.mxu0 0.0
    %534 = vmatprep.subr.mxu0 0.0
    %535 = vmatpush1.msra.mxu0 0.0
    %536 = vmatprep.subr.mxu0 0.0
    %537 = vmatpush1.msra.mxu0 0.0
    %538 = vmatprep.subr.mxu0 0.0
    %539 = vmatpush1.msra.mxu0 0.0
    %540 = vmatprep.subr.mxu0 0.0
    %541 = vmatpush1.msra.mxu0 0.0
    %542 = vmatprep.subr.mxu0 0.0
    %543 = vmatpush1.msra.mxu0 0.0
    %544 = vmatprep.subr.mxu0 0.0
    %545 = vmatpush1.msra.mxu0 0.0
    %546 = vmatprep.subr.mxu0 0.0
    %547 = vmatpush1.msra.mxu0 0.0
    %548 = vmatprep.subr.mxu0 0.0
    %549 = vmatpush1.msra.mxu0 0.0
    %550 = vmatprep.subr.mxu0 0.0
    %551 = vmatpush1.msra.mxu0 0.0
    %552 = vmatprep.subr.mxu0 0.0
    %553 = vmatpush1.msra.mxu0 0.0
    %554 = vmatprep.subr.mxu0 0.0
    %555 = vmatpush1.msra.mxu0 0.0
    %556 = vmatprep.subr.mxu0 0.0
    %557 = vmatpush1.msra.mxu0 0.0
    %558 = vmatprep.subr.mxu0 0.0
    %559 = vmatpush1.msra.mxu0 0.0
    %560 = vmatprep.subr.mxu0 0.0
    %561 = vmatpush1.msra.mxu0 0.0
    %562 = vmatprep.subr.mxu0 0.0
    %563 = vmatpush1.msra.mxu0 0.0
    %564 = vmatprep.mubr.f32.mxu0 0.0
    %565 = vmatmul.mubr.f32.gmra.mrb[0].mxu0 %v498
    %v566 = vpop.f32.mrb[0].mxu0
    %v567 = vadd.f32 0.0, %v566
    %v568 = vpop.f32.mrb[0].mxu0
    %v569 = vadd.f32 0.0, %v568
    %570 = vdwg.mxu0
    %v571 = vadd.f32 %v495, %v567
    %v572 = vadd.f32 %v496, %v569
    %v573 = vtanh.pop %v571
    %v574 = vtanh.pop %v572
    %v575 = vmul.f32 %v573, 0.5
    %v576 = vmul.f32 %v574, %v80
    %v577 = vadd.f32 %v575, 0.5
    %v578 = vadd.f32 %v576, %v85
    %v579 = vmul.f32 %v577, 0.0
    %v580 = vmul.f32 %v577, %v578
    %582 = vrot.lane.b32.xlu0 %v580, 64
    %v583 = vpop.permute.xlu0 %582
    %v585 = vadd.f32 %v579, %v583
    %v586 = vtanh.pop %v585
    %v587 = vmul.f32 %v578, %v586
    %589 = vrot.lane.b32.xlu0 %v587, 64
    %v590 = vpop.permute.xlu0 %589
    %592 = vst.msk [vmem:[#allocation3] sm:$0xff] %vm72, %v590
    %s593 = scalar_lea.vmem [#allocation2], 16
    %v594 = vld [vmem:[%s593] sm:$0xff]
    %v595 = vld [vmem:[%s593 + $0x8] sm:$0xff]
    %v596 = vsel %vm72, %v590, 0
    %598 = vmatprep.subr.mxu0 %v87
    %599 = vmatpush1.msra.mxu0 %v86
    %600 = vmatprep.subr.mxu0 %v89
    %601 = vmatpush1.msra.mxu0 %v88
    %602 = vmatprep.subr.mxu0 %v91
    %603 = vmatpush1.msra.mxu0 %v90
    %604 = vmatprep.subr.mxu0 %v93
    %605 = vmatpush1.msra.mxu0 %v92
    %606 = vmatprep.subr.mxu0 %v95
    %607 = vmatpush1.msra.mxu0 %v94
    %608 = vmatprep.subr.mxu0 %v97
    %609 = vmatpush1.msra.mxu0 %v96
    %610 = vmatprep.subr.mxu0 %v99
    %611 = vmatpush1.msra.mxu0 %v98
    %612 = vmatprep.subr.mxu0 %v101
    %613 = vmatpush1.msra.mxu0 %v100
    %614 = vmatprep.subr.mxu0 0.0
    %615 = vmatpush1.msra.mxu0 0.0
    %616 = vmatprep.subr.mxu0 0.0
    %617 = vmatpush1.msra.mxu0 0.0
    %618 = vmatprep.subr.mxu0 0.0
    %619 = vmatpush1.msra.mxu0 0.0
    %620 = vmatprep.subr.mxu0 0.0
    %621 = vmatpush1.msra.mxu0 0.0
    %622 = vmatprep.subr.mxu0 0.0
    %623 = vmatpush1.msra.mxu0 0.0
    %624 = vmatprep.subr.mxu0 0.0
    %625 = vmatpush1.msra.mxu0 0.0
    %626 = vmatprep.subr.mxu0 0.0
    %627 = vmatpush1.msra.mxu0 0.0
    %628 = vmatprep.subr.mxu0 0.0
    %629 = vmatpush1.msra.mxu0 0.0
    %630 = vmatprep.subr.mxu0 0.0
    %631 = vmatpush1.msra.mxu0 0.0
    %632 = vmatprep.subr.mxu0 0.0
    %633 = vmatpush1.msra.mxu0 0.0
    %634 = vmatprep.subr.mxu0 0.0
    %635 = vmatpush1.msra.mxu0 0.0
    %636 = vmatprep.subr.mxu0 0.0
    %637 = vmatpush1.msra.mxu0 0.0
    %638 = vmatprep.subr.mxu0 0.0
    %639 = vmatpush1.msra.mxu0 0.0
    %640 = vmatprep.subr.mxu0 0.0
    %641 = vmatpush1.msra.mxu0 0.0
    %642 = vmatprep.subr.mxu0 0.0
    %643 = vmatpush1.msra.mxu0 0.0
    %644 = vmatprep.subr.mxu0 0.0
    %645 = vmatpush1.msra.mxu0 0.0
    %646 = vmatprep.subr.mxu0 0.0
    %647 = vmatpush1.msra.mxu0 0.0
    %648 = vmatprep.subr.mxu0 0.0
    %649 = vmatpush1.msra.mxu0 0.0
    %650 = vmatprep.subr.mxu0 0.0
    %651 = vmatpush1.msra.mxu0 0.0
    %652 = vmatprep.subr.mxu0 0.0
    %653 = vmatpush1.msra.mxu0 0.0
    %654 = vmatprep.subr.mxu0 0.0
    %655 = vmatpush1.msra.mxu0 0.0
    %656 = vmatprep.subr.mxu0 0.0
    %657 = vmatpush1.msra.mxu0 0.0
    %658 = vmatprep.subr.mxu0 0.0
    %659 = vmatpush1.msra.mxu0 0.0
    %660 = vmatprep.subr.mxu0 0.0
    %661 = vmatpush1.msra.mxu0 0.0
    %662 = vmatprep.mubr.f32.mxu0 0.0
    %663 = vmatmul.mubr.f32.gmra.mrb[0].mxu0 %v596
    %v664 = vpop.f32.mrb[0].mxu0
    %v665 = vadd.f32 0.0, %v664
    %v666 = vpop.f32.mrb[0].mxu0
    %v667 = vadd.f32 0.0, %v666
    %668 = vdwg.mxu0
    %v669 = vadd.f32 %v594, %v665
    %v670 = vadd.f32 %v595, %v667
    %v671 = vtanh.pop %v669
    %v672 = vtanh.pop %v670
    %v673 = vmul.f32 %v671, 0.5
    %v674 = vmul.f32 %v672, %v80
    %v675 = vadd.f32 %v673, 0.5
    %v676 = vadd.f32 %v674, %v85
    %v677 = vmul.f32 %v675, %v585
    %v678 = vmul.f32 %v675, %v676
    %680 = vrot.lane.b32.xlu0 %v678, 64
    %v681 = vpop.permute.xlu0 %680
    %v683 = vadd.f32 %v677, %v681
    %v684 = vtanh.pop %v683
    %v685 = vmul.f32 %v676, %v684
    %687 = vrot.lane.b32.xlu0 %v685, 64
    %v688 = vpop.permute.xlu0 %687
    %s690 = scalar_lea.vmem [#allocation3], 8
    %691 = vst.msk [vmem:[%s690] sm:$0xff] %vm72, %v688
    %s692 = scalar_lea.vmem [#allocation2], 32
    %v693 = vld [vmem:[%s692] sm:$0xff]
    %v694 = vld [vmem:[%s692 + $0x8] sm:$0xff]
    %v695 = vsel %vm72, %v688, 0
    %697 = vmatprep.subr.mxu0 %v87
    %698 = vmatpush1.msra.mxu0 %v86
    %699 = vmatprep.subr.mxu0 %v89
    %700 = vmatpush1.msra.mxu0 %v88
    %701 = vmatprep.subr.mxu0 %v91
    %702 = vmatpush1.msra.mxu0 %v90
    %703 = vmatprep.subr.mxu0 %v93
    %704 = vmatpush1.msra.mxu0 %v92
    %705 = vmatprep.subr.mxu0 %v95
    %706 = vmatpush1.msra.mxu0 %v94
    %707 = vmatprep.subr.mxu0 %v97
    %708 = vmatpush1.msra.mxu0 %v96
    %709 = vmatprep.subr.mxu0 %v99
    %710 = vmatpush1.msra.mxu0 %v98
    %711 = vmatprep.subr.mxu0 %v101
    %712 = vmatpush1.msra.mxu0 %v100
    %713 = vmatprep.subr.mxu0 0.0
    %714 = vmatpush1.msra.mxu0 0.0
    %715 = vmatprep.subr.mxu0 0.0
    %716 = vmatpush1.msra.mxu0 0.0
    %717 = vmatprep.subr.mxu0 0.0
    %718 = vmatpush1.msra.mxu0 0.0
    %719 = vmatprep.subr.mxu0 0.0
    %720 = vmatpush1.msra.mxu0 0.0
    %721 = vmatprep.subr.mxu0 0.0
    %722 = vmatpush1.msra.mxu0 0.0
    %723 = vmatprep.subr.mxu0 0.0
    %724 = vmatpush1.msra.mxu0 0.0
    %725 = vmatprep.subr.mxu0 0.0
    %726 = vmatpush1.msra.mxu0 0.0
    %727 = vmatprep.subr.mxu0 0.0
    %728 = vmatpush1.msra.mxu0 0.0
    %729 = vmatprep.subr.mxu0 0.0
    %730 = vmatpush1.msra.mxu0 0.0
    %731 = vmatprep.subr.mxu0 0.0
    %732 = vmatpush1.msra.mxu0 0.0
    %733 = vmatprep.subr.mxu0 0.0
    %734 = vmatpush1.msra.mxu0 0.0
    %735 = vmatprep.subr.mxu0 0.0
    %736 = vmatpush1.msra.mxu0 0.0
    %737 = vmatprep.subr.mxu0 0.0
    %738 = vmatpush1.msra.mxu0 0.0
    %739 = vmatprep.subr.mxu0 0.0
    %740 = vmatpush1.msra.mxu0 0.0
    %741 = vmatprep.subr.mxu0 0.0
    %742 = vmatpush1.msra.mxu0 0.0
    %743 = vmatprep.subr.mxu0 0.0
    %744 = vmatpush1.msra.mxu0 0.0
    %745 = vmatprep.subr.mxu0 0.0
    %746 = vmatpush1.msra.mxu0 0.0
    %747 = vmatprep.subr.mxu0 0.0
    %748 = vmatpush1.msra.mxu0 0.0
    %749 = vmatprep.subr.mxu0 0.0
    %750 = vmatpush1.msra.mxu0 0.0
    %751 = vmatprep.subr.mxu0 0.0
    %752 = vmatpush1.msra.mxu0 0.0
    %753 = vmatprep.subr.mxu0 0.0
    %754 = vmatpush1.msra.mxu0 0.0
    %755 = vmatprep.subr.mxu0 0.0
    %756 = vmatpush1.msra.mxu0 0.0
    %757 = vmatprep.subr.mxu0 0.0
    %758 = vmatpush1.msra.mxu0 0.0
    %759 = vmatprep.subr.mxu0 0.0
    %760 = vmatpush1.msra.mxu0 0.0
    %761 = vmatprep.mubr.f32.mxu0 0.0
    %762 = vmatmul.mubr.f32.gmra.mrb[0].mxu0 %v695
    %v763 = vpop.f32.mrb[0].mxu0
    %v764 = vadd.f32 0.0, %v763
    %v765 = vpop.f32.mrb[0].mxu0
    %v766 = vadd.f32 0.0, %v765
    %767 = vdwg.mxu0
    %v768 = vadd.f32 %v693, %v764
    %v769 = vadd.f32 %v694, %v766
    %v770 = vtanh.pop %v768
    %v771 = vtanh.pop %v769
    %v772 = vmul.f32 %v770, 0.5
    %v773 = vmul.f32 %v771, %v80
    %v774 = vadd.f32 %v772, 0.5
    %v775 = vadd.f32 %v773, %v85
    %v776 = vmul.f32 %v774, %v683
    %v777 = vmul.f32 %v774, %v775
    %779 = vrot.lane.b32.xlu0 %v777, 64
    %v780 = vpop.permute.xlu0 %779
    %v782 = vadd.f32 %v776, %v780
    %v783 = vtanh.pop %v782
    %v784 = vmul.f32 %v775, %v783
    %786 = vrot.lane.b32.xlu0 %v784, 64
    %v787 = vpop.permute.xlu0 %786
    %s789 = scalar_lea.vmem [#allocation3], 16
    %790 = vst.msk [vmem:[%s789] sm:$0xff] %vm72, %v787
    %s791 = scalar_lea.vmem [#allocation2], 48
    %v792 = vld [vmem:[%s791] sm:$0xff]
    %v793 = vld [vmem:[%s791 + $0x8] sm:$0xff]
    %v794 = vsel %vm72, %v787, 0
    %796 = vmatprep.subr.mxu0 %v87
    %797 = vmatpush1.msra.mxu0 %v86
    %798 = vmatprep.subr.mxu0 %v89
    %799 = vmatpush1.msra.mxu0 %v88
    %800 = vmatprep.subr.mxu0 %v91
    %801 = vmatpush1.msra.mxu0 %v90
    %802 = vmatprep.subr.mxu0 %v93
    %803 = vmatpush1.msra.mxu0 %v92
    %804 = vmatprep.subr.mxu0 %v95
    %805 = vmatpush1.msra.mxu0 %v94
    %806 = vmatprep.subr.mxu0 %v97
    %807 = vmatpush1.msra.mxu0 %v96
    %808 = vmatprep.subr.mxu0 %v99
    %809 = vmatpush1.msra.mxu0 %v98
    %810 = vmatprep.subr.mxu0 %v101
    %811 = vmatpush1.msra.mxu0 %v100
    %812 = vmatprep.subr.mxu0 0.0
    %813 = vmatpush1.msra.mxu0 0.0
    %814 = vmatprep.subr.mxu0 0.0
    %815 = vmatpush1.msra.mxu0 0.0
    %816 = vmatprep.subr.mxu0 0.0
    %817 = vmatpush1.msra.mxu0 0.0
    %818 = vmatprep.subr.mxu0 0.0
    %819 = vmatpush1.msra.mxu0 0.0
    %820 = vmatprep.subr.mxu0 0.0
    %821 = vmatpush1.msra.mxu0 0.0
    %822 = vmatprep.subr.mxu0 0.0
    %823 = vmatpush1.msra.mxu0 0.0
    %824 = vmatprep.subr.mxu0 0.0
    %825 = vmatpush1.msra.mxu0 0.0
    %826 = vmatprep.subr.mxu0 0.0
    %827 = vmatpush1.msra.mxu0 0.0
    %828 = vmatprep.subr.mxu0 0.0
    %829 = vmatpush1.msra.mxu0 0.0
    %830 = vmatprep.subr.mxu0 0.0
    %831 = vmatpush1.msra.mxu0 0.0
    %832 = vmatprep.subr.mxu0 0.0
    %833 = vmatpush1.msra.mxu0 0.0
    %834 = vmatprep.subr.mxu0 0.0
    %835 = vmatpush1.msra.mxu0 0.0
    %836 = vmatprep.subr.mxu0 0.0
    %837 = vmatpush1.msra.mxu0 0.0
    %838 = vmatprep.subr.mxu0 0.0
    %839 = vmatpush1.msra.mxu0 0.0
    %840 = vmatprep.subr.mxu0 0.0
    %841 = vmatpush1.msra.mxu0 0.0
    %842 = vmatprep.subr.mxu0 0.0
    %843 = vmatpush1.msra.mxu0 0.0
    %844 = vmatprep.subr.mxu0 0.0
    %845 = vmatpush1.msra.mxu0 0.0
    %846 = vmatprep.subr.mxu0 0.0
    %847 = vmatpush1.msra.mxu0 0.0
    %848 = vmatprep.subr.mxu0 0.0
    %849 = vmatpush1.msra.mxu0 0.0
    %850 = vmatprep.subr.mxu0 0.0
    %851 = vmatpush1.msra.mxu0 0.0
    %852 = vmatprep.subr.mxu0 0.0
    %853 = vmatpush1.msra.mxu0 0.0
    %854 = vmatprep.subr.mxu0 0.0
    %855 = vmatpush1.msra.mxu0 0.0
    %856 = vmatprep.subr.mxu0 0.0
    %857 = vmatpush1.msra.mxu0 0.0
    %858 = vmatprep.subr.mxu0 0.0
    %859 = vmatpush1.msra.mxu0 0.0
    %860 = vmatprep.mubr.f32.mxu0 0.0
    %861 = vmatmul.mubr.f32.gmra.mrb[0].mxu0 %v794
    %v862 = vpop.f32.mrb[0].mxu0
    %v863 = vadd.f32 0.0, %v862
    %v864 = vpop.f32.mrb[0].mxu0
    %v865 = vadd.f32 0.0, %v864
    %866 = vdwg.mxu0
    %v867 = vadd.f32 %v792, %v863
    %v868 = vadd.f32 %v793, %v865
    %v869 = vtanh.pop %v867
    %v870 = vtanh.pop %v868
    %v871 = vmul.f32 %v869, 0.5
    %v872 = vmul.f32 %v870, %v80
    %v873 = vadd.f32 %v871, 0.5
    %v874 = vadd.f32 %v872, %v85
    %v875 = vmul.f32 %v873, %v782
    %v876 = vmul.f32 %v873, %v874
    %878 = vrot.lane.b32.xlu0 %v876, 64
    %v879 = vpop.permute.xlu0 %878
    %v881 = vadd.f32 %v875, %v879
    %v882 = vtanh.pop %v881
    %v883 = vmul.f32 %v874, %v882
    %885 = vrot.lane.b32.xlu0 %v883, 64
    %v886 = vpop.permute.xlu0 %885
    %s888 = scalar_lea.vmem [#allocation3], 24
    %889 = vst.msk [vmem:[%s888] sm:$0xff] %vm72, %v886
    %s890 = scalar_lea.vmem [#allocation2], 64
    %v891 = vld [vmem:[%s890] sm:$0xff]
    %v892 = vld [vmem:[%s890 + $0x8] sm:$0xff]
    %v893 = vsel %vm72, %v886, 0
    %895 = vmatprep.subr.mxu0 %v87
    %896 = vmatpush1.msra.mxu0 %v86
    %897 = vmatprep.subr.mxu0 %v89
    %898 = vmatpush1.msra.mxu0 %v88
    %899 = vmatprep.subr.mxu0 %v91
    %900 = vmatpush1.msra.mxu0 %v90
    %901 = vmatprep.subr.mxu0 %v93
    %902 = vmatpush1.msra.mxu0 %v92
    %903 = vmatprep.subr.mxu0 %v95
    %904 = vmatpush1.msra.mxu0 %v94
    %905 = vmatprep.subr.mxu0 %v97
    %906 = vmatpush1.msra.mxu0 %v96
    %907 = vmatprep.subr.mxu0 %v99
    %908 = vmatpush1.msra.mxu0 %v98
    %909 = vmatprep.subr.mxu0 %v101
    %910 = vmatpush1.msra.mxu0 %v100
    %911 = vmatprep.subr.mxu0 0.0
    %912 = vmatpush1.msra.mxu0 0.0
    %913 = vmatprep.subr.mxu0 0.0
    %914 = vmatpush1.msra.mxu0 0.0
    %915 = vmatprep.subr.mxu0 0.0
    %916 = vmatpush1.msra.mxu0 0.0
    %917 = vmatprep.subr.mxu0 0.0
    %918 = vmatpush1.msra.mxu0 0.0
    %919 = vmatprep.subr.mxu0 0.0
    %920 = vmatpush1.msra.mxu0 0.0
    %921 = vmatprep.subr.mxu0 0.0
    %922 = vmatpush1.msra.mxu0 0.0
    %923 = vmatprep.subr.mxu0 0.0
    %924 = vmatpush1.msra.mxu0 0.0
    %925 = vmatprep.subr.mxu0 0.0
    %926 = vmatpush1.msra.mxu0 0.0
    %927 = vmatprep.subr.mxu0 0.0
    %928 = vmatpush1.msra.mxu0 0.0
    %929 = vmatprep.subr.mxu0 0.0
    %930 = vmatpush1.msra.mxu0 0.0
    %931 = vmatprep.subr.mxu0 0.0
    %932 = vmatpush1.msra.mxu0 0.0
    %933 = vmatprep.subr.mxu0 0.0
    %934 = vmatpush1.msra.mxu0 0.0
    %935 = vmatprep.subr.mxu0 0.0
    %936 = vmatpush1.msra.mxu0 0.0
    %937 = vmatprep.subr.mxu0 0.0
    %938 = vmatpush1.msra.mxu0 0.0
    %939 = vmatprep.subr.mxu0 0.0
    %940 = vmatpush1.msra.mxu0 0.0
    %941 = vmatprep.subr.mxu0 0.0
    %942 = vmatpush1.msra.mxu0 0.0
    %943 = vmatprep.subr.mxu0 0.0
    %944 = vmatpush1.msra.mxu0 0.0
    %945 = vmatprep.subr.mxu0 0.0
    %946 = vmatpush1.msra.mxu0 0.0
    %947 = vmatprep.subr.mxu0 0.0
    %948 = vmatpush1.msra.mxu0 0.0
    %949 = vmatprep.subr.mxu0 0.0
    %950 = vmatpush1.msra.mxu0 0.0
    %951 = vmatprep.subr.mxu0 0.0
    %952 = vmatpush1.msra.mxu0 0.0
    %953 = vmatprep.subr.mxu0 0.0
    %954 = vmatpush1.msra.mxu0 0.0
    %955 = vmatprep.subr.mxu0 0.0
    %956 = vmatpush1.msra.mxu0 0.0
    %957 = vmatprep.subr.mxu0 0.0
    %958 = vmatpush1.msra.mxu0 0.0
    %959 = vmatprep.mubr.f32.mxu0 0.0
    %960 = vmatmul.mubr.f32.gmra.mrb[0].mxu0 %v893
    %v961 = vpop.f32.mrb[0].mxu0
    %v962 = vadd.f32 0.0, %v961
    %v963 = vpop.f32.mrb[0].mxu0
    %v964 = vadd.f32 0.0, %v963
    %965 = vdwg.mxu0
    %v966 = vadd.f32 %v891, %v962
    %v967 = vadd.f32 %v892, %v964
    %v968 = vtanh.pop %v966
    %v969 = vtanh.pop %v967
    %v970 = vmul.f32 %v968, 0.5
    %v971 = vmul.f32 %v969, %v80
    %v972 = vadd.f32 %v970, 0.5
    %v973 = vadd.f32 %v971, %v85
    %v974 = vmul.f32 %v972, %v881
    %v975 = vmul.f32 %v972, %v973
    %977 = vrot.lane.b32.xlu0 %v975, 64
    %v978 = vpop.permute.xlu0 %977
    %v980 = vadd.f32 %v974, %v978
    %v981 = vtanh.pop %v980
    %v982 = vmul.f32 %v973, %v981
    %984 = vrot.lane.b32.xlu0 %v982, 64
    %v985 = vpop.permute.xlu0 %984
    %s987 = scalar_lea.vmem [#allocation3], 32
    %988 = vst.msk [vmem:[%s987] sm:$0xff] %vm72, %v985
    %s989 = scalar_lea.vmem [#allocation2], 80
    %v990 = vld [vmem:[%s989] sm:$0xff]
    %v991 = vld [vmem:[%s989 + $0x8] sm:$0xff]
    %v992 = vsel %vm72, %v985, 0
    %994 = vmatprep.subr.mxu0 %v87
    %995 = vmatpush1.msra.mxu0 %v86
    %996 = vmatprep.subr.mxu0 %v89
    %997 = vmatpush1.msra.mxu0 %v88
    %998 = vmatprep.subr.mxu0 %v91
    %999 = vmatpush1.msra.mxu0 %v90
    %1000 = vmatprep.subr.mxu0 %v93
    %1001 = vmatpush1.msra.mxu0 %v92
    %1002 = vmatprep.subr.mxu0 %v95
    %1003 = vmatpush1.msra.mxu0 %v94
    %1004 = vmatprep.subr.mxu0 %v97
    %1005 = vmatpush1.msra.mxu0 %v96
    %1006 = vmatprep.subr.mxu0 %v99
    %1007 = vmatpush1.msra.mxu0 %v98
    %1008 = vmatprep.subr.mxu0 %v101
    %1009 = vmatpush1.msra.mxu0 %v100
    %1010 = vmatprep.subr.mxu0 0.0
    %1011 = vmatpush1.msra.mxu0 0.0
    %1012 = vmatprep.subr.mxu0 0.0
    %1013 = vmatpush1.msra.mxu0 0.0
    %1014 = vmatprep.subr.mxu0 0.0
    %1015 = vmatpush1.msra.mxu0 0.0
    %1016 = vmatprep.subr.mxu0 0.0
    %1017 = vmatpush1.msra.mxu0 0.0
    %1018 = vmatprep.subr.mxu0 0.0
    %1019 = vmatpush1.msra.mxu0 0.0
    %1020 = vmatprep.subr.mxu0 0.0
    %1021 = vmatpush1.msra.mxu0 0.0
    %1022 = vmatprep.subr.mxu0 0.0
    %1023 = vmatpush1.msra.mxu0 0.0
    %1024 = vmatprep.subr.mxu0 0.0
    %1025 = vmatpush1.msra.mxu0 0.0
    %1026 = vmatprep.subr.mxu0 0.0
    %1027 = vmatpush1.msra.mxu0 0.0
    %1028 = vmatprep.subr.mxu0 0.0
    %1029 = vmatpush1.msra.mxu0 0.0
    %1030 = vmatprep.subr.mxu0 0.0
    %1031 = vmatpush1.msra.mxu0 0.0
    %1032 = vmatprep.subr.mxu0 0.0
    %1033 = vmatpush1.msra.mxu0 0.0
    %1034 = vmatprep.subr.mxu0 0.0
    %1035 = vmatpush1.msra.mxu0 0.0
    %1036 = vmatprep.subr.mxu0 0.0
    %1037 = vmatpush1.msra.mxu0 0.0
    %1038 = vmatprep.subr.mxu0 0.0
    %1039 = vmatpush1.msra.mxu0 0.0
    %1040 = vmatprep.subr.mxu0 0.0
    %1041 = vmatpush1.msra.mxu0 0.0
    %1042 = vmatprep.subr.mxu0 0.0
    %1043 = vmatpush1.msra.mxu0 0.0
    %1044 = vmatprep.subr.mxu0 0.0
    %1045 = vmatpush1.msra.mxu0 0.0
    %1046 = vmatprep.subr.mxu0 0.0
    %1047 = vmatpush1.msra.mxu0 0.0
    %1048 = vmatprep.subr.mxu0 0.0
    %1049 = vmatpush1.msra.mxu0 0.0
    %1050 = vmatprep.subr.mxu0 0.0
    %1051 = vmatpush1.msra.mxu0 0.0
    %1052 = vmatprep.subr.mxu0 0.0
    %1053 = vmatpush1.msra.mxu0 0.0
    %1054 = vmatprep.subr.mxu0 0.0
    %1055 = vmatpush1.msra.mxu0 0.0
    %1056 = vmatprep.subr.mxu0 0.0
    %1057 = vmatpush1.msra.mxu0 0.0
    %1058 = vmatprep.mubr.f32.mxu0 0.0
    %1059 = vmatmul.mubr.f32.gmra.mrb[0].mxu0 %v992
    %v1060 = vpop.f32.mrb[0].mxu0
    %v1061 = vadd.f32 0.0, %v1060
    %v1062 = vpop.f32.mrb[0].mxu0
    %v1063 = vadd.f32 0.0, %v1062
    %1064 = vdwg.mxu0
    %v1065 = vadd.f32 %v990, %v1061
    %v1066 = vadd.f32 %v991, %v1063
    %v1067 = vtanh.pop %v1065
    %v1068 = vtanh.pop %v1066
    %v1069 = vmul.f32 %v1067, 0.5
    %v1070 = vmul.f32 %v1068, %v80
    %v1071 = vadd.f32 %v1069, 0.5
    %v1072 = vadd.f32 %v1070, %v85
    %v1073 = vmul.f32 %v1071, %v980
    %v1074 = vmul.f32 %v1071, %v1072
    %1076 = vrot.lane.b32.xlu0 %v1074, 64
    %v1077 = vpop.permute.xlu0 %1076
    %v1079 = vadd.f32 %v1073, %v1077
    %v1080 = vtanh.pop %v1079
    %v1081 = vmul.f32 %v1072, %v1080
    %1083 = vrot.lane.b32.xlu0 %v1081, 64
    %v1084 = vpop.permute.xlu0 %1083
    %s1086 = scalar_lea.vmem [#allocation3], 40
    %1087 = vst.msk [vmem:[%s1086] sm:$0xff] %vm72, %v1084
    %s1088 = scalar_lea.vmem [#allocation2], 96
    %v1089 = vld [vmem:[%s1088] sm:$0xff]
    %v1090 = vld [vmem:[%s1088 + $0x8] sm:$0xff]
    %v1091 = vsel %vm72, %v1084, 0
    %1093 = vmatprep.subr.mxu0 %v87
    %1094 = vmatpush1.msra.mxu0 %v86
    %1095 = vmatprep.subr.mxu0 %v89
    %1096 = vmatpush1.msra.mxu0 %v88
    %1097 = vmatprep.subr.mxu0 %v91
    %1098 = vmatpush1.msra.mxu0 %v90
    %1099 = vmatprep.subr.mxu0 %v93
    %1100 = vmatpush1.msra.mxu0 %v92
    %1101 = vmatprep.subr.mxu0 %v95
    %1102 = vmatpush1.msra.mxu0 %v94
    %1103 = vmatprep.subr.mxu0 %v97
    %1104 = vmatpush1.msra.mxu0 %v96
    %1105 = vmatprep.subr.mxu0 %v99
    %1106 = vmatpush1.msra.mxu0 %v98
    %1107 = vmatprep.subr.mxu0 %v101
    %1108 = vmatpush1.msra.mxu0 %v100
    %1109 = vmatprep.subr.mxu0 0.0
    %1110 = vmatpush1.msra.mxu0 0.0
    %1111 = vmatprep.subr.mxu0 0.0
    %1112 = vmatpush1.msra.mxu0 0.0
    %1113 = vmatprep.subr.mxu0 0.0
    %1114 = vmatpush1.msra.mxu0 0.0
    %1115 = vmatprep.subr.mxu0 0.0
    %1116 = vmatpush1.msra.mxu0 0.0
    %1117 = vmatprep.subr.mxu0 0.0
    %1118 = vmatpush1.msra.mxu0 0.0
    %1119 = vmatprep.subr.mxu0 0.0
    %1120 = vmatpush1.msra.mxu0 0.0
    %1121 = vmatprep.subr.mxu0 0.0
    %1122 = vmatpush1.msra.mxu0 0.0
    %1123 = vmatprep.subr.mxu0 0.0
    %1124 = vmatpush1.msra.mxu0 0.0
    %1125 = vmatprep.subr.mxu0 0.0
    %1126 = vmatpush1.msra.mxu0 0.0
    %1127 = vmatprep.subr.mxu0 0.0
    %1128 = vmatpush1.msra.mxu0 0.0
    %1129 = vmatprep.subr.mxu0 0.0
    %1130 = vmatpush1.msra.mxu0 0.0
    %1131 = vmatprep.subr.mxu0 0.0
    %1132 = vmatpush1.msra.mxu0 0.0
    %1133 = vmatprep.subr.mxu0 0.0
    %1134 = vmatpush1.msra.mxu0 0.0
    %1135 = vmatprep.subr.mxu0 0.0
    %1136 = vmatpush1.msra.mxu0 0.0
    %1137 = vmatprep.subr.mxu0 0.0
    %1138 = vmatpush1.msra.mxu0 0.0
    %1139 = vmatprep.subr.mxu0 0.0
    %1140 = vmatpush1.msra.mxu0 0.0
    %1141 = vmatprep.subr.mxu0 0.0
    %1142 = vmatpush1.msra.mxu0 0.0
    %1143 = vmatprep.subr.mxu0 0.0
    %1144 = vmatpush1.msra.mxu0 0.0
    %1145 = vmatprep.subr.mxu0 0.0
    %1146 = vmatpush1.msra.mxu0 0.0
    %1147 = vmatprep.subr.mxu0 0.0
    %1148 = vmatpush1.msra.mxu0 0.0
    %1149 = vmatprep.subr.mxu0 0.0
    %1150 = vmatpush1.msra.mxu0 0.0
    %1151 = vmatprep.subr.mxu0 0.0
    %1152 = vmatpush1.msra.mxu0 0.0
    %1153 = vmatprep.subr.mxu0 0.0
    %1154 = vmatpush1.msra.mxu0 0.0
    %1155 = vmatprep.subr.mxu0 0.0
    %1156 = vmatpush1.msra.mxu0 0.0
    %1157 = vmatprep.mubr.f32.mxu0 0.0
    %1158 = vmatmul.mubr.f32.gmra.mrb[0].mxu0 %v1091
    %v1159 = vpop.f32.mrb[0].mxu0
    %v1160 = vadd.f32 0.0, %v1159
    %v1161 = vpop.f32.mrb[0].mxu0
    %v1162 = vadd.f32 0.0, %v1161
    %1163 = vdwg.mxu0
    %v1164 = vadd.f32 %v1089, %v1160
    %v1165 = vadd.f32 %v1090, %v1162
    %v1166 = vtanh.pop %v1164
    %v1167 = vtanh.pop %v1165
    %v1168 = vmul.f32 %v1166, 0.5
    %v1169 = vmul.f32 %v1167, %v80
    %v1170 = vadd.f32 %v1168, 0.5
    %v1171 = vadd.f32 %v1169, %v85
    %v1172 = vmul.f32 %v1170, %v1079
    %v1173 = vmul.f32 %v1170, %v1171
    %1175 = vrot.lane.b32.xlu0 %v1173, 64
    %v1176 = vpop.permute.xlu0 %1175
    %v1178 = vadd.f32 %v1172, %v1176
    %v1179 = vtanh.pop %v1178
    %v1180 = vmul.f32 %v1171, %v1179
    %1182 = vrot.lane.b32.xlu0 %v1180, 64
    %v1183 = vpop.permute.xlu0 %1182
    %s1185 = scalar_lea.vmem [#allocation3], 48
    %1186 = vst.msk [vmem:[%s1185] sm:$0xff] %vm72, %v1183
    %s1187 = scalar_lea.vmem [#allocation2], 112
    %v1188 = vld [vmem:[%s1187] sm:$0xff]
    %v1189 = vld [vmem:[%s1187 + $0x8] sm:$0xff]
    %v1190 = vsel %vm72, %v1183, 0
    %1192 = vmatprep.subr.mxu0 %v87
    %1193 = vmatpush1.msra.mxu0 %v86
    %1194 = vmatprep.subr.mxu0 %v89
    %1195 = vmatpush1.msra.mxu0 %v88
    %1196 = vmatprep.subr.mxu0 %v91
    %1197 = vmatpush1.msra.mxu0 %v90
    %1198 = vmatprep.subr.mxu0 %v93
    %1199 = vmatpush1.msra.mxu0 %v92
    %1200 = vmatprep.subr.mxu0 %v95
    %1201 = vmatpush1.msra.mxu0 %v94
    %1202 = vmatprep.subr.mxu0 %v97
    %1203 = vmatpush1.msra.mxu0 %v96
    %1204 = vmatprep.subr.mxu0 %v99
    %1205 = vmatpush1.msra.mxu0 %v98
    %1206 = vmatprep.subr.mxu0 %v101
    %1207 = vmatpush1.msra.mxu0 %v100
    %1208 = vmatprep.subr.mxu0 0.0
    %1209 = vmatpush1.msra.mxu0 0.0
    %1210 = vmatprep.subr.mxu0 0.0
    %1211 = vmatpush1.msra.mxu0 0.0
    %1212 = vmatprep.subr.mxu0 0.0
    %1213 = vmatpush1.msra.mxu0 0.0
    %1214 = vmatprep.subr.mxu0 0.0
    %1215 = vmatpush1.msra.mxu0 0.0
    %1216 = vmatprep.subr.mxu0 0.0
    %1217 = vmatpush1.msra.mxu0 0.0
    %1218 = vmatprep.subr.mxu0 0.0
    %1219 = vmatpush1.msra.mxu0 0.0
    %1220 = vmatprep.subr.mxu0 0.0
    %1221 = vmatpush1.msra.mxu0 0.0
    %1222 = vmatprep.subr.mxu0 0.0
    %1223 = vmatpush1.msra.mxu0 0.0
    %1224 = vmatprep.subr.mxu0 0.0
    %1225 = vmatpush1.msra.mxu0 0.0
    %1226 = vmatprep.subr.mxu0 0.0
    %1227 = vmatpush1.msra.mxu0 0.0
    %1228 = vmatprep.subr.mxu0 0.0
    %1229 = vmatpush1.msra.mxu0 0.0
    %1230 = vmatprep.subr.mxu0 0.0
    %1231 = vmatpush1.msra.mxu0 0.0
    %1232 = vmatprep.subr.mxu0 0.0
    %1233 = vmatpush1.msra.mxu0 0.0
    %1234 = vmatprep.subr.mxu0 0.0
    %1235 = vmatpush1.msra.mxu0 0.0
    %1236 = vmatprep.subr.mxu0 0.0
    %1237 = vmatpush1.msra.mxu0 0.0
    %1238 = vmatprep.subr.mxu0 0.0
    %1239 = vmatpush1.msra.mxu0 0.0
    %1240 = vmatprep.subr.mxu0 0.0
    %1241 = vmatpush1.msra.mxu0 0.0
    %1242 = vmatprep.subr.mxu0 0.0
    %1243 = vmatpush1.msra.mxu0 0.0
    %1244 = vmatprep.subr.mxu0 0.0
    %1245 = vmatpush1.msra.mxu0 0.0
    %1246 = vmatprep.subr.mxu0 0.0
    %1247 = vmatpush1.msra.mxu0 0.0
    %1248 = vmatprep.subr.mxu0 0.0
    %1249 = vmatpush1.msra.mxu0 0.0
    %1250 = vmatprep.subr.mxu0 0.0
    %1251 = vmatpush1.msra.mxu0 0.0
    %1252 = vmatprep.subr.mxu0 0.0
    %1253 = vmatpush1.msra.mxu0 0.0
    %1254 = vmatprep.subr.mxu0 0.0
    %1255 = vmatpush1.msra.mxu0 0.0
    %1256 = vmatprep.mubr.f32.mxu0 0.0
    %1257 = vmatmul.mubr.f32.gmra.mrb[0].mxu0 %v1190
    %v1258 = vpop.f32.mrb[0].mxu0
    %v1259 = vadd.f32 0.0, %v1258
    %v1260 = vpop.f32.mrb[0].mxu0
    %v1261 = vadd.f32 0.0, %v1260
    %1262 = vdwg.mxu0
    %v1263 = vadd.f32 %v1188, %v1259
    %v1264 = vadd.f32 %v1189, %v1261
    %v1265 = vtanh.pop %v1263
    %v1266 = vtanh.pop %v1264
    %v1267 = vmul.f32 %v1265, 0.5
    %v1268 = vmul.f32 %v1266, %v80
    %v1269 = vadd.f32 %v1267, 0.5
    %v1270 = vadd.f32 %v1268, %v85
    %v1271 = vmul.f32 %v1269, %v1178
    %v1272 = vmul.f32 %v1269, %v1270
    %1274 = vrot.lane.b32.xlu0 %v1272, 64
    %v1275 = vpop.permute.xlu0 %1274
    %v1277 = vadd.f32 %v1271, %v1275
    %v1278 = vtanh.pop %v1277
    %v1279 = vmul.f32 %v1270, %v1278
    %1281 = vrot.lane.b32.xlu0 %v1279, 64
    %v1282 = vpop.permute.xlu0 %1281
    %s1284 = scalar_lea.vmem [#allocation3], 56
    %1285 = vst.msk [vmem:[%s1284] sm:$0xff] %vm72, %v1282
    %s1286 = scalar_lea.vmem [#allocation2], 128
    %v1287 = vld [vmem:[%s1286] sm:$0xff]
    %v1288 = vld [vmem:[%s1286 + $0x8] sm:$0xff]
    %v1289 = vsel %vm72, %v1282, 0
    %1291 = vmatprep.subr.mxu0 %v87
    %1292 = vmatpush1.msra.mxu0 %v86
    %1293 = vmatprep.subr.mxu0 %v89
    %1294 = vmatpush1.msra.mxu0 %v88
    %1295 = vmatprep.subr.mxu0 %v91
    %1296 = vmatpush1.msra.mxu0 %v90
    %1297 = vmatprep.subr.mxu0 %v93
    %1298 = vmatpush1.msra.mxu0 %v92
    %1299 = vmatprep.subr.mxu0 %v95
    %1300 = vmatpush1.msra.mxu0 %v94
    %1301 = vmatprep.subr.mxu0 %v97
    %1302 = vmatpush1.msra.mxu0 %v96
    %1303 = vmatprep.subr.mxu0 %v99
    %1304 = vmatpush1.msra.mxu0 %v98
    %1305 = vmatprep.subr.mxu0 %v101
    %1306 = vmatpush1.msra.mxu0 %v100
    %1307 = vmatprep.subr.mxu0 0.0
    %1308 = vmatpush1.msra.mxu0 0.0
    %1309 = vmatprep.subr.mxu0 0.0
    %1310 = vmatpush1.msra.mxu0 0.0
    %1311 = vmatprep.subr.mxu0 0.0
    %1312 = vmatpush1.msra.mxu0 0.0
    %1313 = vmatprep.subr.mxu0 0.0
    %1314 = vmatpush1.msra.mxu0 0.0
    %1315 = vmatprep.subr.mxu0 0.0
    %1316 = vmatpush1.msra.mxu0 0.0
    %1317 = vmatprep.subr.mxu0 0.0
    %1318 = vmatpush1.msra.mxu0 0.0
    %1319 = vmatprep.subr.mxu0 0.0
    %1320 = vmatpush1.msra.mxu0 0.0
    %1321 = vmatprep.subr.mxu0 0.0
    %1322 = vmatpush1.msra.mxu0 0.0
    %1323 = vmatprep.subr.mxu0 0.0
    %1324 = vmatpush1.msra.mxu0 0.0
    %1325 = vmatprep.subr.mxu0 0.0
    %1326 = vmatpush1.msra.mxu0 0.0
    %1327 = vmatprep.subr.mxu0 0.0
    %1328 = vmatpush1.msra.mxu0 0.0
    %1329 = vmatprep.subr.mxu0 0.0
    %1330 = vmatpush1.msra.mxu0 0.0
    %1331 = vmatprep.subr.mxu0 0.0
    %1332 = vmatpush1.msra.mxu0 0.0
    %1333 = vmatprep.subr.mxu0 0.0
    %1334 = vmatpush1.msra.mxu0 0.0
    %1335 = vmatprep.subr.mxu0 0.0
    %1336 = vmatpush1.msra.mxu0 0.0
    %1337 = vmatprep.subr.mxu0 0.0
    %1338 = vmatpush1.msra.mxu0 0.0
    %1339 = vmatprep.subr.mxu0 0.0
    %1340 = vmatpush1.msra.mxu0 0.0
    %1341 = vmatprep.subr.mxu0 0.0
    %1342 = vmatpush1.msra.mxu0 0.0
    %1343 = vmatprep.subr.mxu0 0.0
    %1344 = vmatpush1.msra.mxu0 0.0
    %1345 = vmatprep.subr.mxu0 0.0
    %1346 = vmatpush1.msra.mxu0 0.0
    %1347 = vmatprep.subr.mxu0 0.0
    %1348 = vmatpush1.msra.mxu0 0.0
    %1349 = vmatprep.subr.mxu0 0.0
    %1350 = vmatpush1.msra.mxu0 0.0
    %1351 = vmatprep.subr.mxu0 0.0
    %1352 = vmatpush1.msra.mxu0 0.0
    %1353 = vmatprep.subr.mxu0 0.0
    %1354 = vmatpush1.msra.mxu0 0.0
    %1355 = vmatprep.mubr.f32.mxu0 0.0
    %1356 = vmatmul.mubr.f32.gmra.mrb[0].mxu0 %v1289
    %v1357 = vpop.f32.mrb[0].mxu0
    %v1358 = vadd.f32 0.0, %v1357
    %v1359 = vpop.f32.mrb[0].mxu0
    %v1360 = vadd.f32 0.0, %v1359
    %1361 = vdwg.mxu0
    %v1362 = vadd.f32 %v1287, %v1358
    %v1363 = vadd.f32 %v1288, %v1360
    %v1364 = vtanh.pop %v1362
    %v1365 = vtanh.pop %v1363
    %v1366 = vmul.f32 %v1364, 0.5
    %v1367 = vmul.f32 %v1365, %v80
    %v1368 = vadd.f32 %v1366, 0.5
    %v1369 = vadd.f32 %v1367, %v85
    %v1370 = vmul.f32 %v1368, %v1277
    %v1371 = vmul.f32 %v1368, %v1369
    %1373 = vrot.lane.b32.xlu0 %v1371, 64
    %v1374 = vpop.permute.xlu0 %1373
    %v1376 = vadd.f32 %v1370, %v1374
    %v1377 = vtanh.pop %v1376
    %v1378 = vmul.f32 %v1369, %v1377
    %1380 = vrot.lane.b32.xlu0 %v1378, 64
    %v1381 = vpop.permute.xlu0 %1380
    %s1383 = scalar_lea.vmem [#allocation3], 64
    %1384 = vst.msk [vmem:[%s1383] sm:$0xff] %vm72, %v1381
    %s1385 = scalar_lea.vmem [#allocation2], 144
    %v1386 = vld [vmem:[%s1385] sm:$0xff]
    %v1387 = vld [vmem:[%s1385 + $0x8] sm:$0xff]
    %v1388 = vsel %vm72, %v1381, 0
    %1390 = vmatprep.subr.mxu0 %v87
    %1391 = vmatpush1.msra.mxu0 %v86
    %1392 = vmatprep.subr.mxu0 %v89
    %1393 = vmatpush1.msra.mxu0 %v88
    %1394 = vmatprep.subr.mxu0 %v91
    %1395 = vmatpush1.msra.mxu0 %v90
    %1396 = vmatprep.subr.mxu0 %v93
    %1397 = vmatpush1.msra.mxu0 %v92
    %1398 = vmatprep.subr.mxu0 %v95
    %1399 = vmatpush1.msra.mxu0 %v94
    %1400 = vmatprep.subr.mxu0 %v97
    %1401 = vmatpush1.msra.mxu0 %v96
    %1402 = vmatprep.subr.mxu0 %v99
    %1403 = vmatpush1.msra.mxu0 %v98
    %1404 = vmatprep.subr.mxu0 %v101
    %1405 = vmatpush1.msra.mxu0 %v100
    %1406 = vmatprep.subr.mxu0 0.0
    %1407 = vmatpush1.msra.mxu0 0.0
    %1408 = vmatprep.subr.mxu0 0.0
    %1409 = vmatpush1.msra.mxu0 0.0
    %1410 = vmatprep.subr.mxu0 0.0
    %1411 = vmatpush1.msra.mxu0 0.0
    %1412 = vmatprep.subr.mxu0 0.0
    %1413 = vmatpush1.msra.mxu0 0.0
    %1414 = vmatprep.subr.mxu0 0.0
    %1415 = vmatpush1.msra.mxu0 0.0
    %1416 = vmatprep.subr.mxu0 0.0
    %1417 = vmatpush1.msra.mxu0 0.0
    %1418 = vmatprep.subr.mxu0 0.0
    %1419 = vmatpush1.msra.mxu0 0.0
    %1420 = vmatprep.subr.mxu0 0.0
    %1421 = vmatpush1.msra.mxu0 0.0
    %1422 = vmatprep.subr.mxu0 0.0
    %1423 = vmatpush1.msra.mxu0 0.0
    %1424 = vmatprep.subr.mxu0 0.0
    %1425 = vmatpush1.msra.mxu0 0.0
    %1426 = vmatprep.subr.mxu0 0.0
    %1427 = vmatpush1.msra.mxu0 0.0
    %1428 = vmatprep.subr.mxu0 0.0
    %1429 = vmatpush1.msra.mxu0 0.0
    %1430 = vmatprep.subr.mxu0 0.0
    %1431 = vmatpush1.msra.mxu0 0.0
    %1432 = vmatprep.subr.mxu0 0.0
    %1433 = vmatpush1.msra.mxu0 0.0
    %1434 = vmatprep.subr.mxu0 0.0
    %1435 = vmatpush1.msra.mxu0 0.0
    %1436 = vmatprep.subr.mxu0 0.0
    %1437 = vmatpush1.msra.mxu0 0.0
    %1438 = vmatprep.subr.mxu0 0.0
    %1439 = vmatpush1.msra.mxu0 0.0
    %1440 = vmatprep.subr.mxu0 0.0
    %1441 = vmatpush1.msra.mxu0 0.0
    %1442 = vmatprep.subr.mxu0 0.0
    %1443 = vmatpush1.msra.mxu0 0.0
    %1444 = vmatprep.subr.mxu0 0.0
    %1445 = vmatpush1.msra.mxu0 0.0
    %1446 = vmatprep.subr.mxu0 0.0
    %1447 = vmatpush1.msra.mxu0 0.0
    %1448 = vmatprep.subr.mxu0 0.0
    %1449 = vmatpush1.msra.mxu0 0.0
    %1450 = vmatprep.subr.mxu0 0.0
    %1451 = vmatpush1.msra.mxu0 0.0
    %1452 = vmatprep.subr.mxu0 0.0
    %1453 = vmatpush1.msra.mxu0 0.0
    %1454 = vmatprep.mubr.f32.mxu0 0.0
    %1455 = vmatmul.mubr.f32.gmra.mrb[0].mxu0 %v1388
    %v1456 = vpop.f32.mrb[0].mxu0
    %v1457 = vadd.f32 0.0, %v1456
    %v1458 = vpop.f32.mrb[0].mxu0
    %v1459 = vadd.f32 0.0, %v1458
    %1460 = vdwg.mxu0
    %v1461 = vadd.f32 %v1386, %v1457
    %v1462 = vadd.f32 %v1387, %v1459
    %v1463 = vtanh.pop %v1461
    %v1464 = vtanh.pop %v1462
    %v1465 = vmul.f32 %v1463, 0.5
    %v1466 = vmul.f32 %v1464, %v80
    %v1467 = vadd.f32 %v1465, 0.5
    %v1468 = vadd.f32 %v1466, %v85
    %v1469 = vmul.f32 %v1467, %v1376
    %v1470 = vmul.f32 %v1467, %v1468
    %1472 = vrot.lane.b32.xlu0 %v1470, 64
    %v1473 = vpop.permute.xlu0 %1472
    %v1475 = vadd.f32 %v1469, %v1473
    %v1476 = vtanh.pop %v1475
    %v1477 = vmul.f32 %v1468, %v1476
    %1479 = vrot.lane.b32.xlu0 %v1477, 64
    %v1480 = vpop.permute.xlu0 %1479
    %s1482 = scalar_lea.vmem [#allocation3], 72
    %1483 = vst.msk [vmem:[%s1482] sm:$0xff] %vm72, %v1480
    %s1484 = scalar_lea.vmem [#allocation2], 160
    %v1485 = vld [vmem:[%s1484] sm:$0xff]
    %v1486 = vld [vmem:[%s1484 + $0x8] sm:$0xff]
    %v1487 = vsel %vm72, %v1480, 0
    %1489 = vmatprep.subr.mxu0 %v87
    %1490 = vmatpush1.msra.mxu0 %v86
    %1491 = vmatprep.subr.mxu0 %v89
    %1492 = vmatpush1.msra.mxu0 %v88
    %1493 = vmatprep.subr.mxu0 %v91
    %1494 = vmatpush1.msra.mxu0 %v90
    %1495 = vmatprep.subr.mxu0 %v93
    %1496 = vmatpush1.msra.mxu0 %v92
    %1497 = vmatprep.subr.mxu0 %v95
    %1498 = vmatpush1.msra.mxu0 %v94
    %1499 = vmatprep.subr.mxu0 %v97
    %1500 = vmatpush1.msra.mxu0 %v96
    %1501 = vmatprep.subr.mxu0 %v99
    %1502 = vmatpush1.msra.mxu0 %v98
    %1503 = vmatprep.subr.mxu0 %v101
    %1504 = vmatpush1.msra.mxu0 %v100
    %1505 = vmatprep.subr.mxu0 0.0
    %1506 = vmatpush1.msra.mxu0 0.0
    %1507 = vmatprep.subr.mxu0 0.0
    %1508 = vmatpush1.msra.mxu0 0.0
    %1509 = vmatprep.subr.mxu0 0.0
    %1510 = vmatpush1.msra.mxu0 0.0
    %1511 = vmatprep.subr.mxu0 0.0
    %1512 = vmatpush1.msra.mxu0 0.0
    %1513 = vmatprep.subr.mxu0 0.0
    %1514 = vmatpush1.msra.mxu0 0.0
    %1515 = vmatprep.subr.mxu0 0.0
    %1516 = vmatpush1.msra.mxu0 0.0
    %1517 = vmatprep.subr.mxu0 0.0
    %1518 = vmatpush1.msra.mxu0 0.0
    %1519 = vmatprep.subr.mxu0 0.0
    %1520 = vmatpush1.msra.mxu0 0.0
    %1521 = vmatprep.subr.mxu0 0.0
    %1522 = vmatpush1.msra.mxu0 0.0
    %1523 = vmatprep.subr.mxu0 0.0
    %1524 = vmatpush1.msra.mxu0 0.0
    %1525 = vmatprep.subr.mxu0 0.0
    %1526 = vmatpush1.msra.mxu0 0.0
    %1527 = vmatprep.subr.mxu0 0.0
    %1528 = vmatpush1.msra.mxu0 0.0
    %1529 = vmatprep.subr.mxu0 0.0
    %1530 = vmatpush1.msra.mxu0 0.0
    %1531 = vmatprep.subr.mxu0 0.0
    %1532 = vmatpush1.msra.mxu0 0.0
    %1533 = vmatprep.subr.mxu0 0.0
    %1534 = vmatpush1.msra.mxu0 0.0
    %1535 = vmatprep.subr.mxu0 0.0
    %1536 = vmatpush1.msra.mxu0 0.0
    %1537 = vmatprep.subr.mxu0 0.0
    %1538 = vmatpush1.msra.mxu0 0.0
    %1539 = vmatprep.subr.mxu0 0.0
    %1540 = vmatpush1.msra.mxu0 0.0
    %1541 = vmatprep.subr.mxu0 0.0
    %1542 = vmatpush1.msra.mxu0 0.0
    %1543 = vmatprep.subr.mxu0 0.0
    %1544 = vmatpush1.msra.mxu0 0.0
    %1545 = vmatprep.subr.mxu0 0.0
    %1546 = vmatpush1.msra.mxu0 0.0
    %1547 = vmatprep.subr.mxu0 0.0
    %1548 = vmatpush1.msra.mxu0 0.0
    %1549 = vmatprep.subr.mxu0 0.0
    %1550 = vmatpush1.msra.mxu0 0.0
    %1551 = vmatprep.subr.mxu0 0.0
    %1552 = vmatpush1.msra.mxu0 0.0
    %1553 = vmatprep.mubr.f32.mxu0 0.0
    %1554 = vmatmul.mubr.f32.gmra.mrb[0].mxu0 %v1487
    %v1555 = vpop.f32.mrb[0].mxu0
    %v1556 = vadd.f32 0.0, %v1555
    %v1557 = vpop.f32.mrb[0].mxu0
    %v1558 = vadd.f32 0.0, %v1557
    %1559 = vdwg.mxu0
    %v1560 = vadd.f32 %v1485, %v1556
    %v1561 = vadd.f32 %v1486, %v1558
    %v1562 = vtanh.pop %v1560
    %v1563 = vtanh.pop %v1561
    %v1564 = vmul.f32 %v1562, 0.5
    %v1565 = vmul.f32 %v1563, %v80
    %v1566 = vadd.f32 %v1564, 0.5
    %v1567 = vadd.f32 %v1565, %v85
    %v1568 = vmul.f32 %v1566, %v1475
    %v1569 = vmul.f32 %v1566, %v1567
    %1571 = vrot.lane.b32.xlu0 %v1569, 64
    %v1572 = vpop.permute.xlu0 %1571
    %v1574 = vadd.f32 %v1568, %v1572
    %v1575 = vtanh.pop %v1574
    %v1576 = vmul.f32 %v1567, %v1575
    %1578 = vrot.lane.b32.xlu0 %v1576, 64
    %v1579 = vpop.permute.xlu0 %1578
    %s1581 = scalar_lea.vmem [#allocation3], 80
    %1582 = vst.msk [vmem:[%s1581] sm:$0xff] %vm72, %v1579
    %s1583 = scalar_lea.vmem [#allocation2], 176
    %v1584 = vld [vmem:[%s1583] sm:$0xff]
    %v1585 = vld [vmem:[%s1583 + $0x8] sm:$0xff]
    %v1586 = vsel %vm72, %v1579, 0
    %1588 = vmatprep.subr.mxu0 %v87
    %1589 = vmatpush1.msra.mxu0 %v86
    %1590 = vmatprep.subr.mxu0 %v89
    %1591 = vmatpush1.msra.mxu0 %v88
    %1592 = vmatprep.subr.mxu0 %v91
    %1593 = vmatpush1.msra.mxu0 %v90
    %1594 = vmatprep.subr.mxu0 %v93
    %1595 = vmatpush1.msra.mxu0 %v92
    %1596 = vmatprep.subr.mxu0 %v95
    %1597 = vmatpush1.msra.mxu0 %v94
    %1598 = vmatprep.subr.mxu0 %v97
    %1599 = vmatpush1.msra.mxu0 %v96
    %1600 = vmatprep.subr.mxu0 %v99
    %1601 = vmatpush1.msra.mxu0 %v98
    %1602 = vmatprep.subr.mxu0 %v101
    %1603 = vmatpush1.msra.mxu0 %v100
    %1604 = vmatprep.subr.mxu0 0.0
    %1605 = vmatpush1.msra.mxu0 0.0
    %1606 = vmatprep.subr.mxu0 0.0
    %1607 = vmatpush1.msra.mxu0 0.0
    %1608 = vmatprep.subr.mxu0 0.0
    %1609 = vmatpush1.msra.mxu0 0.0
    %1610 = vmatprep.subr.mxu0 0.0
    %1611 = vmatpush1.msra.mxu0 0.0
    %1612 = vmatprep.subr.mxu0 0.0
    %1613 = vmatpush1.msra.mxu0 0.0
    %1614 = vmatprep.subr.mxu0 0.0
    %1615 = vmatpush1.msra.mxu0 0.0
    %1616 = vmatprep.subr.mxu0 0.0
    %1617 = vmatpush1.msra.mxu0 0.0
    %1618 = vmatprep.subr.mxu0 0.0
    %1619 = vmatpush1.msra.mxu0 0.0
    %1620 = vmatprep.subr.mxu0 0.0
    %1621 = vmatpush1.msra.mxu0 0.0
    %1622 = vmatprep.subr.mxu0 0.0
    %1623 = vmatpush1.msra.mxu0 0.0
    %1624 = vmatprep.subr.mxu0 0.0
    %1625 = vmatpush1.msra.mxu0 0.0
    %1626 = vmatprep.subr.mxu0 0.0
    %1627 = vmatpush1.msra.mxu0 0.0
    %1628 = vmatprep.subr.mxu0 0.0
    %1629 = vmatpush1.msra.mxu0 0.0
    %1630 = vmatprep.subr.mxu0 0.0
    %1631 = vmatpush1.msra.mxu0 0.0
    %1632 = vmatprep.subr.mxu0 0.0
    %1633 = vmatpush1.msra.mxu0 0.0
    %1634 = vmatprep.subr.mxu0 0.0
    %1635 = vmatpush1.msra.mxu0 0.0
    %1636 = vmatprep.subr.mxu0 0.0
    %1637 = vmatpush1.msra.mxu0 0.0
    %1638 = vmatprep.subr.mxu0 0.0
    %1639 = vmatpush1.msra.mxu0 0.0
    %1640 = vmatprep.subr.mxu0 0.0
    %1641 = vmatpush1.msra.mxu0 0.0
    %1642 = vmatprep.subr.mxu0 0.0
    %1643 = vmatpush1.msra.mxu0 0.0
    %1644 = vmatprep.subr.mxu0 0.0
    %1645 = vmatpush1.msra.mxu0 0.0
    %1646 = vmatprep.subr.mxu0 0.0
    %1647 = vmatpush1.msra.mxu0 0.0
    %1648 = vmatprep.subr.mxu0 0.0
    %1649 = vmatpush1.msra.mxu0 0.0
    %1650 = vmatprep.subr.mxu0 0.0
    %1651 = vmatpush1.msra.mxu0 0.0
    %1652 = vmatprep.mubr.f32.mxu0 0.0
    %1653 = vmatmul.mubr.f32.gmra.mrb[0].mxu0 %v1586
    %v1654 = vpop.f32.mrb[0].mxu0
    %v1655 = vadd.f32 0.0, %v1654
    %v1656 = vpop.f32.mrb[0].mxu0
    %v1657 = vadd.f32 0.0, %v1656
    %1658 = vdwg.mxu0
    %v1659 = vadd.f32 %v1584, %v1655
    %v1660 = vadd.f32 %v1585, %v1657
    %v1661 = vtanh.pop %v1659
    %v1662 = vtanh.pop %v1660
    %v1663 = vmul.f32 %v1661, 0.5
    %v1664 = vmul.f32 %v1662, %v80
    %v1665 = vadd.f32 %v1663, 0.5
    %v1666 = vadd.f32 %v1664, %v85
    %v1667 = vmul.f32 %v1665, %v1574
    %v1668 = vmul.f32 %v1665, %v1666
    %1670 = vrot.lane.b32.xlu0 %v1668, 64
    %v1671 = vpop.permute.xlu0 %1670
    %v1673 = vadd.f32 %v1667, %v1671
    %v1674 = vtanh.pop %v1673
    %v1675 = vmul.f32 %v1666, %v1674
    %1677 = vrot.lane.b32.xlu0 %v1675, 64
    %v1678 = vpop.permute.xlu0 %1677
    %s1680 = scalar_lea.vmem [#allocation3], 88
    %1681 = vst.msk [vmem:[%s1680] sm:$0xff] %vm72, %v1678
    %s1682 = scalar_lea.vmem [#allocation2], 192
    %v1683 = vld [vmem:[%s1682] sm:$0xff]
    %v1684 = vld [vmem:[%s1682 + $0x8] sm:$0xff]
    %v1685 = vsel %vm72, %v1678, 0
    %1687 = vmatprep.subr.mxu0 %v87
    %1688 = vmatpush1.msra.mxu0 %v86
    %1689 = vmatprep.subr.mxu0 %v89
    %1690 = vmatpush1.msra.mxu0 %v88
    %1691 = vmatprep.subr.mxu0 %v91
    %1692 = vmatpush1.msra.mxu0 %v90
    %1693 = vmatprep.subr.mxu0 %v93
    %1694 = vmatpush1.msra.mxu0 %v92
    %1695 = vmatprep.subr.mxu0 %v95
    %1696 = vmatpush1.msra.mxu0 %v94
    %1697 = vmatprep.subr.mxu0 %v97
    %1698 = vmatpush1.msra.mxu0 %v96
    %1699 = vmatprep.subr.mxu0 %v99
    %1700 = vmatpush1.msra.mxu0 %v98
    %1701 = vmatprep.subr.mxu0 %v101
    %1702 = vmatpush1.msra.mxu0 %v100
    %1703 = vmatprep.subr.mxu0 0.0
    %1704 = vmatpush1.msra.mxu0 0.0
    %1705 = vmatprep.subr.mxu0 0.0
    %1706 = vmatpush1.msra.mxu0 0.0
    %1707 = vmatprep.subr.mxu0 0.0
    %1708 = vmatpush1.msra.mxu0 0.0
    %1709 = vmatprep.subr.mxu0 0.0
    %1710 = vmatpush1.msra.mxu0 0.0
    %1711 = vmatprep.subr.mxu0 0.0
    %1712 = vmatpush1.msra.mxu0 0.0
    %1713 = vmatprep.subr.mxu0 0.0
    %1714 = vmatpush1.msra.mxu0 0.0
    %1715 = vmatprep.subr.mxu0 0.0
    %1716 = vmatpush1.msra.mxu0 0.0
    %1717 = vmatprep.subr.mxu0 0.0
    %1718 = vmatpush1.msra.mxu0 0.0
    %1719 = vmatprep.subr.mxu0 0.0
    %1720 = vmatpush1.msra.mxu0 0.0
    %1721 = vmatprep.subr.mxu0 0.0
    %1722 = vmatpush1.msra.mxu0 0.0
    %1723 = vmatprep.subr.mxu0 0.0
    %1724 = vmatpush1.msra.mxu0 0.0
    %1725 = vmatprep.subr.mxu0 0.0
    %1726 = vmatpush1.msra.mxu0 0.0
    %1727 = vmatprep.subr.mxu0 0.0
    %1728 = vmatpush1.msra.mxu0 0.0
    %1729 = vmatprep.subr.mxu0 0.0
    %1730 = vmatpush1.msra.mxu0 0.0
    %1731 = vmatprep.subr.mxu0 0.0
    %1732 = vmatpush1.msra.mxu0 0.0
    %1733 = vmatprep.subr.mxu0 0.0
    %1734 = vmatpush1.msra.mxu0 0.0
    %1735 = vmatprep.subr.mxu0 0.0
    %1736 = vmatpush1.msra.mxu0 0.0
    %1737 = vmatprep.subr.mxu0 0.0
    %1738 = vmatpush1.msra.mxu0 0.0
    %1739 = vmatprep.subr.mxu0 0.0
    %1740 = vmatpush1.msra.mxu0 0.0
    %1741 = vmatprep.subr.mxu0 0.0
    %1742 = vmatpush1.msra.mxu0 0.0
    %1743 = vmatprep.subr.mxu0 0.0
    %1744 = vmatpush1.msra.mxu0 0.0
    %1745 = vmatprep.subr.mxu0 0.0
    %1746 = vmatpush1.msra.mxu0 0.0
    %1747 = vmatprep.subr.mxu0 0.0
    %1748 = vmatpush1.msra.mxu0 0.0
    %1749 = vmatprep.subr.mxu0 0.0
    %1750 = vmatpush1.msra.mxu0 0.0
    %1751 = vmatprep.mubr.f32.mxu0 0.0
    %1752 = vmatmul.mubr.f32.gmra.mrb[0].mxu0 %v1685
    %v1753 = vpop.f32.mrb[0].mxu0
    %v1754 = vadd.f32 0.0, %v1753
    %v1755 = vpop.f32.mrb[0].mxu0
    %v1756 = vadd.f32 0.0, %v1755
    %1757 = vdwg.mxu0
    %v1758 = vadd.f32 %v1683, %v1754
    %v1759 = vadd.f32 %v1684, %v1756
    %v1760 = vtanh.pop %v1758
    %v1761 = vtanh.pop %v1759
    %v1762 = vmul.f32 %v1760, 0.5
    %v1763 = vmul.f32 %v1761, %v80
    %v1764 = vadd.f32 %v1762, 0.5
    %v1765 = vadd.f32 %v1763, %v85
    %v1766 = vmul.f32 %v1764, %v1673
    %v1767 = vmul.f32 %v1764, %v1765
    %1769 = vrot.lane.b32.xlu0 %v1767, 64
    %v1770 = vpop.permute.xlu0 %1769
    %v1772 = vadd.f32 %v1766, %v1770
    %v1773 = vtanh.pop %v1772
    %v1774 = vmul.f32 %v1765, %v1773
    %1776 = vrot.lane.b32.xlu0 %v1774, 64
    %v1777 = vpop.permute.xlu0 %1776
    %s1779 = scalar_lea.vmem [#allocation3], 96
    %1780 = vst.msk [vmem:[%s1779] sm:$0xff] %vm72, %v1777
    %s1781 = scalar_lea.vmem [#allocation2], 208
    %v1782 = vld [vmem:[%s1781] sm:$0xff]
    %v1783 = vld [vmem:[%s1781 + $0x8] sm:$0xff]
    %v1784 = vsel %vm72, %v1777, 0
    %1786 = vmatprep.subr.mxu0 %v87
    %1787 = vmatpush1.msra.mxu0 %v86
    %1788 = vmatprep.subr.mxu0 %v89
    %1789 = vmatpush1.msra.mxu0 %v88
    %1790 = vmatprep.subr.mxu0 %v91
    %1791 = vmatpush1.msra.mxu0 %v90
    %1792 = vmatprep.subr.mxu0 %v93
    %1793 = vmatpush1.msra.mxu0 %v92
    %1794 = vmatprep.subr.mxu0 %v95
    %1795 = vmatpush1.msra.mxu0 %v94
    %1796 = vmatprep.subr.mxu0 %v97
    %1797 = vmatpush1.msra.mxu0 %v96
    %1798 = vmatprep.subr.mxu0 %v99
    %1799 = vmatpush1.msra.mxu0 %v98
    %1800 = vmatprep.subr.mxu0 %v101
    %1801 = vmatpush1.msra.mxu0 %v100
    %1802 = vmatprep.subr.mxu0 0.0
    %1803 = vmatpush1.msra.mxu0 0.0
    %1804 = vmatprep.subr.mxu0 0.0
    %1805 = vmatpush1.msra.mxu0 0.0
    %1806 = vmatprep.subr.mxu0 0.0
    %1807 = vmatpush1.msra.mxu0 0.0
    %1808 = vmatprep.subr.mxu0 0.0
    %1809 = vmatpush1.msra.mxu0 0.0
    %1810 = vmatprep.subr.mxu0 0.0
    %1811 = vmatpush1.msra.mxu0 0.0
    %1812 = vmatprep.subr.mxu0 0.0
    %1813 = vmatpush1.msra.mxu0 0.0
    %1814 = vmatprep.subr.mxu0 0.0
    %1815 = vmatpush1.msra.mxu0 0.0
    %1816 = vmatprep.subr.mxu0 0.0
    %1817 = vmatpush1.msra.mxu0 0.0
    %1818 = vmatprep.subr.mxu0 0.0
    %1819 = vmatpush1.msra.mxu0 0.0
    %1820 = vmatprep.subr.mxu0 0.0
    %1821 = vmatpush1.msra.mxu0 0.0
    %1822 = vmatprep.subr.mxu0 0.0
    %1823 = vmatpush1.msra.mxu0 0.0
    %1824 = vmatprep.subr.mxu0 0.0
    %1825 = vmatpush1.msra.mxu0 0.0
    %1826 = vmatprep.subr.mxu0 0.0
    %1827 = vmatpush1.msra.mxu0 0.0
    %1828 = vmatprep.subr.mxu0 0.0
    %1829 = vmatpush1.msra.mxu0 0.0
    %1830 = vmatprep.subr.mxu0 0.0
    %1831 = vmatpush1.msra.mxu0 0.0
    %1832 = vmatprep.subr.mxu0 0.0
    %1833 = vmatpush1.msra.mxu0 0.0
    %1834 = vmatprep.subr.mxu0 0.0
    %1835 = vmatpush1.msra.mxu0 0.0
    %1836 = vmatprep.subr.mxu0 0.0
    %1837 = vmatpush1.msra.mxu0 0.0
    %1838 = vmatprep.subr.mxu0 0.0
    %1839 = vmatpush1.msra.mxu0 0.0
    %1840 = vmatprep.subr.mxu0 0.0
    %1841 = vmatpush1.msra.mxu0 0.0
    %1842 = vmatprep.subr.mxu0 0.0
    %1843 = vmatpush1.msra.mxu0 0.0
    %1844 = vmatprep.subr.mxu0 0.0
    %1845 = vmatpush1.msra.mxu0 0.0
    %1846 = vmatprep.subr.mxu0 0.0
    %1847 = vmatpush1.msra.mxu0 0.0
    %1848 = vmatprep.subr.mxu0 0.0
    %1849 = vmatpush1.msra.mxu0 0.0
    %1850 = vmatprep.mubr.f32.mxu0 0.0
    %1851 = vmatmul.mubr.f32.gmra.mrb[0].mxu0 %v1784
    %v1852 = vpop.f32.mrb[0].mxu0
    %v1853 = vadd.f32 0.0, %v1852
    %v1854 = vpop.f32.mrb[0].mxu0
    %v1855 = vadd.f32 0.0, %v1854
    %1856 = vdwg.mxu0
    %v1857 = vadd.f32 %v1782, %v1853
    %v1858 = vadd.f32 %v1783, %v1855
    %v1859 = vtanh.pop %v1857
    %v1860 = vtanh.pop %v1858
    %v1861 = vmul.f32 %v1859, 0.5
    %v1862 = vmul.f32 %v1860, %v80
    %v1863 = vadd.f32 %v1861, 0.5
    %v1864 = vadd.f32 %v1862, %v85
    %v1865 = vmul.f32 %v1863, %v1772
    %v1866 = vmul.f32 %v1863, %v1864
    %1868 = vrot.lane.b32.xlu0 %v1866, 64
    %v1869 = vpop.permute.xlu0 %1868
    %v1871 = vadd.f32 %v1865, %v1869
    %v1872 = vtanh.pop %v1871
    %v1873 = vmul.f32 %v1864, %v1872
    %1875 = vrot.lane.b32.xlu0 %v1873, 64
    %v1876 = vpop.permute.xlu0 %1875
    %s1878 = scalar_lea.vmem [#allocation3], 104
    %1879 = vst.msk [vmem:[%s1878] sm:$0xff] %vm72, %v1876
    %s1880 = scalar_lea.vmem [#allocation2], 224
    %v1881 = vld [vmem:[%s1880] sm:$0xff]
    %v1882 = vld [vmem:[%s1880 + $0x8] sm:$0xff]
    %v1883 = vsel %vm72, %v1876, 0
    %1885 = vmatprep.subr.mxu0 %v87
    %1886 = vmatpush1.msra.mxu0 %v86
    %1887 = vmatprep.subr.mxu0 %v89
    %1888 = vmatpush1.msra.mxu0 %v88
    %1889 = vmatprep.subr.mxu0 %v91
    %1890 = vmatpush1.msra.mxu0 %v90
    %1891 = vmatprep.subr.mxu0 %v93
    %1892 = vmatpush1.msra.mxu0 %v92
    %1893 = vmatprep.subr.mxu0 %v95
    %1894 = vmatpush1.msra.mxu0 %v94
    %1895 = vmatprep.subr.mxu0 %v97
    %1896 = vmatpush1.msra.mxu0 %v96
    %1897 = vmatprep.subr.mxu0 %v99
    %1898 = vmatpush1.msra.mxu0 %v98
    %1899 = vmatprep.subr.mxu0 %v101
    %1900 = vmatpush1.msra.mxu0 %v100
    %1901 = vmatprep.subr.mxu0 0.0
    %1902 = vmatpush1.msra.mxu0 0.0
    %1903 = vmatprep.subr.mxu0 0.0
    %1904 = vmatpush1.msra.mxu0 0.0
    %1905 = vmatprep.subr.mxu0 0.0
    %1906 = vmatpush1.msra.mxu0 0.0
    %1907 = vmatprep.subr.mxu0 0.0
    %1908 = vmatpush1.msra.mxu0 0.0
    %1909 = vmatprep.subr.mxu0 0.0
    %1910 = vmatpush1.msra.mxu0 0.0
    %1911 = vmatprep.subr.mxu0 0.0
    %1912 = vmatpush1.msra.mxu0 0.0
    %1913 = vmatprep.subr.mxu0 0.0
    %1914 = vmatpush1.msra.mxu0 0.0
    %1915 = vmatprep.subr.mxu0 0.0
    %1916 = vmatpush1.msra.mxu0 0.0
    %1917 = vmatprep.subr.mxu0 0.0
    %1918 = vmatpush1.msra.mxu0 0.0
    %1919 = vmatprep.subr.mxu0 0.0
    %1920 = vmatpush1.msra.mxu0 0.0
    %1921 = vmatprep.subr.mxu0 0.0
    %1922 = vmatpush1.msra.mxu0 0.0
    %1923 = vmatprep.subr.mxu0 0.0
    %1924 = vmatpush1.msra.mxu0 0.0
    %1925 = vmatprep.subr.mxu0 0.0
    %1926 = vmatpush1.msra.mxu0 0.0
    %1927 = vmatprep.subr.mxu0 0.0
    %1928 = vmatpush1.msra.mxu0 0.0
    %1929 = vmatprep.subr.mxu0 0.0
    %1930 = vmatpush1.msra.mxu0 0.0
    %1931 = vmatprep.subr.mxu0 0.0
    %1932 = vmatpush1.msra.mxu0 0.0
    %1933 = vmatprep.subr.mxu0 0.0
    %1934 = vmatpush1.msra.mxu0 0.0
    %1935 = vmatprep.subr.mxu0 0.0
    %1936 = vmatpush1.msra.mxu0 0.0
    %1937 = vmatprep.subr.mxu0 0.0
    %1938 = vmatpush1.msra.mxu0 0.0
    %1939 = vmatprep.subr.mxu0 0.0
    %1940 = vmatpush1.msra.mxu0 0.0
    %1941 = vmatprep.subr.mxu0 0.0
    %1942 = vmatpush1.msra.mxu0 0.0
    %1943 = vmatprep.subr.mxu0 0.0
    %1944 = vmatpush1.msra.mxu0 0.0
    %1945 = vmatprep.subr.mxu0 0.0
    %1946 = vmatpush1.msra.mxu0 0.0
    %1947 = vmatprep.subr.mxu0 0.0
    %1948 = vmatpush1.msra.mxu0 0.0
    %1949 = vmatprep.mubr.f32.mxu0 0.0
    %1950 = vmatmul.mubr.f32.gmra.mrb[0].mxu0 %v1883
    %v1951 = vpop.f32.mrb[0].mxu0
    %v1952 = vadd.f32 0.0, %v1951
    %v1953 = vpop.f32.mrb[0].mxu0
    %v1954 = vadd.f32 0.0, %v1953
    %1955 = vdwg.mxu0
    %v1956 = vadd.f32 %v1881, %v1952
    %v1957 = vadd.f32 %v1882, %v1954
    %v1958 = vtanh.pop %v1956
    %v1959 = vtanh.pop %v1957
    %v1960 = vmul.f32 %v1958, 0.5
    %v1961 = vmul.f32 %v1959, %v80
    %v1962 = vadd.f32 %v1960, 0.5
    %v1963 = vadd.f32 %v1961, %v85
    %v1964 = vmul.f32 %v1962, %v1871
    %v1965 = vmul.f32 %v1962, %v1963
    %1967 = vrot.lane.b32.xlu0 %v1965, 64
    %v1968 = vpop.permute.xlu0 %1967
    %v1970 = vadd.f32 %v1964, %v1968
    %v1971 = vtanh.pop %v1970
    %v1972 = vmul.f32 %v1963, %v1971
    %1974 = vrot.lane.b32.xlu0 %v1972, 64
    %v1975 = vpop.permute.xlu0 %1974
    %s1977 = scalar_lea.vmem [#allocation3], 112
    %1978 = vst.msk [vmem:[%s1977] sm:$0xff] %vm72, %v1975
    %s1979 = scalar_lea.vmem [#allocation2], 240
    %v1980 = vld [vmem:[%s1979] sm:$0xff]
    %v1981 = vld [vmem:[%s1979 + $0x8] sm:$0xff]
    %v1982 = vsel %vm72, %v1975, 0
    %1984 = vmatprep.subr.mxu0 %v87
    %1985 = vmatpush1.msra.mxu0 %v86
    %1986 = vmatprep.subr.mxu0 %v89
    %1987 = vmatpush1.msra.mxu0 %v88
    %1988 = vmatprep.subr.mxu0 %v91
    %1989 = vmatpush1.msra.mxu0 %v90
    %1990 = vmatprep.subr.mxu0 %v93
    %1991 = vmatpush1.msra.mxu0 %v92
    %1992 = vmatprep.subr.mxu0 %v95
    %1993 = vmatpush1.msra.mxu0 %v94
    %1994 = vmatprep.subr.mxu0 %v97
    %1995 = vmatpush1.msra.mxu0 %v96
    %1996 = vmatprep.subr.mxu0 %v99
    %1997 = vmatpush1.msra.mxu0 %v98
    %1998 = vmatprep.subr.mxu0 %v101
    %1999 = vmatpush1.msra.mxu0 %v100
    %2000 = vmatprep.subr.mxu0 0.0
    %2001 = vmatpush1.msra.mxu0 0.0
    %2002 = vmatprep.subr.mxu0 0.0
    %2003 = vmatpush1.msra.mxu0 0.0
    %2004 = vmatprep.subr.mxu0 0.0
    %2005 = vmatpush1.msra.mxu0 0.0
    %2006 = vmatprep.subr.mxu0 0.0
    %2007 = vmatpush1.msra.mxu0 0.0
    %2008 = vmatprep.subr.mxu0 0.0
    %2009 = vmatpush1.msra.mxu0 0.0
    %2010 = vmatprep.subr.mxu0 0.0
    %2011 = vmatpush1.msra.mxu0 0.0
    %2012 = vmatprep.subr.mxu0 0.0
    %2013 = vmatpush1.msra.mxu0 0.0
    %2014 = vmatprep.subr.mxu0 0.0
    %2015 = vmatpush1.msra.mxu0 0.0
    %2016 = vmatprep.subr.mxu0 0.0
    %2017 = vmatpush1.msra.mxu0 0.0
    %2018 = vmatprep.subr.mxu0 0.0
    %2019 = vmatpush1.msra.mxu0 0.0
    %2020 = vmatprep.subr.mxu0 0.0
    %2021 = vmatpush1.msra.mxu0 0.0
    %2022 = vmatprep.subr.mxu0 0.0
    %2023 = vmatpush1.msra.mxu0 0.0
    %2024 = vmatprep.subr.mxu0 0.0
    %2025 = vmatpush1.msra.mxu0 0.0
    %2026 = vmatprep.subr.mxu0 0.0
    %2027 = vmatpush1.msra.mxu0 0.0
    %2028 = vmatprep.subr.mxu0 0.0
    %2029 = vmatpush1.msra.mxu0 0.0
    %2030 = vmatprep.subr.mxu0 0.0
    %2031 = vmatpush1.msra.mxu0 0.0
    %2032 = vmatprep.subr.mxu0 0.0
    %2033 = vmatpush1.msra.mxu0 0.0
    %2034 = vmatprep.subr.mxu0 0.0
    %2035 = vmatpush1.msra.mxu0 0.0
    %2036 = vmatprep.subr.mxu0 0.0
    %2037 = vmatpush1.msra.mxu0 0.0
    %2038 = vmatprep.subr.mxu0 0.0
    %2039 = vmatpush1.msra.mxu0 0.0
    %2040 = vmatprep.subr.mxu0 0.0
    %2041 = vmatpush1.msra.mxu0 0.0
    %2042 = vmatprep.subr.mxu0 0.0
    %2043 = vmatpush1.msra.mxu0 0.0
    %2044 = vmatprep.subr.mxu0 0.0
    %2045 = vmatpush1.msra.mxu0 0.0
    %2046 = vmatprep.subr.mxu0 0.0
    %2047 = vmatpush1.msra.mxu0 0.0
    %2048 = vmatprep.mubr.f32.mxu0 0.0
    %2049 = vmatmul.mubr.f32.gmra.mrb[0].mxu0 %v1982
    %v2050 = vpop.f32.mrb[0].mxu0
    %v2051 = vadd.f32 0.0, %v2050
    %v2052 = vpop.f32.mrb[0].mxu0
    %v2053 = vadd.f32 0.0, %v2052
    %2054 = vdwg.mxu0
    %v2055 = vadd.f32 %v1980, %v2051
    %v2056 = vadd.f32 %v1981, %v2053
    %v2057 = vtanh.pop %v2055
    %v2058 = vtanh.pop %v2056
    %v2059 = vmul.f32 %v2057, 0.5
    %v2060 = vmul.f32 %v2058, %v80
    %v2061 = vadd.f32 %v2059, 0.5
    %v2062 = vadd.f32 %v2060, %v85
    %v2063 = vmul.f32 %v2061, %v1970
    %v2064 = vmul.f32 %v2061, %v2062
    %2066 = vrot.lane.b32.xlu0 %v2064, 64
    %v2067 = vpop.permute.xlu0 %2066
    %v2069 = vadd.f32 %v2063, %v2067
    %v2070 = vtanh.pop %v2069
    %v2071 = vmul.f32 %v2062, %v2070
    %2073 = vrot.lane.b32.xlu0 %v2071, 64
    %v2074 = vpop.permute.xlu0 %2073
    %s2076 = scalar_lea.vmem [#allocation3], 120
    %2077 = vst.msk [vmem:[%s2076] sm:$0xff] %vm72, %v2074
    %s2078 = scalar_lea.vmem [#allocation2], 256
    %v2079 = vld [vmem:[%s2078] sm:$0xff]
    %v2080 = vld [vmem:[%s2078 + $0x8] sm:$0xff]
    %v2081 = vsel %vm72, %v2074, 0
    %2083 = vmatprep.subr.mxu0 %v87
    %2084 = vmatpush1.msra.mxu0 %v86
    %2085 = vmatprep.subr.mxu0 %v89
    %2086 = vmatpush1.msra.mxu0 %v88
    %2087 = vmatprep.subr.mxu0 %v91
    %2088 = vmatpush1.msra.mxu0 %v90
    %2089 = vmatprep.subr.mxu0 %v93
    %2090 = vmatpush1.msra.mxu0 %v92
    %2091 = vmatprep.subr.mxu0 %v95
    %2092 = vmatpush1.msra.mxu0 %v94
    %2093 = vmatprep.subr.mxu0 %v97
    %2094 = vmatpush1.msra.mxu0 %v96
    %2095 = vmatprep.subr.mxu0 %v99
    %2096 = vmatpush1.msra.mxu0 %v98
    %2097 = vmatprep.subr.mxu0 %v101
    %2098 = vmatpush1.msra.mxu0 %v100
    %2099 = vmatprep.subr.mxu0 0.0
    %2100 = vmatpush1.msra.mxu0 0.0
    %2101 = vmatprep.subr.mxu0 0.0
    %2102 = vmatpush1.msra.mxu0 0.0
    %2103 = vmatprep.subr.mxu0 0.0
    %2104 = vmatpush1.msra.mxu0 0.0
    %2105 = vmatprep.subr.mxu0 0.0
    %2106 = vmatpush1.msra.mxu0 0.0
    %2107 = vmatprep.subr.mxu0 0.0
    %2108 = vmatpush1.msra.mxu0 0.0
    %2109 = vmatprep.subr.mxu0 0.0
    %2110 = vmatpush1.msra.mxu0 0.0
    %2111 = vmatprep.subr.mxu0 0.0
    %2112 = vmatpush1.msra.mxu0 0.0
    %2113 = vmatprep.subr.mxu0 0.0
    %2114 = vmatpush1.msra.mxu0 0.0
    %2115 = vmatprep.subr.mxu0 0.0
    %2116 = vmatpush1.msra.mxu0 0.0
    %2117 = vmatprep.subr.mxu0 0.0
    %2118 = vmatpush1.msra.mxu0 0.0
    %2119 = vmatprep.subr.mxu0 0.0
    %2120 = vmatpush1.msra.mxu0 0.0
    %2121 = vmatprep.subr.mxu0 0.0
    %2122 = vmatpush1.msra.mxu0 0.0
    %2123 = vmatprep.subr.mxu0 0.0
    %2124 = vmatpush1.msra.mxu0 0.0
    %2125 = vmatprep.subr.mxu0 0.0
    %2126 = vmatpush1.msra.mxu0 0.0
    %2127 = vmatprep.subr.mxu0 0.0
    %2128 = vmatpush1.msra.mxu0 0.0
    %2129 = vmatprep.subr.mxu0 0.0
    %2130 = vmatpush1.msra.mxu0 0.0
    %2131 = vmatprep.subr.mxu0 0.0
    %2132 = vmatpush1.msra.mxu0 0.0
    %2133 = vmatprep.subr.mxu0 0.0
    %2134 = vmatpush1.msra.mxu0 0.0
    %2135 = vmatprep.subr.mxu0 0.0
    %2136 = vmatpush1.msra.mxu0 0.0
    %2137 = vmatprep.subr.mxu0 0.0
    %2138 = vmatpush1.msra.mxu0 0.0
    %2139 = vmatprep.subr.mxu0 0.0
    %2140 = vmatpush1.msra.mxu0 0.0
    %2141 = vmatprep.subr.mxu0 0.0
    %2142 = vmatpush1.msra.mxu0 0.0
    %2143 = vmatprep.subr.mxu0 0.0
    %2144 = vmatpush1.msra.mxu0 0.0
    %2145 = vmatprep.subr.mxu0 0.0
    %2146 = vmatpush1.msra.mxu0 0.0
    %2147 = vmatprep.mubr.f32.mxu0 0.0
    %2148 = vmatmul.mubr.f32.gmra.mrb[0].mxu0 %v2081
    %v2149 = vpop.f32.mrb[0].mxu0
    %v2150 = vadd.f32 0.0, %v2149
    %v2151 = vpop.f32.mrb[0].mxu0
    %v2152 = vadd.f32 0.0, %v2151
    %2153 = vdwg.mxu0
    %v2154 = vadd.f32 %v2079, %v2150
    %v2155 = vadd.f32 %v2080, %v2152
    %v2156 = vtanh.pop %v2154
    %v2157 = vtanh.pop %v2155
    %v2158 = vmul.f32 %v2156, 0.5
    %v2159 = vmul.f32 %v2157, %v80
    %v2160 = vadd.f32 %v2158, 0.5
    %v2161 = vadd.f32 %v2159, %v85
    %v2162 = vmul.f32 %v2160, %v2069
    %v2163 = vmul.f32 %v2160, %v2161
    %2165 = vrot.lane.b32.xlu0 %v2163, 64
    %v2166 = vpop.permute.xlu0 %2165
    %v2168 = vadd.f32 %v2162, %v2166
    %v2169 = vtanh.pop %v2168
    %v2170 = vmul.f32 %v2161, %v2169
    %2172 = vrot.lane.b32.xlu0 %v2170, 64
    %v2173 = vpop.permute.xlu0 %2172
    %s2175 = scalar_lea.vmem [#allocation3], 128
    %2176 = vst.msk [vmem:[%s2175] sm:$0xff] %vm72, %v2173
    %s2177 = scalar_lea.vmem [#allocation2], 272
    %v2178 = vld [vmem:[%s2177] sm:$0xff]
    %v2179 = vld [vmem:[%s2177 + $0x8] sm:$0xff]
    %v2180 = vsel %vm72, %v2173, 0
    %2182 = vmatprep.subr.mxu0 %v87
    %2183 = vmatpush1.msra.mxu0 %v86
    %2184 = vmatprep.subr.mxu0 %v89
    %2185 = vmatpush1.msra.mxu0 %v88
    %2186 = vmatprep.subr.mxu0 %v91
    %2187 = vmatpush1.msra.mxu0 %v90
    %2188 = vmatprep.subr.mxu0 %v93
    %2189 = vmatpush1.msra.mxu0 %v92
    %2190 = vmatprep.subr.mxu0 %v95
    %2191 = vmatpush1.msra.mxu0 %v94
    %2192 = vmatprep.subr.mxu0 %v97
    %2193 = vmatpush1.msra.mxu0 %v96
    %2194 = vmatprep.subr.mxu0 %v99
    %2195 = vmatpush1.msra.mxu0 %v98
    %2196 = vmatprep.subr.mxu0 %v101
    %2197 = vmatpush1.msra.mxu0 %v100
    %2198 = vmatprep.subr.mxu0 0.0
    %2199 = vmatpush1.msra.mxu0 0.0
    %2200 = vmatprep.subr.mxu0 0.0
    %2201 = vmatpush1.msra.mxu0 0.0
    %2202 = vmatprep.subr.mxu0 0.0
    %2203 = vmatpush1.msra.mxu0 0.0
    %2204 = vmatprep.subr.mxu0 0.0
    %2205 = vmatpush1.msra.mxu0 0.0
    %2206 = vmatprep.subr.mxu0 0.0
    %2207 = vmatpush1.msra.mxu0 0.0
    %2208 = vmatprep.subr.mxu0 0.0
    %2209 = vmatpush1.msra.mxu0 0.0
    %2210 = vmatprep.subr.mxu0 0.0
    %2211 = vmatpush1.msra.mxu0 0.0
    %2212 = vmatprep.subr.mxu0 0.0
    %2213 = vmatpush1.msra.mxu0 0.0
    %2214 = vmatprep.subr.mxu0 0.0
    %2215 = vmatpush1.msra.mxu0 0.0
    %2216 = vmatprep.subr.mxu0 0.0
    %2217 = vmatpush1.msra.mxu0 0.0
    %2218 = vmatprep.subr.mxu0 0.0
    %2219 = vmatpush1.msra.mxu0 0.0
    %2220 = vmatprep.subr.mxu0 0.0
    %2221 = vmatpush1.msra.mxu0 0.0
    %2222 = vmatprep.subr.mxu0 0.0
    %2223 = vmatpush1.msra.mxu0 0.0
    %2224 = vmatprep.subr.mxu0 0.0
    %2225 = vmatpush1.msra.mxu0 0.0
    %2226 = vmatprep.subr.mxu0 0.0
    %2227 = vmatpush1.msra.mxu0 0.0
    %2228 = vmatprep.subr.mxu0 0.0
    %2229 = vmatpush1.msra.mxu0 0.0
    %2230 = vmatprep.subr.mxu0 0.0
    %2231 = vmatpush1.msra.mxu0 0.0
    %2232 = vmatprep.subr.mxu0 0.0
    %2233 = vmatpush1.msra.mxu0 0.0
    %2234 = vmatprep.subr.mxu0 0.0
    %2235 = vmatpush1.msra.mxu0 0.0
    %2236 = vmatprep.subr.mxu0 0.0
    %2237 = vmatpush1.msra.mxu0 0.0
    %2238 = vmatprep.subr.mxu0 0.0
    %2239 = vmatpush1.msra.mxu0 0.0
    %2240 = vmatprep.subr.mxu0 0.0
    %2241 = vmatpush1.msra.mxu0 0.0
    %2242 = vmatprep.subr.mxu0 0.0
    %2243 = vmatpush1.msra.mxu0 0.0
    %2244 = vmatprep.subr.mxu0 0.0
    %2245 = vmatpush1.msra.mxu0 0.0
    %2246 = vmatprep.mubr.f32.mxu0 0.0
    %2247 = vmatmul.mubr.f32.gmra.mrb[0].mxu0 %v2180
    %v2248 = vpop.f32.mrb[0].mxu0
    %v2249 = vadd.f32 0.0, %v2248
    %v2250 = vpop.f32.mrb[0].mxu0
    %v2251 = vadd.f32 0.0, %v2250
    %2252 = vdwg.mxu0
    %v2253 = vadd.f32 %v2178, %v2249
    %v2254 = vadd.f32 %v2179, %v2251
    %v2255 = vtanh.pop %v2253
    %v2256 = vtanh.pop %v2254
    %v2257 = vmul.f32 %v2255, 0.5
    %v2258 = vmul.f32 %v2256, %v80
    %v2259 = vadd.f32 %v2257, 0.5
    %v2260 = vadd.f32 %v2258, %v85
    %v2261 = vmul.f32 %v2259, %v2168
    %v2262 = vmul.f32 %v2259, %v2260
    %2264 = vrot.lane.b32.xlu0 %v2262, 64
    %v2265 = vpop.permute.xlu0 %2264
    %v2267 = vadd.f32 %v2261, %v2265
    %v2268 = vtanh.pop %v2267
    %v2269 = vmul.f32 %v2260, %v2268
    %2271 = vrot.lane.b32.xlu0 %v2269, 64
    %v2272 = vpop.permute.xlu0 %2271
    %s2274 = scalar_lea.vmem [#allocation3], 136
    %2275 = vst.msk [vmem:[%s2274] sm:$0xff] %vm72, %v2272
    %s2276 = scalar_lea.vmem [#allocation2], 288
    %v2277 = vld [vmem:[%s2276] sm:$0xff]
    %v2278 = vld [vmem:[%s2276 + $0x8] sm:$0xff]
    %v2279 = vsel %vm72, %v2272, 0
    %2281 = vmatprep.subr.mxu0 %v87
    %2282 = vmatpush1.msra.mxu0 %v86
    %2283 = vmatprep.subr.mxu0 %v89
    %2284 = vmatpush1.msra.mxu0 %v88
    %2285 = vmatprep.subr.mxu0 %v91
    %2286 = vmatpush1.msra.mxu0 %v90
    %2287 = vmatprep.subr.mxu0 %v93
    %2288 = vmatpush1.msra.mxu0 %v92
    %2289 = vmatprep.subr.mxu0 %v95
    %2290 = vmatpush1.msra.mxu0 %v94
    %2291 = vmatprep.subr.mxu0 %v97
    %2292 = vmatpush1.msra.mxu0 %v96
    %2293 = vmatprep.subr.mxu0 %v99
    %2294 = vmatpush1.msra.mxu0 %v98
    %2295 = vmatprep.subr.mxu0 %v101
    %2296 = vmatpush1.msra.mxu0 %v100
    %2297 = vmatprep.subr.mxu0 0.0
    %2298 = vmatpush1.msra.mxu0 0.0
    %2299 = vmatprep.subr.mxu0 0.0
    %2300 = vmatpush1.msra.mxu0 0.0
    %2301 = vmatprep.subr.mxu0 0.0
    %2302 = vmatpush1.msra.mxu0 0.0
    %2303 = vmatprep.subr.mxu0 0.0
    %2304 = vmatpush1.msra.mxu0 0.0
    %2305 = vmatprep.subr.mxu0 0.0
    %2306 = vmatpush1.msra.mxu0 0.0
    %2307 = vmatprep.subr.mxu0 0.0
    %2308 = vmatpush1.msra.mxu0 0.0
    %2309 = vmatprep.subr.mxu0 0.0
    %2310 = vmatpush1.msra.mxu0 0.0
    %2311 = vmatprep.subr.mxu0 0.0
    %2312 = vmatpush1.msra.mxu0 0.0
    %2313 = vmatprep.subr.mxu0 0.0
    %2314 = vmatpush1.msra.mxu0 0.0
    %2315 = vmatprep.subr.mxu0 0.0
    %2316 = vmatpush1.msra.mxu0 0.0
    %2317 = vmatprep.subr.mxu0 0.0
    %2318 = vmatpush1.msra.mxu0 0.0
    %2319 = vmatprep.subr.mxu0 0.0
    %2320 = vmatpush1.msra.mxu0 0.0
    %2321 = vmatprep.subr.mxu0 0.0
    %2322 = vmatpush1.msra.mxu0 0.0
    %2323 = vmatprep.subr.mxu0 0.0
    %2324 = vmatpush1.msra.mxu0 0.0
    %2325 = vmatprep.subr.mxu0 0.0
    %2326 = vmatpush1.msra.mxu0 0.0
    %2327 = vmatprep.subr.mxu0 0.0
    %2328 = vmatpush1.msra.mxu0 0.0
    %2329 = vmatprep.subr.mxu0 0.0
    %2330 = vmatpush1.msra.mxu0 0.0
    %2331 = vmatprep.subr.mxu0 0.0
    %2332 = vmatpush1.msra.mxu0 0.0
    %2333 = vmatprep.subr.mxu0 0.0
    %2334 = vmatpush1.msra.mxu0 0.0
    %2335 = vmatprep.subr.mxu0 0.0
    %2336 = vmatpush1.msra.mxu0 0.0
    %2337 = vmatprep.subr.mxu0 0.0
    %2338 = vmatpush1.msra.mxu0 0.0
    %2339 = vmatprep.subr.mxu0 0.0
    %2340 = vmatpush1.msra.mxu0 0.0
    %2341 = vmatprep.subr.mxu0 0.0
    %2342 = vmatpush1.msra.mxu0 0.0
    %2343 = vmatprep.subr.mxu0 0.0
    %2344 = vmatpush1.msra.mxu0 0.0
    %2345 = vmatprep.mubr.f32.mxu0 0.0
    %2346 = vmatmul.mubr.f32.gmra.mrb[0].mxu0 %v2279
    %v2347 = vpop.f32.mrb[0].mxu0
    %v2348 = vadd.f32 0.0, %v2347
    %v2349 = vpop.f32.mrb[0].mxu0
    %v2350 = vadd.f32 0.0, %v2349
    %2351 = vdwg.mxu0
    %v2352 = vadd.f32 %v2277, %v2348
    %v2353 = vadd.f32 %v2278, %v2350
    %v2354 = vtanh.pop %v2352
    %v2355 = vtanh.pop %v2353
    %v2356 = vmul.f32 %v2354, 0.5
    %v2357 = vmul.f32 %v2355, %v80
    %v2358 = vadd.f32 %v2356, 0.5
    %v2359 = vadd.f32 %v2357, %v85
    %v2360 = vmul.f32 %v2358, %v2267
    %v2361 = vmul.f32 %v2358, %v2359
    %2363 = vrot.lane.b32.xlu0 %v2361, 64
    %v2364 = vpop.permute.xlu0 %2363
    %v2366 = vadd.f32 %v2360, %v2364
    %v2367 = vtanh.pop %v2366
    %v2368 = vmul.f32 %v2359, %v2367
    %2370 = vrot.lane.b32.xlu0 %v2368, 64
    %v2371 = vpop.permute.xlu0 %2370
    %s2373 = scalar_lea.vmem [#allocation3], 144
    %2374 = vst.msk [vmem:[%s2373] sm:$0xff] %vm72, %v2371
    %s2375 = scalar_lea.vmem [#allocation2], 304
    %v2376 = vld [vmem:[%s2375] sm:$0xff]
    %v2377 = vld [vmem:[%s2375 + $0x8] sm:$0xff]
    %v2378 = vsel %vm72, %v2371, 0
    %2380 = vmatprep.subr.mxu0 %v87
    %2381 = vmatpush1.msra.mxu0 %v86
    %2382 = vmatprep.subr.mxu0 %v89
    %2383 = vmatpush1.msra.mxu0 %v88
    %2384 = vmatprep.subr.mxu0 %v91
    %2385 = vmatpush1.msra.mxu0 %v90
    %2386 = vmatprep.subr.mxu0 %v93
    %2387 = vmatpush1.msra.mxu0 %v92
    %2388 = vmatprep.subr.mxu0 %v95
    %2389 = vmatpush1.msra.mxu0 %v94
    %2390 = vmatprep.subr.mxu0 %v97
    %2391 = vmatpush1.msra.mxu0 %v96
    %2392 = vmatprep.subr.mxu0 %v99
    %2393 = vmatpush1.msra.mxu0 %v98
    %2394 = vmatprep.subr.mxu0 %v101
    %2395 = vmatpush1.msra.mxu0 %v100
    %2396 = vmatprep.subr.mxu0 0.0
    %2397 = vmatpush1.msra.mxu0 0.0
    %2398 = vmatprep.subr.mxu0 0.0
    %2399 = vmatpush1.msra.mxu0 0.0
    %2400 = vmatprep.subr.mxu0 0.0
    %2401 = vmatpush1.msra.mxu0 0.0
    %2402 = vmatprep.subr.mxu0 0.0
    %2403 = vmatpush1.msra.mxu0 0.0
    %2404 = vmatprep.subr.mxu0 0.0
    %2405 = vmatpush1.msra.mxu0 0.0
    %2406 = vmatprep.subr.mxu0 0.0
    %2407 = vmatpush1.msra.mxu0 0.0
    %2408 = vmatprep.subr.mxu0 0.0
    %2409 = vmatpush1.msra.mxu0 0.0
    %2410 = vmatprep.subr.mxu0 0.0
    %2411 = vmatpush1.msra.mxu0 0.0
    %2412 = vmatprep.subr.mxu0 0.0
    %2413 = vmatpush1.msra.mxu0 0.0
    %2414 = vmatprep.subr.mxu0 0.0
    %2415 = vmatpush1.msra.mxu0 0.0
    %2416 = vmatprep.subr.mxu0 0.0
    %2417 = vmatpush1.msra.mxu0 0.0
    %2418 = vmatprep.subr.mxu0 0.0
    %2419 = vmatpush1.msra.mxu0 0.0
    %2420 = vmatprep.subr.mxu0 0.0
    %2421 = vmatpush1.msra.mxu0 0.0
    %2422 = vmatprep.subr.mxu0 0.0
    %2423 = vmatpush1.msra.mxu0 0.0
    %2424 = vmatprep.subr.mxu0 0.0
    %2425 = vmatpush1.msra.mxu0 0.0
    %2426 = vmatprep.subr.mxu0 0.0
    %2427 = vmatpush1.msra.mxu0 0.0
    %2428 = vmatprep.subr.mxu0 0.0
    %2429 = vmatpush1.msra.mxu0 0.0
    %2430 = vmatprep.subr.mxu0 0.0
    %2431 = vmatpush1.msra.mxu0 0.0
    %2432 = vmatprep.subr.mxu0 0.0
    %2433 = vmatpush1.msra.mxu0 0.0
    %2434 = vmatprep.subr.mxu0 0.0
    %2435 = vmatpush1.msra.mxu0 0.0
    %2436 = vmatprep.subr.mxu0 0.0
    %2437 = vmatpush1.msra.mxu0 0.0
    %2438 = vmatprep.subr.mxu0 0.0
    %2439 = vmatpush1.msra.mxu0 0.0
    %2440 = vmatprep.subr.mxu0 0.0
    %2441 = vmatpush1.msra.mxu0 0.0
    %2442 = vmatprep.subr.mxu0 0.0
    %2443 = vmatpush1.msra.mxu0 0.0
    %2444 = vmatprep.mubr.f32.mxu0 0.0
    %2445 = vmatmul.mubr.f32.gmra.mrb[0].mxu0 %v2378
    %v2446 = vpop.f32.mrb[0].mxu0
    %v2447 = vadd.f32 0.0, %v2446
    %v2448 = vpop.f32.mrb[0].mxu0
    %v2449 = vadd.f32 0.0, %v2448
    %2450 = vdwg.mxu0
    %v2451 = vadd.f32 %v2376, %v2447
    %v2452 = vadd.f32 %v2377, %v2449
    %v2453 = vtanh.pop %v2451
    %v2454 = vtanh.pop %v2452
    %v2455 = vmul.f32 %v2453, 0.5
    %v2456 = vmul.f32 %v2454, %v80
    %v2457 = vadd.f32 %v2455, 0.5
    %v2458 = vadd.f32 %v2456, %v85
    %v2459 = vmul.f32 %v2457, %v2366
    %v2460 = vmul.f32 %v2457, %v2458
    %2462 = vrot.lane.b32.xlu0 %v2460, 64
    %v2463 = vpop.permute.xlu0 %2462
    %v2465 = vadd.f32 %v2459, %v2463
    %v2466 = vtanh.pop %v2465
    %v2467 = vmul.f32 %v2458, %v2466
    %2469 = vrot.lane.b32.xlu0 %v2467, 64
    %v2470 = vpop.permute.xlu0 %2469
    %s2472 = scalar_lea.vmem [#allocation3], 152
    %2473 = vst.msk [vmem:[%s2472] sm:$0xff] %vm72, %v2470
    %s2474 = scalar_lea.vmem [#allocation2], 320
    %v2475 = vld [vmem:[%s2474] sm:$0xff]
    %v2476 = vld [vmem:[%s2474 + $0x8] sm:$0xff]
    %v2477 = vsel %vm72, %v2470, 0
    %2479 = vmatprep.subr.mxu0 %v87
    %2480 = vmatpush1.msra.mxu0 %v86
    %2481 = vmatprep.subr.mxu0 %v89
    %2482 = vmatpush1.msra.mxu0 %v88
    %2483 = vmatprep.subr.mxu0 %v91
    %2484 = vmatpush1.msra.mxu0 %v90
    %2485 = vmatprep.subr.mxu0 %v93
    %2486 = vmatpush1.msra.mxu0 %v92
    %2487 = vmatprep.subr.mxu0 %v95
    %2488 = vmatpush1.msra.mxu0 %v94
    %2489 = vmatprep.subr.mxu0 %v97
    %2490 = vmatpush1.msra.mxu0 %v96
    %2491 = vmatprep.subr.mxu0 %v99
    %2492 = vmatpush1.msra.mxu0 %v98
    %2493 = vmatprep.subr.mxu0 %v101
    %2494 = vmatpush1.msra.mxu0 %v100
    %2495 = vmatprep.subr.mxu0 0.0
    %2496 = vmatpush1.msra.mxu0 0.0
    %2497 = vmatprep.subr.mxu0 0.0
    %2498 = vmatpush1.msra.mxu0 0.0
    %2499 = vmatprep.subr.mxu0 0.0
    %2500 = vmatpush1.msra.mxu0 0.0
    %2501 = vmatprep.subr.mxu0 0.0
    %2502 = vmatpush1.msra.mxu0 0.0
    %2503 = vmatprep.subr.mxu0 0.0
    %2504 = vmatpush1.msra.mxu0 0.0
    %2505 = vmatprep.subr.mxu0 0.0
    %2506 = vmatpush1.msra.mxu0 0.0
    %2507 = vmatprep.subr.mxu0 0.0
    %2508 = vmatpush1.msra.mxu0 0.0
    %2509 = vmatprep.subr.mxu0 0.0
    %2510 = vmatpush1.msra.mxu0 0.0
    %2511 = vmatprep.subr.mxu0 0.0
    %2512 = vmatpush1.msra.mxu0 0.0
    %2513 = vmatprep.subr.mxu0 0.0
    %2514 = vmatpush1.msra.mxu0 0.0
    %2515 = vmatprep.subr.mxu0 0.0
    %2516 = vmatpush1.msra.mxu0 0.0
    %2517 = vmatprep.subr.mxu0 0.0
    %2518 = vmatpush1.msra.mxu0 0.0
    %2519 = vmatprep.subr.mxu0 0.0
    %2520 = vmatpush1.msra.mxu0 0.0
    %2521 = vmatprep.subr.mxu0 0.0
    %2522 = vmatpush1.msra.mxu0 0.0
    %2523 = vmatprep.subr.mxu0 0.0
    %2524 = vmatpush1.msra.mxu0 0.0
    %2525 = vmatprep.subr.mxu0 0.0
    %2526 = vmatpush1.msra.mxu0 0.0
    %2527 = vmatprep.subr.mxu0 0.0
    %2528 = vmatpush1.msra.mxu0 0.0
    %2529 = vmatprep.subr.mxu0 0.0
    %2530 = vmatpush1.msra.mxu0 0.0
    %2531 = vmatprep.subr.mxu0 0.0
    %2532 = vmatpush1.msra.mxu0 0.0
    %2533 = vmatprep.subr.mxu0 0.0
    %2534 = vmatpush1.msra.mxu0 0.0
    %2535 = vmatprep.subr.mxu0 0.0
    %2536 = vmatpush1.msra.mxu0 0.0
    %2537 = vmatprep.subr.mxu0 0.0
    %2538 = vmatpush1.msra.mxu0 0.0
    %2539 = vmatprep.subr.mxu0 0.0
    %2540 = vmatpush1.msra.mxu0 0.0
    %2541 = vmatprep.subr.mxu0 0.0
    %2542 = vmatpush1.msra.mxu0 0.0
    %2543 = vmatprep.mubr.f32.mxu0 0.0
    %2544 = vmatmul.mubr.f32.gmra.mrb[0].mxu0 %v2477
    %v2545 = vpop.f32.mrb[0].mxu0
    %v2546 = vadd.f32 0.0, %v2545
    %v2547 = vpop.f32.mrb[0].mxu0
    %v2548 = vadd.f32 0.0, %v2547
    %2549 = vdwg.mxu0
    %v2550 = vadd.f32 %v2475, %v2546
    %v2551 = vadd.f32 %v2476, %v2548
    %v2552 = vtanh.pop %v2550
    %v2553 = vtanh.pop %v2551
    %v2554 = vmul.f32 %v2552, 0.5
    %v2555 = vmul.f32 %v2553, %v80
    %v2556 = vadd.f32 %v2554, 0.5
    %v2557 = vadd.f32 %v2555, %v85
    %v2558 = vmul.f32 %v2556, %v2465
    %v2559 = vmul.f32 %v2556, %v2557
    %2561 = vrot.lane.b32.xlu0 %v2559, 64
    %v2562 = vpop.permute.xlu0 %2561
    %v2564 = vadd.f32 %v2558, %v2562
    %v2565 = vtanh.pop %v2564
    %v2566 = vmul.f32 %v2557, %v2565
    %2568 = vrot.lane.b32.xlu0 %v2566, 64
    %v2569 = vpop.permute.xlu0 %2568
    %s2571 = scalar_lea.vmem [#allocation3], 160
    %2572 = vst.msk [vmem:[%s2571] sm:$0xff] %vm72, %v2569
    %s2573 = scalar_lea.vmem [#allocation2], 336
    %v2574 = vld [vmem:[%s2573] sm:$0xff]
    %v2575 = vld [vmem:[%s2573 + $0x8] sm:$0xff]
    %v2576 = vsel %vm72, %v2569, 0
    %2578 = vmatprep.subr.mxu0 %v87
    %2579 = vmatpush1.msra.mxu0 %v86
    %2580 = vmatprep.subr.mxu0 %v89
    %2581 = vmatpush1.msra.mxu0 %v88
    %2582 = vmatprep.subr.mxu0 %v91
    %2583 = vmatpush1.msra.mxu0 %v90
    %2584 = vmatprep.subr.mxu0 %v93
    %2585 = vmatpush1.msra.mxu0 %v92
    %2586 = vmatprep.subr.mxu0 %v95
    %2587 = vmatpush1.msra.mxu0 %v94
    %2588 = vmatprep.subr.mxu0 %v97
    %2589 = vmatpush1.msra.mxu0 %v96
    %2590 = vmatprep.subr.mxu0 %v99
    %2591 = vmatpush1.msra.mxu0 %v98
    %2592 = vmatprep.subr.mxu0 %v101
    %2593 = vmatpush1.msra.mxu0 %v100
    %2594 = vmatprep.subr.mxu0 0.0
    %2595 = vmatpush1.msra.mxu0 0.0
    %2596 = vmatprep.subr.mxu0 0.0
    %2597 = vmatpush1.msra.mxu0 0.0
    %2598 = vmatprep.subr.mxu0 0.0
    %2599 = vmatpush1.msra.mxu0 0.0
    %2600 = vmatprep.subr.mxu0 0.0
    %2601 = vmatpush1.msra.mxu0 0.0
    %2602 = vmatprep.subr.mxu0 0.0
    %2603 = vmatpush1.msra.mxu0 0.0
    %2604 = vmatprep.subr.mxu0 0.0
    %2605 = vmatpush1.msra.mxu0 0.0
    %2606 = vmatprep.subr.mxu0 0.0
    %2607 = vmatpush1.msra.mxu0 0.0
    %2608 = vmatprep.subr.mxu0 0.0
    %2609 = vmatpush1.msra.mxu0 0.0
    %2610 = vmatprep.subr.mxu0 0.0
    %2611 = vmatpush1.msra.mxu0 0.0
    %2612 = vmatprep.subr.mxu0 0.0
    %2613 = vmatpush1.msra.mxu0 0.0
    %2614 = vmatprep.subr.mxu0 0.0
    %2615 = vmatpush1.msra.mxu0 0.0
    %2616 = vmatprep.subr.mxu0 0.0
    %2617 = vmatpush1.msra.mxu0 0.0
    %2618 = vmatprep.subr.mxu0 0.0
    %2619 = vmatpush1.msra.mxu0 0.0
    %2620 = vmatprep.subr.mxu0 0.0
    %2621 = vmatpush1.msra.mxu0 0.0
    %2622 = vmatprep.subr.mxu0 0.0
    %2623 = vmatpush1.msra.mxu0 0.0
    %2624 = vmatprep.subr.mxu0 0.0
    %2625 = vmatpush1.msra.mxu0 0.0
    %2626 = vmatprep.subr.mxu0 0.0
    %2627 = vmatpush1.msra.mxu0 0.0
    %2628 = vmatprep.subr.mxu0 0.0
    %2629 = vmatpush1.msra.mxu0 0.0
    %2630 = vmatprep.subr.mxu0 0.0
    %2631 = vmatpush1.msra.mxu0 0.0
    %2632 = vmatprep.subr.mxu0 0.0
    %2633 = vmatpush1.msra.mxu0 0.0
    %2634 = vmatprep.subr.mxu0 0.0
    %2635 = vmatpush1.msra.mxu0 0.0
    %2636 = vmatprep.subr.mxu0 0.0
    %2637 = vmatpush1.msra.mxu0 0.0
    %2638 = vmatprep.subr.mxu0 0.0
    %2639 = vmatpush1.msra.mxu0 0.0
    %2640 = vmatprep.subr.mxu0 0.0
    %2641 = vmatpush1.msra.mxu0 0.0
    %2642 = vmatprep.mubr.f32.mxu0 0.0
    %2643 = vmatmul.mubr.f32.gmra.mrb[0].mxu0 %v2576
    %v2644 = vpop.f32.mrb[0].mxu0
    %v2645 = vadd.f32 0.0, %v2644
    %v2646 = vpop.f32.mrb[0].mxu0
    %v2647 = vadd.f32 0.0, %v2646
    %2648 = vdwg.mxu0
    %v2649 = vadd.f32 %v2574, %v2645
    %v2650 = vadd.f32 %v2575, %v2647
    %v2651 = vtanh.pop %v2649
    %v2652 = vtanh.pop %v2650
    %v2653 = vmul.f32 %v2651, 0.5
    %v2654 = vmul.f32 %v2652, %v80
    %v2655 = vadd.f32 %v2653, 0.5
    %v2656 = vadd.f32 %v2654, %v85
    %v2657 = vmul.f32 %v2655, %v2564
    %v2658 = vmul.f32 %v2655, %v2656
    %2660 = vrot.lane.b32.xlu0 %v2658, 64
    %v2661 = vpop.permute.xlu0 %2660
    %v2663 = vadd.f32 %v2657, %v2661
    %v2664 = vtanh.pop %v2663
    %v2665 = vmul.f32 %v2656, %v2664
    %2667 = vrot.lane.b32.xlu0 %v2665, 64
    %v2668 = vpop.permute.xlu0 %2667
    %s2670 = scalar_lea.vmem [#allocation3], 168
    %2671 = vst.msk [vmem:[%s2670] sm:$0xff] %vm72, %v2668
    %s2672 = scalar_lea.vmem [#allocation2], 352
    %v2673 = vld [vmem:[%s2672] sm:$0xff]
    %v2674 = vld [vmem:[%s2672 + $0x8] sm:$0xff]
    %v2675 = vsel %vm72, %v2668, 0
    %2677 = vmatprep.subr.mxu0 %v87
    %2678 = vmatpush1.msra.mxu0 %v86
    %2679 = vmatprep.subr.mxu0 %v89
    %2680 = vmatpush1.msra.mxu0 %v88
    %2681 = vmatprep.subr.mxu0 %v91
    %2682 = vmatpush1.msra.mxu0 %v90
    %2683 = vmatprep.subr.mxu0 %v93
    %2684 = vmatpush1.msra.mxu0 %v92
    %2685 = vmatprep.subr.mxu0 %v95
    %2686 = vmatpush1.msra.mxu0 %v94
    %2687 = vmatprep.subr.mxu0 %v97
    %2688 = vmatpush1.msra.mxu0 %v96
    %2689 = vmatprep.subr.mxu0 %v99
    %2690 = vmatpush1.msra.mxu0 %v98
    %2691 = vmatprep.subr.mxu0 %v101
    %2692 = vmatpush1.msra.mxu0 %v100
    %2693 = vmatprep.subr.mxu0 0.0
    %2694 = vmatpush1.msra.mxu0 0.0
    %2695 = vmatprep.subr.mxu0 0.0
    %2696 = vmatpush1.msra.mxu0 0.0
    %2697 = vmatprep.subr.mxu0 0.0
    %2698 = vmatpush1.msra.mxu0 0.0
    %2699 = vmatprep.subr.mxu0 0.0
    %2700 = vmatpush1.msra.mxu0 0.0
    %2701 = vmatprep.subr.mxu0 0.0
    %2702 = vmatpush1.msra.mxu0 0.0
    %2703 = vmatprep.subr.mxu0 0.0
    %2704 = vmatpush1.msra.mxu0 0.0
    %2705 = vmatprep.subr.mxu0 0.0
    %2706 = vmatpush1.msra.mxu0 0.0
    %2707 = vmatprep.subr.mxu0 0.0
    %2708 = vmatpush1.msra.mxu0 0.0
    %2709 = vmatprep.subr.mxu0 0.0
    %2710 = vmatpush1.msra.mxu0 0.0
    %2711 = vmatprep.subr.mxu0 0.0
    %2712 = vmatpush1.msra.mxu0 0.0
    %2713 = vmatprep.subr.mxu0 0.0
    %2714 = vmatpush1.msra.mxu0 0.0
    %2715 = vmatprep.subr.mxu0 0.0
    %2716 = vmatpush1.msra.mxu0 0.0
    %2717 = vmatprep.subr.mxu0 0.0
    %2718 = vmatpush1.msra.mxu0 0.0
    %2719 = vmatprep.subr.mxu0 0.0
    %2720 = vmatpush1.msra.mxu0 0.0
    %2721 = vmatprep.subr.mxu0 0.0
    %2722 = vmatpush1.msra.mxu0 0.0
    %2723 = vmatprep.subr.mxu0 0.0
    %2724 = vmatpush1.msra.mxu0 0.0
    %2725 = vmatprep.subr.mxu0 0.0
    %2726 = vmatpush1.msra.mxu0 0.0
    %2727 = vmatprep.subr.mxu0 0.0
    %2728 = vmatpush1.msra.mxu0 0.0
    %2729 = vmatprep.subr.mxu0 0.0
    %2730 = vmatpush1.msra.mxu0 0.0
    %2731 = vmatprep.subr.mxu0 0.0
    %2732 = vmatpush1.msra.mxu0 0.0
    %2733 = vmatprep.subr.mxu0 0.0
    %2734 = vmatpush1.msra.mxu0 0.0
    %2735 = vmatprep.subr.mxu0 0.0
    %2736 = vmatpush1.msra.mxu0 0.0
    %2737 = vmatprep.subr.mxu0 0.0
    %2738 = vmatpush1.msra.mxu0 0.0
    %2739 = vmatprep.subr.mxu0 0.0
    %2740 = vmatpush1.msra.mxu0 0.0
    %2741 = vmatprep.mubr.f32.mxu0 0.0
    %2742 = vmatmul.mubr.f32.gmra.mrb[0].mxu0 %v2675
    %v2743 = vpop.f32.mrb[0].mxu0
    %v2744 = vadd.f32 0.0, %v2743
    %v2745 = vpop.f32.mrb[0].mxu0
    %v2746 = vadd.f32 0.0, %v2745
    %2747 = vdwg.mxu0
    %v2748 = vadd.f32 %v2673, %v2744
    %v2749 = vadd.f32 %v2674, %v2746
    %v2750 = vtanh.pop %v2748
    %v2751 = vtanh.pop %v2749
    %v2752 = vmul.f32 %v2750, 0.5
    %v2753 = vmul.f32 %v2751, %v80
    %v2754 = vadd.f32 %v2752, 0.5
    %v2755 = vadd.f32 %v2753, %v85
    %v2756 = vmul.f32 %v2754, %v2663
    %v2757 = vmul.f32 %v2754, %v2755
    %2759 = vrot.lane.b32.xlu0 %v2757, 64
    %v2760 = vpop.permute.xlu0 %2759
    %v2762 = vadd.f32 %v2756, %v2760
    %v2763 = vtanh.pop %v2762
    %v2764 = vmul.f32 %v2755, %v2763
    %2766 = vrot.lane.b32.xlu0 %v2764, 64
    %v2767 = vpop.permute.xlu0 %2766
    %s2769 = scalar_lea.vmem [#allocation3], 176
    %2770 = vst.msk [vmem:[%s2769] sm:$0xff] %vm72, %v2767
    %s2771 = scalar_lea.vmem [#allocation2], 368
    %v2772 = vld [vmem:[%s2771] sm:$0xff]
    %v2773 = vld [vmem:[%s2771 + $0x8] sm:$0xff]
    %v2774 = vsel %vm72, %v2767, 0
    %2776 = vmatprep.subr.mxu0 %v87
    %2777 = vmatpush1.msra.mxu0 %v86
    %2778 = vmatprep.subr.mxu0 %v89
    %2779 = vmatpush1.msra.mxu0 %v88
    %2780 = vmatprep.subr.mxu0 %v91
    %2781 = vmatpush1.msra.mxu0 %v90
    %2782 = vmatprep.subr.mxu0 %v93
    %2783 = vmatpush1.msra.mxu0 %v92
    %2784 = vmatprep.subr.mxu0 %v95
    %2785 = vmatpush1.msra.mxu0 %v94
    %2786 = vmatprep.subr.mxu0 %v97
    %2787 = vmatpush1.msra.mxu0 %v96
    %2788 = vmatprep.subr.mxu0 %v99
    %2789 = vmatpush1.msra.mxu0 %v98
    %2790 = vmatprep.subr.mxu0 %v101
    %2791 = vmatpush1.msra.mxu0 %v100
    %2792 = vmatprep.subr.mxu0 0.0
    %2793 = vmatpush1.msra.mxu0 0.0
    %2794 = vmatprep.subr.mxu0 0.0
    %2795 = vmatpush1.msra.mxu0 0.0
    %2796 = vmatprep.subr.mxu0 0.0
    %2797 = vmatpush1.msra.mxu0 0.0
    %2798 = vmatprep.subr.mxu0 0.0
    %2799 = vmatpush1.msra.mxu0 0.0
    %2800 = vmatprep.subr.mxu0 0.0
    %2801 = vmatpush1.msra.mxu0 0.0
    %2802 = vmatprep.subr.mxu0 0.0
    %2803 = vmatpush1.msra.mxu0 0.0
    %2804 = vmatprep.subr.mxu0 0.0
    %2805 = vmatpush1.msra.mxu0 0.0
    %2806 = vmatprep.subr.mxu0 0.0
    %2807 = vmatpush1.msra.mxu0 0.0
    %2808 = vmatprep.subr.mxu0 0.0
    %2809 = vmatpush1.msra.mxu0 0.0
    %2810 = vmatprep.subr.mxu0 0.0
    %2811 = vmatpush1.msra.mxu0 0.0
    %2812 = vmatprep.subr.mxu0 0.0
    %2813 = vmatpush1.msra.mxu0 0.0
    %2814 = vmatprep.subr.mxu0 0.0
    %2815 = vmatpush1.msra.mxu0 0.0
    %2816 = vmatprep.subr.mxu0 0.0
    %2817 = vmatpush1.msra.mxu0 0.0
    %2818 = vmatprep.subr.mxu0 0.0
    %2819 = vmatpush1.msra.mxu0 0.0
    %2820 = vmatprep.subr.mxu0 0.0
    %2821 = vmatpush1.msra.mxu0 0.0
    %2822 = vmatprep.subr.mxu0 0.0
    %2823 = vmatpush1.msra.mxu0 0.0
    %2824 = vmatprep.subr.mxu0 0.0
    %2825 = vmatpush1.msra.mxu0 0.0
    %2826 = vmatprep.subr.mxu0 0.0
    %2827 = vmatpush1.msra.mxu0 0.0
    %2828 = vmatprep.subr.mxu0 0.0
    %2829 = vmatpush1.msra.mxu0 0.0
    %2830 = vmatprep.subr.mxu0 0.0
    %2831 = vmatpush1.msra.mxu0 0.0
    %2832 = vmatprep.subr.mxu0 0.0
    %2833 = vmatpush1.msra.mxu0 0.0
    %2834 = vmatprep.subr.mxu0 0.0
    %2835 = vmatpush1.msra.mxu0 0.0
    %2836 = vmatprep.subr.mxu0 0.0
    %2837 = vmatpush1.msra.mxu0 0.0
    %2838 = vmatprep.subr.mxu0 0.0
    %2839 = vmatpush1.msra.mxu0 0.0
    %2840 = vmatprep.mubr.f32.mxu0 0.0
    %2841 = vmatmul.mubr.f32.gmra.mrb[0].mxu0 %v2774
    %v2842 = vpop.f32.mrb[0].mxu0
    %v2843 = vadd.f32 0.0, %v2842
    %v2844 = vpop.f32.mrb[0].mxu0
    %v2845 = vadd.f32 0.0, %v2844
    %2846 = vdwg.mxu0
    %v2847 = vadd.f32 %v2772, %v2843
    %v2848 = vadd.f32 %v2773, %v2845
    %v2849 = vtanh.pop %v2847
    %v2850 = vtanh.pop %v2848
    %v2851 = vmul.f32 %v2849, 0.5
    %v2852 = vmul.f32 %v2850, %v80
    %v2853 = vadd.f32 %v2851, 0.5
    %v2854 = vadd.f32 %v2852, %v85
    %v2855 = vmul.f32 %v2853, %v2762
    %v2856 = vmul.f32 %v2853, %v2854
    %2858 = vrot.lane.b32.xlu0 %v2856, 64
    %v2859 = vpop.permute.xlu0 %2858
    %v2861 = vadd.f32 %v2855, %v2859
    %v2862 = vtanh.pop %v2861
    %v2863 = vmul.f32 %v2854, %v2862
    %2865 = vrot.lane.b32.xlu0 %v2863, 64
    %v2866 = vpop.permute.xlu0 %2865
    %s2868 = scalar_lea.vmem [#allocation3], 184
    %2869 = vst.msk [vmem:[%s2868] sm:$0xff] %vm72, %v2866
    %v2870 = vld [vmem:[#allocation3] sm:$0xff]
    %v2871 = vld [vmem:[#allocation3 + $0x8] sm:$0xff]
    %v2872 = vld [vmem:[#allocation3 + $0x10] sm:$0xff]
    %v2873 = vld [vmem:[#allocation3 + $0x18] sm:$0xff]
    %v2874 = vld [vmem:[#allocation3 + $0x20] sm:$0xff]
    %v2875 = vld [vmem:[#allocation3 + $0x28] sm:$0xff]
    %v2876 = vld [vmem:[#allocation3 + $0x30] sm:$0xff]
    %v2877 = vld [vmem:[#allocation3 + $0x38] sm:$0xff]
    %v2878 = vld [vmem:[#allocation3 + $0x40] sm:$0xff]
    %v2879 = vld [vmem:[#allocation3 + $0x48] sm:$0xff]
    %v2880 = vld [vmem:[#allocation3 + $0x50] sm:$0xff]
    %v2881 = vld [vmem:[#allocation3 + $0x58] sm:$0xff]
    %v2882 = vld [vmem:[#allocation3 + $0x60] sm:$0xff]
    %v2883 = vld [vmem:[#allocation3 + $0x68] sm:$0xff]
    %v2884 = vld [vmem:[#allocation3 + $0x70] sm:$0xff]
    %v2885 = vld [vmem:[#allocation3 + $0x78] sm:$0xff]
    %v2886 = vld [vmem:[#allocation3 + $0x80] sm:$0xff]
    %v2887 = vld [vmem:[#allocation3 + $0x88] sm:$0xff]
    %v2888 = vld [vmem:[#allocation3 + $0x90] sm:$0xff]
    %v2889 = vld [vmem:[#allocation3 + $0x98] sm:$0xff]
    %v2890 = vld [vmem:[#allocation3 + $0xa0] sm:$0xff]
    %v2891 = vld [vmem:[#allocation3 + $0xa8] sm:$0xff]
    %v2892 = vld [vmem:[#allocation3 + $0xb0] sm:$0xff]
    %v2893 = vld [vmem:[#allocation3 + $0xb8] sm:$0xff]
    %v2894 = vld [vmem:[%s4] sm:$0xff]
    %v2895 = vld [vmem:[%s4 + $0x8] sm:$0xff]
    %v2896 = vld [vmem:[%s4 + $0x10] sm:$0xff]
    %v2897 = vld [vmem:[%s4 + $0x18] sm:$0xff]
    %v2898 = vld [vmem:[%s4 + $0x20] sm:$0xff]
    %v2899 = vld [vmem:[%s4 + $0x28] sm:$0xff]
    %v2900 = vld [vmem:[%s4 + $0x30] sm:$0xff]
    %v2901 = vld [vmem:[%s4 + $0x38] sm:$0xff]
    %v2902 = vld [vmem:[%s4 + $0x40] sm:$0xff]
    %v2903 = vld [vmem:[%s4 + $0x48] sm:$0xff]
    %v2904 = vld [vmem:[%s4 + $0x50] sm:$0xff]
    %v2905 = vld [vmem:[%s4 + $0x58] sm:$0xff]
    %v2906 = vld [vmem:[%s4 + $0x60] sm:$0xff]
    %v2907 = vld [vmem:[%s4 + $0x68] sm:$0xff]
    %v2908 = vld [vmem:[%s4 + $0x70] sm:$0xff]
    %v2909 = vld [vmem:[%s4 + $0x78] sm:$0xff]
    %v2910 = vld [vmem:[%s6] sm:$0x3]
    %v2912 = vlaneseq
    %v2913 = vshrl.u32 %v2912, 7
    %v2914 = vsub.s32 0, %v2913
    %v2915 = vrot.slane %v2910, %v2914
    %v2916 = vlaneseq
    %v2917 = vshrl.u32 %v2916, 7
    %v2918 = vsub.s32 1, %v2917
    %v2919 = vrot.slane %v2910, %v2918
    %v2923 = vsel %vm72, %v2870, 0
    %v2926 = vsel %vm72, %v2871, 0
    %v2929 = vsel %vm72, %v2872, 0
    %v2932 = vsel %vm72, %v2873, 0
    %v2935 = vsel %vm72, %v2874, 0
    %v2938 = vsel %vm72, %v2875, 0
    %v2941 = vsel %vm72, %v2876, 0
    %v2944 = vsel %vm72, %v2877, 0
    %v2947 = vsel %vm72, %v2878, 0
    %v2950 = vsel %vm72, %v2879, 0
    %v2953 = vsel %vm72, %v2880, 0
    %v2956 = vsel %vm72, %v2881, 0
    %v2959 = vsel %vm72, %v2882, 0
    %v2962 = vsel %vm72, %v2883, 0
    %v2965 = vsel %vm72, %v2884, 0
    %v2968 = vsel %vm72, %v2885, 0
    %v2971 = vsel %vm72, %v2886, 0
    %v2974 = vsel %vm72, %v2887, 0
    %v2977 = vsel %vm72, %v2888, 0
    %v2980 = vsel %vm72, %v2889, 0
    %v2983 = vsel %vm72, %v2890, 0
    %v2986 = vsel %vm72, %v2891, 0
    %v2989 = vsel %vm72, %v2892, 0
    %v2992 = vsel %vm72, %v2893, 0
    %2994 = vmatprep.subr.mxu0 %v2895
    %2995 = vmatpush1.msra.mxu0 %v2894
    %2996 = vmatprep.subr.mxu0 %v2897
    %2997 = vmatpush1.msra.mxu0 %v2896
    %2998 = vmatprep.subr.mxu0 %v2899
    %2999 = vmatpush1.msra.mxu0 %v2898
    %3000 = vmatprep.subr.mxu0 %v2901
    %3001 = vmatpush1.msra.mxu0 %v2900
    %3002 = vmatprep.subr.mxu0 %v2903
    %3003 = vmatpush1.msra.mxu0 %v2902
    %3004 = vmatprep.subr.mxu0 %v2905
    %3005 = vmatpush1.msra.mxu0 %v2904
    %3006 = vmatprep.subr.mxu0 %v2907
    %3007 = vmatpush1.msra.mxu0 %v2906
    %3008 = vmatprep.subr.mxu0 %v2909
    %3009 = vmatpush1.msra.mxu0 %v2908
    %3010 = vmatprep.subr.mxu0 0.0
    %3011 = vmatpush1.msra.mxu0 0.0
    %3012 = vmatprep.subr.mxu0 0.0
    %3013 = vmatpush1.msra.mxu0 0.0
    %3014 = vmatprep.subr.mxu0 0.0
    %3015 = vmatpush1.msra.mxu0 0.0
    %3016 = vmatprep.subr.mxu0 0.0
    %3017 = vmatpush1.msra.mxu0 0.0
    %3018 = vmatprep.subr.mxu0 0.0
    %3019 = vmatpush1.msra.mxu0 0.0
    %3020 = vmatprep.subr.mxu0 0.0
    %3021 = vmatpush1.msra.mxu0 0.0
    %3022 = vmatprep.subr.mxu0 0.0
    %3023 = vmatpush1.msra.mxu0 0.0
    %3024 = vmatprep.subr.mxu0 0.0
    %3025 = vmatpush1.msra.mxu0 0.0
    %3026 = vmatprep.subr.mxu0 0.0
    %3027 = vmatpush1.msra.mxu0 0.0
    %3028 = vmatprep.subr.mxu0 0.0
    %3029 = vmatpush1.msra.mxu0 0.0
    %3030 = vmatprep.subr.mxu0 0.0
    %3031 = vmatpush1.msra.mxu0 0.0
    %3032 = vmatprep.subr.mxu0 0.0
    %3033 = vmatpush1.msra.mxu0 0.0
    %3034 = vmatprep.subr.mxu0 0.0
    %3035 = vmatpush1.msra.mxu0 0.0
    %3036 = vmatprep.subr.mxu0 0.0
    %3037 = vmatpush1.msra.mxu0 0.0
    %3038 = vmatprep.subr.mxu0 0.0
    %3039 = vmatpush1.msra.mxu0 0.0
    %3040 = vmatprep.subr.mxu0 0.0
    %3041 = vmatpush1.msra.mxu0 0.0
    %3042 = vmatprep.subr.mxu0 0.0
    %3043 = vmatpush1.msra.mxu0 0.0
    %3044 = vmatprep.subr.mxu0 0.0
    %3045 = vmatpush1.msra.mxu0 0.0
    %3046 = vmatprep.subr.mxu0 0.0
    %3047 = vmatpush1.msra.mxu0 0.0
    %3048 = vmatprep.subr.mxu0 0.0
    %3049 = vmatpush1.msra.mxu0 0.0
    %3050 = vmatprep.subr.mxu0 0.0
    %3051 = vmatpush1.msra.mxu0 0.0
    %3052 = vmatprep.subr.mxu0 0.0
    %3053 = vmatpush1.msra.mxu0 0.0
    %3054 = vmatprep.subr.mxu0 0.0
    %3055 = vmatpush1.msra.mxu0 0.0
    %3056 = vmatprep.subr.mxu0 0.0
    %3057 = vmatpush1.msra.mxu0 0.0
    %3058 = vmatprep.mubr.f32.mxu0 0.0
    %3059 = vmatmul.mubr.f32.gmra.mrb[0].mxu0 %v2923
    %v3060 = vpop.f32.mrb[0].mxu0
    %v3061 = vadd.f32 %v2915, %v3060
    %v3062 = vpop.f32.mrb[0].mxu0
    %v3063 = vadd.f32 %v2919, %v3062
    %3064 = vmatprep.mubr.f32.mxu0 0.0
    %3065 = vmatmul.mubr.f32.gmra.mrb[0].mxu0 %v2926
    %v3066 = vpop.f32.mrb[0].mxu0
    %v3067 = vadd.f32 %v2915, %v3066
    %v3068 = vpop.f32.mrb[0].mxu0
    %v3069 = vadd.f32 %v2919, %v3068
    %3070 = vmatprep.mubr.f32.mxu0 0.0
    %3071 = vmatmul.mubr.f32.gmra.mrb[0].mxu0 %v2929
    %v3072 = vpop.f32.mrb[0].mxu0
    %v3073 = vadd.f32 %v2915, %v3072
    %v3074 = vpop.f32.mrb[0].mxu0
    %v3075 = vadd.f32 %v2919, %v3074
    %3076 = vmatprep.mubr.f32.mxu0 0.0
    %3077 = vmatmul.mubr.f32.gmra.mrb[0].mxu0 %v2932
    %v3078 = vpop.f32.mrb[0].mxu0
    %v3079 = vadd.f32 %v2915, %v3078
    %v3080 = vpop.f32.mrb[0].mxu0
    %v3081 = vadd.f32 %v2919, %v3080
    %3082 = vmatprep.mubr.f32.mxu0 0.0
    %3083 = vmatmul.mubr.f32.gmra.mrb[0].mxu0 %v2935
    %v3084 = vpop.f32.mrb[0].mxu0
    %v3085 = vadd.f32 %v2915, %v3084
    %v3086 = vpop.f32.mrb[0].mxu0
    %v3087 = vadd.f32 %v2919, %v3086
    %3088 = vmatprep.mubr.f32.mxu0 0.0
    %3089 = vmatmul.mubr.f32.gmra.mrb[0].mxu0 %v2938
    %v3090 = vpop.f32.mrb[0].mxu0
    %v3091 = vadd.f32 %v2915, %v3090
    %v3092 = vpop.f32.mrb[0].mxu0
    %v3093 = vadd.f32 %v2919, %v3092
    %3094 = vmatprep.mubr.f32.mxu0 0.0
    %3095 = vmatmul.mubr.f32.gmra.mrb[0].mxu0 %v2941
    %v3096 = vpop.f32.mrb[0].mxu0
    %v3097 = vadd.f32 %v2915, %v3096
    %v3098 = vpop.f32.mrb[0].mxu0
    %v3099 = vadd.f32 %v2919, %v3098
    %3100 = vmatprep.mubr.f32.mxu0 0.0
    %3101 = vmatmul.mubr.f32.gmra.mrb[0].mxu0 %v2944
    %v3102 = vpop.f32.mrb[0].mxu0
    %v3103 = vadd.f32 %v2915, %v3102
    %v3104 = vpop.f32.mrb[0].mxu0
    %v3105 = vadd.f32 %v2919, %v3104
    %3106 = vmatprep.mubr.f32.mxu0 0.0
    %3107 = vmatmul.mubr.f32.gmra.mrb[0].mxu0 %v2947
    %v3108 = vpop.f32.mrb[0].mxu0
    %v3109 = vadd.f32 %v2915, %v3108
    %v3110 = vpop.f32.mrb[0].mxu0
    %v3111 = vadd.f32 %v2919, %v3110
    %3112 = vmatprep.mubr.f32.mxu0 0.0
    %3113 = vmatmul.mubr.f32.gmra.mrb[0].mxu0 %v2950
    %v3114 = vpop.f32.mrb[0].mxu0
    %v3115 = vadd.f32 %v2915, %v3114
    %v3116 = vpop.f32.mrb[0].mxu0
    %v3117 = vadd.f32 %v2919, %v3116
    %3118 = vmatprep.mubr.f32.mxu0 0.0
    %3119 = vmatmul.mubr.f32.gmra.mrb[0].mxu0 %v2953
    %v3120 = vpop.f32.mrb[0].mxu0
    %v3121 = vadd.f32 %v2915, %v3120
    %v3122 = vpop.f32.mrb[0].mxu0
    %v3123 = vadd.f32 %v2919, %v3122
    %3124 = vmatprep.mubr.f32.mxu0 0.0
    %3125 = vmatmul.mubr.f32.gmra.mrb[0].mxu0 %v2956
    %v3126 = vpop.f32.mrb[0].mxu0
    %v3127 = vadd.f32 %v2915, %v3126
    %v3128 = vpop.f32.mrb[0].mxu0
    %v3129 = vadd.f32 %v2919, %v3128
    %3130 = vmatprep.mubr.f32.mxu0 0.0
    %3131 = vmatmul.mubr.f32.gmra.mrb[0].mxu0 %v2959
    %v3132 = vpop.f32.mrb[0].mxu0
    %v3133 = vadd.f32 %v2915, %v3132
    %v3134 = vpop.f32.mrb[0].mxu0
    %v3135 = vadd.f32 %v2919, %v3134
    %3136 = vmatprep.mubr.f32.mxu0 0.0
    %3137 = vmatmul.mubr.f32.gmra.mrb[0].mxu0 %v2962
    %v3138 = vpop.f32.mrb[0].mxu0
    %v3139 = vadd.f32 %v2915, %v3138
    %v3140 = vpop.f32.mrb[0].mxu0
    %v3141 = vadd.f32 %v2919, %v3140
    %3142 = vmatprep.mubr.f32.mxu0 0.0
    %3143 = vmatmul.mubr.f32.gmra.mrb[0].mxu0 %v2965
    %v3144 = vpop.f32.mrb[0].mxu0
    %v3145 = vadd.f32 %v2915, %v3144
    %v3146 = vpop.f32.mrb[0].mxu0
    %v3147 = vadd.f32 %v2919, %v3146
    %3148 = vmatprep.mubr.f32.mxu0 0.0
    %3149 = vmatmul.mubr.f32.gmra.mrb[0].mxu0 %v2968
    %v3150 = vpop.f32.mrb[0].mxu0
    %v3151 = vadd.f32 %v2915, %v3150
    %v3152 = vpop.f32.mrb[0].mxu0
    %v3153 = vadd.f32 %v2919, %v3152
    %3154 = vmatprep.mubr.f32.mxu0 0.0
    %3155 = vmatmul.mubr.f32.gmra.mrb[0].mxu0 %v2971
    %v3156 = vpop.f32.mrb[0].mxu0
    %v3157 = vadd.f32 %v2915, %v3156
    %v3158 = vpop.f32.mrb[0].mxu0
    %v3159 = vadd.f32 %v2919, %v3158
    %3160 = vmatprep.mubr.f32.mxu0 0.0
    %3161 = vmatmul.mubr.f32.gmra.mrb[0].mxu0 %v2974
    %v3162 = vpop.f32.mrb[0].mxu0
    %v3163 = vadd.f32 %v2915, %v3162
    %v3164 = vpop.f32.mrb[0].mxu0
    %v3165 = vadd.f32 %v2919, %v3164
    %3166 = vmatprep.mubr.f32.mxu0 0.0
    %3167 = vmatmul.mubr.f32.gmra.mrb[0].mxu0 %v2977
    %v3168 = vpop.f32.mrb[0].mxu0
    %v3169 = vadd.f32 %v2915, %v3168
    %v3170 = vpop.f32.mrb[0].mxu0
    %v3171 = vadd.f32 %v2919, %v3170
    %3172 = vmatprep.mubr.f32.mxu0 0.0
    %3173 = vmatmul.mubr.f32.gmra.mrb[0].mxu0 %v2980
    %v3174 = vpop.f32.mrb[0].mxu0
    %v3175 = vadd.f32 %v2915, %v3174
    %v3176 = vpop.f32.mrb[0].mxu0
    %v3177 = vadd.f32 %v2919, %v3176
    %3178 = vmatprep.mubr.f32.mxu0 0.0
    %3179 = vmatmul.mubr.f32.gmra.mrb[0].mxu0 %v2983
    %v3180 = vpop.f32.mrb[0].mxu0
    %v3181 = vadd.f32 %v2915, %v3180
    %v3182 = vpop.f32.mrb[0].mxu0
    %v3183 = vadd.f32 %v2919, %v3182
    %3184 = vmatprep.mubr.f32.mxu0 0.0
    %3185 = vmatmul.mubr.f32.gmra.mrb[0].mxu0 %v2986
    %v3186 = vpop.f32.mrb[0].mxu0
    %v3187 = vadd.f32 %v2915, %v3186
    %v3188 = vpop.f32.mrb[0].mxu0
    %v3189 = vadd.f32 %v2919, %v3188
    %3190 = vmatprep.mubr.f32.mxu0 0.0
    %3191 = vmatmul.mubr.f32.gmra.mrb[0].mxu0 %v2989
    %v3192 = vpop.f32.mrb[0].mxu0
    %v3193 = vadd.f32 %v2915, %v3192
    %v3194 = vpop.f32.mrb[0].mxu0
    %v3195 = vadd.f32 %v2919, %v3194
    %3196 = vmatprep.mubr.f32.mxu0 0.0
    %3197 = vmatmul.mubr.f32.gmra.mrb[0].mxu0 %v2992
    %v3198 = vpop.f32.mrb[0].mxu0
    %v3199 = vadd.f32 %v2915, %v3198
    %v3200 = vpop.f32.mrb[0].mxu0
    %v3201 = vadd.f32 %v2919, %v3200
    %3202 = vdwg.mxu0
    %3203 = vst [vmem:[#allocation2] sm:$0xff] %v3061
    %3204 = vst [vmem:[#allocation2 + $0x8] sm:$0xff] %v3063
    %3205 = vst [vmem:[#allocation2 + $0x10] sm:$0xff] %v3067
    %3206 = vst [vmem:[#allocation2 + $0x18] sm:$0xff] %v3069
    %3207 = vst [vmem:[#allocation2 + $0x20] sm:$0xff] %v3073
    %3208 = vst [vmem:[#allocation2 + $0x28] sm:$0xff] %v3075
    %3209 = vst [vmem:[#allocation2 + $0x30] sm:$0xff] %v3079
    %3210 = vst [vmem:[#allocation2 + $0x38] sm:$0xff] %v3081
    %3211 = vst [vmem:[#allocation2 + $0x40] sm:$0xff] %v3085
    %3212 = vst [vmem:[#allocation2 + $0x48] sm:$0xff] %v3087
    %3213 = vst [vmem:[#allocation2 + $0x50] sm:$0xff] %v3091
    %3214 = vst [vmem:[#allocation2 + $0x58] sm:$0xff] %v3093
    %3215 = vst [vmem:[#allocation2 + $0x60] sm:$0xff] %v3097
    %3216 = vst [vmem:[#allocation2 + $0x68] sm:$0xff] %v3099
    %3217 = vst [vmem:[#allocation2 + $0x70] sm:$0xff] %v3103
    %3218 = vst [vmem:[#allocation2 + $0x78] sm:$0xff] %v3105
    %3219 = vst [vmem:[#allocation2 + $0x80] sm:$0xff] %v3109
    %3220 = vst [vmem:[#allocation2 + $0x88] sm:$0xff] %v3111
    %3221 = vst [vmem:[#allocation2 + $0x90] sm:$0xff] %v3115
    %3222 = vst [vmem:[#allocation2 + $0x98] sm:$0xff] %v3117
    %3223 = vst [vmem:[#allocation2 + $0xa0] sm:$0xff] %v3121
    %3224 = vst [vmem:[#allocation2 + $0xa8] sm:$0xff] %v3123
    %3225 = vst [vmem:[#allocation2 + $0xb0] sm:$0xff] %v3127
    %3226 = vst [vmem:[#allocation2 + $0xb8] sm:$0xff] %v3129
    %3227 = vst [vmem:[#allocation2 + $0xc0] sm:$0xff] %v3133
    %3228 = vst [vmem:[#allocation2 + $0xc8] sm:$0xff] %v3135
    %3229 = vst [vmem:[#allocation2 + $0xd0] sm:$0xff] %v3139
    %3230 = vst [vmem:[#allocation2 + $0xd8] sm:$0xff] %v3141
    %3231 = vst [vmem:[#allocation2 + $0xe0] sm:$0xff] %v3145
    %3232 = vst [vmem:[#allocation2 + $0xe8] sm:$0xff] %v3147
    %3233 = vst [vmem:[#allocation2 + $0xf0] sm:$0xff] %v3151
    %3234 = vst [vmem:[#allocation2 + $0xf8] sm:$0xff] %v3153
    %3235 = vst [vmem:[#allocation2 + $0x100] sm:$0xff] %v3157
    %3236 = vst [vmem:[#allocation2 + $0x108] sm:$0xff] %v3159
    %3237 = vst [vmem:[#allocation2 + $0x110] sm:$0xff] %v3163
    %3238 = vst [vmem:[#allocation2 + $0x118] sm:$0xff] %v3165
    %3239 = vst [vmem:[#allocation2 + $0x120] sm:$0xff] %v3169
    %3240 = vst [vmem:[#allocation2 + $0x128] sm:$0xff] %v3171
    %3241 = vst [vmem:[#allocation2 + $0x130] sm:$0xff] %v3175
    %3242 = vst [vmem:[#allocation2 + $0x138] sm:$0xff] %v3177
    %3243 = vst [vmem:[#allocation2 + $0x140] sm:$0xff] %v3181
    %3244 = vst [vmem:[#allocation2 + $0x148] sm:$0xff] %v3183
    %3245 = vst [vmem:[#allocation2 + $0x150] sm:$0xff] %v3187
    %3246 = vst [vmem:[#allocation2 + $0x158] sm:$0xff] %v3189
    %3247 = vst [vmem:[#allocation2 + $0x160] sm:$0xff] %v3193
    %3248 = vst [vmem:[#allocation2 + $0x168] sm:$0xff] %v3195
    %3249 = vst [vmem:[#allocation2 + $0x170] sm:$0xff] %v3199
    %3250 = vst [vmem:[#allocation2 + $0x178] sm:$0xff] %v3201
    %v3251 = vld [vmem:[#allocation2] sm:$0xff]
    %v3252 = vld [vmem:[#allocation2 + $0x8] sm:$0xff]
    %3253 = vmatprep.subr.mxu0 %v103
    %3254 = vmatpush1.msra.mxu0 %v102
    %3255 = vmatprep.subr.mxu0 %v105
    %3256 = vmatpush1.msra.mxu0 %v104
    %3257 = vmatprep.subr.mxu0 %v107
    %3258 = vmatpush1.msra.mxu0 %v106
    %3259 = vmatprep.subr.mxu0 %v109
    %3260 = vmatpush1.msra.mxu0 %v108
    %3261 = vmatprep.subr.mxu0 %v111
    %3262 = vmatpush1.msra.mxu0 %v110
    %3263 = vmatprep.subr.mxu0 %v113
    %3264 = vmatpush1.msra.mxu0 %v112
    %3265 = vmatprep.subr.mxu0 %v115
    %3266 = vmatpush1.msra.mxu0 %v114
    %3267 = vmatprep.subr.mxu0 %v117
    %3268 = vmatpush1.msra.mxu0 %v116
    %3269 = vmatprep.subr.mxu0 0.0
    %3270 = vmatpush1.msra.mxu0 0.0
    %3271 = vmatprep.subr.mxu0 0.0
    %3272 = vmatpush1.msra.mxu0 0.0
    %3273 = vmatprep.subr.mxu0 0.0
    %3274 = vmatpush1.msra.mxu0 0.0
    %3275 = vmatprep.subr.mxu0 0.0
    %3276 = vmatpush1.msra.mxu0 0.0
    %3277 = vmatprep.subr.mxu0 0.0
    %3278 = vmatpush1.msra.mxu0 0.0
    %3279 = vmatprep.subr.mxu0 0.0
    %3280 = vmatpush1.msra.mxu0 0.0
    %3281 = vmatprep.subr.mxu0 0.0
    %3282 = vmatpush1.msra.mxu0 0.0
    %3283 = vmatprep.subr.mxu0 0.0
    %3284 = vmatpush1.msra.mxu0 0.0
    %3285 = vmatprep.subr.mxu0 0.0
    %3286 = vmatpush1.msra.mxu0 0.0
    %3287 = vmatprep.subr.mxu0 0.0
    %3288 = vmatpush1.msra.mxu0 0.0
    %3289 = vmatprep.subr.mxu0 0.0
    %3290 = vmatpush1.msra.mxu0 0.0
    %3291 = vmatprep.subr.mxu0 0.0
    %3292 = vmatpush1.msra.mxu0 0.0
    %3293 = vmatprep.subr.mxu0 0.0
    %3294 = vmatpush1.msra.mxu0 0.0
    %3295 = vmatprep.subr.mxu0 0.0
    %3296 = vmatpush1.msra.mxu0 0.0
    %3297 = vmatprep.subr.mxu0 0.0
    %3298 = vmatpush1.msra.mxu0 0.0
    %3299 = vmatprep.subr.mxu0 0.0
    %3300 = vmatpush1.msra.mxu0 0.0
    %3301 = vmatprep.subr.mxu0 0.0
    %3302 = vmatpush1.msra.mxu0 0.0
    %3303 = vmatprep.subr.mxu0 0.0
    %3304 = vmatpush1.msra.mxu0 0.0
    %3305 = vmatprep.subr.mxu0 0.0
    %3306 = vmatpush1.msra.mxu0 0.0
    %3307 = vmatprep.subr.mxu0 0.0
    %3308 = vmatpush1.msra.mxu0 0.0
    %3309 = vmatprep.subr.mxu0 0.0
    %3310 = vmatpush1.msra.mxu0 0.0
    %3311 = vmatprep.subr.mxu0 0.0
    %3312 = vmatpush1.msra.mxu0 0.0
    %3313 = vmatprep.subr.mxu0 0.0
    %3314 = vmatpush1.msra.mxu0 0.0
    %3315 = vmatprep.subr.mxu0 0.0
    %3316 = vmatpush1.msra.mxu0 0.0
    %3317 = vmatprep.mubr.f32.mxu0 0.0
    %3318 = vmatmul.mubr.f32.gmra.mrb[0].mxu0 %v498
    %v3319 = vpop.f32.mrb[0].mxu0
    %v3320 = vadd.f32 0.0, %v3319
    %v3321 = vpop.f32.mrb[0].mxu0
    %v3322 = vadd.f32 0.0, %v3321
    %3323 = vdwg.mxu0
    %v3324 = vadd.f32 %v3251, %v3320
    %v3325 = vadd.f32 %v3252, %v3322
    %v3326 = vtanh.pop %v3324
    %v3327 = vtanh.pop %v3325
    %v3328 = vmul.f32 %v3326, 0.5
    %v3329 = vmul.f32 %v3327, %v80
    %v3330 = vadd.f32 %v3328, 0.5
    %v3331 = vadd.f32 %v3329, %v85
    %v3332 = vmul.f32 %v3330, 0.0
    %v3333 = vmul.f32 %v3330, %v3331
    %3335 = vrot.lane.b32.xlu0 %v3333, 64
    %v3336 = vpop.permute.xlu0 %3335
    %v3338 = vadd.f32 %v3332, %v3336
    %v3339 = vtanh.pop %v3338
    %v3340 = vmul.f32 %v3331, %v3339
    %v3341 = vld [vmem:[%s593] sm:$0xff]
    %v3342 = vld [vmem:[%s593 + $0x8] sm:$0xff]
    %3344 = vrot.lane.b32.xlu0 %v3340, 64
    %v3345 = vpop.permute.xlu0 %3344
    %v3346 = vsel %vm72, %v3345, 0
    %3348 = vmatprep.subr.mxu0 %v103
    %3349 = vmatpush1.msra.mxu0 %v102
    %3350 = vmatprep.subr.mxu0 %v105
    %3351 = vmatpush1.msra.mxu0 %v104
    %3352 = vmatprep.subr.mxu0 %v107
    %3353 = vmatpush1.msra.mxu0 %v106
    %3354 = vmatprep.subr.mxu0 %v109
    %3355 = vmatpush1.msra.mxu0 %v108
    %3356 = vmatprep.subr.mxu0 %v111
    %3357 = vmatpush1.msra.mxu0 %v110
    %3358 = vmatprep.subr.mxu0 %v113
    %3359 = vmatpush1.msra.mxu0 %v112
    %3360 = vmatprep.subr.mxu0 %v115
    %3361 = vmatpush1.msra.mxu0 %v114
    %3362 = vmatprep.subr.mxu0 %v117
    %3363 = vmatpush1.msra.mxu0 %v116
    %3364 = vmatprep.subr.mxu0 0.0
    %3365 = vmatpush1.msra.mxu0 0.0
    %3366 = vmatprep.subr.mxu0 0.0
    %3367 = vmatpush1.msra.mxu0 0.0
    %3368 = vmatprep.subr.mxu0 0.0
    %3369 = vmatpush1.msra.mxu0 0.0
    %3370 = vmatprep.subr.mxu0 0.0
    %3371 = vmatpush1.msra.mxu0 0.0
    %3372 = vmatprep.subr.mxu0 0.0
    %3373 = vmatpush1.msra.mxu0 0.0
    %3374 = vmatprep.subr.mxu0 0.0
    %3375 = vmatpush1.msra.mxu0 0.0
    %3376 = vmatprep.subr.mxu0 0.0
    %3377 = vmatpush1.msra.mxu0 0.0
    %3378 = vmatprep.subr.mxu0 0.0
    %3379 = vmatpush1.msra.mxu0 0.0
    %3380 = vmatprep.subr.mxu0 0.0
    %3381 = vmatpush1.msra.mxu0 0.0
    %3382 = vmatprep.subr.mxu0 0.0
    %3383 = vmatpush1.msra.mxu0 0.0
    %3384 = vmatprep.subr.mxu0 0.0
    %3385 = vmatpush1.msra.mxu0 0.0
    %3386 = vmatprep.subr.mxu0 0.0
    %3387 = vmatpush1.msra.mxu0 0.0
    %3388 = vmatprep.subr.mxu0 0.0
    %3389 = vmatpush1.msra.mxu0 0.0
    %3390 = vmatprep.subr.mxu0 0.0
    %3391 = vmatpush1.msra.mxu0 0.0
    %3392 = vmatprep.subr.mxu0 0.0
    %3393 = vmatpush1.msra.mxu0 0.0
    %3394 = vmatprep.subr.mxu0 0.0
    %3395 = vmatpush1.msra.mxu0 0.0
    %3396 = vmatprep.subr.mxu0 0.0
    %3397 = vmatpush1.msra.mxu0 0.0
    %3398 = vmatprep.subr.mxu0 0.0
    %3399 = vmatpush1.msra.mxu0 0.0
    %3400 = vmatprep.subr.mxu0 0.0
    %3401 = vmatpush1.msra.mxu0 0.0
    %3402 = vmatprep.subr.mxu0 0.0
    %3403 = vmatpush1.msra.mxu0 0.0
    %3404 = vmatprep.subr.mxu0 0.0
    %3405 = vmatpush1.msra.mxu0 0.0
    %3406 = vmatprep.subr.mxu0 0.0
    %3407 = vmatpush1.msra.mxu0 0.0
    %3408 = vmatprep.subr.mxu0 0.0
    %3409 = vmatpush1.msra.mxu0 0.0
    %3410 = vmatprep.subr.mxu0 0.0
    %3411 = vmatpush1.msra.mxu0 0.0
    %3412 = vmatprep.mubr.f32.mxu0 0.0
    %3413 = vmatmul.mubr.f32.gmra.mrb[0].mxu0 %v3346
    %v3414 = vpop.f32.mrb[0].mxu0
    %v3415 = vadd.f32 0.0, %v3414
    %v3416 = vpop.f32.mrb[0].mxu0
    %v3417 = vadd.f32 0.0, %v3416
    %3418 = vdwg.mxu0
    %v3419 = vadd.f32 %v3341, %v3415
    %v3420 = vadd.f32 %v3342, %v3417
    %v3421 = vtanh.pop %v3419
    %v3422 = vtanh.pop %v3420
    %v3423 = vmul.f32 %v3421, 0.5
    %v3424 = vmul.f32 %v3422, %v80
    %v3425 = vadd.f32 %v3423, 0.5
    %v3426 = vadd.f32 %v3424, %v85
    %v3427 = vmul.f32 %v3425, %v3338
    %v3428 = vmul.f32 %v3425, %v3426
    %3430 = vrot.lane.b32.xlu0 %v3428, 64
    %v3431 = vpop.permute.xlu0 %3430
    %v3433 = vadd.f32 %v3427, %v3431
    %v3434 = vtanh.pop %v3433
    %v3435 = vmul.f32 %v3426, %v3434
    %v3436 = vld [vmem:[%s692] sm:$0xff]
    %v3437 = vld [vmem:[%s692 + $0x8] sm:$0xff]
    %3439 = vrot.lane.b32.xlu0 %v3435, 64
    %v3440 = vpop.permute.xlu0 %3439
    %v3441 = vsel %vm72, %v3440, 0
    %3443 = vmatprep.subr.mxu0 %v103
    %3444 = vmatpush1.msra.mxu0 %v102
    %3445 = vmatprep.subr.mxu0 %v105
    %3446 = vmatpush1.msra.mxu0 %v104
    %3447 = vmatprep.subr.mxu0 %v107
    %3448 = vmatpush1.msra.mxu0 %v106
    %3449 = vmatprep.subr.mxu0 %v109
    %3450 = vmatpush1.msra.mxu0 %v108
    %3451 = vmatprep.subr.mxu0 %v111
    %3452 = vmatpush1.msra.mxu0 %v110
    %3453 = vmatprep.subr.mxu0 %v113
    %3454 = vmatpush1.msra.mxu0 %v112
    %3455 = vmatprep.subr.mxu0 %v115
    %3456 = vmatpush1.msra.mxu0 %v114
    %3457 = vmatprep.subr.mxu0 %v117
    %3458 = vmatpush1.msra.mxu0 %v116
    %3459 = vmatprep.subr.mxu0 0.0
    %3460 = vmatpush1.msra.mxu0 0.0
    %3461 = vmatprep.subr.mxu0 0.0
    %3462 = vmatpush1.msra.mxu0 0.0
    %3463 = vmatprep.subr.mxu0 0.0
    %3464 = vmatpush1.msra.mxu0 0.0
    %3465 = vmatprep.subr.mxu0 0.0
    %3466 = vmatpush1.msra.mxu0 0.0
    %3467 = vmatprep.subr.mxu0 0.0
    %3468 = vmatpush1.msra.mxu0 0.0
    %3469 = vmatprep.subr.mxu0 0.0
    %3470 = vmatpush1.msra.mxu0 0.0
    %3471 = vmatprep.subr.mxu0 0.0
    %3472 = vmatpush1.msra.mxu0 0.0
    %3473 = vmatprep.subr.mxu0 0.0
    %3474 = vmatpush1.msra.mxu0 0.0
    %3475 = vmatprep.subr.mxu0 0.0
    %3476 = vmatpush1.msra.mxu0 0.0
    %3477 = vmatprep.subr.mxu0 0.0
    %3478 = vmatpush1.msra.mxu0 0.0
    %3479 = vmatprep.subr.mxu0 0.0
    %3480 = vmatpush1.msra.mxu0 0.0
    %3481 = vmatprep.subr.mxu0 0.0
    %3482 = vmatpush1.msra.mxu0 0.0
    %3483 = vmatprep.subr.mxu0 0.0
    %3484 = vmatpush1.msra.mxu0 0.0
    %3485 = vmatprep.subr.mxu0 0.0
    %3486 = vmatpush1.msra.mxu0 0.0
    %3487 = vmatprep.subr.mxu0 0.0
    %3488 = vmatpush1.msra.mxu0 0.0
    %3489 = vmatprep.subr.mxu0 0.0
    %3490 = vmatpush1.msra.mxu0 0.0
    %3491 = vmatprep.subr.mxu0 0.0
    %3492 = vmatpush1.msra.mxu0 0.0
    %3493 = vmatprep.subr.mxu0 0.0
    %3494 = vmatpush1.msra.mxu0 0.0
    %3495 = vmatprep.subr.mxu0 0.0
    %3496 = vmatpush1.msra.mxu0 0.0
    %3497 = vmatprep.subr.mxu0 0.0
    %3498 = vmatpush1.msra.mxu0 0.0
    %3499 = vmatprep.subr.mxu0 0.0
    %3500 = vmatpush1.msra.mxu0 0.0
    %3501 = vmatprep.subr.mxu0 0.0
    %3502 = vmatpush1.msra.mxu0 0.0
    %3503 = vmatprep.subr.mxu0 0.0
    %3504 = vmatpush1.msra.mxu0 0.0
    %3505 = vmatprep.subr.mxu0 0.0
    %3506 = vmatpush1.msra.mxu0 0.0
    %3507 = vmatprep.mubr.f32.mxu0 0.0
    %3508 = vmatmul.mubr.f32.gmra.mrb[0].mxu0 %v3441
    %v3509 = vpop.f32.mrb[0].mxu0
    %v3510 = vadd.f32 0.0, %v3509
    %v3511 = vpop.f32.mrb[0].mxu0
    %v3512 = vadd.f32 0.0, %v3511
    %3513 = vdwg.mxu0
    %v3514 = vadd.f32 %v3436, %v3510
    %v3515 = vadd.f32 %v3437, %v3512
    %v3516 = vtanh.pop %v3514
    %v3517 = vtanh.pop %v3515
    %v3518 = vmul.f32 %v3516, 0.5
    %v3519 = vmul.f32 %v3517, %v80
    %v3520 = vadd.f32 %v3518, 0.5
    %v3521 = vadd.f32 %v3519, %v85
    %v3522 = vmul.f32 %v3520, %v3433
    %v3523 = vmul.f32 %v3520, %v3521
    %3525 = vrot.lane.b32.xlu0 %v3523, 64
    %v3526 = vpop.permute.xlu0 %3525
    %v3528 = vadd.f32 %v3522, %v3526
    %v3529 = vtanh.pop %v3528
    %v3530 = vmul.f32 %v3521, %v3529
    %v3531 = vld [vmem:[%s791] sm:$0xff]
    %v3532 = vld [vmem:[%s791 + $0x8] sm:$0xff]
    %3534 = vrot.lane.b32.xlu0 %v3530, 64
    %v3535 = vpop.permute.xlu0 %3534
    %v3536 = vsel %vm72, %v3535, 0
    %3538 = vmatprep.subr.mxu0 %v103
    %3539 = vmatpush1.msra.mxu0 %v102
    %3540 = vmatprep.subr.mxu0 %v105
    %3541 = vmatpush1.msra.mxu0 %v104
    %3542 = vmatprep.subr.mxu0 %v107
    %3543 = vmatpush1.msra.mxu0 %v106
    %3544 = vmatprep.subr.mxu0 %v109
    %3545 = vmatpush1.msra.mxu0 %v108
    %3546 = vmatprep.subr.mxu0 %v111
    %3547 = vmatpush1.msra.mxu0 %v110
    %3548 = vmatprep.subr.mxu0 %v113
    %3549 = vmatpush1.msra.mxu0 %v112
    %3550 = vmatprep.subr.mxu0 %v115
    %3551 = vmatpush1.msra.mxu0 %v114
    %3552 = vmatprep.subr.mxu0 %v117
    %3553 = vmatpush1.msra.mxu0 %v116
    %3554 = vmatprep.subr.mxu0 0.0
    %3555 = vmatpush1.msra.mxu0 0.0
    %3556 = vmatprep.subr.mxu0 0.0
    %3557 = vmatpush1.msra.mxu0 0.0
    %3558 = vmatprep.subr.mxu0 0.0
    %3559 = vmatpush1.msra.mxu0 0.0
    %3560 = vmatprep.subr.mxu0 0.0
    %3561 = vmatpush1.msra.mxu0 0.0
    %3562 = vmatprep.subr.mxu0 0.0
    %3563 = vmatpush1.msra.mxu0 0.0
    %3564 = vmatprep.subr.mxu0 0.0
    %3565 = vmatpush1.msra.mxu0 0.0
    %3566 = vmatprep.subr.mxu0 0.0
    %3567 = vmatpush1.msra.mxu0 0.0
    %3568 = vmatprep.subr.mxu0 0.0
    %3569 = vmatpush1.msra.mxu0 0.0
    %3570 = vmatprep.subr.mxu0 0.0
    %3571 = vmatpush1.msra.mxu0 0.0
    %3572 = vmatprep.subr.mxu0 0.0
    %3573 = vmatpush1.msra.mxu0 0.0
    %3574 = vmatprep.subr.mxu0 0.0
    %3575 = vmatpush1.msra.mxu0 0.0
    %3576 = vmatprep.subr.mxu0 0.0
    %3577 = vmatpush1.msra.mxu0 0.0
    %3578 = vmatprep.subr.mxu0 0.0
    %3579 = vmatpush1.msra.mxu0 0.0
    %3580 = vmatprep.subr.mxu0 0.0
    %3581 = vmatpush1.msra.mxu0 0.0
    %3582 = vmatprep.subr.mxu0 0.0
    %3583 = vmatpush1.msra.mxu0 0.0
    %3584 = vmatprep.subr.mxu0 0.0
    %3585 = vmatpush1.msra.mxu0 0.0
    %3586 = vmatprep.subr.mxu0 0.0
    %3587 = vmatpush1.msra.mxu0 0.0
    %3588 = vmatprep.subr.mxu0 0.0
    %3589 = vmatpush1.msra.mxu0 0.0
    %3590 = vmatprep.subr.mxu0 0.0
    %3591 = vmatpush1.msra.mxu0 0.0
    %3592 = vmatprep.subr.mxu0 0.0
    %3593 = vmatpush1.msra.mxu0 0.0
    %3594 = vmatprep.subr.mxu0 0.0
    %3595 = vmatpush1.msra.mxu0 0.0
    %3596 = vmatprep.subr.mxu0 0.0
    %3597 = vmatpush1.msra.mxu0 0.0
    %3598 = vmatprep.subr.mxu0 0.0
    %3599 = vmatpush1.msra.mxu0 0.0
    %3600 = vmatprep.subr.mxu0 0.0
    %3601 = vmatpush1.msra.mxu0 0.0
    %3602 = vmatprep.mubr.f32.mxu0 0.0
    %3603 = vmatmul.mubr.f32.gmra.mrb[0].mxu0 %v3536
    %v3604 = vpop.f32.mrb[0].mxu0
    %v3605 = vadd.f32 0.0, %v3604
    %v3606 = vpop.f32.mrb[0].mxu0
    %v3607 = vadd.f32 0.0, %v3606
    %3608 = vdwg.mxu0
    %v3609 = vadd.f32 %v3531, %v3605
    %v3610 = vadd.f32 %v3532, %v3607
    %v3611 = vtanh.pop %v3609
    %v3612 = vtanh.pop %v3610
    %v3613 = vmul.f32 %v3611, 0.5
    %v3614 = vmul.f32 %v3612, %v80
    %v3615 = vadd.f32 %v3613, 0.5
    %v3616 = vadd.f32 %v3614, %v85
    %v3617 = vmul.f32 %v3615, %v3528
    %v3618 = vmul.f32 %v3615, %v3616
    %3620 = vrot.lane.b32.xlu0 %v3618, 64
    %v3621 = vpop.permute.xlu0 %3620
    %v3623 = vadd.f32 %v3617, %v3621
    %v3624 = vtanh.pop %v3623
    %v3625 = vmul.f32 %v3616, %v3624
    %v3626 = vld [vmem:[%s890] sm:$0xff]
    %v3627 = vld [vmem:[%s890 + $0x8] sm:$0xff]
    %3629 = vrot.lane.b32.xlu0 %v3625, 64
    %v3630 = vpop.permute.xlu0 %3629
    %v3631 = vsel %vm72, %v3630, 0
    %3633 = vmatprep.subr.mxu0 %v103
    %3634 = vmatpush1.msra.mxu0 %v102
    %3635 = vmatprep.subr.mxu0 %v105
    %3636 = vmatpush1.msra.mxu0 %v104
    %3637 = vmatprep.subr.mxu0 %v107
    %3638 = vmatpush1.msra.mxu0 %v106
    %3639 = vmatprep.subr.mxu0 %v109
    %3640 = vmatpush1.msra.mxu0 %v108
    %3641 = vmatprep.subr.mxu0 %v111
    %3642 = vmatpush1.msra.mxu0 %v110
    %3643 = vmatprep.subr.mxu0 %v113
    %3644 = vmatpush1.msra.mxu0 %v112
    %3645 = vmatprep.subr.mxu0 %v115
    %3646 = vmatpush1.msra.mxu0 %v114
    %3647 = vmatprep.subr.mxu0 %v117
    %3648 = vmatpush1.msra.mxu0 %v116
    %3649 = vmatprep.subr.mxu0 0.0
    %3650 = vmatpush1.msra.mxu0 0.0
    %3651 = vmatprep.subr.mxu0 0.0
    %3652 = vmatpush1.msra.mxu0 0.0
    %3653 = vmatprep.subr.mxu0 0.0
    %3654 = vmatpush1.msra.mxu0 0.0
    %3655 = vmatprep.subr.mxu0 0.0
    %3656 = vmatpush1.msra.mxu0 0.0
    %3657 = vmatprep.subr.mxu0 0.0
    %3658 = vmatpush1.msra.mxu0 0.0
    %3659 = vmatprep.subr.mxu0 0.0
    %3660 = vmatpush1.msra.mxu0 0.0
    %3661 = vmatprep.subr.mxu0 0.0
    %3662 = vmatpush1.msra.mxu0 0.0
    %3663 = vmatprep.subr.mxu0 0.0
    %3664 = vmatpush1.msra.mxu0 0.0
    %3665 = vmatprep.subr.mxu0 0.0
    %3666 = vmatpush1.msra.mxu0 0.0
    %3667 = vmatprep.subr.mxu0 0.0
    %3668 = vmatpush1.msra.mxu0 0.0
    %3669 = vmatprep.subr.mxu0 0.0
    %3670 = vmatpush1.msra.mxu0 0.0
    %3671 = vmatprep.subr.mxu0 0.0
    %3672 = vmatpush1.msra.mxu0 0.0
    %3673 = vmatprep.subr.mxu0 0.0
    %3674 = vmatpush1.msra.mxu0 0.0
    %3675 = vmatprep.subr.mxu0 0.0
    %3676 = vmatpush1.msra.mxu0 0.0
    %3677 = vmatprep.subr.mxu0 0.0
    %3678 = vmatpush1.msra.mxu0 0.0
    %3679 = vmatprep.subr.mxu0 0.0
    %3680 = vmatpush1.msra.mxu0 0.0
    %3681 = vmatprep.subr.mxu0 0.0
    %3682 = vmatpush1.msra.mxu0 0.0
    %3683 = vmatprep.subr.mxu0 0.0
    %3684 = vmatpush1.msra.mxu0 0.0
    %3685 = vmatprep.subr.mxu0 0.0
    %3686 = vmatpush1.msra.mxu0 0.0
    %3687 = vmatprep.subr.mxu0 0.0
    %3688 = vmatpush1.msra.mxu0 0.0
    %3689 = vmatprep.subr.mxu0 0.0
    %3690 = vmatpush1.msra.mxu0 0.0
    %3691 = vmatprep.subr.mxu0 0.0
    %3692 = vmatpush1.msra.mxu0 0.0
    %3693 = vmatprep.subr.mxu0 0.0
    %3694 = vmatpush1.msra.mxu0 0.0
    %3695 = vmatprep.subr.mxu0 0.0
    %3696 = vmatpush1.msra.mxu0 0.0
    %3697 = vmatprep.mubr.f32.mxu0 0.0
    %3698 = vmatmul.mubr.f32.gmra.mrb[0].mxu0 %v3631
    %v3699 = vpop.f32.mrb[0].mxu0
    %v3700 = vadd.f32 0.0, %v3699
    %v3701 = vpop.f32.mrb[0].mxu0
    %v3702 = vadd.f32 0.0, %v3701
    %3703 = vdwg.mxu0
    %v3704 = vadd.f32 %v3626, %v3700
    %v3705 = vadd.f32 %v3627, %v3702
    %v3706 = vtanh.pop %v3704
    %v3707 = vtanh.pop %v3705
    %v3708 = vmul.f32 %v3706, 0.5
    %v3709 = vmul.f32 %v3707, %v80
    %v3710 = vadd.f32 %v3708, 0.5
    %v3711 = vadd.f32 %v3709, %v85
    %v3712 = vmul.f32 %v3710, %v3623
    %v3713 = vmul.f32 %v3710, %v3711
    %3715 = vrot.lane.b32.xlu0 %v3713, 64
    %v3716 = vpop.permute.xlu0 %3715
    %v3718 = vadd.f32 %v3712, %v3716
    %v3719 = vtanh.pop %v3718
    %v3720 = vmul.f32 %v3711, %v3719
    %v3721 = vld [vmem:[%s989] sm:$0xff]
    %v3722 = vld [vmem:[%s989 + $0x8] sm:$0xff]
    %3724 = vrot.lane.b32.xlu0 %v3720, 64
    %v3725 = vpop.permute.xlu0 %3724
    %v3726 = vsel %vm72, %v3725, 0
    %3728 = vmatprep.subr.mxu0 %v103
    %3729 = vmatpush1.msra.mxu0 %v102
    %3730 = vmatprep.subr.mxu0 %v105
    %3731 = vmatpush1.msra.mxu0 %v104
    %3732 = vmatprep.subr.mxu0 %v107
    %3733 = vmatpush1.msra.mxu0 %v106
    %3734 = vmatprep.subr.mxu0 %v109
    %3735 = vmatpush1.msra.mxu0 %v108
    %3736 = vmatprep.subr.mxu0 %v111
    %3737 = vmatpush1.msra.mxu0 %v110
    %3738 = vmatprep.subr.mxu0 %v113
    %3739 = vmatpush1.msra.mxu0 %v112
    %3740 = vmatprep.subr.mxu0 %v115
    %3741 = vmatpush1.msra.mxu0 %v114
    %3742 = vmatprep.subr.mxu0 %v117
    %3743 = vmatpush1.msra.mxu0 %v116
    %3744 = vmatprep.subr.mxu0 0.0
    %3745 = vmatpush1.msra.mxu0 0.0
    %3746 = vmatprep.subr.mxu0 0.0
    %3747 = vmatpush1.msra.mxu0 0.0
    %3748 = vmatprep.subr.mxu0 0.0
    %3749 = vmatpush1.msra.mxu0 0.0
    %3750 = vmatprep.subr.mxu0 0.0
    %3751 = vmatpush1.msra.mxu0 0.0
    %3752 = vmatprep.subr.mxu0 0.0
    %3753 = vmatpush1.msra.mxu0 0.0
    %3754 = vmatprep.subr.mxu0 0.0
    %3755 = vmatpush1.msra.mxu0 0.0
    %3756 = vmatprep.subr.mxu0 0.0
    %3757 = vmatpush1.msra.mxu0 0.0
    %3758 = vmatprep.subr.mxu0 0.0
    %3759 = vmatpush1.msra.mxu0 0.0
    %3760 = vmatprep.subr.mxu0 0.0
    %3761 = vmatpush1.msra.mxu0 0.0
    %3762 = vmatprep.subr.mxu0 0.0
    %3763 = vmatpush1.msra.mxu0 0.0
    %3764 = vmatprep.subr.mxu0 0.0
    %3765 = vmatpush1.msra.mxu0 0.0
    %3766 = vmatprep.subr.mxu0 0.0
    %3767 = vmatpush1.msra.mxu0 0.0
    %3768 = vmatprep.subr.mxu0 0.0
    %3769 = vmatpush1.msra.mxu0 0.0
    %3770 = vmatprep.subr.mxu0 0.0
    %3771 = vmatpush1.msra.mxu0 0.0
    %3772 = vmatprep.subr.mxu0 0.0
    %3773 = vmatpush1.msra.mxu0 0.0
    %3774 = vmatprep.subr.mxu0 0.0
    %3775 = vmatpush1.msra.mxu0 0.0
    %3776 = vmatprep.subr.mxu0 0.0
    %3777 = vmatpush1.msra.mxu0 0.0
    %3778 = vmatprep.subr.mxu0 0.0
    %3779 = vmatpush1.msra.mxu0 0.0
    %3780 = vmatprep.subr.mxu0 0.0
    %3781 = vmatpush1.msra.mxu0 0.0
    %3782 = vmatprep.subr.mxu0 0.0
    %3783 = vmatpush1.msra.mxu0 0.0
    %3784 = vmatprep.subr.mxu0 0.0
    %3785 = vmatpush1.msra.mxu0 0.0
    %3786 = vmatprep.subr.mxu0 0.0
    %3787 = vmatpush1.msra.mxu0 0.0
    %3788 = vmatprep.subr.mxu0 0.0
    %3789 = vmatpush1.msra.mxu0 0.0
    %3790 = vmatprep.subr.mxu0 0.0
    %3791 = vmatpush1.msra.mxu0 0.0
    %3792 = vmatprep.mubr.f32.mxu0 0.0
    %3793 = vmatmul.mubr.f32.gmra.mrb[0].mxu0 %v3726
    %v3794 = vpop.f32.mrb[0].mxu0
    %v3795 = vadd.f32 0.0, %v3794
    %v3796 = vpop.f32.mrb[0].mxu0
    %v3797 = vadd.f32 0.0, %v3796
    %3798 = vdwg.mxu0
    %v3799 = vadd.f32 %v3721, %v3795
    %v3800 = vadd.f32 %v3722, %v3797
    %v3801 = vtanh.pop %v3799
    %v3802 = vtanh.pop %v3800
    %v3803 = vmul.f32 %v3801, 0.5
    %v3804 = vmul.f32 %v3802, %v80
    %v3805 = vadd.f32 %v3803, 0.5
    %v3806 = vadd.f32 %v3804, %v85
    %v3807 = vmul.f32 %v3805, %v3718
    %v3808 = vmul.f32 %v3805, %v3806
    %3810 = vrot.lane.b32.xlu0 %v3808, 64
    %v3811 = vpop.permute.xlu0 %3810
    %v3813 = vadd.f32 %v3807, %v3811
    %v3814 = vtanh.pop %v3813
    %v3815 = vmul.f32 %v3806, %v3814
    %v3816 = vld [vmem:[%s1088] sm:$0xff]
    %v3817 = vld [vmem:[%s1088 + $0x8] sm:$0xff]
    %3819 = vrot.lane.b32.xlu0 %v3815, 64
    %v3820 = vpop.permute.xlu0 %3819
    %v3821 = vsel %vm72, %v3820, 0
    %3823 = vmatprep.subr.mxu0 %v103
    %3824 = vmatpush1.msra.mxu0 %v102
    %3825 = vmatprep.subr.mxu0 %v105
    %3826 = vmatpush1.msra.mxu0 %v104
    %3827 = vmatprep.subr.mxu0 %v107
    %3828 = vmatpush1.msra.mxu0 %v106
    %3829 = vmatprep.subr.mxu0 %v109
    %3830 = vmatpush1.msra.mxu0 %v108
    %3831 = vmatprep.subr.mxu0 %v111
    %3832 = vmatpush1.msra.mxu0 %v110
    %3833 = vmatprep.subr.mxu0 %v113
    %3834 = vmatpush1.msra.mxu0 %v112
    %3835 = vmatprep.subr.mxu0 %v115
    %3836 = vmatpush1.msra.mxu0 %v114
    %3837 = vmatprep.subr.mxu0 %v117
    %3838 = vmatpush1.msra.mxu0 %v116
    %3839 = vmatprep.subr.mxu0 0.0
    %3840 = vmatpush1.msra.mxu0 0.0
    %3841 = vmatprep.subr.mxu0 0.0
    %3842 = vmatpush1.msra.mxu0 0.0
    %3843 = vmatprep.subr.mxu0 0.0
    %3844 = vmatpush1.msra.mxu0 0.0
    %3845 = vmatprep.subr.mxu0 0.0
    %3846 = vmatpush1.msra.mxu0 0.0
    %3847 = vmatprep.subr.mxu0 0.0
    %3848 = vmatpush1.msra.mxu0 0.0
    %3849 = vmatprep.subr.mxu0 0.0
    %3850 = vmatpush1.msra.mxu0 0.0
    %3851 = vmatprep.subr.mxu0 0.0
    %3852 = vmatpush1.msra.mxu0 0.0
    %3853 = vmatprep.subr.mxu0 0.0
    %3854 = vmatpush1.msra.mxu0 0.0
    %3855 = vmatprep.subr.mxu0 0.0
    %3856 = vmatpush1.msra.mxu0 0.0
    %3857 = vmatprep.subr.mxu0 0.0
    %3858 = vmatpush1.msra.mxu0 0.0
    %3859 = vmatprep.subr.mxu0 0.0
    %3860 = vmatpush1.msra.mxu0 0.0
    %3861 = vmatprep.subr.mxu0 0.0
    %3862 = vmatpush1.msra.mxu0 0.0
    %3863 = vmatprep.subr.mxu0 0.0
    %3864 = vmatpush1.msra.mxu0 0.0
    %3865 = vmatprep.subr.mxu0 0.0
    %3866 = vmatpush1.msra.mxu0 0.0
    %3867 = vmatprep.subr.mxu0 0.0
    %3868 = vmatpush1.msra.mxu0 0.0
    %3869 = vmatprep.subr.mxu0 0.0
    %3870 = vmatpush1.msra.mxu0 0.0
    %3871 = vmatprep.subr.mxu0 0.0
    %3872 = vmatpush1.msra.mxu0 0.0
    %3873 = vmatprep.subr.mxu0 0.0
    %3874 = vmatpush1.msra.mxu0 0.0
    %3875 = vmatprep.subr.mxu0 0.0
    %3876 = vmatpush1.msra.mxu0 0.0
    %3877 = vmatprep.subr.mxu0 0.0
    %3878 = vmatpush1.msra.mxu0 0.0
    %3879 = vmatprep.subr.mxu0 0.0
    %3880 = vmatpush1.msra.mxu0 0.0
    %3881 = vmatprep.subr.mxu0 0.0
    %3882 = vmatpush1.msra.mxu0 0.0
    %3883 = vmatprep.subr.mxu0 0.0
    %3884 = vmatpush1.msra.mxu0 0.0
    %3885 = vmatprep.subr.mxu0 0.0
    %3886 = vmatpush1.msra.mxu0 0.0
    %3887 = vmatprep.mubr.f32.mxu0 0.0
    %3888 = vmatmul.mubr.f32.gmra.mrb[0].mxu0 %v3821
    %v3889 = vpop.f32.mrb[0].mxu0
    %v3890 = vadd.f32 0.0, %v3889
    %v3891 = vpop.f32.mrb[0].mxu0
    %v3892 = vadd.f32 0.0, %v3891
    %3893 = vdwg.mxu0
    %v3894 = vadd.f32 %v3816, %v3890
    %v3895 = vadd.f32 %v3817, %v3892
    %v3896 = vtanh.pop %v3894
    %v3897 = vtanh.pop %v3895
    %v3898 = vmul.f32 %v3896, 0.5
    %v3899 = vmul.f32 %v3897, %v80
    %v3900 = vadd.f32 %v3898, 0.5
    %v3901 = vadd.f32 %v3899, %v85
    %v3902 = vmul.f32 %v3900, %v3813
    %v3903 = vmul.f32 %v3900, %v3901
    %3905 = vrot.lane.b32.xlu0 %v3903, 64
    %v3906 = vpop.permute.xlu0 %3905
    %v3908 = vadd.f32 %v3902, %v3906
    %v3909 = vtanh.pop %v3908
    %v3910 = vmul.f32 %v3901, %v3909
    %v3911 = vld [vmem:[%s1187] sm:$0xff]
    %v3912 = vld [vmem:[%s1187 + $0x8] sm:$0xff]
    %3914 = vrot.lane.b32.xlu0 %v3910, 64
    %v3915 = vpop.permute.xlu0 %3914
    %v3916 = vsel %vm72, %v3915, 0
    %3918 = vmatprep.subr.mxu0 %v103
    %3919 = vmatpush1.msra.mxu0 %v102
    %3920 = vmatprep.subr.mxu0 %v105
    %3921 = vmatpush1.msra.mxu0 %v104
    %3922 = vmatprep.subr.mxu0 %v107
    %3923 = vmatpush1.msra.mxu0 %v106
    %3924 = vmatprep.subr.mxu0 %v109
    %3925 = vmatpush1.msra.mxu0 %v108
    %3926 = vmatprep.subr.mxu0 %v111
    %3927 = vmatpush1.msra.mxu0 %v110
    %3928 = vmatprep.subr.mxu0 %v113
    %3929 = vmatpush1.msra.mxu0 %v112
    %3930 = vmatprep.subr.mxu0 %v115
    %3931 = vmatpush1.msra.mxu0 %v114
    %3932 = vmatprep.subr.mxu0 %v117
    %3933 = vmatpush1.msra.mxu0 %v116
    %3934 = vmatprep.subr.mxu0 0.0
    %3935 = vmatpush1.msra.mxu0 0.0
    %3936 = vmatprep.subr.mxu0 0.0
    %3937 = vmatpush1.msra.mxu0 0.0
    %3938 = vmatprep.subr.mxu0 0.0
    %3939 = vmatpush1.msra.mxu0 0.0
    %3940 = vmatprep.subr.mxu0 0.0
    %3941 = vmatpush1.msra.mxu0 0.0
    %3942 = vmatprep.subr.mxu0 0.0
    %3943 = vmatpush1.msra.mxu0 0.0
    %3944 = vmatprep.subr.mxu0 0.0
    %3945 = vmatpush1.msra.mxu0 0.0
    %3946 = vmatprep.subr.mxu0 0.0
    %3947 = vmatpush1.msra.mxu0 0.0
    %3948 = vmatprep.subr.mxu0 0.0
    %3949 = vmatpush1.msra.mxu0 0.0
    %3950 = vmatprep.subr.mxu0 0.0
    %3951 = vmatpush1.msra.mxu0 0.0
    %3952 = vmatprep.subr.mxu0 0.0
    %3953 = vmatpush1.msra.mxu0 0.0
    %3954 = vmatprep.subr.mxu0 0.0
    %3955 = vmatpush1.msra.mxu0 0.0
    %3956 = vmatprep.subr.mxu0 0.0
    %3957 = vmatpush1.msra.mxu0 0.0
    %3958 = vmatprep.subr.mxu0 0.0
    %3959 = vmatpush1.msra.mxu0 0.0
    %3960 = vmatprep.subr.mxu0 0.0
    %3961 = vmatpush1.msra.mxu0 0.0
    %3962 = vmatprep.subr.mxu0 0.0
    %3963 = vmatpush1.msra.mxu0 0.0
    %3964 = vmatprep.subr.mxu0 0.0
    %3965 = vmatpush1.msra.mxu0 0.0
    %3966 = vmatprep.subr.mxu0 0.0
    %3967 = vmatpush1.msra.mxu0 0.0
    %3968 = vmatprep.subr.mxu0 0.0
    %3969 = vmatpush1.msra.mxu0 0.0
    %3970 = vmatprep.subr.mxu0 0.0
    %3971 = vmatpush1.msra.mxu0 0.0
    %3972 = vmatprep.subr.mxu0 0.0
    %3973 = vmatpush1.msra.mxu0 0.0
    %3974 = vmatprep.subr.mxu0 0.0
    %3975 = vmatpush1.msra.mxu0 0.0
    %3976 = vmatprep.subr.mxu0 0.0
    %3977 = vmatpush1.msra.mxu0 0.0
    %3978 = vmatprep.subr.mxu0 0.0
    %3979 = vmatpush1.msra.mxu0 0.0
    %3980 = vmatprep.subr.mxu0 0.0
    %3981 = vmatpush1.msra.mxu0 0.0
    %3982 = vmatprep.mubr.f32.mxu0 0.0
    %3983 = vmatmul.mubr.f32.gmra.mrb[0].mxu0 %v3916
    %v3984 = vpop.f32.mrb[0].mxu0
    %v3985 = vadd.f32 0.0, %v3984
    %v3986 = vpop.f32.mrb[0].mxu0
    %v3987 = vadd.f32 0.0, %v3986
    %3988 = vdwg.mxu0
    %v3989 = vadd.f32 %v3911, %v3985
    %v3990 = vadd.f32 %v3912, %v3987
    %v3991 = vtanh.pop %v3989
    %v3992 = vtanh.pop %v3990
    %v3993 = vmul.f32 %v3991, 0.5
    %v3994 = vmul.f32 %v3992, %v80
    %v3995 = vadd.f32 %v3993, 0.5
    %v3996 = vadd.f32 %v3994, %v85
    %v3997 = vmul.f32 %v3995, %v3908
    %v3998 = vmul.f32 %v3995, %v3996
    %4000 = vrot.lane.b32.xlu0 %v3998, 64
    %v4001 = vpop.permute.xlu0 %4000
    %v4003 = vadd.f32 %v3997, %v4001
    %v4004 = vtanh.pop %v4003
    %v4005 = vmul.f32 %v3996, %v4004
    %v4006 = vld [vmem:[%s1286] sm:$0xff]
    %v4007 = vld [vmem:[%s1286 + $0x8] sm:$0xff]
    %4009 = vrot.lane.b32.xlu0 %v4005, 64
    %v4010 = vpop.permute.xlu0 %4009
    %v4011 = vsel %vm72, %v4010, 0
    %4013 = vmatprep.subr.mxu0 %v103
    %4014 = vmatpush1.msra.mxu0 %v102
    %4015 = vmatprep.subr.mxu0 %v105
    %4016 = vmatpush1.msra.mxu0 %v104
    %4017 = vmatprep.subr.mxu0 %v107
    %4018 = vmatpush1.msra.mxu0 %v106
    %4019 = vmatprep.subr.mxu0 %v109
    %4020 = vmatpush1.msra.mxu0 %v108
    %4021 = vmatprep.subr.mxu0 %v111
    %4022 = vmatpush1.msra.mxu0 %v110
    %4023 = vmatprep.subr.mxu0 %v113
    %4024 = vmatpush1.msra.mxu0 %v112
    %4025 = vmatprep.subr.mxu0 %v115
    %4026 = vmatpush1.msra.mxu0 %v114
    %4027 = vmatprep.subr.mxu0 %v117
    %4028 = vmatpush1.msra.mxu0 %v116
    %4029 = vmatprep.subr.mxu0 0.0
    %4030 = vmatpush1.msra.mxu0 0.0
    %4031 = vmatprep.subr.mxu0 0.0
    %4032 = vmatpush1.msra.mxu0 0.0
    %4033 = vmatprep.subr.mxu0 0.0
    %4034 = vmatpush1.msra.mxu0 0.0
    %4035 = vmatprep.subr.mxu0 0.0
    %4036 = vmatpush1.msra.mxu0 0.0
    %4037 = vmatprep.subr.mxu0 0.0
    %4038 = vmatpush1.msra.mxu0 0.0
    %4039 = vmatprep.subr.mxu0 0.0
    %4040 = vmatpush1.msra.mxu0 0.0
    %4041 = vmatprep.subr.mxu0 0.0
    %4042 = vmatpush1.msra.mxu0 0.0
    %4043 = vmatprep.subr.mxu0 0.0
    %4044 = vmatpush1.msra.mxu0 0.0
    %4045 = vmatprep.subr.mxu0 0.0
    %4046 = vmatpush1.msra.mxu0 0.0
    %4047 = vmatprep.subr.mxu0 0.0
    %4048 = vmatpush1.msra.mxu0 0.0
    %4049 = vmatprep.subr.mxu0 0.0
    %4050 = vmatpush1.msra.mxu0 0.0
    %4051 = vmatprep.subr.mxu0 0.0
    %4052 = vmatpush1.msra.mxu0 0.0
    %4053 = vmatprep.subr.mxu0 0.0
    %4054 = vmatpush1.msra.mxu0 0.0
    %4055 = vmatprep.subr.mxu0 0.0
    %4056 = vmatpush1.msra.mxu0 0.0
    %4057 = vmatprep.subr.mxu0 0.0
    %4058 = vmatpush1.msra.mxu0 0.0
    %4059 = vmatprep.subr.mxu0 0.0
    %4060 = vmatpush1.msra.mxu0 0.0
    %4061 = vmatprep.subr.mxu0 0.0
    %4062 = vmatpush1.msra.mxu0 0.0
    %4063 = vmatprep.subr.mxu0 0.0
    %4064 = vmatpush1.msra.mxu0 0.0
    %4065 = vmatprep.subr.mxu0 0.0
    %4066 = vmatpush1.msra.mxu0 0.0
    %4067 = vmatprep.subr.mxu0 0.0
    %4068 = vmatpush1.msra.mxu0 0.0
    %4069 = vmatprep.subr.mxu0 0.0
    %4070 = vmatpush1.msra.mxu0 0.0
    %4071 = vmatprep.subr.mxu0 0.0
    %4072 = vmatpush1.msra.mxu0 0.0
    %4073 = vmatprep.subr.mxu0 0.0
    %4074 = vmatpush1.msra.mxu0 0.0
    %4075 = vmatprep.subr.mxu0 0.0
    %4076 = vmatpush1.msra.mxu0 0.0
    %4077 = vmatprep.mubr.f32.mxu0 0.0
    %4078 = vmatmul.mubr.f32.gmra.mrb[0].mxu0 %v4011
    %v4079 = vpop.f32.mrb[0].mxu0
    %v4080 = vadd.f32 0.0, %v4079
    %v4081 = vpop.f32.mrb[0].mxu0
    %v4082 = vadd.f32 0.0, %v4081
    %4083 = vdwg.mxu0
    %v4084 = vadd.f32 %v4006, %v4080
    %v4085 = vadd.f32 %v4007, %v4082
    %v4086 = vtanh.pop %v4084
    %v4087 = vtanh.pop %v4085
    %v4088 = vmul.f32 %v4086, 0.5
    %v4089 = vmul.f32 %v4087, %v80
    %v4090 = vadd.f32 %v4088, 0.5
    %v4091 = vadd.f32 %v4089, %v85
    %v4092 = vmul.f32 %v4090, %v4003
    %v4093 = vmul.f32 %v4090, %v4091
    %4095 = vrot.lane.b32.xlu0 %v4093, 64
    %v4096 = vpop.permute.xlu0 %4095
    %v4098 = vadd.f32 %v4092, %v4096
    %v4099 = vtanh.pop %v4098
    %v4100 = vmul.f32 %v4091, %v4099
    %v4101 = vld [vmem:[%s1385] sm:$0xff]
    %v4102 = vld [vmem:[%s1385 + $0x8] sm:$0xff]
    %4104 = vrot.lane.b32.xlu0 %v4100, 64
    %v4105 = vpop.permute.xlu0 %4104
    %v4106 = vsel %vm72, %v4105, 0
    %4108 = vmatprep.subr.mxu0 %v103
    %4109 = vmatpush1.msra.mxu0 %v102
    %4110 = vmatprep.subr.mxu0 %v105
    %4111 = vmatpush1.msra.mxu0 %v104
    %4112 = vmatprep.subr.mxu0 %v107
    %4113 = vmatpush1.msra.mxu0 %v106
    %4114 = vmatprep.subr.mxu0 %v109
    %4115 = vmatpush1.msra.mxu0 %v108
    %4116 = vmatprep.subr.mxu0 %v111
    %4117 = vmatpush1.msra.mxu0 %v110
    %4118 = vmatprep.subr.mxu0 %v113
    %4119 = vmatpush1.msra.mxu0 %v112
    %4120 = vmatprep.subr.mxu0 %v115
    %4121 = vmatpush1.msra.mxu0 %v114
    %4122 = vmatprep.subr.mxu0 %v117
    %4123 = vmatpush1.msra.mxu0 %v116
    %4124 = vmatprep.subr.mxu0 0.0
    %4125 = vmatpush1.msra.mxu0 0.0
    %4126 = vmatprep.subr.mxu0 0.0
    %4127 = vmatpush1.msra.mxu0 0.0
    %4128 = vmatprep.subr.mxu0 0.0
    %4129 = vmatpush1.msra.mxu0 0.0
    %4130 = vmatprep.subr.mxu0 0.0
    %4131 = vmatpush1.msra.mxu0 0.0
    %4132 = vmatprep.subr.mxu0 0.0
    %4133 = vmatpush1.msra.mxu0 0.0
    %4134 = vmatprep.subr.mxu0 0.0
    %4135 = vmatpush1.msra.mxu0 0.0
    %4136 = vmatprep.subr.mxu0 0.0
    %4137 = vmatpush1.msra.mxu0 0.0
    %4138 = vmatprep.subr.mxu0 0.0
    %4139 = vmatpush1.msra.mxu0 0.0
    %4140 = vmatprep.subr.mxu0 0.0
    %4141 = vmatpush1.msra.mxu0 0.0
    %4142 = vmatprep.subr.mxu0 0.0
    %4143 = vmatpush1.msra.mxu0 0.0
    %4144 = vmatprep.subr.mxu0 0.0
    %4145 = vmatpush1.msra.mxu0 0.0
    %4146 = vmatprep.subr.mxu0 0.0
    %4147 = vmatpush1.msra.mxu0 0.0
    %4148 = vmatprep.subr.mxu0 0.0
    %4149 = vmatpush1.msra.mxu0 0.0
    %4150 = vmatprep.subr.mxu0 0.0
    %4151 = vmatpush1.msra.mxu0 0.0
    %4152 = vmatprep.subr.mxu0 0.0
    %4153 = vmatpush1.msra.mxu0 0.0
    %4154 = vmatprep.subr.mxu0 0.0
    %4155 = vmatpush1.msra.mxu0 0.0
    %4156 = vmatprep.subr.mxu0 0.0
    %4157 = vmatpush1.msra.mxu0 0.0
    %4158 = vmatprep.subr.mxu0 0.0
    %4159 = vmatpush1.msra.mxu0 0.0
    %4160 = vmatprep.subr.mxu0 0.0
    %4161 = vmatpush1.msra.mxu0 0.0
    %4162 = vmatprep.subr.mxu0 0.0
    %4163 = vmatpush1.msra.mxu0 0.0
    %4164 = vmatprep.subr.mxu0 0.0
    %4165 = vmatpush1.msra.mxu0 0.0
    %4166 = vmatprep.subr.mxu0 0.0
    %4167 = vmatpush1.msra.mxu0 0.0
    %4168 = vmatprep.subr.mxu0 0.0
    %4169 = vmatpush1.msra.mxu0 0.0
    %4170 = vmatprep.subr.mxu0 0.0
    %4171 = vmatpush1.msra.mxu0 0.0
    %4172 = vmatprep.mubr.f32.mxu0 0.0
    %4173 = vmatmul.mubr.f32.gmra.mrb[0].mxu0 %v4106
    %v4174 = vpop.f32.mrb[0].mxu0
    %v4175 = vadd.f32 0.0, %v4174
    %v4176 = vpop.f32.mrb[0].mxu0
    %v4177 = vadd.f32 0.0, %v4176
    %4178 = vdwg.mxu0
    %v4179 = vadd.f32 %v4101, %v4175
    %v4180 = vadd.f32 %v4102, %v4177
    %v4181 = vtanh.pop %v4179
    %v4182 = vtanh.pop %v4180
    %v4183 = vmul.f32 %v4181, 0.5
    %v4184 = vmul.f32 %v4182, %v80
    %v4185 = vadd.f32 %v4183, 0.5
    %v4186 = vadd.f32 %v4184, %v85
    %v4187 = vmul.f32 %v4185, %v4098
    %v4188 = vmul.f32 %v4185, %v4186
    %4190 = vrot.lane.b32.xlu0 %v4188, 64
    %v4191 = vpop.permute.xlu0 %4190
    %v4193 = vadd.f32 %v4187, %v4191
    %v4194 = vtanh.pop %v4193
    %v4195 = vmul.f32 %v4186, %v4194
    %v4196 = vld [vmem:[%s1484] sm:$0xff]
    %v4197 = vld [vmem:[%s1484 + $0x8] sm:$0xff]
    %4199 = vrot.lane.b32.xlu0 %v4195, 64
    %v4200 = vpop.permute.xlu0 %4199
    %v4201 = vsel %vm72, %v4200, 0
    %4203 = vmatprep.subr.mxu0 %v103
    %4204 = vmatpush1.msra.mxu0 %v102
    %4205 = vmatprep.subr.mxu0 %v105
    %4206 = vmatpush1.msra.mxu0 %v104
    %4207 = vmatprep.subr.mxu0 %v107
    %4208 = vmatpush1.msra.mxu0 %v106
    %4209 = vmatprep.subr.mxu0 %v109
    %4210 = vmatpush1.msra.mxu0 %v108
    %4211 = vmatprep.subr.mxu0 %v111
    %4212 = vmatpush1.msra.mxu0 %v110
    %4213 = vmatprep.subr.mxu0 %v113
    %4214 = vmatpush1.msra.mxu0 %v112
    %4215 = vmatprep.subr.mxu0 %v115
    %4216 = vmatpush1.msra.mxu0 %v114
    %4217 = vmatprep.subr.mxu0 %v117
    %4218 = vmatpush1.msra.mxu0 %v116
    %4219 = vmatprep.subr.mxu0 0.0
    %4220 = vmatpush1.msra.mxu0 0.0
    %4221 = vmatprep.subr.mxu0 0.0
    %4222 = vmatpush1.msra.mxu0 0.0
    %4223 = vmatprep.subr.mxu0 0.0
    %4224 = vmatpush1.msra.mxu0 0.0
    %4225 = vmatprep.subr.mxu0 0.0
    %4226 = vmatpush1.msra.mxu0 0.0
    %4227 = vmatprep.subr.mxu0 0.0
    %4228 = vmatpush1.msra.mxu0 0.0
    %4229 = vmatprep.subr.mxu0 0.0
    %4230 = vmatpush1.msra.mxu0 0.0
    %4231 = vmatprep.subr.mxu0 0.0
    %4232 = vmatpush1.msra.mxu0 0.0
    %4233 = vmatprep.subr.mxu0 0.0
    %4234 = vmatpush1.msra.mxu0 0.0
    %4235 = vmatprep.subr.mxu0 0.0
    %4236 = vmatpush1.msra.mxu0 0.0
    %4237 = vmatprep.subr.mxu0 0.0
    %4238 = vmatpush1.msra.mxu0 0.0
    %4239 = vmatprep.subr.mxu0 0.0
    %4240 = vmatpush1.msra.mxu0 0.0
    %4241 = vmatprep.subr.mxu0 0.0
    %4242 = vmatpush1.msra.mxu0 0.0
    %4243 = vmatprep.subr.mxu0 0.0
    %4244 = vmatpush1.msra.mxu0 0.0
    %4245 = vmatprep.subr.mxu0 0.0
    %4246 = vmatpush1.msra.mxu0 0.0
    %4247 = vmatprep.subr.mxu0 0.0
    %4248 = vmatpush1.msra.mxu0 0.0
    %4249 = vmatprep.subr.mxu0 0.0
    %4250 = vmatpush1.msra.mxu0 0.0
    %4251 = vmatprep.subr.mxu0 0.0
    %4252 = vmatpush1.msra.mxu0 0.0
    %4253 = vmatprep.subr.mxu0 0.0
    %4254 = vmatpush1.msra.mxu0 0.0
    %4255 = vmatprep.subr.mxu0 0.0
    %4256 = vmatpush1.msra.mxu0 0.0
    %4257 = vmatprep.subr.mxu0 0.0
    %4258 = vmatpush1.msra.mxu0 0.0
    %4259 = vmatprep.subr.mxu0 0.0
    %4260 = vmatpush1.msra.mxu0 0.0
    %4261 = vmatprep.subr.mxu0 0.0
    %4262 = vmatpush1.msra.mxu0 0.0
    %4263 = vmatprep.subr.mxu0 0.0
    %4264 = vmatpush1.msra.mxu0 0.0
    %4265 = vmatprep.subr.mxu0 0.0
    %4266 = vmatpush1.msra.mxu0 0.0
    %4267 = vmatprep.mubr.f32.mxu0 0.0
    %4268 = vmatmul.mubr.f32.gmra.mrb[0].mxu0 %v4201
    %v4269 = vpop.f32.mrb[0].mxu0
    %v4270 = vadd.f32 0.0, %v4269
    %v4271 = vpop.f32.mrb[0].mxu0
    %v4272 = vadd.f32 0.0, %v4271
    %4273 = vdwg.mxu0
    %v4274 = vadd.f32 %v4196, %v4270
    %v4275 = vadd.f32 %v4197, %v4272
    %v4276 = vtanh.pop %v4274
    %v4277 = vtanh.pop %v4275
    %v4278 = vmul.f32 %v4276, 0.5
    %v4279 = vmul.f32 %v4277, %v80
    %v4280 = vadd.f32 %v4278, 0.5
    %v4281 = vadd.f32 %v4279, %v85
    %v4282 = vmul.f32 %v4280, %v4193
    %v4283 = vmul.f32 %v4280, %v4281
    %4285 = vrot.lane.b32.xlu0 %v4283, 64
    %v4286 = vpop.permute.xlu0 %4285
    %v4288 = vadd.f32 %v4282, %v4286
    %v4289 = vtanh.pop %v4288
    %v4290 = vmul.f32 %v4281, %v4289
    %v4291 = vld [vmem:[%s1583] sm:$0xff]
    %v4292 = vld [vmem:[%s1583 + $0x8] sm:$0xff]
    %4294 = vrot.lane.b32.xlu0 %v4290, 64
    %v4295 = vpop.permute.xlu0 %4294
    %v4296 = vsel %vm72, %v4295, 0
    %4298 = vmatprep.subr.mxu0 %v103
    %4299 = vmatpush1.msra.mxu0 %v102
    %4300 = vmatprep.subr.mxu0 %v105
    %4301 = vmatpush1.msra.mxu0 %v104
    %4302 = vmatprep.subr.mxu0 %v107
    %4303 = vmatpush1.msra.mxu0 %v106
    %4304 = vmatprep.subr.mxu0 %v109
    %4305 = vmatpush1.msra.mxu0 %v108
    %4306 = vmatprep.subr.mxu0 %v111
    %4307 = vmatpush1.msra.mxu0 %v110
    %4308 = vmatprep.subr.mxu0 %v113
    %4309 = vmatpush1.msra.mxu0 %v112
    %4310 = vmatprep.subr.mxu0 %v115
    %4311 = vmatpush1.msra.mxu0 %v114
    %4312 = vmatprep.subr.mxu0 %v117
    %4313 = vmatpush1.msra.mxu0 %v116
    %4314 = vmatprep.subr.mxu0 0.0
    %4315 = vmatpush1.msra.mxu0 0.0
    %4316 = vmatprep.subr.mxu0 0.0
    %4317 = vmatpush1.msra.mxu0 0.0
    %4318 = vmatprep.subr.mxu0 0.0
    %4319 = vmatpush1.msra.mxu0 0.0
    %4320 = vmatprep.subr.mxu0 0.0
    %4321 = vmatpush1.msra.mxu0 0.0
    %4322 = vmatprep.subr.mxu0 0.0
    %4323 = vmatpush1.msra.mxu0 0.0
    %4324 = vmatprep.subr.mxu0 0.0
    %4325 = vmatpush1.msra.mxu0 0.0
    %4326 = vmatprep.subr.mxu0 0.0
    %4327 = vmatpush1.msra.mxu0 0.0
    %4328 = vmatprep.subr.mxu0 0.0
    %4329 = vmatpush1.msra.mxu0 0.0
    %4330 = vmatprep.subr.mxu0 0.0
    %4331 = vmatpush1.msra.mxu0 0.0
    %4332 = vmatprep.subr.mxu0 0.0
    %4333 = vmatpush1.msra.mxu0 0.0
    %4334 = vmatprep.subr.mxu0 0.0
    %4335 = vmatpush1.msra.mxu0 0.0
    %4336 = vmatprep.subr.mxu0 0.0
    %4337 = vmatpush1.msra.mxu0 0.0
    %4338 = vmatprep.subr.mxu0 0.0
    %4339 = vmatpush1.msra.mxu0 0.0
    %4340 = vmatprep.subr.mxu0 0.0
    %4341 = vmatpush1.msra.mxu0 0.0
    %4342 = vmatprep.subr.mxu0 0.0
    %4343 = vmatpush1.msra.mxu0 0.0
    %4344 = vmatprep.subr.mxu0 0.0
    %4345 = vmatpush1.msra.mxu0 0.0
    %4346 = vmatprep.subr.mxu0 0.0
    %4347 = vmatpush1.msra.mxu0 0.0
    %4348 = vmatprep.subr.mxu0 0.0
    %4349 = vmatpush1.msra.mxu0 0.0
    %4350 = vmatprep.subr.mxu0 0.0
    %4351 = vmatpush1.msra.mxu0 0.0
    %4352 = vmatprep.subr.mxu0 0.0
    %4353 = vmatpush1.msra.mxu0 0.0
    %4354 = vmatprep.subr.mxu0 0.0
    %4355 = vmatpush1.msra.mxu0 0.0
    %4356 = vmatprep.subr.mxu0 0.0
    %4357 = vmatpush1.msra.mxu0 0.0
    %4358 = vmatprep.subr.mxu0 0.0
    %4359 = vmatpush1.msra.mxu0 0.0
    %4360 = vmatprep.subr.mxu0 0.0
    %4361 = vmatpush1.msra.mxu0 0.0
    %4362 = vmatprep.mubr.f32.mxu0 0.0
    %4363 = vmatmul.mubr.f32.gmra.mrb[0].mxu0 %v4296
    %v4364 = vpop.f32.mrb[0].mxu0
    %v4365 = vadd.f32 0.0, %v4364
    %v4366 = vpop.f32.mrb[0].mxu0
    %v4367 = vadd.f32 0.0, %v4366
    %4368 = vdwg.mxu0
    %v4369 = vadd.f32 %v4291, %v4365
    %v4370 = vadd.f32 %v4292, %v4367
    %v4371 = vtanh.pop %v4369
    %v4372 = vtanh.pop %v4370
    %v4373 = vmul.f32 %v4371, 0.5
    %v4374 = vmul.f32 %v4372, %v80
    %v4375 = vadd.f32 %v4373, 0.5
    %v4376 = vadd.f32 %v4374, %v85
    %v4377 = vmul.f32 %v4375, %v4288
    %v4378 = vmul.f32 %v4375, %v4376
    %4380 = vrot.lane.b32.xlu0 %v4378, 64
    %v4381 = vpop.permute.xlu0 %4380
    %v4383 = vadd.f32 %v4377, %v4381
    %v4384 = vtanh.pop %v4383
    %v4385 = vmul.f32 %v4376, %v4384
    %v4386 = vld [vmem:[%s1682] sm:$0xff]
    %v4387 = vld [vmem:[%s1682 + $0x8] sm:$0xff]
    %4389 = vrot.lane.b32.xlu0 %v4385, 64
    %v4390 = vpop.permute.xlu0 %4389
    %v4391 = vsel %vm72, %v4390, 0
    %4393 = vmatprep.subr.mxu0 %v103
    %4394 = vmatpush1.msra.mxu0 %v102
    %4395 = vmatprep.subr.mxu0 %v105
    %4396 = vmatpush1.msra.mxu0 %v104
    %4397 = vmatprep.subr.mxu0 %v107
    %4398 = vmatpush1.msra.mxu0 %v106
    %4399 = vmatprep.subr.mxu0 %v109
    %4400 = vmatpush1.msra.mxu0 %v108
    %4401 = vmatprep.subr.mxu0 %v111
    %4402 = vmatpush1.msra.mxu0 %v110
    %4403 = vmatprep.subr.mxu0 %v113
    %4404 = vmatpush1.msra.mxu0 %v112
    %4405 = vmatprep.subr.mxu0 %v115
    %4406 = vmatpush1.msra.mxu0 %v114
    %4407 = vmatprep.subr.mxu0 %v117
    %4408 = vmatpush1.msra.mxu0 %v116
    %4409 = vmatprep.subr.mxu0 0.0
    %4410 = vmatpush1.msra.mxu0 0.0
    %4411 = vmatprep.subr.mxu0 0.0
    %4412 = vmatpush1.msra.mxu0 0.0
    %4413 = vmatprep.subr.mxu0 0.0
    %4414 = vmatpush1.msra.mxu0 0.0
    %4415 = vmatprep.subr.mxu0 0.0
    %4416 = vmatpush1.msra.mxu0 0.0
    %4417 = vmatprep.subr.mxu0 0.0
    %4418 = vmatpush1.msra.mxu0 0.0
    %4419 = vmatprep.subr.mxu0 0.0
    %4420 = vmatpush1.msra.mxu0 0.0
    %4421 = vmatprep.subr.mxu0 0.0
    %4422 = vmatpush1.msra.mxu0 0.0
    %4423 = vmatprep.subr.mxu0 0.0
    %4424 = vmatpush1.msra.mxu0 0.0
    %4425 = vmatprep.subr.mxu0 0.0
    %4426 = vmatpush1.msra.mxu0 0.0
    %4427 = vmatprep.subr.mxu0 0.0
    %4428 = vmatpush1.msra.mxu0 0.0
    %4429 = vmatprep.subr.mxu0 0.0
    %4430 = vmatpush1.msra.mxu0 0.0
    %4431 = vmatprep.subr.mxu0 0.0
    %4432 = vmatpush1.msra.mxu0 0.0
    %4433 = vmatprep.subr.mxu0 0.0
    %4434 = vmatpush1.msra.mxu0 0.0
    %4435 = vmatprep.subr.mxu0 0.0
    %4436 = vmatpush1.msra.mxu0 0.0
    %4437 = vmatprep.subr.mxu0 0.0
    %4438 = vmatpush1.msra.mxu0 0.0
    %4439 = vmatprep.subr.mxu0 0.0
    %4440 = vmatpush1.msra.mxu0 0.0
    %4441 = vmatprep.subr.mxu0 0.0
    %4442 = vmatpush1.msra.mxu0 0.0
    %4443 = vmatprep.subr.mxu0 0.0
    %4444 = vmatpush1.msra.mxu0 0.0
    %4445 = vmatprep.subr.mxu0 0.0
    %4446 = vmatpush1.msra.mxu0 0.0
    %4447 = vmatprep.subr.mxu0 0.0
    %4448 = vmatpush1.msra.mxu0 0.0
    %4449 = vmatprep.subr.mxu0 0.0
    %4450 = vmatpush1.msra.mxu0 0.0
    %4451 = vmatprep.subr.mxu0 0.0
    %4452 = vmatpush1.msra.mxu0 0.0
    %4453 = vmatprep.subr.mxu0 0.0
    %4454 = vmatpush1.msra.mxu0 0.0
    %4455 = vmatprep.subr.mxu0 0.0
    %4456 = vmatpush1.msra.mxu0 0.0
    %4457 = vmatprep.mubr.f32.mxu0 0.0
    %4458 = vmatmul.mubr.f32.gmra.mrb[0].mxu0 %v4391
    %v4459 = vpop.f32.mrb[0].mxu0
    %v4460 = vadd.f32 0.0, %v4459
    %v4461 = vpop.f32.mrb[0].mxu0
    %v4462 = vadd.f32 0.0, %v4461
    %4463 = vdwg.mxu0
    %v4464 = vadd.f32 %v4386, %v4460
    %v4465 = vadd.f32 %v4387, %v4462
    %v4466 = vtanh.pop %v4464
    %v4467 = vtanh.pop %v4465
    %v4468 = vmul.f32 %v4466, 0.5
    %v4469 = vmul.f32 %v4467, %v80
    %v4470 = vadd.f32 %v4468, 0.5
    %v4471 = vadd.f32 %v4469, %v85
    %v4472 = vmul.f32 %v4470, %v4383
    %v4473 = vmul.f32 %v4470, %v4471
    %4475 = vrot.lane.b32.xlu0 %v4473, 64
    %v4476 = vpop.permute.xlu0 %4475
    %v4478 = vadd.f32 %v4472, %v4476
    %v4479 = vtanh.pop %v4478
    %v4480 = vmul.f32 %v4471, %v4479
    %v4481 = vld [vmem:[%s1781] sm:$0xff]
    %v4482 = vld [vmem:[%s1781 + $0x8] sm:$0xff]
    %4484 = vrot.lane.b32.xlu0 %v4480, 64
    %v4485 = vpop.permute.xlu0 %4484
    %v4486 = vsel %vm72, %v4485, 0
    %4488 = vmatprep.subr.mxu0 %v103
    %4489 = vmatpush1.msra.mxu0 %v102
    %4490 = vmatprep.subr.mxu0 %v105
    %4491 = vmatpush1.msra.mxu0 %v104
    %4492 = vmatprep.subr.mxu0 %v107
    %4493 = vmatpush1.msra.mxu0 %v106
    %4494 = vmatprep.subr.mxu0 %v109
    %4495 = vmatpush1.msra.mxu0 %v108
    %4496 = vmatprep.subr.mxu0 %v111
    %4497 = vmatpush1.msra.mxu0 %v110
    %4498 = vmatprep.subr.mxu0 %v113
    %4499 = vmatpush1.msra.mxu0 %v112
    %4500 = vmatprep.subr.mxu0 %v115
    %4501 = vmatpush1.msra.mxu0 %v114
    %4502 = vmatprep.subr.mxu0 %v117
    %4503 = vmatpush1.msra.mxu0 %v116
    %4504 = vmatprep.subr.mxu0 0.0
    %4505 = vmatpush1.msra.mxu0 0.0
    %4506 = vmatprep.subr.mxu0 0.0
    %4507 = vmatpush1.msra.mxu0 0.0
    %4508 = vmatprep.subr.mxu0 0.0
    %4509 = vmatpush1.msra.mxu0 0.0
    %4510 = vmatprep.subr.mxu0 0.0
    %4511 = vmatpush1.msra.mxu0 0.0
    %4512 = vmatprep.subr.mxu0 0.0
    %4513 = vmatpush1.msra.mxu0 0.0
    %4514 = vmatprep.subr.mxu0 0.0
    %4515 = vmatpush1.msra.mxu0 0.0
    %4516 = vmatprep.subr.mxu0 0.0
    %4517 = vmatpush1.msra.mxu0 0.0
    %4518 = vmatprep.subr.mxu0 0.0
    %4519 = vmatpush1.msra.mxu0 0.0
    %4520 = vmatprep.subr.mxu0 0.0
    %4521 = vmatpush1.msra.mxu0 0.0
    %4522 = vmatprep.subr.mxu0 0.0
    %4523 = vmatpush1.msra.mxu0 0.0
    %4524 = vmatprep.subr.mxu0 0.0
    %4525 = vmatpush1.msra.mxu0 0.0
    %4526 = vmatprep.subr.mxu0 0.0
    %4527 = vmatpush1.msra.mxu0 0.0
    %4528 = vmatprep.subr.mxu0 0.0
    %4529 = vmatpush1.msra.mxu0 0.0
    %4530 = vmatprep.subr.mxu0 0.0
    %4531 = vmatpush1.msra.mxu0 0.0
    %4532 = vmatprep.subr.mxu0 0.0
    %4533 = vmatpush1.msra.mxu0 0.0
    %4534 = vmatprep.subr.mxu0 0.0
    %4535 = vmatpush1.msra.mxu0 0.0
    %4536 = vmatprep.subr.mxu0 0.0
    %4537 = vmatpush1.msra.mxu0 0.0
    %4538 = vmatprep.subr.mxu0 0.0
    %4539 = vmatpush1.msra.mxu0 0.0
    %4540 = vmatprep.subr.mxu0 0.0
    %4541 = vmatpush1.msra.mxu0 0.0
    %4542 = vmatprep.subr.mxu0 0.0
    %4543 = vmatpush1.msra.mxu0 0.0
    %4544 = vmatprep.subr.mxu0 0.0
    %4545 = vmatpush1.msra.mxu0 0.0
    %4546 = vmatprep.subr.mxu0 0.0
    %4547 = vmatpush1.msra.mxu0 0.0
    %4548 = vmatprep.subr.mxu0 0.0
    %4549 = vmatpush1.msra.mxu0 0.0
    %4550 = vmatprep.subr.mxu0 0.0
    %4551 = vmatpush1.msra.mxu0 0.0
    %4552 = vmatprep.mubr.f32.mxu0 0.0
    %4553 = vmatmul.mubr.f32.gmra.mrb[0].mxu0 %v4486
    %v4554 = vpop.f32.mrb[0].mxu0
    %v4555 = vadd.f32 0.0, %v4554
    %v4556 = vpop.f32.mrb[0].mxu0
    %v4557 = vadd.f32 0.0, %v4556
    %4558 = vdwg.mxu0
    %v4559 = vadd.f32 %v4481, %v4555
    %v4560 = vadd.f32 %v4482, %v4557
    %v4561 = vtanh.pop %v4559
    %v4562 = vtanh.pop %v4560
    %v4563 = vmul.f32 %v4561, 0.5
    %v4564 = vmul.f32 %v4562, %v80
    %v4565 = vadd.f32 %v4563, 0.5
    %v4566 = vadd.f32 %v4564, %v85
    %v4567 = vmul.f32 %v4565, %v4478
    %v4568 = vmul.f32 %v4565, %v4566
    %4570 = vrot.lane.b32.xlu0 %v4568, 64
    %v4571 = vpop.permute.xlu0 %4570
    %v4573 = vadd.f32 %v4567, %v4571
    %v4574 = vtanh.pop %v4573
    %v4575 = vmul.f32 %v4566, %v4574
    %v4576 = vld [vmem:[%s1880] sm:$0xff]
    %v4577 = vld [vmem:[%s1880 + $0x8] sm:$0xff]
    %4579 = vrot.lane.b32.xlu0 %v4575, 64
    %v4580 = vpop.permute.xlu0 %4579
    %v4581 = vsel %vm72, %v4580, 0
    %4583 = vmatprep.subr.mxu0 %v103
    %4584 = vmatpush1.msra.mxu0 %v102
    %4585 = vmatprep.subr.mxu0 %v105
    %4586 = vmatpush1.msra.mxu0 %v104
    %4587 = vmatprep.subr.mxu0 %v107
    %4588 = vmatpush1.msra.mxu0 %v106
    %4589 = vmatprep.subr.mxu0 %v109
    %4590 = vmatpush1.msra.mxu0 %v108
    %4591 = vmatprep.subr.mxu0 %v111
    %4592 = vmatpush1.msra.mxu0 %v110
    %4593 = vmatprep.subr.mxu0 %v113
    %4594 = vmatpush1.msra.mxu0 %v112
    %4595 = vmatprep.subr.mxu0 %v115
    %4596 = vmatpush1.msra.mxu0 %v114
    %4597 = vmatprep.subr.mxu0 %v117
    %4598 = vmatpush1.msra.mxu0 %v116
    %4599 = vmatprep.subr.mxu0 0.0
    %4600 = vmatpush1.msra.mxu0 0.0
    %4601 = vmatprep.subr.mxu0 0.0
    %4602 = vmatpush1.msra.mxu0 0.0
    %4603 = vmatprep.subr.mxu0 0.0
    %4604 = vmatpush1.msra.mxu0 0.0
    %4605 = vmatprep.subr.mxu0 0.0
    %4606 = vmatpush1.msra.mxu0 0.0
    %4607 = vmatprep.subr.mxu0 0.0
    %4608 = vmatpush1.msra.mxu0 0.0
    %4609 = vmatprep.subr.mxu0 0.0
    %4610 = vmatpush1.msra.mxu0 0.0
    %4611 = vmatprep.subr.mxu0 0.0
    %4612 = vmatpush1.msra.mxu0 0.0
    %4613 = vmatprep.subr.mxu0 0.0
    %4614 = vmatpush1.msra.mxu0 0.0
    %4615 = vmatprep.subr.mxu0 0.0
    %4616 = vmatpush1.msra.mxu0 0.0
    %4617 = vmatprep.subr.mxu0 0.0
    %4618 = vmatpush1.msra.mxu0 0.0
    %4619 = vmatprep.subr.mxu0 0.0
    %4620 = vmatpush1.msra.mxu0 0.0
    %4621 = vmatprep.subr.mxu0 0.0
    %4622 = vmatpush1.msra.mxu0 0.0
    %4623 = vmatprep.subr.mxu0 0.0
    %4624 = vmatpush1.msra.mxu0 0.0
    %4625 = vmatprep.subr.mxu0 0.0
    %4626 = vmatpush1.msra.mxu0 0.0
    %4627 = vmatprep.subr.mxu0 0.0
    %4628 = vmatpush1.msra.mxu0 0.0
    %4629 = vmatprep.subr.mxu0 0.0
    %4630 = vmatpush1.msra.mxu0 0.0
    %4631 = vmatprep.subr.mxu0 0.0
    %4632 = vmatpush1.msra.mxu0 0.0
    %4633 = vmatprep.subr.mxu0 0.0
    %4634 = vmatpush1.msra.mxu0 0.0
    %4635 = vmatprep.subr.mxu0 0.0
    %4636 = vmatpush1.msra.mxu0 0.0
    %4637 = vmatprep.subr.mxu0 0.0
    %4638 = vmatpush1.msra.mxu0 0.0
    %4639 = vmatprep.subr.mxu0 0.0
    %4640 = vmatpush1.msra.mxu0 0.0
    %4641 = vmatprep.subr.mxu0 0.0
    %4642 = vmatpush1.msra.mxu0 0.0
    %4643 = vmatprep.subr.mxu0 0.0
    %4644 = vmatpush1.msra.mxu0 0.0
    %4645 = vmatprep.subr.mxu0 0.0
    %4646 = vmatpush1.msra.mxu0 0.0
    %4647 = vmatprep.mubr.f32.mxu0 0.0
    %4648 = vmatmul.mubr.f32.gmra.mrb[0].mxu0 %v4581
    %v4649 = vpop.f32.mrb[0].mxu0
    %v4650 = vadd.f32 0.0, %v4649
    %v4651 = vpop.f32.mrb[0].mxu0
    %v4652 = vadd.f32 0.0, %v4651
    %4653 = vdwg.mxu0
    %v4654 = vadd.f32 %v4576, %v4650
    %v4655 = vadd.f32 %v4577, %v4652
    %v4656 = vtanh.pop %v4654
    %v4657 = vtanh.pop %v4655
    %v4658 = vmul.f32 %v4656, 0.5
    %v4659 = vmul.f32 %v4657, %v80
    %v4660 = vadd.f32 %v4658, 0.5
    %v4661 = vadd.f32 %v4659, %v85
    %v4662 = vmul.f32 %v4660, %v4573
    %v4663 = vmul.f32 %v4660, %v4661
    %4665 = vrot.lane.b32.xlu0 %v4663, 64
    %v4666 = vpop.permute.xlu0 %4665
    %v4668 = vadd.f32 %v4662, %v4666
    %v4669 = vtanh.pop %v4668
    %v4670 = vmul.f32 %v4661, %v4669
    %v4671 = vld [vmem:[%s1979] sm:$0xff]
    %v4672 = vld [vmem:[%s1979 + $0x8] sm:$0xff]
    %4674 = vrot.lane.b32.xlu0 %v4670, 64
    %v4675 = vpop.permute.xlu0 %4674
    %v4676 = vsel %vm72, %v4675, 0
    %4678 = vmatprep.subr.mxu0 %v103
    %4679 = vmatpush1.msra.mxu0 %v102
    %4680 = vmatprep.subr.mxu0 %v105
    %4681 = vmatpush1.msra.mxu0 %v104
    %4682 = vmatprep.subr.mxu0 %v107
    %4683 = vmatpush1.msra.mxu0 %v106
    %4684 = vmatprep.subr.mxu0 %v109
    %4685 = vmatpush1.msra.mxu0 %v108
    %4686 = vmatprep.subr.mxu0 %v111
    %4687 = vmatpush1.msra.mxu0 %v110
    %4688 = vmatprep.subr.mxu0 %v113
    %4689 = vmatpush1.msra.mxu0 %v112
    %4690 = vmatprep.subr.mxu0 %v115
    %4691 = vmatpush1.msra.mxu0 %v114
    %4692 = vmatprep.subr.mxu0 %v117
    %4693 = vmatpush1.msra.mxu0 %v116
    %4694 = vmatprep.subr.mxu0 0.0
    %4695 = vmatpush1.msra.mxu0 0.0
    %4696 = vmatprep.subr.mxu0 0.0
    %4697 = vmatpush1.msra.mxu0 0.0
    %4698 = vmatprep.subr.mxu0 0.0
    %4699 = vmatpush1.msra.mxu0 0.0
    %4700 = vmatprep.subr.mxu0 0.0
    %4701 = vmatpush1.msra.mxu0 0.0
    %4702 = vmatprep.subr.mxu0 0.0
    %4703 = vmatpush1.msra.mxu0 0.0
    %4704 = vmatprep.subr.mxu0 0.0
    %4705 = vmatpush1.msra.mxu0 0.0
    %4706 = vmatprep.subr.mxu0 0.0
    %4707 = vmatpush1.msra.mxu0 0.0
    %4708 = vmatprep.subr.mxu0 0.0
    %4709 = vmatpush1.msra.mxu0 0.0
    %4710 = vmatprep.subr.mxu0 0.0
    %4711 = vmatpush1.msra.mxu0 0.0
    %4712 = vmatprep.subr.mxu0 0.0
    %4713 = vmatpush1.msra.mxu0 0.0
    %4714 = vmatprep.subr.mxu0 0.0
    %4715 = vmatpush1.msra.mxu0 0.0
    %4716 = vmatprep.subr.mxu0 0.0
    %4717 = vmatpush1.msra.mxu0 0.0
    %4718 = vmatprep.subr.mxu0 0.0
    %4719 = vmatpush1.msra.mxu0 0.0
    %4720 = vmatprep.subr.mxu0 0.0
    %4721 = vmatpush1.msra.mxu0 0.0
    %4722 = vmatprep.subr.mxu0 0.0
    %4723 = vmatpush1.msra.mxu0 0.0
    %4724 = vmatprep.subr.mxu0 0.0
    %4725 = vmatpush1.msra.mxu0 0.0
    %4726 = vmatprep.subr.mxu0 0.0
    %4727 = vmatpush1.msra.mxu0 0.0
    %4728 = vmatprep.subr.mxu0 0.0
    %4729 = vmatpush1.msra.mxu0 0.0
    %4730 = vmatprep.subr.mxu0 0.0
    %4731 = vmatpush1.msra.mxu0 0.0
    %4732 = vmatprep.subr.mxu0 0.0
    %4733 = vmatpush1.msra.mxu0 0.0
    %4734 = vmatprep.subr.mxu0 0.0
    %4735 = vmatpush1.msra.mxu0 0.0
    %4736 = vmatprep.subr.mxu0 0.0
    %4737 = vmatpush1.msra.mxu0 0.0
    %4738 = vmatprep.subr.mxu0 0.0
    %4739 = vmatpush1.msra.mxu0 0.0
    %4740 = vmatprep.subr.mxu0 0.0
    %4741 = vmatpush1.msra.mxu0 0.0
    %4742 = vmatprep.mubr.f32.mxu0 0.0
    %4743 = vmatmul.mubr.f32.gmra.mrb[0].mxu0 %v4676
    %v4744 = vpop.f32.mrb[0].mxu0
    %v4745 = vadd.f32 0.0, %v4744
    %v4746 = vpop.f32.mrb[0].mxu0
    %v4747 = vadd.f32 0.0, %v4746
    %4748 = vdwg.mxu0
    %v4749 = vadd.f32 %v4671, %v4745
    %v4750 = vadd.f32 %v4672, %v4747
    %v4751 = vtanh.pop %v4749
    %v4752 = vtanh.pop %v4750
    %v4753 = vmul.f32 %v4751, 0.5
    %v4754 = vmul.f32 %v4752, %v80
    %v4755 = vadd.f32 %v4753, 0.5
    %v4756 = vadd.f32 %v4754, %v85
    %v4757 = vmul.f32 %v4755, %v4668
    %v4758 = vmul.f32 %v4755, %v4756
    %4760 = vrot.lane.b32.xlu0 %v4758, 64
    %v4761 = vpop.permute.xlu0 %4760
    %v4763 = vadd.f32 %v4757, %v4761
    %v4764 = vtanh.pop %v4763
    %v4765 = vmul.f32 %v4756, %v4764
    %v4766 = vld [vmem:[%s2078] sm:$0xff]
    %v4767 = vld [vmem:[%s2078 + $0x8] sm:$0xff]
    %4769 = vrot.lane.b32.xlu0 %v4765, 64
    %v4770 = vpop.permute.xlu0 %4769
    %v4771 = vsel %vm72, %v4770, 0
    %4773 = vmatprep.subr.mxu0 %v103
    %4774 = vmatpush1.msra.mxu0 %v102
    %4775 = vmatprep.subr.mxu0 %v105
    %4776 = vmatpush1.msra.mxu0 %v104
    %4777 = vmatprep.subr.mxu0 %v107
    %4778 = vmatpush1.msra.mxu0 %v106
    %4779 = vmatprep.subr.mxu0 %v109
    %4780 = vmatpush1.msra.mxu0 %v108
    %4781 = vmatprep.subr.mxu0 %v111
    %4782 = vmatpush1.msra.mxu0 %v110
    %4783 = vmatprep.subr.mxu0 %v113
    %4784 = vmatpush1.msra.mxu0 %v112
    %4785 = vmatprep.subr.mxu0 %v115
    %4786 = vmatpush1.msra.mxu0 %v114
    %4787 = vmatprep.subr.mxu0 %v117
    %4788 = vmatpush1.msra.mxu0 %v116
    %4789 = vmatprep.subr.mxu0 0.0
    %4790 = vmatpush1.msra.mxu0 0.0
    %4791 = vmatprep.subr.mxu0 0.0
    %4792 = vmatpush1.msra.mxu0 0.0
    %4793 = vmatprep.subr.mxu0 0.0
    %4794 = vmatpush1.msra.mxu0 0.0
    %4795 = vmatprep.subr.mxu0 0.0
    %4796 = vmatpush1.msra.mxu0 0.0
    %4797 = vmatprep.subr.mxu0 0.0
    %4798 = vmatpush1.msra.mxu0 0.0
    %4799 = vmatprep.subr.mxu0 0.0
    %4800 = vmatpush1.msra.mxu0 0.0
    %4801 = vmatprep.subr.mxu0 0.0
    %4802 = vmatpush1.msra.mxu0 0.0
    %4803 = vmatprep.subr.mxu0 0.0
    %4804 = vmatpush1.msra.mxu0 0.0
    %4805 = vmatprep.subr.mxu0 0.0
    %4806 = vmatpush1.msra.mxu0 0.0
    %4807 = vmatprep.subr.mxu0 0.0
    %4808 = vmatpush1.msra.mxu0 0.0
    %4809 = vmatprep.subr.mxu0 0.0
    %4810 = vmatpush1.msra.mxu0 0.0
    %4811 = vmatprep.subr.mxu0 0.0
    %4812 = vmatpush1.msra.mxu0 0.0
    %4813 = vmatprep.subr.mxu0 0.0
    %4814 = vmatpush1.msra.mxu0 0.0
    %4815 = vmatprep.subr.mxu0 0.0
    %4816 = vmatpush1.msra.mxu0 0.0
    %4817 = vmatprep.subr.mxu0 0.0
    %4818 = vmatpush1.msra.mxu0 0.0
    %4819 = vmatprep.subr.mxu0 0.0
    %4820 = vmatpush1.msra.mxu0 0.0
    %4821 = vmatprep.subr.mxu0 0.0
    %4822 = vmatpush1.msra.mxu0 0.0
    %4823 = vmatprep.subr.mxu0 0.0
    %4824 = vmatpush1.msra.mxu0 0.0
    %4825 = vmatprep.subr.mxu0 0.0
    %4826 = vmatpush1.msra.mxu0 0.0
    %4827 = vmatprep.subr.mxu0 0.0
    %4828 = vmatpush1.msra.mxu0 0.0
    %4829 = vmatprep.subr.mxu0 0.0
    %4830 = vmatpush1.msra.mxu0 0.0
    %4831 = vmatprep.subr.mxu0 0.0
    %4832 = vmatpush1.msra.mxu0 0.0
    %4833 = vmatprep.subr.mxu0 0.0
    %4834 = vmatpush1.msra.mxu0 0.0
    %4835 = vmatprep.subr.mxu0 0.0
    %4836 = vmatpush1.msra.mxu0 0.0
    %4837 = vmatprep.mubr.f32.mxu0 0.0
    %4838 = vmatmul.mubr.f32.gmra.mrb[0].mxu0 %v4771
    %v4839 = vpop.f32.mrb[0].mxu0
    %v4840 = vadd.f32 0.0, %v4839
    %v4841 = vpop.f32.mrb[0].mxu0
    %v4842 = vadd.f32 0.0, %v4841
    %4843 = vdwg.mxu0
    %v4844 = vadd.f32 %v4766, %v4840
    %v4845 = vadd.f32 %v4767, %v4842
    %v4846 = vtanh.pop %v4844
    %v4847 = vtanh.pop %v4845
    %v4848 = vmul.f32 %v4846, 0.5
    %v4849 = vmul.f32 %v4847, %v80
    %v4850 = vadd.f32 %v4848, 0.5
    %v4851 = vadd.f32 %v4849, %v85
    %v4852 = vmul.f32 %v4850, %v4763
    %v4853 = vmul.f32 %v4850, %v4851
    %4855 = vrot.lane.b32.xlu0 %v4853, 64
    %v4856 = vpop.permute.xlu0 %4855
    %v4858 = vadd.f32 %v4852, %v4856
    %v4859 = vtanh.pop %v4858
    %v4860 = vmul.f32 %v4851, %v4859
    %v4861 = vld [vmem:[%s2177] sm:$0xff]
    %v4862 = vld [vmem:[%s2177 + $0x8] sm:$0xff]
    %4864 = vrot.lane.b32.xlu0 %v4860, 64
    %v4865 = vpop.permute.xlu0 %4864
    %v4866 = vsel %vm72, %v4865, 0
    %4868 = vmatprep.subr.mxu0 %v103
    %4869 = vmatpush1.msra.mxu0 %v102
    %4870 = vmatprep.subr.mxu0 %v105
    %4871 = vmatpush1.msra.mxu0 %v104
    %4872 = vmatprep.subr.mxu0 %v107
    %4873 = vmatpush1.msra.mxu0 %v106
    %4874 = vmatprep.subr.mxu0 %v109
    %4875 = vmatpush1.msra.mxu0 %v108
    %4876 = vmatprep.subr.mxu0 %v111
    %4877 = vmatpush1.msra.mxu0 %v110
    %4878 = vmatprep.subr.mxu0 %v113
    %4879 = vmatpush1.msra.mxu0 %v112
    %4880 = vmatprep.subr.mxu0 %v115
    %4881 = vmatpush1.msra.mxu0 %v114
    %4882 = vmatprep.subr.mxu0 %v117
    %4883 = vmatpush1.msra.mxu0 %v116
    %4884 = vmatprep.subr.mxu0 0.0
    %4885 = vmatpush1.msra.mxu0 0.0
    %4886 = vmatprep.subr.mxu0 0.0
    %4887 = vmatpush1.msra.mxu0 0.0
    %4888 = vmatprep.subr.mxu0 0.0
    %4889 = vmatpush1.msra.mxu0 0.0
    %4890 = vmatprep.subr.mxu0 0.0
    %4891 = vmatpush1.msra.mxu0 0.0
    %4892 = vmatprep.subr.mxu0 0.0
    %4893 = vmatpush1.msra.mxu0 0.0
    %4894 = vmatprep.subr.mxu0 0.0
    %4895 = vmatpush1.msra.mxu0 0.0
    %4896 = vmatprep.subr.mxu0 0.0
    %4897 = vmatpush1.msra.mxu0 0.0
    %4898 = vmatprep.subr.mxu0 0.0
    %4899 = vmatpush1.msra.mxu0 0.0
    %4900 = vmatprep.subr.mxu0 0.0
    %4901 = vmatpush1.msra.mxu0 0.0
    %4902 = vmatprep.subr.mxu0 0.0
    %4903 = vmatpush1.msra.mxu0 0.0
    %4904 = vmatprep.subr.mxu0 0.0
    %4905 = vmatpush1.msra.mxu0 0.0
    %4906 = vmatprep.subr.mxu0 0.0
    %4907 = vmatpush1.msra.mxu0 0.0
    %4908 = vmatprep.subr.mxu0 0.0
    %4909 = vmatpush1.msra.mxu0 0.0
    %4910 = vmatprep.subr.mxu0 0.0
    %4911 = vmatpush1.msra.mxu0 0.0
    %4912 = vmatprep.subr.mxu0 0.0
    %4913 = vmatpush1.msra.mxu0 0.0
    %4914 = vmatprep.subr.mxu0 0.0
    %4915 = vmatpush1.msra.mxu0 0.0
    %4916 = vmatprep.subr.mxu0 0.0
    %4917 = vmatpush1.msra.mxu0 0.0
    %4918 = vmatprep.subr.mxu0 0.0
    %4919 = vmatpush1.msra.mxu0 0.0
    %4920 = vmatprep.subr.mxu0 0.0
    %4921 = vmatpush1.msra.mxu0 0.0
    %4922 = vmatprep.subr.mxu0 0.0
    %4923 = vmatpush1.msra.mxu0 0.0
    %4924 = vmatprep.subr.mxu0 0.0
    %4925 = vmatpush1.msra.mxu0 0.0
    %4926 = vmatprep.subr.mxu0 0.0
    %4927 = vmatpush1.msra.mxu0 0.0
    %4928 = vmatprep.subr.mxu0 0.0
    %4929 = vmatpush1.msra.mxu0 0.0
    %4930 = vmatprep.subr.mxu0 0.0
    %4931 = vmatpush1.msra.mxu0 0.0
    %4932 = vmatprep.mubr.f32.mxu0 0.0
    %4933 = vmatmul.mubr.f32.gmra.mrb[0].mxu0 %v4866
    %v4934 = vpop.f32.mrb[0].mxu0
    %v4935 = vadd.f32 0.0, %v4934
    %v4936 = vpop.f32.mrb[0].mxu0
    %v4937 = vadd.f32 0.0, %v4936
    %4938 = vdwg.mxu0
    %v4939 = vadd.f32 %v4861, %v4935
    %v4940 = vadd.f32 %v4862, %v4937
    %v4941 = vtanh.pop %v4939
    %v4942 = vtanh.pop %v4940
    %v4943 = vmul.f32 %v4941, 0.5
    %v4944 = vmul.f32 %v4942, %v80
    %v4945 = vadd.f32 %v4943, 0.5
    %v4946 = vadd.f32 %v4944, %v85
    %v4947 = vmul.f32 %v4945, %v4858
    %v4948 = vmul.f32 %v4945, %v4946
    %4950 = vrot.lane.b32.xlu0 %v4948, 64
    %v4951 = vpop.permute.xlu0 %4950
    %v4953 = vadd.f32 %v4947, %v4951
    %v4954 = vtanh.pop %v4953
    %v4955 = vmul.f32 %v4946, %v4954
    %v4956 = vld [vmem:[%s2276] sm:$0xff]
    %v4957 = vld [vmem:[%s2276 + $0x8] sm:$0xff]
    %4959 = vrot.lane.b32.xlu0 %v4955, 64
    %v4960 = vpop.permute.xlu0 %4959
    %v4961 = vsel %vm72, %v4960, 0
    %4963 = vmatprep.subr.mxu0 %v103
    %4964 = vmatpush1.msra.mxu0 %v102
    %4965 = vmatprep.subr.mxu0 %v105
    %4966 = vmatpush1.msra.mxu0 %v104
    %4967 = vmatprep.subr.mxu0 %v107
    %4968 = vmatpush1.msra.mxu0 %v106
    %4969 = vmatprep.subr.mxu0 %v109
    %4970 = vmatpush1.msra.mxu0 %v108
    %4971 = vmatprep.subr.mxu0 %v111
    %4972 = vmatpush1.msra.mxu0 %v110
    %4973 = vmatprep.subr.mxu0 %v113
    %4974 = vmatpush1.msra.mxu0 %v112
    %4975 = vmatprep.subr.mxu0 %v115
    %4976 = vmatpush1.msra.mxu0 %v114
    %4977 = vmatprep.subr.mxu0 %v117
    %4978 = vmatpush1.msra.mxu0 %v116
    %4979 = vmatprep.subr.mxu0 0.0
    %4980 = vmatpush1.msra.mxu0 0.0
    %4981 = vmatprep.subr.mxu0 0.0
    %4982 = vmatpush1.msra.mxu0 0.0
    %4983 = vmatprep.subr.mxu0 0.0
    %4984 = vmatpush1.msra.mxu0 0.0
    %4985 = vmatprep.subr.mxu0 0.0
    %4986 = vmatpush1.msra.mxu0 0.0
    %4987 = vmatprep.subr.mxu0 0.0
    %4988 = vmatpush1.msra.mxu0 0.0
    %4989 = vmatprep.subr.mxu0 0.0
    %4990 = vmatpush1.msra.mxu0 0.0
    %4991 = vmatprep.subr.mxu0 0.0
    %4992 = vmatpush1.msra.mxu0 0.0
    %4993 = vmatprep.subr.mxu0 0.0
    %4994 = vmatpush1.msra.mxu0 0.0
    %4995 = vmatprep.subr.mxu0 0.0
    %4996 = vmatpush1.msra.mxu0 0.0
    %4997 = vmatprep.subr.mxu0 0.0
    %4998 = vmatpush1.msra.mxu0 0.0
    %4999 = vmatprep.subr.mxu0 0.0
    %5000 = vmatpush1.msra.mxu0 0.0
    %5001 = vmatprep.subr.mxu0 0.0
    %5002 = vmatpush1.msra.mxu0 0.0
    %5003 = vmatprep.subr.mxu0 0.0
    %5004 = vmatpush1.msra.mxu0 0.0
    %5005 = vmatprep.subr.mxu0 0.0
    %5006 = vmatpush1.msra.mxu0 0.0
    %5007 = vmatprep.subr.mxu0 0.0
    %5008 = vmatpush1.msra.mxu0 0.0
    %5009 = vmatprep.subr.mxu0 0.0
    %5010 = vmatpush1.msra.mxu0 0.0
    %5011 = vmatprep.subr.mxu0 0.0
    %5012 = vmatpush1.msra.mxu0 0.0
    %5013 = vmatprep.subr.mxu0 0.0
    %5014 = vmatpush1.msra.mxu0 0.0
    %5015 = vmatprep.subr.mxu0 0.0
    %5016 = vmatpush1.msra.mxu0 0.0
    %5017 = vmatprep.subr.mxu0 0.0
    %5018 = vmatpush1.msra.mxu0 0.0
    %5019 = vmatprep.subr.mxu0 0.0
    %5020 = vmatpush1.msra.mxu0 0.0
    %5021 = vmatprep.subr.mxu0 0.0
    %5022 = vmatpush1.msra.mxu0 0.0
    %5023 = vmatprep.subr.mxu0 0.0
    %5024 = vmatpush1.msra.mxu0 0.0
    %5025 = vmatprep.subr.mxu0 0.0
    %5026 = vmatpush1.msra.mxu0 0.0
    %5027 = vmatprep.mubr.f32.mxu0 0.0
    %5028 = vmatmul.mubr.f32.gmra.mrb[0].mxu0 %v4961
    %v5029 = vpop.f32.mrb[0].mxu0
    %v5030 = vadd.f32 0.0, %v5029
    %v5031 = vpop.f32.mrb[0].mxu0
    %v5032 = vadd.f32 0.0, %v5031
    %5033 = vdwg.mxu0
    %v5034 = vadd.f32 %v4956, %v5030
    %v5035 = vadd.f32 %v4957, %v5032
    %v5036 = vtanh.pop %v5034
    %v5037 = vtanh.pop %v5035
    %v5038 = vmul.f32 %v5036, 0.5
    %v5039 = vmul.f32 %v5037, %v80
    %v5040 = vadd.f32 %v5038, 0.5
    %v5041 = vadd.f32 %v5039, %v85
    %v5042 = vmul.f32 %v5040, %v4953
    %v5043 = vmul.f32 %v5040, %v5041
    %5045 = vrot.lane.b32.xlu0 %v5043, 64
    %v5046 = vpop.permute.xlu0 %5045
    %v5048 = vadd.f32 %v5042, %v5046
    %v5049 = vtanh.pop %v5048
    %v5050 = vmul.f32 %v5041, %v5049
    %v5051 = vld [vmem:[%s2375] sm:$0xff]
    %v5052 = vld [vmem:[%s2375 + $0x8] sm:$0xff]
    %5054 = vrot.lane.b32.xlu0 %v5050, 64
    %v5055 = vpop.permute.xlu0 %5054
    %v5056 = vsel %vm72, %v5055, 0
    %5058 = vmatprep.subr.mxu0 %v103
    %5059 = vmatpush1.msra.mxu0 %v102
    %5060 = vmatprep.subr.mxu0 %v105
    %5061 = vmatpush1.msra.mxu0 %v104
    %5062 = vmatprep.subr.mxu0 %v107
    %5063 = vmatpush1.msra.mxu0 %v106
    %5064 = vmatprep.subr.mxu0 %v109
    %5065 = vmatpush1.msra.mxu0 %v108
    %5066 = vmatprep.subr.mxu0 %v111
    %5067 = vmatpush1.msra.mxu0 %v110
    %5068 = vmatprep.subr.mxu0 %v113
    %5069 = vmatpush1.msra.mxu0 %v112
    %5070 = vmatprep.subr.mxu0 %v115
    %5071 = vmatpush1.msra.mxu0 %v114
    %5072 = vmatprep.subr.mxu0 %v117
    %5073 = vmatpush1.msra.mxu0 %v116
    %5074 = vmatprep.subr.mxu0 0.0
    %5075 = vmatpush1.msra.mxu0 0.0
    %5076 = vmatprep.subr.mxu0 0.0
    %5077 = vmatpush1.msra.mxu0 0.0
    %5078 = vmatprep.subr.mxu0 0.0
    %5079 = vmatpush1.msra.mxu0 0.0
    %5080 = vmatprep.subr.mxu0 0.0
    %5081 = vmatpush1.msra.mxu0 0.0
    %5082 = vmatprep.subr.mxu0 0.0
    %5083 = vmatpush1.msra.mxu0 0.0
    %5084 = vmatprep.subr.mxu0 0.0
    %5085 = vmatpush1.msra.mxu0 0.0
    %5086 = vmatprep.subr.mxu0 0.0
    %5087 = vmatpush1.msra.mxu0 0.0
    %5088 = vmatprep.subr.mxu0 0.0
    %5089 = vmatpush1.msra.mxu0 0.0
    %5090 = vmatprep.subr.mxu0 0.0
    %5091 = vmatpush1.msra.mxu0 0.0
    %5092 = vmatprep.subr.mxu0 0.0
    %5093 = vmatpush1.msra.mxu0 0.0
    %5094 = vmatprep.subr.mxu0 0.0
    %5095 = vmatpush1.msra.mxu0 0.0
    %5096 = vmatprep.subr.mxu0 0.0
    %5097 = vmatpush1.msra.mxu0 0.0
    %5098 = vmatprep.subr.mxu0 0.0
    %5099 = vmatpush1.msra.mxu0 0.0
    %5100 = vmatprep.subr.mxu0 0.0
    %5101 = vmatpush1.msra.mxu0 0.0
    %5102 = vmatprep.subr.mxu0 0.0
    %5103 = vmatpush1.msra.mxu0 0.0
    %5104 = vmatprep.subr.mxu0 0.0
    %5105 = vmatpush1.msra.mxu0 0.0
    %5106 = vmatprep.subr.mxu0 0.0
    %5107 = vmatpush1.msra.mxu0 0.0
    %5108 = vmatprep.subr.mxu0 0.0
    %5109 = vmatpush1.msra.mxu0 0.0
    %5110 = vmatprep.subr.mxu0 0.0
    %5111 = vmatpush1.msra.mxu0 0.0
    %5112 = vmatprep.subr.mxu0 0.0
    %5113 = vmatpush1.msra.mxu0 0.0
    %5114 = vmatprep.subr.mxu0 0.0
    %5115 = vmatpush1.msra.mxu0 0.0
    %5116 = vmatprep.subr.mxu0 0.0
    %5117 = vmatpush1.msra.mxu0 0.0
    %5118 = vmatprep.subr.mxu0 0.0
    %5119 = vmatpush1.msra.mxu0 0.0
    %5120 = vmatprep.subr.mxu0 0.0
    %5121 = vmatpush1.msra.mxu0 0.0
    %5122 = vmatprep.mubr.f32.mxu0 0.0
    %5123 = vmatmul.mubr.f32.gmra.mrb[0].mxu0 %v5056
    %v5124 = vpop.f32.mrb[0].mxu0
    %v5125 = vadd.f32 0.0, %v5124
    %v5126 = vpop.f32.mrb[0].mxu0
    %v5127 = vadd.f32 0.0, %v5126
    %5128 = vdwg.mxu0
    %v5129 = vadd.f32 %v5051, %v5125
    %v5130 = vadd.f32 %v5052, %v5127
    %v5131 = vtanh.pop %v5129
    %v5132 = vtanh.pop %v5130
    %v5133 = vmul.f32 %v5131, 0.5
    %v5134 = vmul.f32 %v5132, %v80
    %v5135 = vadd.f32 %v5133, 0.5
    %v5136 = vadd.f32 %v5134, %v85
    %v5137 = vmul.f32 %v5135, %v5048
    %v5138 = vmul.f32 %v5135, %v5136
    %5140 = vrot.lane.b32.xlu0 %v5138, 64
    %v5141 = vpop.permute.xlu0 %5140
    %v5143 = vadd.f32 %v5137, %v5141
    %v5144 = vtanh.pop %v5143
    %v5145 = vmul.f32 %v5136, %v5144
    %v5146 = vld [vmem:[%s2474] sm:$0xff]
    %v5147 = vld [vmem:[%s2474 + $0x8] sm:$0xff]
    %5149 = vrot.lane.b32.xlu0 %v5145, 64
    %v5150 = vpop.permute.xlu0 %5149
    %v5151 = vsel %vm72, %v5150, 0
    %5153 = vmatprep.subr.mxu0 %v103
    %5154 = vmatpush1.msra.mxu0 %v102
    %5155 = vmatprep.subr.mxu0 %v105
    %5156 = vmatpush1.msra.mxu0 %v104
    %5157 = vmatprep.subr.mxu0 %v107
    %5158 = vmatpush1.msra.mxu0 %v106
    %5159 = vmatprep.subr.mxu0 %v109
    %5160 = vmatpush1.msra.mxu0 %v108
    %5161 = vmatprep.subr.mxu0 %v111
    %5162 = vmatpush1.msra.mxu0 %v110
    %5163 = vmatprep.subr.mxu0 %v113
    %5164 = vmatpush1.msra.mxu0 %v112
    %5165 = vmatprep.subr.mxu0 %v115
    %5166 = vmatpush1.msra.mxu0 %v114
    %5167 = vmatprep.subr.mxu0 %v117
    %5168 = vmatpush1.msra.mxu0 %v116
    %5169 = vmatprep.subr.mxu0 0.0
    %5170 = vmatpush1.msra.mxu0 0.0
    %5171 = vmatprep.subr.mxu0 0.0
    %5172 = vmatpush1.msra.mxu0 0.0
    %5173 = vmatprep.subr.mxu0 0.0
    %5174 = vmatpush1.msra.mxu0 0.0
    %5175 = vmatprep.subr.mxu0 0.0
    %5176 = vmatpush1.msra.mxu0 0.0
    %5177 = vmatprep.subr.mxu0 0.0
    %5178 = vmatpush1.msra.mxu0 0.0
    %5179 = vmatprep.subr.mxu0 0.0
    %5180 = vmatpush1.msra.mxu0 0.0
    %5181 = vmatprep.subr.mxu0 0.0
    %5182 = vmatpush1.msra.mxu0 0.0
    %5183 = vmatprep.subr.mxu0 0.0
    %5184 = vmatpush1.msra.mxu0 0.0
    %5185 = vmatprep.subr.mxu0 0.0
    %5186 = vmatpush1.msra.mxu0 0.0
    %5187 = vmatprep.subr.mxu0 0.0
    %5188 = vmatpush1.msra.mxu0 0.0
    %5189 = vmatprep.subr.mxu0 0.0
    %5190 = vmatpush1.msra.mxu0 0.0
    %5191 = vmatprep.subr.mxu0 0.0
    %5192 = vmatpush1.msra.mxu0 0.0
    %5193 = vmatprep.subr.mxu0 0.0
    %5194 = vmatpush1.msra.mxu0 0.0
    %5195 = vmatprep.subr.mxu0 0.0
    %5196 = vmatpush1.msra.mxu0 0.0
    %5197 = vmatprep.subr.mxu0 0.0
    %5198 = vmatpush1.msra.mxu0 0.0
    %5199 = vmatprep.subr.mxu0 0.0
    %5200 = vmatpush1.msra.mxu0 0.0
    %5201 = vmatprep.subr.mxu0 0.0
    %5202 = vmatpush1.msra.mxu0 0.0
    %5203 = vmatprep.subr.mxu0 0.0
    %5204 = vmatpush1.msra.mxu0 0.0
    %5205 = vmatprep.subr.mxu0 0.0
    %5206 = vmatpush1.msra.mxu0 0.0
    %5207 = vmatprep.subr.mxu0 0.0
    %5208 = vmatpush1.msra.mxu0 0.0
    %5209 = vmatprep.subr.mxu0 0.0
    %5210 = vmatpush1.msra.mxu0 0.0
    %5211 = vmatprep.subr.mxu0 0.0
    %5212 = vmatpush1.msra.mxu0 0.0
    %5213 = vmatprep.subr.mxu0 0.0
    %5214 = vmatpush1.msra.mxu0 0.0
    %5215 = vmatprep.subr.mxu0 0.0
    %5216 = vmatpush1.msra.mxu0 0.0
    %5217 = vmatprep.mubr.f32.mxu0 0.0
    %5218 = vmatmul.mubr.f32.gmra.mrb[0].mxu0 %v5151
    %v5219 = vpop.f32.mrb[0].mxu0
    %v5220 = vadd.f32 0.0, %v5219
    %v5221 = vpop.f32.mrb[0].mxu0
    %v5222 = vadd.f32 0.0, %v5221
    %5223 = vdwg.mxu0
    %v5224 = vadd.f32 %v5146, %v5220
    %v5225 = vadd.f32 %v5147, %v5222
    %v5226 = vtanh.pop %v5224
    %v5227 = vtanh.pop %v5225
    %v5228 = vmul.f32 %v5226, 0.5
    %v5229 = vmul.f32 %v5227, %v80
    %v5230 = vadd.f32 %v5228, 0.5
    %v5231 = vadd.f32 %v5229, %v85
    %v5232 = vmul.f32 %v5230, %v5143
    %v5233 = vmul.f32 %v5230, %v5231
    %5235 = vrot.lane.b32.xlu0 %v5233, 64
    %v5236 = vpop.permute.xlu0 %5235
    %v5238 = vadd.f32 %v5232, %v5236
    %v5239 = vtanh.pop %v5238
    %v5240 = vmul.f32 %v5231, %v5239
    %v5241 = vld [vmem:[%s2573] sm:$0xff]
    %v5242 = vld [vmem:[%s2573 + $0x8] sm:$0xff]
    %5244 = vrot.lane.b32.xlu0 %v5240, 64
    %v5245 = vpop.permute.xlu0 %5244
    %v5246 = vsel %vm72, %v5245, 0
    %5248 = vmatprep.subr.mxu0 %v103
    %5249 = vmatpush1.msra.mxu0 %v102
    %5250 = vmatprep.subr.mxu0 %v105
    %5251 = vmatpush1.msra.mxu0 %v104
    %5252 = vmatprep.subr.mxu0 %v107
    %5253 = vmatpush1.msra.mxu0 %v106
    %5254 = vmatprep.subr.mxu0 %v109
    %5255 = vmatpush1.msra.mxu0 %v108
    %5256 = vmatprep.subr.mxu0 %v111
    %5257 = vmatpush1.msra.mxu0 %v110
    %5258 = vmatprep.subr.mxu0 %v113
    %5259 = vmatpush1.msra.mxu0 %v112
    %5260 = vmatprep.subr.mxu0 %v115
    %5261 = vmatpush1.msra.mxu0 %v114
    %5262 = vmatprep.subr.mxu0 %v117
    %5263 = vmatpush1.msra.mxu0 %v116
    %5264 = vmatprep.subr.mxu0 0.0
    %5265 = vmatpush1.msra.mxu0 0.0
    %5266 = vmatprep.subr.mxu0 0.0
    %5267 = vmatpush1.msra.mxu0 0.0
    %5268 = vmatprep.subr.mxu0 0.0
    %5269 = vmatpush1.msra.mxu0 0.0
    %5270 = vmatprep.subr.mxu0 0.0
    %5271 = vmatpush1.msra.mxu0 0.0
    %5272 = vmatprep.subr.mxu0 0.0
    %5273 = vmatpush1.msra.mxu0 0.0
    %5274 = vmatprep.subr.mxu0 0.0
    %5275 = vmatpush1.msra.mxu0 0.0
    %5276 = vmatprep.subr.mxu0 0.0
    %5277 = vmatpush1.msra.mxu0 0.0
    %5278 = vmatprep.subr.mxu0 0.0
    %5279 = vmatpush1.msra.mxu0 0.0
    %5280 = vmatprep.subr.mxu0 0.0
    %5281 = vmatpush1.msra.mxu0 0.0
    %5282 = vmatprep.subr.mxu0 0.0
    %5283 = vmatpush1.msra.mxu0 0.0
    %5284 = vmatprep.subr.mxu0 0.0
    %5285 = vmatpush1.msra.mxu0 0.0
    %5286 = vmatprep.subr.mxu0 0.0
    %5287 = vmatpush1.msra.mxu0 0.0
    %5288 = vmatprep.subr.mxu0 0.0
    %5289 = vmatpush1.msra.mxu0 0.0
    %5290 = vmatprep.subr.mxu0 0.0
    %5291 = vmatpush1.msra.mxu0 0.0
    %5292 = vmatprep.subr.mxu0 0.0
    %5293 = vmatpush1.msra.mxu0 0.0
    %5294 = vmatprep.subr.mxu0 0.0
    %5295 = vmatpush1.msra.mxu0 0.0
    %5296 = vmatprep.subr.mxu0 0.0
    %5297 = vmatpush1.msra.mxu0 0.0
    %5298 = vmatprep.subr.mxu0 0.0
    %5299 = vmatpush1.msra.mxu0 0.0
    %5300 = vmatprep.subr.mxu0 0.0
    %5301 = vmatpush1.msra.mxu0 0.0
    %5302 = vmatprep.subr.mxu0 0.0
    %5303 = vmatpush1.msra.mxu0 0.0
    %5304 = vmatprep.subr.mxu0 0.0
    %5305 = vmatpush1.msra.mxu0 0.0
    %5306 = vmatprep.subr.mxu0 0.0
    %5307 = vmatpush1.msra.mxu0 0.0
    %5308 = vmatprep.subr.mxu0 0.0
    %5309 = vmatpush1.msra.mxu0 0.0
    %5310 = vmatprep.subr.mxu0 0.0
    %5311 = vmatpush1.msra.mxu0 0.0
    %5312 = vmatprep.mubr.f32.mxu0 0.0
    %5313 = vmatmul.mubr.f32.gmra.mrb[0].mxu0 %v5246
    %v5314 = vpop.f32.mrb[0].mxu0
    %v5315 = vadd.f32 0.0, %v5314
    %v5316 = vpop.f32.mrb[0].mxu0
    %v5317 = vadd.f32 0.0, %v5316
    %5318 = vdwg.mxu0
    %v5319 = vadd.f32 %v5241, %v5315
    %v5320 = vadd.f32 %v5242, %v5317
    %v5321 = vtanh.pop %v5319
    %v5322 = vtanh.pop %v5320
    %v5323 = vmul.f32 %v5321, 0.5
    %v5324 = vmul.f32 %v5322, %v80
    %v5325 = vadd.f32 %v5323, 0.5
    %v5326 = vadd.f32 %v5324, %v85
    %v5327 = vmul.f32 %v5325, %v5238
    %v5328 = vmul.f32 %v5325, %v5326
    %5330 = vrot.lane.b32.xlu0 %v5328, 64
    %v5331 = vpop.permute.xlu0 %5330
    %v5333 = vadd.f32 %v5327, %v5331
    %v5334 = vtanh.pop %v5333
    %v5335 = vmul.f32 %v5326, %v5334
    %v5336 = vld [vmem:[%s2672] sm:$0xff]
    %v5337 = vld [vmem:[%s2672 + $0x8] sm:$0xff]
    %5339 = vrot.lane.b32.xlu0 %v5335, 64
    %v5340 = vpop.permute.xlu0 %5339
    %v5341 = vsel %vm72, %v5340, 0
    %5343 = vmatprep.subr.mxu0 %v103
    %5344 = vmatpush1.msra.mxu0 %v102
    %5345 = vmatprep.subr.mxu0 %v105
    %5346 = vmatpush1.msra.mxu0 %v104
    %5347 = vmatprep.subr.mxu0 %v107
    %5348 = vmatpush1.msra.mxu0 %v106
    %5349 = vmatprep.subr.mxu0 %v109
    %5350 = vmatpush1.msra.mxu0 %v108
    %5351 = vmatprep.subr.mxu0 %v111
    %5352 = vmatpush1.msra.mxu0 %v110
    %5353 = vmatprep.subr.mxu0 %v113
    %5354 = vmatpush1.msra.mxu0 %v112
    %5355 = vmatprep.subr.mxu0 %v115
    %5356 = vmatpush1.msra.mxu0 %v114
    %5357 = vmatprep.subr.mxu0 %v117
    %5358 = vmatpush1.msra.mxu0 %v116
    %5359 = vmatprep.subr.mxu0 0.0
    %5360 = vmatpush1.msra.mxu0 0.0
    %5361 = vmatprep.subr.mxu0 0.0
    %5362 = vmatpush1.msra.mxu0 0.0
    %5363 = vmatprep.subr.mxu0 0.0
    %5364 = vmatpush1.msra.mxu0 0.0
    %5365 = vmatprep.subr.mxu0 0.0
    %5366 = vmatpush1.msra.mxu0 0.0
    %5367 = vmatprep.subr.mxu0 0.0
    %5368 = vmatpush1.msra.mxu0 0.0
    %5369 = vmatprep.subr.mxu0 0.0
    %5370 = vmatpush1.msra.mxu0 0.0
    %5371 = vmatprep.subr.mxu0 0.0
    %5372 = vmatpush1.msra.mxu0 0.0
    %5373 = vmatprep.subr.mxu0 0.0
    %5374 = vmatpush1.msra.mxu0 0.0
    %5375 = vmatprep.subr.mxu0 0.0
    %5376 = vmatpush1.msra.mxu0 0.0
    %5377 = vmatprep.subr.mxu0 0.0
    %5378 = vmatpush1.msra.mxu0 0.0
    %5379 = vmatprep.subr.mxu0 0.0
    %5380 = vmatpush1.msra.mxu0 0.0
    %5381 = vmatprep.subr.mxu0 0.0
    %5382 = vmatpush1.msra.mxu0 0.0
    %5383 = vmatprep.subr.mxu0 0.0
    %5384 = vmatpush1.msra.mxu0 0.0
    %5385 = vmatprep.subr.mxu0 0.0
    %5386 = vmatpush1.msra.mxu0 0.0
    %5387 = vmatprep.subr.mxu0 0.0
    %5388 = vmatpush1.msra.mxu0 0.0
    %5389 = vmatprep.subr.mxu0 0.0
    %5390 = vmatpush1.msra.mxu0 0.0
    %5391 = vmatprep.subr.mxu0 0.0
    %5392 = vmatpush1.msra.mxu0 0.0
    %5393 = vmatprep.subr.mxu0 0.0
    %5394 = vmatpush1.msra.mxu0 0.0
    %5395 = vmatprep.subr.mxu0 0.0
    %5396 = vmatpush1.msra.mxu0 0.0
    %5397 = vmatprep.subr.mxu0 0.0
    %5398 = vmatpush1.msra.mxu0 0.0
    %5399 = vmatprep.subr.mxu0 0.0
    %5400 = vmatpush1.msra.mxu0 0.0
    %5401 = vmatprep.subr.mxu0 0.0
    %5402 = vmatpush1.msra.mxu0 0.0
    %5403 = vmatprep.subr.mxu0 0.0
    %5404 = vmatpush1.msra.mxu0 0.0
    %5405 = vmatprep.subr.mxu0 0.0
    %5406 = vmatpush1.msra.mxu0 0.0
    %5407 = vmatprep.mubr.f32.mxu0 0.0
    %5408 = vmatmul.mubr.f32.gmra.mrb[0].mxu0 %v5341
    %v5409 = vpop.f32.mrb[0].mxu0
    %v5410 = vadd.f32 0.0, %v5409
    %v5411 = vpop.f32.mrb[0].mxu0
    %v5412 = vadd.f32 0.0, %v5411
    %5413 = vdwg.mxu0
    %v5414 = vadd.f32 %v5336, %v5410
    %v5415 = vadd.f32 %v5337, %v5412
    %v5416 = vtanh.pop %v5414
    %v5417 = vtanh.pop %v5415
    %v5418 = vmul.f32 %v5416, 0.5
    %v5419 = vmul.f32 %v5417, %v80
    %v5420 = vadd.f32 %v5418, 0.5
    %v5421 = vadd.f32 %v5419, %v85
    %v5422 = vmul.f32 %v5420, %v5333
    %v5423 = vmul.f32 %v5420, %v5421
    %5425 = vrot.lane.b32.xlu0 %v5423, 64
    %v5426 = vpop.permute.xlu0 %5425
    %v5428 = vadd.f32 %v5422, %v5426
    %v5429 = vtanh.pop %v5428
    %v5430 = vmul.f32 %v5421, %v5429
    %v5431 = vld [vmem:[%s2771] sm:$0xff]
    %v5432 = vld [vmem:[%s2771 + $0x8] sm:$0xff]
    %5434 = vrot.lane.b32.xlu0 %v5430, 64
    %v5435 = vpop.permute.xlu0 %5434
    %v5436 = vsel %vm72, %v5435, 0
    %5438 = vmatprep.subr.mxu0 %v103
    %5439 = vmatpush1.msra.mxu0 %v102
    %5440 = vmatprep.subr.mxu0 %v105
    %5441 = vmatpush1.msra.mxu0 %v104
    %5442 = vmatprep.subr.mxu0 %v107
    %5443 = vmatpush1.msra.mxu0 %v106
    %5444 = vmatprep.subr.mxu0 %v109
    %5445 = vmatpush1.msra.mxu0 %v108
    %5446 = vmatprep.subr.mxu0 %v111
    %5447 = vmatpush1.msra.mxu0 %v110
    %5448 = vmatprep.subr.mxu0 %v113
    %5449 = vmatpush1.msra.mxu0 %v112
    %5450 = vmatprep.subr.mxu0 %v115
    %5451 = vmatpush1.msra.mxu0 %v114
    %5452 = vmatprep.subr.mxu0 %v117
    %5453 = vmatpush1.msra.mxu0 %v116
    %5454 = vmatprep.subr.mxu0 0.0
    %5455 = vmatpush1.msra.mxu0 0.0
    %5456 = vmatprep.subr.mxu0 0.0
    %5457 = vmatpush1.msra.mxu0 0.0
    %5458 = vmatprep.subr.mxu0 0.0
    %5459 = vmatpush1.msra.mxu0 0.0
    %5460 = vmatprep.subr.mxu0 0.0
    %5461 = vmatpush1.msra.mxu0 0.0
    %5462 = vmatprep.subr.mxu0 0.0
    %5463 = vmatpush1.msra.mxu0 0.0
    %5464 = vmatprep.subr.mxu0 0.0
    %5465 = vmatpush1.msra.mxu0 0.0
    %5466 = vmatprep.subr.mxu0 0.0
    %5467 = vmatpush1.msra.mxu0 0.0
    %5468 = vmatprep.subr.mxu0 0.0
    %5469 = vmatpush1.msra.mxu0 0.0
    %5470 = vmatprep.subr.mxu0 0.0
    %5471 = vmatpush1.msra.mxu0 0.0
    %5472 = vmatprep.subr.mxu0 0.0
    %5473 = vmatpush1.msra.mxu0 0.0
    %5474 = vmatprep.subr.mxu0 0.0
    %5475 = vmatpush1.msra.mxu0 0.0
    %5476 = vmatprep.subr.mxu0 0.0
    %5477 = vmatpush1.msra.mxu0 0.0
    %5478 = vmatprep.subr.mxu0 0.0
    %5479 = vmatpush1.msra.mxu0 0.0
    %5480 = vmatprep.subr.mxu0 0.0
    %5481 = vmatpush1.msra.mxu0 0.0
    %5482 = vmatprep.subr.mxu0 0.0
    %5483 = vmatpush1.msra.mxu0 0.0
    %5484 = vmatprep.subr.mxu0 0.0
    %5485 = vmatpush1.msra.mxu0 0.0
    %5486 = vmatprep.subr.mxu0 0.0
    %5487 = vmatpush1.msra.mxu0 0.0
    %5488 = vmatprep.subr.mxu0 0.0
    %5489 = vmatpush1.msra.mxu0 0.0
    %5490 = vmatprep.subr.mxu0 0.0
    %5491 = vmatpush1.msra.mxu0 0.0
    %5492 = vmatprep.subr.mxu0 0.0
    %5493 = vmatpush1.msra.mxu0 0.0
    %5494 = vmatprep.subr.mxu0 0.0
    %5495 = vmatpush1.msra.mxu0 0.0
    %5496 = vmatprep.subr.mxu0 0.0
    %5497 = vmatpush1.msra.mxu0 0.0
    %5498 = vmatprep.subr.mxu0 0.0
    %5499 = vmatpush1.msra.mxu0 0.0
    %5500 = vmatprep.subr.mxu0 0.0
    %5501 = vmatpush1.msra.mxu0 0.0
    %5502 = vmatprep.mubr.f32.mxu0 0.0
    %5503 = vmatmul.mubr.f32.gmra.mrb[0].mxu0 %v5436
    %v5504 = vpop.f32.mrb[0].mxu0
    %v5505 = vadd.f32 0.0, %v5504
    %v5506 = vpop.f32.mrb[0].mxu0
    %v5507 = vadd.f32 0.0, %v5506
    %5508 = vdwg.mxu0
    %v5509 = vadd.f32 %v5431, %v5505
    %v5510 = vadd.f32 %v5432, %v5507
    %v5511 = vtanh.pop %v5509
    %v5512 = vtanh.pop %v5510
    %v5513 = vmul.f32 %v5511, 0.5
    %v5514 = vmul.f32 %v5512, %v80
    %v5515 = vadd.f32 %v5513, 0.5
    %v5516 = vadd.f32 %v5514, %v85
    %v5517 = vmul.f32 %v5515, %v5428
    %v5518 = vmul.f32 %v5515, %v5516
    %5520 = vrot.lane.b32.xlu0 %v5518, 64
    %v5521 = vpop.permute.xlu0 %5520
    %v5523 = vadd.f32 %v5517, %v5521
    %v5524 = vtanh.pop %v5523
    %v5525 = vmul.f32 %v5516, %v5524
    %v5526 = vld [vmem:[%s7] sm:$0xff]
    %v5527 = vld [vmem:[%s7 + $0x8] sm:$0xff]
    %v5528 = vld [vmem:[%s7 + $0x10] sm:$0xff]
    %v5529 = vld [vmem:[%s7 + $0x18] sm:$0xff]
    %v5530 = vld [vmem:[%s7 + $0x20] sm:$0xff]
    %v5531 = vld [vmem:[%s7 + $0x28] sm:$0xff]
    %v5532 = vld [vmem:[%s7 + $0x30] sm:$0xff]
    %v5533 = vld [vmem:[%s7 + $0x38] sm:$0xff]
    %v5534 = vld [vmem:[%s8] sm:$0x1]
    %v5536 = vlaneseq
    %v5537 = vshrl.u32 %v5536, 7
    %v5538 = vsub.s32 0, %v5537
    %v5539 = vrot.slane %v5534, %v5538
    %5542 = vrot.lane.b32.xlu0 %v5525, 64
    %v5543 = vpop.permute.xlu0 %5542
    %v5544 = vsel %vm72, %v5543, 0
    %5546 = vmatprep.subr.mxu0 0.0
    %5547 = vmatpush1.msra.mxu0 %v5526
    %5548 = vmatprep.subr.mxu0 0.0
    %5549 = vmatpush1.msra.mxu0 %v5527
    %5550 = vmatprep.subr.mxu0 0.0
    %5551 = vmatpush1.msra.mxu0 %v5528
    %5552 = vmatprep.subr.mxu0 0.0
    %5553 = vmatpush1.msra.mxu0 %v5529
    %5554 = vmatprep.subr.mxu0 0.0
    %5555 = vmatpush1.msra.mxu0 %v5530
    %5556 = vmatprep.subr.mxu0 0.0
    %5557 = vmatpush1.msra.mxu0 %v5531
    %5558 = vmatprep.subr.mxu0 0.0
    %5559 = vmatpush1.msra.mxu0 %v5532
    %5560 = vmatprep.subr.mxu0 0.0
    %5561 = vmatpush1.msra.mxu0 %v5533
    %5562 = vmatprep.subr.mxu0 0.0
    %5563 = vmatpush1.msra.mxu0 0.0
    %5564 = vmatprep.subr.mxu0 0.0
    %5565 = vmatpush1.msra.mxu0 0.0
    %5566 = vmatprep.subr.mxu0 0.0
    %5567 = vmatpush1.msra.mxu0 0.0
    %5568 = vmatprep.subr.mxu0 0.0
    %5569 = vmatpush1.msra.mxu0 0.0
    %5570 = vmatprep.subr.mxu0 0.0
    %5571 = vmatpush1.msra.mxu0 0.0
    %5572 = vmatprep.subr.mxu0 0.0
    %5573 = vmatpush1.msra.mxu0 0.0
    %5574 = vmatprep.subr.mxu0 0.0
    %5575 = vmatpush1.msra.mxu0 0.0
    %5576 = vmatprep.subr.mxu0 0.0
    %5577 = vmatpush1.msra.mxu0 0.0
    %5578 = vmatprep.subr.mxu0 0.0
    %5579 = vmatpush1.msra.mxu0 0.0
    %5580 = vmatprep.subr.mxu0 0.0
    %5581 = vmatpush1.msra.mxu0 0.0
    %5582 = vmatprep.subr.mxu0 0.0
    %5583 = vmatpush1.msra.mxu0 0.0
    %5584 = vmatprep.subr.mxu0 0.0
    %5585 = vmatpush1.msra.mxu0 0.0
    %5586 = vmatprep.subr.mxu0 0.0
    %5587 = vmatpush1.msra.mxu0 0.0
    %5588 = vmatprep.subr.mxu0 0.0
    %5589 = vmatpush1.msra.mxu0 0.0
    %5590 = vmatprep.subr.mxu0 0.0
    %5591 = vmatpush1.msra.mxu0 0.0
    %5592 = vmatprep.subr.mxu0 0.0
    %5593 = vmatpush1.msra.mxu0 0.0
    %5594 = vmatprep.subr.mxu0 0.0
    %5595 = vmatpush1.msra.mxu0 0.0
    %5596 = vmatprep.subr.mxu0 0.0
    %5597 = vmatpush1.msra.mxu0 0.0
    %5598 = vmatprep.subr.mxu0 0.0
    %5599 = vmatpush1.msra.mxu0 0.0
    %5600 = vmatprep.subr.mxu0 0.0
    %5601 = vmatpush1.msra.mxu0 0.0
    %5602 = vmatprep.subr.mxu0 0.0
    %5603 = vmatpush1.msra.mxu0 0.0
    %5604 = vmatprep.subr.mxu0 0.0
    %5605 = vmatpush1.msra.mxu0 0.0
    %5606 = vmatprep.subr.mxu0 0.0
    %5607 = vmatpush1.msra.mxu0 0.0
    %5608 = vmatprep.subr.mxu0 0.0
    %5609 = vmatpush1.msra.mxu0 0.0
    %5610 = vmatprep.mubr.f32.mxu0 0.0
    %5611 = vmatmul.mubr.f32.gmra.mrb[0].mxu0 %v5544
    %v5612 = vpop.f32.mrb[0].mxu0
    %v5613 = vadd.f32 %v5539, %v5612
    %v5614 = vpop.f32.mrb[0].mxu0
    %5615 = vdwg.mxu0
    %v5616 = vmax.f32 %v5613, 0.0
    %v5617 = vld [vmem:[%s9] sm:$0x1]
    %v5619 = vlaneseq
    %v5620 = vshrl.u32 %v5619, 7
    %v5621 = vsub.s32 0, %v5620
    %v5622 = vrot.slane %v5617, %v5621
    %v5624 = vmul.f32 %v5616, %v5622
    %v5625 = vld [vmem:[%s10] sm:$0x1]
    %v5627 = vlaneseq
    %v5628 = vshrl.u32 %v5627, 7
    %v5629 = vsub.s32 0, %v5628
    %v5630 = vrot.slane %v5625, %v5629
    %v5632 = vadd.f32 %v5624, %v5630
    %v5633 = vld [vmem:[#allocation5] sm:$0xff]
    %v5634 = vld [vmem:[#allocation5 + $0x8] sm:$0xff]
    %v5635 = vld [vmem:[#allocation5 + $0x10] sm:$0xff]
    %v5636 = vld [vmem:[#allocation5 + $0x18] sm:$0xff]
    %v5637 = vld [vmem:[%s12] sm:$0x1]
    %v5639 = vlaneseq
    %v5640 = vshrl.u32 %v5639, 7
    %v5641 = vsub.s32 0, %v5640
    %v5642 = vrot.slane %v5637, %v5641
    %vm5644 = vcmask 261120
    %v5646 = vsel %vm5644, %v5632, 0
    %5648 = vmatprep.subr.mxu0 0.0
    %5649 = vmatpush1.msra.mxu0 %v5633
    %5650 = vmatprep.subr.mxu0 0.0
    %5651 = vmatpush1.msra.mxu0 %v5634
    %5652 = vmatprep.subr.mxu0 0.0
    %5653 = vmatpush1.msra.mxu0 %v5635
    %5654 = vmatprep.subr.mxu0 0.0
    %5655 = vmatpush1.msra.mxu0 %v5636
    %5656 = vmatprep.subr.mxu0 0.0
    %5657 = vmatpush1.msra.mxu0 0.0
    %5658 = vmatprep.subr.mxu0 0.0
    %5659 = vmatpush1.msra.mxu0 0.0
    %5660 = vmatprep.subr.mxu0 0.0
    %5661 = vmatpush1.msra.mxu0 0.0
    %5662 = vmatprep.subr.mxu0 0.0
    %5663 = vmatpush1.msra.mxu0 0.0
    %5664 = vmatprep.subr.mxu0 0.0
    %5665 = vmatpush1.msra.mxu0 0.0
    %5666 = vmatprep.subr.mxu0 0.0
    %5667 = vmatpush1.msra.mxu0 0.0
    %5668 = vmatprep.subr.mxu0 0.0
    %5669 = vmatpush1.msra.mxu0 0.0
    %5670 = vmatprep.subr.mxu0 0.0
    %5671 = vmatpush1.msra.mxu0 0.0
    %5672 = vmatprep.subr.mxu0 0.0
    %5673 = vmatpush1.msra.mxu0 0.0
    %5674 = vmatprep.subr.mxu0 0.0
    %5675 = vmatpush1.msra.mxu0 0.0
    %5676 = vmatprep.subr.mxu0 0.0
    %5677 = vmatpush1.msra.mxu0 0.0
    %5678 = vmatprep.subr.mxu0 0.0
    %5679 = vmatpush1.msra.mxu0 0.0
    %5680 = vmatprep.subr.mxu0 0.0
    %5681 = vmatpush1.msra.mxu0 0.0
    %5682 = vmatprep.subr.mxu0 0.0
    %5683 = vmatpush1.msra.mxu0 0.0
    %5684 = vmatprep.subr.mxu0 0.0
    %5685 = vmatpush1.msra.mxu0 0.0
    %5686 = vmatprep.subr.mxu0 0.0
    %5687 = vmatpush1.msra.mxu0 0.0
    %5688 = vmatprep.subr.mxu0 0.0
    %5689 = vmatpush1.msra.mxu0 0.0
    %5690 = vmatprep.subr.mxu0 0.0
    %5691 = vmatpush1.msra.mxu0 0.0
    %5692 = vmatprep.subr.mxu0 0.0
    %5693 = vmatpush1.msra.mxu0 0.0
    %5694 = vmatprep.subr.mxu0 0.0
    %5695 = vmatpush1.msra.mxu0 0.0
    %5696 = vmatprep.subr.mxu0 0.0
    %5697 = vmatpush1.msra.mxu0 0.0
    %5698 = vmatprep.subr.mxu0 0.0
    %5699 = vmatpush1.msra.mxu0 0.0
    %5700 = vmatprep.subr.mxu0 0.0
    %5701 = vmatpush1.msra.mxu0 0.0
    %5702 = vmatprep.subr.mxu0 0.0
    %5703 = vmatpush1.msra.mxu0 0.0
    %5704 = vmatprep.subr.mxu0 0.0
    %5705 = vmatpush1.msra.mxu0 0.0
    %5706 = vmatprep.subr.mxu0 0.0
    %5707 = vmatpush1.msra.mxu0 0.0
    %5708 = vmatprep.subr.mxu0 0.0
    %5709 = vmatpush1.msra.mxu0 0.0
    %5710 = vmatprep.subr.mxu0 0.0
    %5711 = vmatpush1.msra.mxu0 0.0
    %5712 = vmatprep.mubr.f32.mxu0 0.0
    %5713 = vmatmul.mubr.f32.gmra.mrb[0].mxu0 %v5646
    %v5714 = vpop.f32.mrb[0].mxu0
    %v5715 = vadd.f32 %v5642, %v5714
    %v5716 = vpop.f32.mrb[0].mxu0
    %5717 = vdwg.mxu0
    %v5718 = vmax.f32 %v5715, 0.0
    %v5719 = vld [vmem:[%s13] sm:$0x1]
    %v5721 = vlaneseq
    %v5722 = vshrl.u32 %v5721, 7
    %v5723 = vsub.s32 0, %v5722
    %v5724 = vrot.slane %v5719, %v5723
    %v5726 = vmul.f32 %v5718, %v5724
    %v5727 = vld [vmem:[%s14] sm:$0x1]
    %v5729 = vlaneseq
    %v5730 = vshrl.u32 %v5729, 7
    %v5731 = vsub.s32 0, %v5730
    %v5732 = vrot.slane %v5727, %v5731
    %v5734 = vadd.f32 %v5726, %v5732
    %v5735 = vld [vmem:[%s15] sm:$0xff]
    %v5736 = vld [vmem:[%s15 + $0x8] sm:$0xff]
    %v5737 = vld [vmem:[%s15 + $0x10] sm:$0xff]
    %v5738 = vld [vmem:[%s15 + $0x18] sm:$0xff]
    %v5739 = vld [vmem:[#allocation4] sm:$0x1]
    %v5741 = vlaneseq
    %v5742 = vshrl.u32 %v5741, 7
    %v5743 = vsub.s32 0, %v5742
    %v5744 = vrot.slane %v5739, %v5743
    %v5747 = vsel %vm5644, %v5734, 0
    %5749 = vmatprep.subr.mxu0 0.0
    %5750 = vmatpush1.msra.mxu0 %v5735
    %5751 = vmatprep.subr.mxu0 0.0
    %5752 = vmatpush1.msra.mxu0 %v5736
    %5753 = vmatprep.subr.mxu0 0.0
    %5754 = vmatpush1.msra.mxu0 %v5737
    %5755 = vmatprep.subr.mxu0 0.0
    %5756 = vmatpush1.msra.mxu0 %v5738
    %5757 = vmatprep.subr.mxu0 0.0
    %5758 = vmatpush1.msra.mxu0 0.0
    %5759 = vmatprep.subr.mxu0 0.0
    %5760 = vmatpush1.msra.mxu0 0.0
    %5761 = vmatprep.subr.mxu0 0.0
    %5762 = vmatpush1.msra.mxu0 0.0
    %5763 = vmatprep.subr.mxu0 0.0
    %5764 = vmatpush1.msra.mxu0 0.0
    %5765 = vmatprep.subr.mxu0 0.0
    %5766 = vmatpush1.msra.mxu0 0.0
    %5767 = vmatprep.subr.mxu0 0.0
    %5768 = vmatpush1.msra.mxu0 0.0
    %5769 = vmatprep.subr.mxu0 0.0
    %5770 = vmatpush1.msra.mxu0 0.0
    %5771 = vmatprep.subr.mxu0 0.0
    %5772 = vmatpush1.msra.mxu0 0.0
    %5773 = vmatprep.subr.mxu0 0.0
    %5774 = vmatpush1.msra.mxu0 0.0
    %5775 = vmatprep.subr.mxu0 0.0
    %5776 = vmatpush1.msra.mxu0 0.0
    %5777 = vmatprep.subr.mxu0 0.0
    %5778 = vmatpush1.msra.mxu0 0.0
    %5779 = vmatprep.subr.mxu0 0.0
    %5780 = vmatpush1.msra.mxu0 0.0
    %5781 = vmatprep.subr.mxu0 0.0
    %5782 = vmatpush1.msra.mxu0 0.0
    %5783 = vmatprep.subr.mxu0 0.0
    %5784 = vmatpush1.msra.mxu0 0.0
    %5785 = vmatprep.subr.mxu0 0.0
    %5786 = vmatpush1.msra.mxu0 0.0
    %5787 = vmatprep.subr.mxu0 0.0
    %5788 = vmatpush1.msra.mxu0 0.0
    %5789 = vmatprep.subr.mxu0 0.0
    %5790 = vmatpush1.msra.mxu0 0.0
    %5791 = vmatprep.subr.mxu0 0.0
    %5792 = vmatpush1.msra.mxu0 0.0
    %5793 = vmatprep.subr.mxu0 0.0
    %5794 = vmatpush1.msra.mxu0 0.0
    %5795 = vmatprep.subr.mxu0 0.0
    %5796 = vmatpush1.msra.mxu0 0.0
    %5797 = vmatprep.subr.mxu0 0.0
    %5798 = vmatpush1.msra.mxu0 0.0
    %5799 = vmatprep.subr.mxu0 0.0
    %5800 = vmatpush1.msra.mxu0 0.0
    %5801 = vmatprep.subr.mxu0 0.0
    %5802 = vmatpush1.msra.mxu0 0.0
    %5803 = vmatprep.subr.mxu0 0.0
    %5804 = vmatpush1.msra.mxu0 0.0
    %5805 = vmatprep.subr.mxu0 0.0
    %5806 = vmatpush1.msra.mxu0 0.0
    %5807 = vmatprep.subr.mxu0 0.0
    %5808 = vmatpush1.msra.mxu0 0.0
    %5809 = vmatprep.subr.mxu0 0.0
    %5810 = vmatpush1.msra.mxu0 0.0
    %5811 = vmatprep.subr.mxu0 0.0
    %5812 = vmatpush1.msra.mxu0 0.0
    %5813 = vmatprep.mubr.f32.mxu0 0.0
    %5814 = vmatmul.mubr.f32.gmra.mrb[0].mxu0 %v5747
    %v5815 = vpop.f32.mrb[0].mxu0
    %v5816 = vadd.f32 %v5744, %v5815
    %v5817 = vpop.f32.mrb[0].mxu0
    %5818 = vdwg.mxu0
    %vm5819 = vcmask 7168
    %5820 = vst.msk [vmem:[%s17] sm:$0xff] %vm5819, %v5816
    // Predicated region
    $region74: #{tpu_custom_call.1} parent=1 // pred_check
      _
    $region75: #{tpu_custom_call.1} parent=1 // pred_check_branch
      %5822 = sbr.rel (0) target = $region77
    $region76: #{tpu_custom_call.1} parent=1 // pred_region
      _
    $region77: #{tpu_custom_call.1} parent=1 // pred_fallthru
      _
    // Predicated region
    $region78: #{tpu_custom_call.1} parent=1 // pred_check
      _
    $region79: #{tpu_custom_call.1} parent=1 // pred_check_branch
      %5824 = sbr.rel (0) target = $region81
    $region80: #{tpu_custom_call.1} parent=1 // pred_region
      _
    $region81: #{tpu_custom_call.1} parent=1 // pred_fallthru
      _
    %5825 = vsyncpa [#allocation6], 1

</llo_original>
